<compile_context>
chip_gen: v7x
topology: tpu7x:2x2x1
jax: 0.10.0
libtpu: 0.0.40
codegen_flags: <defaults>
</compile_context>

<pallas_src>
import jax
import jax.numpy as jnp
from jax.experimental import pallas as pl
from jax.experimental.pallas import tpu as pltpu


# ---------------------------------------------------------------------------
# Kernel: one grid step = TK voxels, full SVFE pipeline.
# ---------------------------------------------------------------------------
def svfe_kernel(x_ref,
                w1_ref, b1_ref,
                w2a_ref, w2b_ref, b2_ref,
                w3a_ref, w3b_ref, b3_ref,
                out_ref):
    tk, t, cin = x_ref.shape
    r = tk * t

    x = x_ref[...].reshape(r, cin)                               # (R, 7) f32

    # mask = torch.ne(torch.max(x, 2)[0], 0) -> per-point scalar in {0,1}
    maskf = (jnp.max(x, axis=1, keepdims=True) != 0.0).astype(jnp.float32)

    def mm(a, w_ref):
        # bf16 MXU matmul, f32 accumulate
        return jnp.dot(a.astype(jnp.bfloat16), w_ref[...],
                       preferred_element_type=jnp.float32)

    def vmax(a):
        # per-voxel max over the T points: (R, C) -> (tk, C)
        return jnp.max(a.reshape(tk, t, a.shape[-1]), axis=1)

    def bcast(a):
        # per-voxel (tk, C) -> per-point (R, C)
        c = a.shape[-1]
        return jnp.broadcast_to(a[:, None, :], (tk, t, c)).reshape(r, c)

    # ---- VFE-1 : FCN(7 -> 16) (BN folded into W/b) -----------------------
    pwf1 = jnp.maximum(mm(x, w1_ref) + b1_ref[...], 0.0)         # (R, 16)
    mp1 = pwf1 * maskf                                           # masked pwf
    laf1 = vmax(pwf1)                                            # (tk, 16)

    # ---- VFE-2 : FCN(32 -> 64), concat folded into split matmul ----------
    # h1 = [m*pwf1, m*laf1];  h1 @ W2 = (m*pwf1) @ W2a + m * (laf1 @ W2b)
    z2 = mm(mp1, w2a_ref) + maskf * bcast(mm(laf1, w2b_ref)) + b2_ref[...]
    pwf2 = jnp.maximum(z2, 0.0)                                  # (R, 64)
    mp2 = pwf2 * maskf
    laf2 = vmax(pwf2)                                            # (tk, 64)

    # ---- FCN(128 -> 128), same split-matmul trick -------------------------
    z3 = mm(mp2, w3a_ref) + maskf * bcast(mm(laf2, w3b_ref)) + b3_ref[...]
    h3 = jnp.maximum(z3, 0.0)                                    # (R, 128)

    # final torch.max over points (unmasked, exactly as in the module)
    out_ref[...] = vmax(h3).astype(out_ref.dtype)                # (tk, 128)


# ---------------------------------------------------------------------------
# Wrapper
# ---------------------------------------------------------------------------
def svfe_forward(x, kernel_params, *, tk=256,
                 vmem_limit_bytes=32 * 1024 * 1024):
    K, T, CIN = x.shape
    (w1, b1, w2a, w2b, b2, w3a, w3b, b3) = kernel_params
    cout = b3.shape[-1]

    # Tile size: multiple of 8 (sublane alignment).  When K allows, cap it so
    # the grid has >= 2 steps, letting the "parallel" axis use both v7x cores.
    tk = max(8, (tk // 8) * 8)
    if K >= 16:
        tk = min(tk, (((K + 1) // 2) + 7) // 8 * 8)

    k_pad = pl.cdiv(K, tk) * tk
    if k_pad != K:
        x = jnp.pad(x, ((0, k_pad - K), (0, 0), (0, 0)))
    grid = (k_pad // tk,)

    flat = (w1, b1, w2a, w2b, b2, w3a, w3b, b3)
    param_specs = [pl.BlockSpec(a.shape, lambda i: (0, 0)) for a in flat]

    out = pl.pallas_call(
        svfe_kernel,
        out_shape=jax.ShapeDtypeStruct((k_pad, cout), jnp.float32),
        grid_spec=pltpu.PrefetchScalarGridSpec(
            num_scalar_prefetch=0,
            grid=grid,
            in_specs=[pl.BlockSpec((tk, T, CIN), lambda i: (i, 0, 0))]
                     + param_specs,
            out_specs=pl.BlockSpec((tk, cout), lambda i: (i, 0)),
        ),
        compiler_params=pltpu.CompilerParams(
            dimension_semantics=("parallel",),
            vmem_limit_bytes=vmem_limit_bytes),
    )(x, *flat)
    return out[:K]


# ---------------------------------------------------------------------------
# Parameter init (mirrors nn.Linear + fresh BatchNorm1d) and packing
# ---------------------------------------------------------------------------
def init_fcn(key, cin, cout):
    k_w, k_b = jax.random.split(key)
    bound = 1.0 / (cin ** 0.5)
    w = jax.random.uniform(k_w, (cin, cout), jnp.float32, -bound, bound)
    b = jax.random.uniform(k_b, (1, cout), jnp.float32, -bound, bound)
    bn = (jnp.ones((1, cout), jnp.float32),    # gamma
          jnp.zeros((1, cout), jnp.float32),   # beta
          jnp.zeros((1, cout), jnp.float32),   # running mean
          jnp.ones((1, cout), jnp.float32))    # running var
    return w, b, bn


def pack_params(params, eps=1e-5):
    """Fold eval-mode BN into W/b, split W2/W3 for the concat-free path,
    cast weights to bf16 for the MXU."""
    def fold(w, b, bn):
        gamma, beta, mu, var = bn
        s = gamma / jnp.sqrt(var + eps)
        return w * s, b * s + (beta - mu * s)

    (w1, b1, bn1), (w2, b2, bn2), (w3, b3, bn3) = params
    w1f, b1f = fold(w1, b1, bn1)
    w2f, b2f = fold(w2, b2, bn2)
    w3f, b3f = fold(w3, b3, bn3)

    c1 = w1f.shape[1]                     # 16 : VFE-1 units
    c2 = w2f.shape[1]                     # 64 : VFE-2 units
    w2a, w2b = w2f[:c1], w2f[c1:]         # (16,64), (16,64)
    w3a, w3b = w3f[:c2], w3f[c2:]         # (64,128), (64,128)

    bf = lambda w: w.astype(jnp.bfloat16)
    return (bf(w1f), b1f, bf(w2a), bf(w2b), b2f, bf(w3a), bf(w3b), b3f)


# ---------------------------------------------------------------------------
# Pure-JAX reference (original PyTorch semantics, f32, eval-mode BN)
# ---------------------------------------------------------------------------
def svfe_reference(x, params, eps=1e-5):
    def fcn(h, w, b, bn):
        gamma, beta, mu, var = bn
        kk, tt, c = h.shape
        y = h.reshape(kk * tt, c) @ w + b
        y = (y - mu) / jnp.sqrt(var + eps) * gamma + beta
        return jnp.maximum(y, 0.0).reshape(kk, tt, -1)

    maskf = (jnp.max(x, axis=2) != 0.0).astype(jnp.float32)[..., None]

    def vfe(h, p):
        pwf = fcn(h, *p)
        laf = jnp.broadcast_to(jnp.max(pwf, axis=1, keepdims=True), pwf.shape)
        return jnp.concatenate([pwf, laf], axis=2) * maskf

    h = vfe(x, params[0])
    h = vfe(h, params[1])
    h = fcn(h, *params[2])
    return jnp.max(h, axis=1)


if __name__ == "__main__":
    K, T, CIN = 300, 8, 7        # 300 voxels (not a multiple of the tile)
    key = jax.random.PRNGKey(0)
    k_x, k_m, k1, k2, k3 = jax.random.split(key, 5)

    x = jax.random.normal(k_x, (K, T, CIN), jnp.float32)
    # zero out some "empty" points so the mask path is actually exercised
    point_valid = (jax.random.uniform(k_m, (K, T)) > 0.3).astype(jnp.float32)
    x = x * point_valid[..., None]

    params = (
        init_fcn(k1, 7, 16),      # VFE(7, 32)   -> FCN(7, 16)
        init_fcn(k2, 32, 64),     # VFE(32, 128) -> FCN(32, 64)
        init_fcn(k3, 128, 128),   # FCN(128, 128)
    )

    kparams = pack_params(params)
    out = svfe_forward(x, kparams, tk=128)   # padded to 384, grid of 3 steps
    out = jax.block_until_ready(out)

    ref = svfe_reference(x, params)
    assert out.shape == (K, 128), out.shape
    max_err = float(jnp.max(jnp.abs(out - ref)))
    # bf16 matmuls with f32 accumulation vs f32 reference -> loose tolerance
    assert jnp.allclose(out, ref, atol=5e-2, rtol=5e-2), max_err

    print("KERNEL_OK")
</pallas_src>

<mosaic_0001>
module attributes {stable_mosaic.version = 11 : i64} {
  func.func @svfe_kernel(%arg0: i32, %arg1: memref<128x8x7xf32, #tpu.memory_space<vmem>>, %arg2: memref<7x16xbf16, #tpu.memory_space<vmem>>, %arg3: memref<1x16xf32, #tpu.memory_space<vmem>>, %arg4: memref<16x64xbf16, #tpu.memory_space<vmem>>, %arg5: memref<16x64xbf16, #tpu.memory_space<vmem>>, %arg6: memref<1x64xf32, #tpu.memory_space<vmem>>, %arg7: memref<64x128xbf16, #tpu.memory_space<vmem>>, %arg8: memref<64x128xbf16, #tpu.memory_space<vmem>>, %arg9: memref<1x128xf32, #tpu.memory_space<vmem>>, %arg10: memref<128x128xf32, #tpu.memory_space<vmem>>) attributes {dimension_semantics = [#tpu.dimension_semantics<parallel>], iteration_bounds = array<i64: 3>, scalar_prefetch = 0 : i64, scratch_operands = 0 : i64, tpu.core_type = #tpu.core_type<tc>, window_params = [{transform_indices = @transform_0, window_bounds = array<i64: 128, 8, 7>}, {pipeline_mode = #tpu.pipeline_mode<synchronous>, transform_indices = @transform_1, window_bounds = array<i64: 7, 16>}, {pipeline_mode = #tpu.pipeline_mode<synchronous>, transform_indices = @transform_2, window_bounds = array<i64: 1, 16>}, {pipeline_mode = #tpu.pipeline_mode<synchronous>, transform_indices = @transform_3, window_bounds = array<i64: 16, 64>}, {pipeline_mode = #tpu.pipeline_mode<synchronous>, transform_indices = @transform_4, window_bounds = array<i64: 16, 64>}, {pipeline_mode = #tpu.pipeline_mode<synchronous>, transform_indices = @transform_5, window_bounds = array<i64: 1, 64>}, {pipeline_mode = #tpu.pipeline_mode<synchronous>, transform_indices = @transform_6, window_bounds = array<i64: 64, 128>}, {pipeline_mode = #tpu.pipeline_mode<synchronous>, transform_indices = @transform_7, window_bounds = array<i64: 64, 128>}, {pipeline_mode = #tpu.pipeline_mode<synchronous>, transform_indices = @transform_8, window_bounds = array<i64: 1, 128>}, {transform_indices = @transform_9, window_bounds = array<i64: 128, 128>}]} {
    %c0 = arith.constant 0 : index
    %c0_0 = arith.constant 0 : index
    %c0_1 = arith.constant 0 : index
    %0 = vector.load %arg1[%c0, %c0_0, %c0_1] : memref<128x8x7xf32, #tpu.memory_space<vmem>>, vector<128x8x7xf32>
    %1 = vector.shape_cast %0 : vector<128x8x7xf32> to vector<1024x7xf32>
    %cst = arith.constant dense<0xFF800000> : vector<1024xf32>
    %2 = vector.multi_reduction <maximumf>, %1, %cst [1] : vector<1024x7xf32> to vector<1024xf32>
    %3 = vector.shape_cast %2 : vector<1024xf32> to vector<1024x1xf32>
    %cst_2 = arith.constant 0.000000e+00 : f32
    %4 = vector.broadcast %cst_2 : f32 to vector<1024x1xf32>
    %5 = arith.cmpf one, %3, %4 : vector<1024x1xf32>
    %6 = arith.extui %5 : vector<1024x1xi1> to vector<1024x1xi32>
    %7 = arith.sitofp %6 : vector<1024x1xi32> to vector<1024x1xf32>
    %8 = arith.truncf %1 : vector<1024x7xf32> to vector<1024x7xbf16>
    %c0_3 = arith.constant 0 : index
    %c0_4 = arith.constant 0 : index
    %9 = vector.load %arg2[%c0_3, %c0_4] : memref<7x16xbf16, #tpu.memory_space<vmem>>, vector<7x16xbf16>
    %cst_5 = arith.constant dense<0.000000e+00> : vector<1024x16xf32>
    %10 = tpu.matmul %8, %9, %cst_5 {dimension_numbers = #tpu.dot_dimension_numbers<[1], [0], [0], [1], [0, 0, 1, 1], [], []>} : vector<1024x7xbf16>, vector<7x16xbf16>, vector<1024x16xf32> -> vector<1024x16xf32>
    %c0_6 = arith.constant 0 : index
    %c0_7 = arith.constant 0 : index
    %11 = vector.load %arg3[%c0_6, %c0_7] : memref<1x16xf32, #tpu.memory_space<vmem>>, vector<1x16xf32>
    %12 = vector.broadcast %11 : vector<1x16xf32> to vector<1024x16xf32>
    %13 = arith.addf %10, %12 : vector<1024x16xf32>
    %cst_8 = arith.constant 0.000000e+00 : f32
    %14 = vector.broadcast %cst_8 : f32 to vector<1024x16xf32>
    %15 = arith.maximumf %13, %14 : vector<1024x16xf32>
    %16 = vector.broadcast %7 : vector<1024x1xf32> to vector<1024x16xf32>
    %17 = arith.mulf %15, %16 : vector<1024x16xf32>
    %18 = vector.shape_cast %15 : vector<1024x16xf32> to vector<128x8x16xf32>
    %cst_9 = arith.constant dense<0xFF800000> : vector<128x16xf32>
    %19 = vector.multi_reduction <maximumf>, %18, %cst_9 [1] : vector<128x8x16xf32> to vector<128x16xf32>
    %20 = arith.truncf %17 : vector<1024x16xf32> to vector<1024x16xbf16>
    %c0_10 = arith.constant 0 : index
    %c0_11 = arith.constant 0 : index
    %21 = vector.load %arg4[%c0_10, %c0_11] : memref<16x64xbf16, #tpu.memory_space<vmem>>, vector<16x64xbf16>
    %cst_12 = arith.constant dense<0.000000e+00> : vector<1024x64xf32>
    %22 = tpu.matmul %20, %21, %cst_12 {dimension_numbers = #tpu.dot_dimension_numbers<[1], [0], [0], [1], [0, 0, 1, 1], [], []>} : vector<1024x16xbf16>, vector<16x64xbf16>, vector<1024x64xf32> -> vector<1024x64xf32>
    %23 = arith.truncf %19 : vector<128x16xf32> to vector<128x16xbf16>
    %c0_13 = arith.constant 0 : index
    %c0_14 = arith.constant 0 : index
    %24 = vector.load %arg5[%c0_13, %c0_14] : memref<16x64xbf16, #tpu.memory_space<vmem>>, vector<16x64xbf16>
    %cst_15 = arith.constant dense<0.000000e+00> : vector<128x64xf32>
    %25 = tpu.matmul %23, %24, %cst_15 {dimension_numbers = #tpu.dot_dimension_numbers<[1], [0], [0], [1], [0, 0, 1, 1], [], []>} : vector<128x16xbf16>, vector<16x64xbf16>, vector<128x64xf32> -> vector<128x64xf32>
    %26 = vector.shape_cast %25 : vector<128x64xf32> to vector<128x1x64xf32>
    %27 = vector.shape_cast %26 : vector<128x1x64xf32> to vector<128x1x64xf32>
    %28 = vector.broadcast %27 : vector<128x1x64xf32> to vector<128x8x64xf32>
    %29 = vector.shape_cast %28 : vector<128x8x64xf32> to vector<1024x64xf32>
    %30 = vector.broadcast %7 : vector<1024x1xf32> to vector<1024x64xf32>
    %31 = arith.mulf %30, %29 : vector<1024x64xf32>
    %32 = arith.addf %22, %31 : vector<1024x64xf32>
    %c0_16 = arith.constant 0 : index
    %c0_17 = arith.constant 0 : index
    %33 = vector.load %arg6[%c0_16, %c0_17] : memref<1x64xf32, #tpu.memory_space<vmem>>, vector<1x64xf32>
    %34 = vector.broadcast %33 : vector<1x64xf32> to vector<1024x64xf32>
    %35 = arith.addf %32, %34 : vector<1024x64xf32>
    %cst_18 = arith.constant 0.000000e+00 : f32
    %36 = vector.broadcast %cst_18 : f32 to vector<1024x64xf32>
    %37 = arith.maximumf %35, %36 : vector<1024x64xf32>
    %38 = vector.broadcast %7 : vector<1024x1xf32> to vector<1024x64xf32>
    %39 = arith.mulf %37, %38 : vector<1024x64xf32>
    %40 = vector.shape_cast %37 : vector<1024x64xf32> to vector<128x8x64xf32>
    %cst_19 = arith.constant dense<0xFF800000> : vector<128x64xf32>
    %41 = vector.multi_reduction <maximumf>, %40, %cst_19 [1] : vector<128x8x64xf32> to vector<128x64xf32>
    %42 = arith.truncf %39 : vector<1024x64xf32> to vector<1024x64xbf16>
    %c0_20 = arith.constant 0 : index
    %c0_21 = arith.constant 0 : index
    %43 = vector.load %arg7[%c0_20, %c0_21] : memref<64x128xbf16, #tpu.memory_space<vmem>>, vector<64x128xbf16>
    %cst_22 = arith.constant dense<0.000000e+00> : vector<1024x128xf32>
    %44 = tpu.matmul %42, %43, %cst_22 {dimension_numbers = #tpu.dot_dimension_numbers<[1], [0], [0], [1], [0, 0, 1, 1], [], []>} : vector<1024x64xbf16>, vector<64x128xbf16>, vector<1024x128xf32> -> vector<1024x128xf32>
    %45 = arith.truncf %41 : vector<128x64xf32> to vector<128x64xbf16>
    %c0_23 = arith.constant 0 : index
    %c0_24 = arith.constant 0 : index
    %46 = vector.load %arg8[%c0_23, %c0_24] : memref<64x128xbf16, #tpu.memory_space<vmem>>, vector<64x128xbf16>
    %cst_25 = arith.constant dense<0.000000e+00> : vector<128x128xf32>
    %47 = tpu.matmul %45, %46, %cst_25 {dimension_numbers = #tpu.dot_dimension_numbers<[1], [0], [0], [1], [0, 0, 1, 1], [], []>} : vector<128x64xbf16>, vector<64x128xbf16>, vector<128x128xf32> -> vector<128x128xf32>
    %48 = vector.shape_cast %47 : vector<128x128xf32> to vector<128x1x128xf32>
    %49 = vector.shape_cast %48 : vector<128x1x128xf32> to vector<128x1x128xf32>
    %50 = vector.broadcast %49 : vector<128x1x128xf32> to vector<128x8x128xf32>
    %51 = vector.shape_cast %50 : vector<128x8x128xf32> to vector<1024x128xf32>
    %52 = vector.broadcast %7 : vector<1024x1xf32> to vector<1024x128xf32>
    %53 = arith.mulf %52, %51 : vector<1024x128xf32>
    %54 = arith.addf %44, %53 : vector<1024x128xf32>
    %c0_26 = arith.constant 0 : index
    %c0_27 = arith.constant 0 : index
    %55 = vector.load %arg9[%c0_26, %c0_27] : memref<1x128xf32, #tpu.memory_space<vmem>>, vector<1x128xf32>
    %56 = vector.broadcast %55 : vector<1x128xf32> to vector<1024x128xf32>
    %57 = arith.addf %54, %56 : vector<1024x128xf32>
    %cst_28 = arith.constant 0.000000e+00 : f32
    %58 = vector.broadcast %cst_28 : f32 to vector<1024x128xf32>
    %59 = arith.maximumf %57, %58 : vector<1024x128xf32>
    %60 = vector.shape_cast %59 : vector<1024x128xf32> to vector<128x8x128xf32>
    %cst_29 = arith.constant dense<0xFF800000> : vector<128x128xf32>
    %61 = vector.multi_reduction <maximumf>, %60, %cst_29 [1] : vector<128x8x128xf32> to vector<128x128xf32>
    %c0_30 = arith.constant 0 : index
    %c0_31 = arith.constant 0 : index
    %62 = vector.load %arg10[%c0_30, %c0_31] : memref<128x128xf32, #tpu.memory_space<vmem>>, vector<128x128xf32>
    tpu.vector_store %arg10[%c0_30, %c0_31], %61 {strides = array<i32>} : memref<128x128xf32, #tpu.memory_space<vmem>>, vector<128x128xf32>,
    return
  }
  func.func @transform_0(%arg0: i32) -> (i32, i32, i32) {
    %c0_i32 = arith.constant 0 : i32
    %c0_i32_0 = arith.constant 0 : i32
    %c0_i32_1 = arith.constant 0 : i32
    return %arg0, %c0_i32, %c0_i32_0 : i32, i32, i32
  }
  func.func @transform_1(%arg0: i32) -> (i32, i32) {
    %c0_i32 = arith.constant 0 : i32
    %c0_i32_0 = arith.constant 0 : i32
    %c0_i32_1 = arith.constant 0 : i32
    return %c0_i32, %c0_i32_0 : i32, i32
  }
  func.func @transform_2(%arg0: i32) -> (i32, i32) {
    %c0_i32 = arith.constant 0 : i32
    %c0_i32_0 = arith.constant 0 : i32
    %c0_i32_1 = arith.constant 0 : i32
    return %c0_i32, %c0_i32_0 : i32, i32
  }
  func.func @transform_3(%arg0: i32) -> (i32, i32) {
    %c0_i32 = arith.constant 0 : i32
    %c0_i32_0 = arith.constant 0 : i32
    %c0_i32_1 = arith.constant 0 : i32
    return %c0_i32, %c0_i32_0 : i32, i32
  }
  func.func @transform_4(%arg0: i32) -> (i32, i32) {
    %c0_i32 = arith.constant 0 : i32
    %c0_i32_0 = arith.constant 0 : i32
    %c0_i32_1 = arith.constant 0 : i32
    return %c0_i32, %c0_i32_0 : i32, i32
  }
  func.func @transform_5(%arg0: i32) -> (i32, i32) {
    %c0_i32 = arith.constant 0 : i32
    %c0_i32_0 = arith.constant 0 : i32
    %c0_i32_1 = arith.constant 0 : i32
    return %c0_i32, %c0_i32_0 : i32, i32
  }
  func.func @transform_6(%arg0: i32) -> (i32, i32) {
    %c0_i32 = arith.constant 0 : i32
    %c0_i32_0 = arith.constant 0 : i32
    %c0_i32_1 = arith.constant 0 : i32
    return %c0_i32, %c0_i32_0 : i32, i32
  }
  func.func @transform_7(%arg0: i32) -> (i32, i32) {
    %c0_i32 = arith.constant 0 : i32
    %c0_i32_0 = arith.constant 0 : i32
    %c0_i32_1 = arith.constant 0 : i32
    return %c0_i32, %c0_i32_0 : i32, i32
  }
  func.func @transform_8(%arg0: i32) -> (i32, i32) {
    %c0_i32 = arith.constant 0 : i32
    %c0_i32_0 = arith.constant 0 : i32
    %c0_i32_1 = arith.constant 0 : i32
    return %c0_i32, %c0_i32_0 : i32, i32
  }
  func.func @transform_9(%arg0: i32) -> (i32, i32) {
    %c0_i32 = arith.constant 0 : i32
    %c0_i32_0 = arith.constant 0 : i32
    return %arg0, %c0_i32 : i32, i32
  }
}

</mosaic_0001>

<llo_original>
// kernel: tpu_custom_call.1
$region0: #{tpu_custom_call.1}
  #allocation0 [shape = 'u32[]', space=smem, size = 0x4, offset = 0x4, fixed_abs, tag = 'smem constant byte address 0x4 - core index']
  #allocation1 [shape = 'u32[144,128]{1,0:T(1,128)}', space=vmem, size = 0x12000, scoped, tag = 'internal scratch']
  %s0 = inlined_call_operand.vmem [shape: f32[384,8,7], index: 0, kind: input, shape index: {}]
  %s1 = inlined_call_operand.vmem [shape: bf16[7,16], index: 1, kind: input, shape index: {}]
  %s2 = inlined_call_operand.vmem [shape: f32[1,16], index: 2, kind: input, shape index: {}]
  %s3 = inlined_call_operand.vmem [shape: bf16[16,64], index: 3, kind: input, shape index: {}]
  %s4 = inlined_call_operand.vmem [shape: bf16[16,64], index: 4, kind: input, shape index: {}]
  %s5 = inlined_call_operand.vmem [shape: f32[1,64], index: 5, kind: input, shape index: {}]
  %s6 = inlined_call_operand.vmem [shape: bf16[64,128], index: 6, kind: input, shape index: {}]
  %s7 = inlined_call_operand.vmem [shape: bf16[64,128], index: 7, kind: input, shape index: {}]
  %s8 = inlined_call_operand.vmem [shape: f32[1,128], index: 8, kind: input, shape index: {}]
  %s9 = inlined_call_operand.hbm [shape: f32[384,128], index: 9, kind: output, shape index: {}]
  %s10 = sld [smem:[#allocation0]]
  $region69: #{tpu_custom_call.1} parent=0
    _
  %s12 = ssub.s32 1, %s10
  %s13 = scalar_select 0, %s12, %s10
  $region1: #{tpu_custom_call.1} parent=0
    #allocation2 [shape = 'u8[131072]{0}', space=vmem, size = 0x20000, scoped, tag = 'output window, operand 0']
    #allocation3 [shape = 's32[2]{0}', space=sflag, size = 0x8, scoped, tag = 'scoped memory for tpu_custom_call.1']
    %14 = vsyncpa [#allocation3], 0
    %s15 = scalar_lea.sflag [#allocation3], 1
    %16 = vsyncpa %s15, 0
    loop: start=0, step=1, limit=5
    $region2: #{tpu_custom_call.1} parent=1 // loop_pre_header
      _
    $region3: #{tpu_custom_call.1} parent=1 // loop_header
      %s18 = sphi 0, %s22
      %p19 = scmp.ge.s32.totalorder %s18, 5
      %s28 = sphi 0, %s30
      %s31 = sphi 0, %s28
      %s32 = sphi 0, %s31
      %s48 = sphi 0, %s32
      %s52 = sphi 0, %s52
      %s54 = sphi 0, %s52
      %s55 = sphi 0, %s54
      %s69 = sphi 0, %s55
      %s73 = sphi 0, %s73
      %s75 = sphi 0, %s73
      %s76 = sphi 0, %s75
      %s90 = sphi 0, %s76
      %s94 = sphi 0, %s94
      %s96 = sphi 0, %s94
      %s97 = sphi 0, %s96
      %s111 = sphi 0, %s97
      %s115 = sphi 0, %s115
      %s117 = sphi 0, %s115
      %s118 = sphi 0, %s117
      %s132 = sphi 0, %s118
      %s136 = sphi 0, %s136
      %s138 = sphi 0, %s136
      %s139 = sphi 0, %s138
      %s153 = sphi 0, %s139
      %s157 = sphi 0, %s157
      %s159 = sphi 0, %s157
      %s160 = sphi 0, %s159
      %s174 = sphi 0, %s160
      %s178 = sphi 0, %s178
      %s180 = sphi 0, %s178
      %s181 = sphi 0, %s180
      %s195 = sphi 0, %s181
      %s199 = sphi 0, %s199
      %s201 = sphi 0, %s199
      %s202 = sphi 0, %s201
      %s216 = sphi 0, %s202
      %s222 = sphi 0, %s224
      %s225 = sphi 0, %s222
      %s226 = sphi 0, %s225
      %s242 = sphi 0, %s226
    $region4: #{tpu_custom_call.1} parent=1 // loop_header_branch
      %21 = sbr.rel (%p19) target = $region8
    $region5: #{tpu_custom_call.1} parent=1 // loop_body
      %s23 = ssub.s32 %s18, 1
      %s24 = ssub.s32 %s18, 2
      %s25 = sadd.s32 %s18, 1
      %s26 = ssub.s32 %s18, %s25
      %p27 = scmp.eq.s32.totalorder %s26, 0
      %s29 = sadd.s32 %s28, 1
      %s30 = scalar_select %p27, %s28, %s29
      %p33 = pneg %p27
      %p34 = scmp.eq.s32.totalorder %s18, 2
      %p35 = por %p33, %p34
      %p36 = scmp.ne.s32.totalorder %s28, %s31
      %p37 = scmp.eq.s32.totalorder %s18, 0
      %p38 = por %p36, %p37
      %p39 = scmp.ne.s32.totalorder %s28, %s31
      %p40 = scmp.eq.s32.totalorder %s23, 2
      %p41 = por %p39, %p40
      %p42 = scmp.ne.s32.totalorder %s31, %s32
      %p43 = scmp.eq.s32.totalorder %s23, 0
      %p44 = por %p42, %p43
      %p45 = scmp.ne.s32.totalorder %s31, %s32
      %p46 = scmp.eq.s32.totalorder %s24, 2
      %p47 = por %p45, %p46
      %p49 = scmp.ne.s32.totalorder %s32, %s48
      %p50 = scmp.eq.s32.totalorder %s24, 0
      %p51 = por %p49, %p50
      %s53 = sadd.s32 %s52, 1
      %p56 = scmp.eq.s32.totalorder %s18, 2
      %p57 = scmp.ne.s32.totalorder %s52, %s54
      %p58 = scmp.eq.s32.totalorder %s18, 0
      %p59 = por %p57, %p58
      %p60 = scmp.ne.s32.totalorder %s52, %s54
      %p61 = scmp.eq.s32.totalorder %s23, 2
      %p62 = por %p60, %p61
      %p63 = scmp.ne.s32.totalorder %s54, %s55
      %p64 = scmp.eq.s32.totalorder %s23, 0
      %p65 = por %p63, %p64
      %p66 = scmp.ne.s32.totalorder %s54, %s55
      %p67 = scmp.eq.s32.totalorder %s24, 2
      %p68 = por %p66, %p67
      %p70 = scmp.ne.s32.totalorder %s55, %s69
      %p71 = scmp.eq.s32.totalorder %s24, 0
      %p72 = por %p70, %p71
      %s74 = sadd.s32 %s73, 1
      %p77 = scmp.eq.s32.totalorder %s18, 2
      %p78 = scmp.ne.s32.totalorder %s73, %s75
      %p79 = scmp.eq.s32.totalorder %s18, 0
      %p80 = por %p78, %p79
      %p81 = scmp.ne.s32.totalorder %s73, %s75
      %p82 = scmp.eq.s32.totalorder %s23, 2
      %p83 = por %p81, %p82
      %p84 = scmp.ne.s32.totalorder %s75, %s76
      %p85 = scmp.eq.s32.totalorder %s23, 0
      %p86 = por %p84, %p85
      %p87 = scmp.ne.s32.totalorder %s75, %s76
      %p88 = scmp.eq.s32.totalorder %s24, 2
      %p89 = por %p87, %p88
      %p91 = scmp.ne.s32.totalorder %s76, %s90
      %p92 = scmp.eq.s32.totalorder %s24, 0
      %p93 = por %p91, %p92
      %s95 = sadd.s32 %s94, 1
      %p98 = scmp.eq.s32.totalorder %s18, 2
      %p99 = scmp.ne.s32.totalorder %s94, %s96
      %p100 = scmp.eq.s32.totalorder %s18, 0
      %p101 = por %p99, %p100
      %p102 = scmp.ne.s32.totalorder %s94, %s96
      %p103 = scmp.eq.s32.totalorder %s23, 2
      %p104 = por %p102, %p103
      %p105 = scmp.ne.s32.totalorder %s96, %s97
      %p106 = scmp.eq.s32.totalorder %s23, 0
      %p107 = por %p105, %p106
      %p108 = scmp.ne.s32.totalorder %s96, %s97
      %p109 = scmp.eq.s32.totalorder %s24, 2
      %p110 = por %p108, %p109
      %p112 = scmp.ne.s32.totalorder %s97, %s111
      %p113 = scmp.eq.s32.totalorder %s24, 0
      %p114 = por %p112, %p113
      %s116 = sadd.s32 %s115, 1
      %p119 = scmp.eq.s32.totalorder %s18, 2
      %p120 = scmp.ne.s32.totalorder %s115, %s117
      %p121 = scmp.eq.s32.totalorder %s18, 0
      %p122 = por %p120, %p121
      %p123 = scmp.ne.s32.totalorder %s115, %s117
      %p124 = scmp.eq.s32.totalorder %s23, 2
      %p125 = por %p123, %p124
      %p126 = scmp.ne.s32.totalorder %s117, %s118
      %p127 = scmp.eq.s32.totalorder %s23, 0
      %p128 = por %p126, %p127
      %p129 = scmp.ne.s32.totalorder %s117, %s118
      %p130 = scmp.eq.s32.totalorder %s24, 2
      %p131 = por %p129, %p130
      %p133 = scmp.ne.s32.totalorder %s118, %s132
      %p134 = scmp.eq.s32.totalorder %s24, 0
      %p135 = por %p133, %p134
      %s137 = sadd.s32 %s136, 1
      %p140 = scmp.eq.s32.totalorder %s18, 2
      %p141 = scmp.ne.s32.totalorder %s136, %s138
      %p142 = scmp.eq.s32.totalorder %s18, 0
      %p143 = por %p141, %p142
      %p144 = scmp.ne.s32.totalorder %s136, %s138
      %p145 = scmp.eq.s32.totalorder %s23, 2
      %p146 = por %p144, %p145
      %p147 = scmp.ne.s32.totalorder %s138, %s139
      %p148 = scmp.eq.s32.totalorder %s23, 0
      %p149 = por %p147, %p148
      %p150 = scmp.ne.s32.totalorder %s138, %s139
      %p151 = scmp.eq.s32.totalorder %s24, 2
      %p152 = por %p150, %p151
      %p154 = scmp.ne.s32.totalorder %s139, %s153
      %p155 = scmp.eq.s32.totalorder %s24, 0
      %p156 = por %p154, %p155
      %s158 = sadd.s32 %s157, 1
      %p161 = scmp.eq.s32.totalorder %s18, 2
      %p162 = scmp.ne.s32.totalorder %s157, %s159
      %p163 = scmp.eq.s32.totalorder %s18, 0
      %p164 = por %p162, %p163
      %p165 = scmp.ne.s32.totalorder %s157, %s159
      %p166 = scmp.eq.s32.totalorder %s23, 2
      %p167 = por %p165, %p166
      %p168 = scmp.ne.s32.totalorder %s159, %s160
      %p169 = scmp.eq.s32.totalorder %s23, 0
      %p170 = por %p168, %p169
      %p171 = scmp.ne.s32.totalorder %s159, %s160
      %p172 = scmp.eq.s32.totalorder %s24, 2
      %p173 = por %p171, %p172
      %p175 = scmp.ne.s32.totalorder %s160, %s174
      %p176 = scmp.eq.s32.totalorder %s24, 0
      %p177 = por %p175, %p176
      %s179 = sadd.s32 %s178, 1
      %p182 = scmp.eq.s32.totalorder %s18, 2
      %p183 = scmp.ne.s32.totalorder %s178, %s180
      %p184 = scmp.eq.s32.totalorder %s18, 0
      %p185 = por %p183, %p184
      %p186 = scmp.ne.s32.totalorder %s178, %s180
      %p187 = scmp.eq.s32.totalorder %s23, 2
      %p188 = por %p186, %p187
      %p189 = scmp.ne.s32.totalorder %s180, %s181
      %p190 = scmp.eq.s32.totalorder %s23, 0
      %p191 = por %p189, %p190
      %p192 = scmp.ne.s32.totalorder %s180, %s181
      %p193 = scmp.eq.s32.totalorder %s24, 2
      %p194 = por %p192, %p193
      %p196 = scmp.ne.s32.totalorder %s181, %s195
      %p197 = scmp.eq.s32.totalorder %s24, 0
      %p198 = por %p196, %p197
      %s200 = sadd.s32 %s199, 1
      %p203 = scmp.eq.s32.totalorder %s18, 2
      %p204 = scmp.ne.s32.totalorder %s199, %s201
      %p205 = scmp.eq.s32.totalorder %s18, 0
      %p206 = por %p204, %p205
      %p207 = scmp.ne.s32.totalorder %s199, %s201
      %p208 = scmp.eq.s32.totalorder %s23, 2
      %p209 = por %p207, %p208
      %p210 = scmp.ne.s32.totalorder %s201, %s202
      %p211 = scmp.eq.s32.totalorder %s23, 0
      %p212 = por %p210, %p211
      %p213 = scmp.ne.s32.totalorder %s201, %s202
      %p214 = scmp.eq.s32.totalorder %s24, 2
      %p215 = por %p213, %p214
      %p217 = scmp.ne.s32.totalorder %s202, %s216
      %p218 = scmp.eq.s32.totalorder %s24, 0
      %p219 = por %p217, %p218
      %s220 = ssub.s32 %s18, %s25
      %p221 = scmp.eq.s32.totalorder %s220, 0
      %s223 = sadd.s32 %s222, 1
      %s224 = scalar_select %p221, %s222, %s223
      %p227 = pneg %p221
      %p228 = scmp.eq.s32.totalorder %s18, 2
      %p229 = por %p227, %p228
      %p230 = scmp.ne.s32.totalorder %s222, %s225
      %p231 = scmp.eq.s32.totalorder %s18, 0
      %p232 = por %p230, %p231
      %p233 = scmp.ne.s32.totalorder %s222, %s225
      %p234 = scmp.eq.s32.totalorder %s23, 2
      %p235 = por %p233, %p234
      %p236 = scmp.ne.s32.totalorder %s225, %s226
      %p237 = scmp.eq.s32.totalorder %s23, 0
      %p238 = por %p236, %p237
      %p239 = scmp.ne.s32.totalorder %s225, %s226
      %p240 = scmp.eq.s32.totalorder %s24, 2
      %p241 = por %p239, %p240
      %p243 = scmp.ne.s32.totalorder %s226, %s242
      %p244 = scmp.eq.s32.totalorder %s24, 0
      %p245 = por %p243, %p244
      %p246 = scmp.le.s32.totalorder 1, %s18
      %p247 = scmp.lt.s32.totalorder %s18, 4
      %p248 = pnand %p246, %p247
      %p249 = pneg %p248
      // Predicated region
      $region9: #{tpu_custom_call.1} parent=5 // pred_check
        _
      $region10: #{tpu_custom_call.1} parent=5 // pred_check_branch
        %251 = sbr.rel (%p248) target = $region12
      $region11: #{tpu_custom_call.1} parent=5 // pred_region
        %s252 = ssub.s32 %s18, 1
        // Predicated region
        $region13: #{tpu_custom_call.1} parent=11 // pred_check
          %p253 = pneg %p65
        $region14: #{tpu_custom_call.1} parent=11 // pred_check_branch
          %255 = sbr.rel (%p253) target = $region16
        $region15: #{tpu_custom_call.1} parent=11 // pred_region
          _
        $region16: #{tpu_custom_call.1} parent=11 // pred_fallthru
          _
        // Predicated region
        $region17: #{tpu_custom_call.1} parent=11 // pred_check
          %p256 = pneg %p86
        $region18: #{tpu_custom_call.1} parent=11 // pred_check_branch
          %258 = sbr.rel (%p256) target = $region20
        $region19: #{tpu_custom_call.1} parent=11 // pred_region
          _
        $region20: #{tpu_custom_call.1} parent=11 // pred_fallthru
          _
        // Predicated region
        $region21: #{tpu_custom_call.1} parent=11 // pred_check
          %p259 = pneg %p107
        $region22: #{tpu_custom_call.1} parent=11 // pred_check_branch
          %261 = sbr.rel (%p259) target = $region24
        $region23: #{tpu_custom_call.1} parent=11 // pred_region
          _
        $region24: #{tpu_custom_call.1} parent=11 // pred_fallthru
          _
        // Predicated region
        $region25: #{tpu_custom_call.1} parent=11 // pred_check
          %p262 = pneg %p128
        $region26: #{tpu_custom_call.1} parent=11 // pred_check_branch
          %264 = sbr.rel (%p262) target = $region28
        $region27: #{tpu_custom_call.1} parent=11 // pred_region
          _
        $region28: #{tpu_custom_call.1} parent=11 // pred_fallthru
          _
        // Predicated region
        $region29: #{tpu_custom_call.1} parent=11 // pred_check
          %p265 = pneg %p149
        $region30: #{tpu_custom_call.1} parent=11 // pred_check_branch
          %267 = sbr.rel (%p265) target = $region32
        $region31: #{tpu_custom_call.1} parent=11 // pred_region
          _
        $region32: #{tpu_custom_call.1} parent=11 // pred_fallthru
          _
        // Predicated region
        $region33: #{tpu_custom_call.1} parent=11 // pred_check
          %p268 = pneg %p170
        $region34: #{tpu_custom_call.1} parent=11 // pred_check_branch
          %270 = sbr.rel (%p268) target = $region36
        $region35: #{tpu_custom_call.1} parent=11 // pred_region
          _
        $region36: #{tpu_custom_call.1} parent=11 // pred_fallthru
          _
        // Predicated region
        $region37: #{tpu_custom_call.1} parent=11 // pred_check
          %p271 = pneg %p191
        $region38: #{tpu_custom_call.1} parent=11 // pred_check_branch
          %273 = sbr.rel (%p271) target = $region40
        $region39: #{tpu_custom_call.1} parent=11 // pred_region
          _
        $region40: #{tpu_custom_call.1} parent=11 // pred_fallthru
          _
        // Predicated region
        $region41: #{tpu_custom_call.1} parent=11 // pred_check
          %p274 = pneg %p212
        $region42: #{tpu_custom_call.1} parent=11 // pred_check_branch
          %276 = sbr.rel (%p274) target = $region44
        $region43: #{tpu_custom_call.1} parent=11 // pred_region
          _
        $region44: #{tpu_custom_call.1} parent=11 // pred_fallthru
          _
      $region12: #{tpu_custom_call.1} parent=5 // pred_fallthru
        _
      %p277 = scmp.lt.s32.totalorder %s18, 3
      // Predicated region
      $region45: #{tpu_custom_call.1} parent=5 // pred_check
        %p278 = pneg %p277
      $region46: #{tpu_custom_call.1} parent=5 // pred_check_branch
        %280 = sbr.rel (%p278) target = $region48
      $region47: #{tpu_custom_call.1} parent=5 // pred_region
        // Predicated region
        $region49: #{tpu_custom_call.1} parent=47 // pred_check
          %p281 = pneg %p38
        $region50: #{tpu_custom_call.1} parent=47 // pred_check_branch
          %283 = sbr.rel (%p281) target = $region52
        $region51: #{tpu_custom_call.1} parent=47 // pred_region
          %s284 = smul.u32 128, %s18
          %p285 = scmp.lt.s32.totalorder %s284, 383
          %s286 = scalar_select %p285, %s284, 383
          %s287 = smul.addr %s286, 8
          %s288 = scalar_lea.vmem %s0, %s287
          %s289 = smul.u32 128, %s18
        $region52: #{tpu_custom_call.1} parent=47 // pred_fallthru
          _
      $region48: #{tpu_custom_call.1} parent=5 // pred_fallthru
        _
      %p290 = scmp.le.s32.totalorder 1, %s18
      %p291 = scmp.lt.s32.totalorder %s18, 4
      %p292 = pnand %p290, %p291
      %p293 = pneg %p292
      // Predicated region
      $region53: #{tpu_custom_call.1} parent=5 // pred_check
        _
      $region54: #{tpu_custom_call.1} parent=5 // pred_check_branch
        %295 = sbr.rel (%p292) target = $region56
      $region55: #{tpu_custom_call.1} parent=5 // pred_region
        %s296 = ssub.s32 %s18, 1
        %s297 = smul.u32 128, %s23
        %p298 = scmp.lt.s32.totalorder %s297, 383
        %s299 = scalar_select %p298, %s297, 383
        %s300 = smul.addr %s299, 8
        %s301 = scalar_lea.vmem %s0, %s300
        %p302 = pneg %p44
        %p303 = pneg %p41
        %p304 = pneg %p65
        %p305 = pneg %p62
        %p306 = pneg %p86
        %p307 = pneg %p83
        %p308 = pneg %p107
        %p309 = pneg %p104
        %p310 = pneg %p128
        %p311 = pneg %p125
        %p312 = pneg %p149
        %p313 = pneg %p146
        %p314 = pneg %p170
        %p315 = pneg %p167
        %p316 = pneg %p191
        %p317 = pneg %p188
        %p318 = pneg %p212
        %p319 = pneg %p209
        %p320 = pneg %p238
        %p321 = pneg %p235
        %s322 = sand.u32 %s225, 1
        %s323 = scalar_lea.sflag [#allocation3], %s322
        %s324 = sand.u32 %s225, 1
        %s325 = smul.addr %s324, 128
        %s326 = scalar_lea.vmem [#allocation2], %s325
        %s327 = smul.u32 128, %s23
        %p328 = scmp.lt.s32.totalorder %s327, 383
        %s329 = scalar_select %p328, %s327, 383
        %s330 = smul.addr %s329, 8
        %s331 = scalar_lea.vmem %s0, %s330
        %s332 = smul.u32 128, %s23
        %s333 = smul.u32 16, %s23
        %v335 = vld [vmem:[%s331] sm:$0xff]
        %v336 = vld [vmem:[%s331 + $0x8] sm:$0xff]
        %v337 = vld [vmem:[%s331 + $0x10] sm:$0xff]
        %v338 = vld [vmem:[%s331 + $0x18] sm:$0xff]
        %v339 = vld [vmem:[%s331 + $0x20] sm:$0xff]
        %v340 = vld [vmem:[%s331 + $0x28] sm:$0xff]
        %v341 = vld [vmem:[%s331 + $0x30] sm:$0xff]
        %v342 = vld [vmem:[%s331 + $0x38] sm:$0xff]
        %v343 = vld [vmem:[%s331 + $0x40] sm:$0xff]
        %v344 = vld [vmem:[%s331 + $0x48] sm:$0xff]
        %v345 = vld [vmem:[%s331 + $0x50] sm:$0xff]
        %v346 = vld [vmem:[%s331 + $0x58] sm:$0xff]
        %v347 = vld [vmem:[%s331 + $0x60] sm:$0xff]
        %v348 = vld [vmem:[%s331 + $0x68] sm:$0xff]
        %v349 = vld [vmem:[%s331 + $0x70] sm:$0xff]
        %v350 = vld [vmem:[%s331 + $0x78] sm:$0xff]
        %v351 = vld [vmem:[%s331 + $0x80] sm:$0xff]
        %v352 = vld [vmem:[%s331 + $0x88] sm:$0xff]
        %v353 = vld [vmem:[%s331 + $0x90] sm:$0xff]
        %v354 = vld [vmem:[%s331 + $0x98] sm:$0xff]
        %v355 = vld [vmem:[%s331 + $0xa0] sm:$0xff]
        %v356 = vld [vmem:[%s331 + $0xa8] sm:$0xff]
        %v357 = vld [vmem:[%s331 + $0xb0] sm:$0xff]
        %v358 = vld [vmem:[%s331 + $0xb8] sm:$0xff]
        %v359 = vld [vmem:[%s331 + $0xc0] sm:$0xff]
        %v360 = vld [vmem:[%s331 + $0xc8] sm:$0xff]
        %v361 = vld [vmem:[%s331 + $0xd0] sm:$0xff]
        %v362 = vld [vmem:[%s331 + $0xd8] sm:$0xff]
        %v363 = vld [vmem:[%s331 + $0xe0] sm:$0xff]
        %v364 = vld [vmem:[%s331 + $0xe8] sm:$0xff]
        %v365 = vld [vmem:[%s331 + $0xf0] sm:$0xff]
        %v366 = vld [vmem:[%s331 + $0xf8] sm:$0xff]
        %v367 = vld [vmem:[%s331 + $0x100] sm:$0xff]
        %v368 = vld [vmem:[%s331 + $0x108] sm:$0xff]
        %v369 = vld [vmem:[%s331 + $0x110] sm:$0xff]
        %v370 = vld [vmem:[%s331 + $0x118] sm:$0xff]
        %v371 = vld [vmem:[%s331 + $0x120] sm:$0xff]
        %v372 = vld [vmem:[%s331 + $0x128] sm:$0xff]
        %v373 = vld [vmem:[%s331 + $0x130] sm:$0xff]
        %v374 = vld [vmem:[%s331 + $0x138] sm:$0xff]
        %v375 = vld [vmem:[%s331 + $0x140] sm:$0xff]
        %v376 = vld [vmem:[%s331 + $0x148] sm:$0xff]
        %v377 = vld [vmem:[%s331 + $0x150] sm:$0xff]
        %v378 = vld [vmem:[%s331 + $0x158] sm:$0xff]
        %v379 = vld [vmem:[%s331 + $0x160] sm:$0xff]
        %v380 = vld [vmem:[%s331 + $0x168] sm:$0xff]
        %v381 = vld [vmem:[%s331 + $0x170] sm:$0xff]
        %v382 = vld [vmem:[%s331 + $0x178] sm:$0xff]
        %v383 = vld [vmem:[%s331 + $0x180] sm:$0xff]
        %v384 = vld [vmem:[%s331 + $0x188] sm:$0xff]
        %v385 = vld [vmem:[%s331 + $0x190] sm:$0xff]
        %v386 = vld [vmem:[%s331 + $0x198] sm:$0xff]
        %v387 = vld [vmem:[%s331 + $0x1a0] sm:$0xff]
        %v388 = vld [vmem:[%s331 + $0x1a8] sm:$0xff]
        %v389 = vld [vmem:[%s331 + $0x1b0] sm:$0xff]
        %v390 = vld [vmem:[%s331 + $0x1b8] sm:$0xff]
        %v391 = vld [vmem:[%s331 + $0x1c0] sm:$0xff]
        %v392 = vld [vmem:[%s331 + $0x1c8] sm:$0xff]
        %v393 = vld [vmem:[%s331 + $0x1d0] sm:$0xff]
        %v394 = vld [vmem:[%s331 + $0x1d8] sm:$0xff]
        %v395 = vld [vmem:[%s331 + $0x1e0] sm:$0xff]
        %v396 = vld [vmem:[%s331 + $0x1e8] sm:$0xff]
        %v397 = vld [vmem:[%s331 + $0x1f0] sm:$0xff]
        %v398 = vld [vmem:[%s331 + $0x1f8] sm:$0xff]
        %v399 = vld [vmem:[%s331 + $0x200] sm:$0xff]
        %v400 = vld [vmem:[%s331 + $0x208] sm:$0xff]
        %v401 = vld [vmem:[%s331 + $0x210] sm:$0xff]
        %v402 = vld [vmem:[%s331 + $0x218] sm:$0xff]
        %v403 = vld [vmem:[%s331 + $0x220] sm:$0xff]
        %v404 = vld [vmem:[%s331 + $0x228] sm:$0xff]
        %v405 = vld [vmem:[%s331 + $0x230] sm:$0xff]
        %v406 = vld [vmem:[%s331 + $0x238] sm:$0xff]
        %v407 = vld [vmem:[%s331 + $0x240] sm:$0xff]
        %v408 = vld [vmem:[%s331 + $0x248] sm:$0xff]
        %v409 = vld [vmem:[%s331 + $0x250] sm:$0xff]
        %v410 = vld [vmem:[%s331 + $0x258] sm:$0xff]
        %v411 = vld [vmem:[%s331 + $0x260] sm:$0xff]
        %v412 = vld [vmem:[%s331 + $0x268] sm:$0xff]
        %v413 = vld [vmem:[%s331 + $0x270] sm:$0xff]
        %v414 = vld [vmem:[%s331 + $0x278] sm:$0xff]
        %v415 = vld [vmem:[%s331 + $0x280] sm:$0xff]
        %v416 = vld [vmem:[%s331 + $0x288] sm:$0xff]
        %v417 = vld [vmem:[%s331 + $0x290] sm:$0xff]
        %v418 = vld [vmem:[%s331 + $0x298] sm:$0xff]
        %v419 = vld [vmem:[%s331 + $0x2a0] sm:$0xff]
        %v420 = vld [vmem:[%s331 + $0x2a8] sm:$0xff]
        %v421 = vld [vmem:[%s331 + $0x2b0] sm:$0xff]
        %v422 = vld [vmem:[%s331 + $0x2b8] sm:$0xff]
        %v423 = vld [vmem:[%s331 + $0x2c0] sm:$0xff]
        %v424 = vld [vmem:[%s331 + $0x2c8] sm:$0xff]
        %v425 = vld [vmem:[%s331 + $0x2d0] sm:$0xff]
        %v426 = vld [vmem:[%s331 + $0x2d8] sm:$0xff]
        %v427 = vld [vmem:[%s331 + $0x2e0] sm:$0xff]
        %v428 = vld [vmem:[%s331 + $0x2e8] sm:$0xff]
        %v429 = vld [vmem:[%s331 + $0x2f0] sm:$0xff]
        %v430 = vld [vmem:[%s331 + $0x2f8] sm:$0xff]
        %v431 = vld [vmem:[%s331 + $0x300] sm:$0xff]
        %v432 = vld [vmem:[%s331 + $0x308] sm:$0xff]
        %v433 = vld [vmem:[%s331 + $0x310] sm:$0xff]
        %v434 = vld [vmem:[%s331 + $0x318] sm:$0xff]
        %v435 = vld [vmem:[%s331 + $0x320] sm:$0xff]
        %v436 = vld [vmem:[%s331 + $0x328] sm:$0xff]
        %v437 = vld [vmem:[%s331 + $0x330] sm:$0xff]
        %v438 = vld [vmem:[%s331 + $0x338] sm:$0xff]
        %v439 = vld [vmem:[%s331 + $0x340] sm:$0xff]
        %v440 = vld [vmem:[%s331 + $0x348] sm:$0xff]
        %v441 = vld [vmem:[%s331 + $0x350] sm:$0xff]
        %v442 = vld [vmem:[%s331 + $0x358] sm:$0xff]
        %v443 = vld [vmem:[%s331 + $0x360] sm:$0xff]
        %v444 = vld [vmem:[%s331 + $0x368] sm:$0xff]
        %v445 = vld [vmem:[%s331 + $0x370] sm:$0xff]
        %v446 = vld [vmem:[%s331 + $0x378] sm:$0xff]
        %v447 = vld [vmem:[%s331 + $0x380] sm:$0xff]
        %v448 = vld [vmem:[%s331 + $0x388] sm:$0xff]
        %v449 = vld [vmem:[%s331 + $0x390] sm:$0xff]
        %v450 = vld [vmem:[%s331 + $0x398] sm:$0xff]
        %v451 = vld [vmem:[%s331 + $0x3a0] sm:$0xff]
        %v452 = vld [vmem:[%s331 + $0x3a8] sm:$0xff]
        %v453 = vld [vmem:[%s331 + $0x3b0] sm:$0xff]
        %v454 = vld [vmem:[%s331 + $0x3b8] sm:$0xff]
        %v455 = vld [vmem:[%s331 + $0x3c0] sm:$0xff]
        %v456 = vld [vmem:[%s331 + $0x3c8] sm:$0xff]
        %v457 = vld [vmem:[%s331 + $0x3d0] sm:$0xff]
        %v458 = vld [vmem:[%s331 + $0x3d8] sm:$0xff]
        %v459 = vld [vmem:[%s331 + $0x3e0] sm:$0xff]
        %v460 = vld [vmem:[%s331 + $0x3e8] sm:$0xff]
        %v461 = vld [vmem:[%s331 + $0x3f0] sm:$0xff]
        %v462 = vld [vmem:[%s331 + $0x3f8] sm:$0xff]
        %vm463 = vcmask 56320
        %v464 = vsel %vm463, %v335, -inf
        %465 = vmax.xlane.f32.xlu0 %v464
        %v466 = vpop.xlane.xlu0 %465
        %v467 = vsel %vm463, %v336, -inf
        %468 = vmax.xlane.f32.xlu0 %v467
        %v469 = vpop.xlane.xlu0 %468
        %v470 = vsel %vm463, %v337, -inf
        %471 = vmax.xlane.f32.xlu0 %v470
        %v472 = vpop.xlane.xlu0 %471
        %v473 = vsel %vm463, %v338, -inf
        %474 = vmax.xlane.f32.xlu0 %v473
        %v475 = vpop.xlane.xlu0 %474
        %v476 = vsel %vm463, %v339, -inf
        %477 = vmax.xlane.f32.xlu0 %v476
        %v478 = vpop.xlane.xlu0 %477
        %v479 = vsel %vm463, %v340, -inf
        %480 = vmax.xlane.f32.xlu0 %v479
        %v481 = vpop.xlane.xlu0 %480
        %v482 = vsel %vm463, %v341, -inf
        %483 = vmax.xlane.f32.xlu0 %v482
        %v484 = vpop.xlane.xlu0 %483
        %v485 = vsel %vm463, %v342, -inf
        %486 = vmax.xlane.f32.xlu0 %v485
        %v487 = vpop.xlane.xlu0 %486
        %v488 = vsel %vm463, %v343, -inf
        %489 = vmax.xlane.f32.xlu0 %v488
        %v490 = vpop.xlane.xlu0 %489
        %v491 = vsel %vm463, %v344, -inf
        %492 = vmax.xlane.f32.xlu0 %v491
        %v493 = vpop.xlane.xlu0 %492
        %v494 = vsel %vm463, %v345, -inf
        %495 = vmax.xlane.f32.xlu0 %v494
        %v496 = vpop.xlane.xlu0 %495
        %v497 = vsel %vm463, %v346, -inf
        %498 = vmax.xlane.f32.xlu0 %v497
        %v499 = vpop.xlane.xlu0 %498
        %v500 = vsel %vm463, %v347, -inf
        %501 = vmax.xlane.f32.xlu0 %v500
        %v502 = vpop.xlane.xlu0 %501
        %v503 = vsel %vm463, %v348, -inf
        %504 = vmax.xlane.f32.xlu0 %v503
        %v505 = vpop.xlane.xlu0 %504
        %v506 = vsel %vm463, %v349, -inf
        %507 = vmax.xlane.f32.xlu0 %v506
        %v508 = vpop.xlane.xlu0 %507
        %v509 = vsel %vm463, %v350, -inf
        %510 = vmax.xlane.f32.xlu0 %v509
        %v511 = vpop.xlane.xlu0 %510
        %v512 = vsel %vm463, %v351, -inf
        %513 = vmax.xlane.f32.xlu0 %v512
        %v514 = vpop.xlane.xlu0 %513
        %v515 = vsel %vm463, %v352, -inf
        %516 = vmax.xlane.f32.xlu0 %v515
        %v517 = vpop.xlane.xlu0 %516
        %v518 = vsel %vm463, %v353, -inf
        %519 = vmax.xlane.f32.xlu0 %v518
        %v520 = vpop.xlane.xlu0 %519
        %v521 = vsel %vm463, %v354, -inf
        %522 = vmax.xlane.f32.xlu0 %v521
        %v523 = vpop.xlane.xlu0 %522
        %v524 = vsel %vm463, %v355, -inf
        %525 = vmax.xlane.f32.xlu0 %v524
        %v526 = vpop.xlane.xlu0 %525
        %v527 = vsel %vm463, %v356, -inf
        %528 = vmax.xlane.f32.xlu0 %v527
        %v529 = vpop.xlane.xlu0 %528
        %v530 = vsel %vm463, %v357, -inf
        %531 = vmax.xlane.f32.xlu0 %v530
        %v532 = vpop.xlane.xlu0 %531
        %v533 = vsel %vm463, %v358, -inf
        %534 = vmax.xlane.f32.xlu0 %v533
        %v535 = vpop.xlane.xlu0 %534
        %v536 = vsel %vm463, %v359, -inf
        %537 = vmax.xlane.f32.xlu0 %v536
        %v538 = vpop.xlane.xlu0 %537
        %v539 = vsel %vm463, %v360, -inf
        %540 = vmax.xlane.f32.xlu0 %v539
        %v541 = vpop.xlane.xlu0 %540
        %v542 = vsel %vm463, %v361, -inf
        %543 = vmax.xlane.f32.xlu0 %v542
        %v544 = vpop.xlane.xlu0 %543
        %v545 = vsel %vm463, %v362, -inf
        %546 = vmax.xlane.f32.xlu0 %v545
        %v547 = vpop.xlane.xlu0 %546
        %v548 = vsel %vm463, %v363, -inf
        %549 = vmax.xlane.f32.xlu0 %v548
        %v550 = vpop.xlane.xlu0 %549
        %v551 = vsel %vm463, %v364, -inf
        %552 = vmax.xlane.f32.xlu0 %v551
        %v553 = vpop.xlane.xlu0 %552
        %v554 = vsel %vm463, %v365, -inf
        %555 = vmax.xlane.f32.xlu0 %v554
        %v556 = vpop.xlane.xlu0 %555
        %v557 = vsel %vm463, %v366, -inf
        %558 = vmax.xlane.f32.xlu0 %v557
        %v559 = vpop.xlane.xlu0 %558
        %v560 = vsel %vm463, %v367, -inf
        %561 = vmax.xlane.f32.xlu0 %v560
        %v562 = vpop.xlane.xlu0 %561
        %v563 = vsel %vm463, %v368, -inf
        %564 = vmax.xlane.f32.xlu0 %v563
        %v565 = vpop.xlane.xlu0 %564
        %v566 = vsel %vm463, %v369, -inf
        %567 = vmax.xlane.f32.xlu0 %v566
        %v568 = vpop.xlane.xlu0 %567
        %v569 = vsel %vm463, %v370, -inf
        %570 = vmax.xlane.f32.xlu0 %v569
        %v571 = vpop.xlane.xlu0 %570
        %v572 = vsel %vm463, %v371, -inf
        %573 = vmax.xlane.f32.xlu0 %v572
        %v574 = vpop.xlane.xlu0 %573
        %v575 = vsel %vm463, %v372, -inf
        %576 = vmax.xlane.f32.xlu0 %v575
        %v577 = vpop.xlane.xlu0 %576
        %v578 = vsel %vm463, %v373, -inf
        %579 = vmax.xlane.f32.xlu0 %v578
        %v580 = vpop.xlane.xlu0 %579
        %v581 = vsel %vm463, %v374, -inf
        %582 = vmax.xlane.f32.xlu0 %v581
        %v583 = vpop.xlane.xlu0 %582
        %v584 = vsel %vm463, %v375, -inf
        %585 = vmax.xlane.f32.xlu0 %v584
        %v586 = vpop.xlane.xlu0 %585
        %v587 = vsel %vm463, %v376, -inf
        %588 = vmax.xlane.f32.xlu0 %v587
        %v589 = vpop.xlane.xlu0 %588
        %v590 = vsel %vm463, %v377, -inf
        %591 = vmax.xlane.f32.xlu0 %v590
        %v592 = vpop.xlane.xlu0 %591
        %v593 = vsel %vm463, %v378, -inf
        %594 = vmax.xlane.f32.xlu0 %v593
        %v595 = vpop.xlane.xlu0 %594
        %v596 = vsel %vm463, %v379, -inf
        %597 = vmax.xlane.f32.xlu0 %v596
        %v598 = vpop.xlane.xlu0 %597
        %v599 = vsel %vm463, %v380, -inf
        %600 = vmax.xlane.f32.xlu0 %v599
        %v601 = vpop.xlane.xlu0 %600
        %v602 = vsel %vm463, %v381, -inf
        %603 = vmax.xlane.f32.xlu0 %v602
        %v604 = vpop.xlane.xlu0 %603
        %v605 = vsel %vm463, %v382, -inf
        %606 = vmax.xlane.f32.xlu0 %v605
        %v607 = vpop.xlane.xlu0 %606
        %v608 = vsel %vm463, %v383, -inf
        %609 = vmax.xlane.f32.xlu0 %v608
        %v610 = vpop.xlane.xlu0 %609
        %v611 = vsel %vm463, %v384, -inf
        %612 = vmax.xlane.f32.xlu0 %v611
        %v613 = vpop.xlane.xlu0 %612
        %v614 = vsel %vm463, %v385, -inf
        %615 = vmax.xlane.f32.xlu0 %v614
        %v616 = vpop.xlane.xlu0 %615
        %v617 = vsel %vm463, %v386, -inf
        %618 = vmax.xlane.f32.xlu0 %v617
        %v619 = vpop.xlane.xlu0 %618
        %v620 = vsel %vm463, %v387, -inf
        %621 = vmax.xlane.f32.xlu0 %v620
        %v622 = vpop.xlane.xlu0 %621
        %v623 = vsel %vm463, %v388, -inf
        %624 = vmax.xlane.f32.xlu0 %v623
        %v625 = vpop.xlane.xlu0 %624
        %v626 = vsel %vm463, %v389, -inf
        %627 = vmax.xlane.f32.xlu0 %v626
        %v628 = vpop.xlane.xlu0 %627
        %v629 = vsel %vm463, %v390, -inf
        %630 = vmax.xlane.f32.xlu0 %v629
        %v631 = vpop.xlane.xlu0 %630
        %v632 = vsel %vm463, %v391, -inf
        %633 = vmax.xlane.f32.xlu0 %v632
        %v634 = vpop.xlane.xlu0 %633
        %v635 = vsel %vm463, %v392, -inf
        %636 = vmax.xlane.f32.xlu0 %v635
        %v637 = vpop.xlane.xlu0 %636
        %v638 = vsel %vm463, %v393, -inf
        %639 = vmax.xlane.f32.xlu0 %v638
        %v640 = vpop.xlane.xlu0 %639
        %v641 = vsel %vm463, %v394, -inf
        %642 = vmax.xlane.f32.xlu0 %v641
        %v643 = vpop.xlane.xlu0 %642
        %v644 = vsel %vm463, %v395, -inf
        %645 = vmax.xlane.f32.xlu0 %v644
        %v646 = vpop.xlane.xlu0 %645
        %v647 = vsel %vm463, %v396, -inf
        %648 = vmax.xlane.f32.xlu0 %v647
        %v649 = vpop.xlane.xlu0 %648
        %v650 = vsel %vm463, %v397, -inf
        %651 = vmax.xlane.f32.xlu0 %v650
        %v652 = vpop.xlane.xlu0 %651
        %v653 = vsel %vm463, %v398, -inf
        %654 = vmax.xlane.f32.xlu0 %v653
        %v655 = vpop.xlane.xlu0 %654
        %v656 = vsel %vm463, %v399, -inf
        %657 = vmax.xlane.f32.xlu0 %v656
        %v658 = vpop.xlane.xlu0 %657
        %v659 = vsel %vm463, %v400, -inf
        %660 = vmax.xlane.f32.xlu0 %v659
        %v661 = vpop.xlane.xlu0 %660
        %v662 = vsel %vm463, %v401, -inf
        %663 = vmax.xlane.f32.xlu0 %v662
        %v664 = vpop.xlane.xlu0 %663
        %v665 = vsel %vm463, %v402, -inf
        %666 = vmax.xlane.f32.xlu0 %v665
        %v667 = vpop.xlane.xlu0 %666
        %v668 = vsel %vm463, %v403, -inf
        %669 = vmax.xlane.f32.xlu0 %v668
        %v670 = vpop.xlane.xlu0 %669
        %v671 = vsel %vm463, %v404, -inf
        %672 = vmax.xlane.f32.xlu0 %v671
        %v673 = vpop.xlane.xlu0 %672
        %v674 = vsel %vm463, %v405, -inf
        %675 = vmax.xlane.f32.xlu0 %v674
        %v676 = vpop.xlane.xlu0 %675
        %v677 = vsel %vm463, %v406, -inf
        %678 = vmax.xlane.f32.xlu0 %v677
        %v679 = vpop.xlane.xlu0 %678
        %v680 = vsel %vm463, %v407, -inf
        %681 = vmax.xlane.f32.xlu0 %v680
        %v682 = vpop.xlane.xlu0 %681
        %v683 = vsel %vm463, %v408, -inf
        %684 = vmax.xlane.f32.xlu0 %v683
        %v685 = vpop.xlane.xlu0 %684
        %v686 = vsel %vm463, %v409, -inf
        %687 = vmax.xlane.f32.xlu0 %v686
        %v688 = vpop.xlane.xlu0 %687
        %v689 = vsel %vm463, %v410, -inf
        %690 = vmax.xlane.f32.xlu0 %v689
        %v691 = vpop.xlane.xlu0 %690
        %v692 = vsel %vm463, %v411, -inf
        %693 = vmax.xlane.f32.xlu0 %v692
        %v694 = vpop.xlane.xlu0 %693
        %v695 = vsel %vm463, %v412, -inf
        %696 = vmax.xlane.f32.xlu0 %v695
        %v697 = vpop.xlane.xlu0 %696
        %v698 = vsel %vm463, %v413, -inf
        %699 = vmax.xlane.f32.xlu0 %v698
        %v700 = vpop.xlane.xlu0 %699
        %v701 = vsel %vm463, %v414, -inf
        %702 = vmax.xlane.f32.xlu0 %v701
        %v703 = vpop.xlane.xlu0 %702
        %v704 = vsel %vm463, %v415, -inf
        %705 = vmax.xlane.f32.xlu0 %v704
        %v706 = vpop.xlane.xlu0 %705
        %v707 = vsel %vm463, %v416, -inf
        %708 = vmax.xlane.f32.xlu0 %v707
        %v709 = vpop.xlane.xlu0 %708
        %v710 = vsel %vm463, %v417, -inf
        %711 = vmax.xlane.f32.xlu0 %v710
        %v712 = vpop.xlane.xlu0 %711
        %v713 = vsel %vm463, %v418, -inf
        %714 = vmax.xlane.f32.xlu0 %v713
        %v715 = vpop.xlane.xlu0 %714
        %v716 = vsel %vm463, %v419, -inf
        %717 = vmax.xlane.f32.xlu0 %v716
        %v718 = vpop.xlane.xlu0 %717
        %v719 = vsel %vm463, %v420, -inf
        %720 = vmax.xlane.f32.xlu0 %v719
        %v721 = vpop.xlane.xlu0 %720
        %v722 = vsel %vm463, %v421, -inf
        %723 = vmax.xlane.f32.xlu0 %v722
        %v724 = vpop.xlane.xlu0 %723
        %v725 = vsel %vm463, %v422, -inf
        %726 = vmax.xlane.f32.xlu0 %v725
        %v727 = vpop.xlane.xlu0 %726
        %v728 = vsel %vm463, %v423, -inf
        %729 = vmax.xlane.f32.xlu0 %v728
        %v730 = vpop.xlane.xlu0 %729
        %v731 = vsel %vm463, %v424, -inf
        %732 = vmax.xlane.f32.xlu0 %v731
        %v733 = vpop.xlane.xlu0 %732
        %v734 = vsel %vm463, %v425, -inf
        %735 = vmax.xlane.f32.xlu0 %v734
        %v736 = vpop.xlane.xlu0 %735
        %v737 = vsel %vm463, %v426, -inf
        %738 = vmax.xlane.f32.xlu0 %v737
        %v739 = vpop.xlane.xlu0 %738
        %v740 = vsel %vm463, %v427, -inf
        %741 = vmax.xlane.f32.xlu0 %v740
        %v742 = vpop.xlane.xlu0 %741
        %v743 = vsel %vm463, %v428, -inf
        %744 = vmax.xlane.f32.xlu0 %v743
        %v745 = vpop.xlane.xlu0 %744
        %v746 = vsel %vm463, %v429, -inf
        %747 = vmax.xlane.f32.xlu0 %v746
        %v748 = vpop.xlane.xlu0 %747
        %v749 = vsel %vm463, %v430, -inf
        %750 = vmax.xlane.f32.xlu0 %v749
        %v751 = vpop.xlane.xlu0 %750
        %v752 = vsel %vm463, %v431, -inf
        %753 = vmax.xlane.f32.xlu0 %v752
        %v754 = vpop.xlane.xlu0 %753
        %v755 = vsel %vm463, %v432, -inf
        %756 = vmax.xlane.f32.xlu0 %v755
        %v757 = vpop.xlane.xlu0 %756
        %v758 = vsel %vm463, %v433, -inf
        %759 = vmax.xlane.f32.xlu0 %v758
        %v760 = vpop.xlane.xlu0 %759
        %v761 = vsel %vm463, %v434, -inf
        %762 = vmax.xlane.f32.xlu0 %v761
        %v763 = vpop.xlane.xlu0 %762
        %v764 = vsel %vm463, %v435, -inf
        %765 = vmax.xlane.f32.xlu0 %v764
        %v766 = vpop.xlane.xlu0 %765
        %v767 = vsel %vm463, %v436, -inf
        %768 = vmax.xlane.f32.xlu0 %v767
        %v769 = vpop.xlane.xlu0 %768
        %v770 = vsel %vm463, %v437, -inf
        %771 = vmax.xlane.f32.xlu0 %v770
        %v772 = vpop.xlane.xlu0 %771
        %v773 = vsel %vm463, %v438, -inf
        %774 = vmax.xlane.f32.xlu0 %v773
        %v775 = vpop.xlane.xlu0 %774
        %v776 = vsel %vm463, %v439, -inf
        %777 = vmax.xlane.f32.xlu0 %v776
        %v778 = vpop.xlane.xlu0 %777
        %v779 = vsel %vm463, %v440, -inf
        %780 = vmax.xlane.f32.xlu0 %v779
        %v781 = vpop.xlane.xlu0 %780
        %v782 = vsel %vm463, %v441, -inf
        %783 = vmax.xlane.f32.xlu0 %v782
        %v784 = vpop.xlane.xlu0 %783
        %v785 = vsel %vm463, %v442, -inf
        %786 = vmax.xlane.f32.xlu0 %v785
        %v787 = vpop.xlane.xlu0 %786
        %v788 = vsel %vm463, %v443, -inf
        %789 = vmax.xlane.f32.xlu0 %v788
        %v790 = vpop.xlane.xlu0 %789
        %v791 = vsel %vm463, %v444, -inf
        %792 = vmax.xlane.f32.xlu0 %v791
        %v793 = vpop.xlane.xlu0 %792
        %v794 = vsel %vm463, %v445, -inf
        %795 = vmax.xlane.f32.xlu0 %v794
        %v796 = vpop.xlane.xlu0 %795
        %v797 = vsel %vm463, %v446, -inf
        %798 = vmax.xlane.f32.xlu0 %v797
        %v799 = vpop.xlane.xlu0 %798
        %v800 = vsel %vm463, %v447, -inf
        %801 = vmax.xlane.f32.xlu0 %v800
        %v802 = vpop.xlane.xlu0 %801
        %v803 = vsel %vm463, %v448, -inf
        %804 = vmax.xlane.f32.xlu0 %v803
        %v805 = vpop.xlane.xlu0 %804
        %v806 = vsel %vm463, %v449, -inf
        %807 = vmax.xlane.f32.xlu0 %v806
        %v808 = vpop.xlane.xlu0 %807
        %v809 = vsel %vm463, %v450, -inf
        %810 = vmax.xlane.f32.xlu0 %v809
        %v811 = vpop.xlane.xlu0 %810
        %v812 = vsel %vm463, %v451, -inf
        %813 = vmax.xlane.f32.xlu0 %v812
        %v814 = vpop.xlane.xlu0 %813
        %v815 = vsel %vm463, %v452, -inf
        %816 = vmax.xlane.f32.xlu0 %v815
        %v817 = vpop.xlane.xlu0 %816
        %v818 = vsel %vm463, %v453, -inf
        %819 = vmax.xlane.f32.xlu0 %v818
        %v820 = vpop.xlane.xlu0 %819
        %v821 = vsel %vm463, %v454, -inf
        %822 = vmax.xlane.f32.xlu0 %v821
        %v823 = vpop.xlane.xlu0 %822
        %v824 = vsel %vm463, %v455, -inf
        %825 = vmax.xlane.f32.xlu0 %v824
        %v826 = vpop.xlane.xlu0 %825
        %v827 = vsel %vm463, %v456, -inf
        %828 = vmax.xlane.f32.xlu0 %v827
        %v829 = vpop.xlane.xlu0 %828
        %v830 = vsel %vm463, %v457, -inf
        %831 = vmax.xlane.f32.xlu0 %v830
        %v832 = vpop.xlane.xlu0 %831
        %v833 = vsel %vm463, %v458, -inf
        %834 = vmax.xlane.f32.xlu0 %v833
        %v835 = vpop.xlane.xlu0 %834
        %v836 = vsel %vm463, %v459, -inf
        %837 = vmax.xlane.f32.xlu0 %v836
        %v838 = vpop.xlane.xlu0 %837
        %v839 = vsel %vm463, %v460, -inf
        %840 = vmax.xlane.f32.xlu0 %v839
        %v841 = vpop.xlane.xlu0 %840
        %v842 = vsel %vm463, %v461, -inf
        %843 = vmax.xlane.f32.xlu0 %v842
        %v844 = vpop.xlane.xlu0 %843
        %v845 = vsel %vm463, %v462, -inf
        %846 = vmax.xlane.f32.xlu0 %v845
        %v847 = vpop.xlane.xlu0 %846
        %vm848 = vcmp.ne.f32.partialorder %v466, 0.0
        %vm849 = vcmp.ne.f32.partialorder %v469, 0.0
        %vm850 = vcmp.ne.f32.partialorder %v472, 0.0
        %vm851 = vcmp.ne.f32.partialorder %v475, 0.0
        %vm852 = vcmp.ne.f32.partialorder %v478, 0.0
        %vm853 = vcmp.ne.f32.partialorder %v481, 0.0
        %vm854 = vcmp.ne.f32.partialorder %v484, 0.0
        %vm855 = vcmp.ne.f32.partialorder %v487, 0.0
        %vm856 = vcmp.ne.f32.partialorder %v490, 0.0
        %vm857 = vcmp.ne.f32.partialorder %v493, 0.0
        %vm858 = vcmp.ne.f32.partialorder %v496, 0.0
        %vm859 = vcmp.ne.f32.partialorder %v499, 0.0
        %vm860 = vcmp.ne.f32.partialorder %v502, 0.0
        %vm861 = vcmp.ne.f32.partialorder %v505, 0.0
        %vm862 = vcmp.ne.f32.partialorder %v508, 0.0
        %vm863 = vcmp.ne.f32.partialorder %v511, 0.0
        %vm864 = vcmp.ne.f32.partialorder %v514, 0.0
        %vm865 = vcmp.ne.f32.partialorder %v517, 0.0
        %vm866 = vcmp.ne.f32.partialorder %v520, 0.0
        %vm867 = vcmp.ne.f32.partialorder %v523, 0.0
        %vm868 = vcmp.ne.f32.partialorder %v526, 0.0
        %vm869 = vcmp.ne.f32.partialorder %v529, 0.0
        %vm870 = vcmp.ne.f32.partialorder %v532, 0.0
        %vm871 = vcmp.ne.f32.partialorder %v535, 0.0
        %vm872 = vcmp.ne.f32.partialorder %v538, 0.0
        %vm873 = vcmp.ne.f32.partialorder %v541, 0.0
        %vm874 = vcmp.ne.f32.partialorder %v544, 0.0
        %vm875 = vcmp.ne.f32.partialorder %v547, 0.0
        %vm876 = vcmp.ne.f32.partialorder %v550, 0.0
        %vm877 = vcmp.ne.f32.partialorder %v553, 0.0
        %vm878 = vcmp.ne.f32.partialorder %v556, 0.0
        %vm879 = vcmp.ne.f32.partialorder %v559, 0.0
        %vm880 = vcmp.ne.f32.partialorder %v562, 0.0
        %vm881 = vcmp.ne.f32.partialorder %v565, 0.0
        %vm882 = vcmp.ne.f32.partialorder %v568, 0.0
        %vm883 = vcmp.ne.f32.partialorder %v571, 0.0
        %vm884 = vcmp.ne.f32.partialorder %v574, 0.0
        %vm885 = vcmp.ne.f32.partialorder %v577, 0.0
        %vm886 = vcmp.ne.f32.partialorder %v580, 0.0
        %vm887 = vcmp.ne.f32.partialorder %v583, 0.0
        %vm888 = vcmp.ne.f32.partialorder %v586, 0.0
        %vm889 = vcmp.ne.f32.partialorder %v589, 0.0
        %vm890 = vcmp.ne.f32.partialorder %v592, 0.0
        %vm891 = vcmp.ne.f32.partialorder %v595, 0.0
        %vm892 = vcmp.ne.f32.partialorder %v598, 0.0
        %vm893 = vcmp.ne.f32.partialorder %v601, 0.0
        %vm894 = vcmp.ne.f32.partialorder %v604, 0.0
        %vm895 = vcmp.ne.f32.partialorder %v607, 0.0
        %vm896 = vcmp.ne.f32.partialorder %v610, 0.0
        %vm897 = vcmp.ne.f32.partialorder %v613, 0.0
        %vm898 = vcmp.ne.f32.partialorder %v616, 0.0
        %vm899 = vcmp.ne.f32.partialorder %v619, 0.0
        %vm900 = vcmp.ne.f32.partialorder %v622, 0.0
        %vm901 = vcmp.ne.f32.partialorder %v625, 0.0
        %vm902 = vcmp.ne.f32.partialorder %v628, 0.0
        %vm903 = vcmp.ne.f32.partialorder %v631, 0.0
        %vm904 = vcmp.ne.f32.partialorder %v634, 0.0
        %vm905 = vcmp.ne.f32.partialorder %v637, 0.0
        %vm906 = vcmp.ne.f32.partialorder %v640, 0.0
        %vm907 = vcmp.ne.f32.partialorder %v643, 0.0
        %vm908 = vcmp.ne.f32.partialorder %v646, 0.0
        %vm909 = vcmp.ne.f32.partialorder %v649, 0.0
        %vm910 = vcmp.ne.f32.partialorder %v652, 0.0
        %vm911 = vcmp.ne.f32.partialorder %v655, 0.0
        %vm912 = vcmp.ne.f32.partialorder %v658, 0.0
        %vm913 = vcmp.ne.f32.partialorder %v661, 0.0
        %vm914 = vcmp.ne.f32.partialorder %v664, 0.0
        %vm915 = vcmp.ne.f32.partialorder %v667, 0.0
        %vm916 = vcmp.ne.f32.partialorder %v670, 0.0
        %vm917 = vcmp.ne.f32.partialorder %v673, 0.0
        %vm918 = vcmp.ne.f32.partialorder %v676, 0.0
        %vm919 = vcmp.ne.f32.partialorder %v679, 0.0
        %vm920 = vcmp.ne.f32.partialorder %v682, 0.0
        %vm921 = vcmp.ne.f32.partialorder %v685, 0.0
        %vm922 = vcmp.ne.f32.partialorder %v688, 0.0
        %vm923 = vcmp.ne.f32.partialorder %v691, 0.0
        %vm924 = vcmp.ne.f32.partialorder %v694, 0.0
        %vm925 = vcmp.ne.f32.partialorder %v697, 0.0
        %vm926 = vcmp.ne.f32.partialorder %v700, 0.0
        %vm927 = vcmp.ne.f32.partialorder %v703, 0.0
        %vm928 = vcmp.ne.f32.partialorder %v706, 0.0
        %vm929 = vcmp.ne.f32.partialorder %v709, 0.0
        %vm930 = vcmp.ne.f32.partialorder %v712, 0.0
        %vm931 = vcmp.ne.f32.partialorder %v715, 0.0
        %vm932 = vcmp.ne.f32.partialorder %v718, 0.0
        %vm933 = vcmp.ne.f32.partialorder %v721, 0.0
        %vm934 = vcmp.ne.f32.partialorder %v724, 0.0
        %vm935 = vcmp.ne.f32.partialorder %v727, 0.0
        %vm936 = vcmp.ne.f32.partialorder %v730, 0.0
        %vm937 = vcmp.ne.f32.partialorder %v733, 0.0
        %vm938 = vcmp.ne.f32.partialorder %v736, 0.0
        %vm939 = vcmp.ne.f32.partialorder %v739, 0.0
        %vm940 = vcmp.ne.f32.partialorder %v742, 0.0
        %vm941 = vcmp.ne.f32.partialorder %v745, 0.0
        %vm942 = vcmp.ne.f32.partialorder %v748, 0.0
        %vm943 = vcmp.ne.f32.partialorder %v751, 0.0
        %vm944 = vcmp.ne.f32.partialorder %v754, 0.0
        %vm945 = vcmp.ne.f32.partialorder %v757, 0.0
        %vm946 = vcmp.ne.f32.partialorder %v760, 0.0
        %vm947 = vcmp.ne.f32.partialorder %v763, 0.0
        %vm948 = vcmp.ne.f32.partialorder %v766, 0.0
        %vm949 = vcmp.ne.f32.partialorder %v769, 0.0
        %vm950 = vcmp.ne.f32.partialorder %v772, 0.0
        %vm951 = vcmp.ne.f32.partialorder %v775, 0.0
        %vm952 = vcmp.ne.f32.partialorder %v778, 0.0
        %vm953 = vcmp.ne.f32.partialorder %v781, 0.0
        %vm954 = vcmp.ne.f32.partialorder %v784, 0.0
        %vm955 = vcmp.ne.f32.partialorder %v787, 0.0
        %vm956 = vcmp.ne.f32.partialorder %v790, 0.0
        %vm957 = vcmp.ne.f32.partialorder %v793, 0.0
        %vm958 = vcmp.ne.f32.partialorder %v796, 0.0
        %vm959 = vcmp.ne.f32.partialorder %v799, 0.0
        %vm960 = vcmp.ne.f32.partialorder %v802, 0.0
        %vm961 = vcmp.ne.f32.partialorder %v805, 0.0
        %vm962 = vcmp.ne.f32.partialorder %v808, 0.0
        %vm963 = vcmp.ne.f32.partialorder %v811, 0.0
        %vm964 = vcmp.ne.f32.partialorder %v814, 0.0
        %vm965 = vcmp.ne.f32.partialorder %v817, 0.0
        %vm966 = vcmp.ne.f32.partialorder %v820, 0.0
        %vm967 = vcmp.ne.f32.partialorder %v823, 0.0
        %vm968 = vcmp.ne.f32.partialorder %v826, 0.0
        %vm969 = vcmp.ne.f32.partialorder %v829, 0.0
        %vm970 = vcmp.ne.f32.partialorder %v832, 0.0
        %vm971 = vcmp.ne.f32.partialorder %v835, 0.0
        %vm972 = vcmp.ne.f32.partialorder %v838, 0.0
        %vm973 = vcmp.ne.f32.partialorder %v841, 0.0
        %vm974 = vcmp.ne.f32.partialorder %v844, 0.0
        %vm975 = vcmp.ne.f32.partialorder %v847, 0.0
        %v976 = vsel %vm848, 1, 0
        %v977 = vsel %vm849, 1, 0
        %v978 = vsel %vm850, 1, 0
        %v979 = vsel %vm851, 1, 0
        %v980 = vsel %vm852, 1, 0
        %v981 = vsel %vm853, 1, 0
        %v982 = vsel %vm854, 1, 0
        %v983 = vsel %vm855, 1, 0
        %v984 = vsel %vm856, 1, 0
        %v985 = vsel %vm857, 1, 0
        %v986 = vsel %vm858, 1, 0
        %v987 = vsel %vm859, 1, 0
        %v988 = vsel %vm860, 1, 0
        %v989 = vsel %vm861, 1, 0
        %v990 = vsel %vm862, 1, 0
        %v991 = vsel %vm863, 1, 0
        %v992 = vsel %vm864, 1, 0
        %v993 = vsel %vm865, 1, 0
        %v994 = vsel %vm866, 1, 0
        %v995 = vsel %vm867, 1, 0
        %v996 = vsel %vm868, 1, 0
        %v997 = vsel %vm869, 1, 0
        %v998 = vsel %vm870, 1, 0
        %v999 = vsel %vm871, 1, 0
        %v1000 = vsel %vm872, 1, 0
        %v1001 = vsel %vm873, 1, 0
        %v1002 = vsel %vm874, 1, 0
        %v1003 = vsel %vm875, 1, 0
        %v1004 = vsel %vm876, 1, 0
        %v1005 = vsel %vm877, 1, 0
        %v1006 = vsel %vm878, 1, 0
        %v1007 = vsel %vm879, 1, 0
        %v1008 = vsel %vm880, 1, 0
        %v1009 = vsel %vm881, 1, 0
        %v1010 = vsel %vm882, 1, 0
        %v1011 = vsel %vm883, 1, 0
        %v1012 = vsel %vm884, 1, 0
        %v1013 = vsel %vm885, 1, 0
        %v1014 = vsel %vm886, 1, 0
        %v1015 = vsel %vm887, 1, 0
        %v1016 = vsel %vm888, 1, 0
        %v1017 = vsel %vm889, 1, 0
        %v1018 = vsel %vm890, 1, 0
        %v1019 = vsel %vm891, 1, 0
        %v1020 = vsel %vm892, 1, 0
        %v1021 = vsel %vm893, 1, 0
        %v1022 = vsel %vm894, 1, 0
        %v1023 = vsel %vm895, 1, 0
        %v1024 = vsel %vm896, 1, 0
        %v1025 = vsel %vm897, 1, 0
        %v1026 = vsel %vm898, 1, 0
        %v1027 = vsel %vm899, 1, 0
        %v1028 = vsel %vm900, 1, 0
        %v1029 = vsel %vm901, 1, 0
        %v1030 = vsel %vm902, 1, 0
        %v1031 = vsel %vm903, 1, 0
        %v1032 = vsel %vm904, 1, 0
        %v1033 = vsel %vm905, 1, 0
        %v1034 = vsel %vm906, 1, 0
        %v1035 = vsel %vm907, 1, 0
        %v1036 = vsel %vm908, 1, 0
        %v1037 = vsel %vm909, 1, 0
        %v1038 = vsel %vm910, 1, 0
        %v1039 = vsel %vm911, 1, 0
        %v1040 = vsel %vm912, 1, 0
        %v1041 = vsel %vm913, 1, 0
        %v1042 = vsel %vm914, 1, 0
        %v1043 = vsel %vm915, 1, 0
        %v1044 = vsel %vm916, 1, 0
        %v1045 = vsel %vm917, 1, 0
        %v1046 = vsel %vm918, 1, 0
        %v1047 = vsel %vm919, 1, 0
        %v1048 = vsel %vm920, 1, 0
        %v1049 = vsel %vm921, 1, 0
        %v1050 = vsel %vm922, 1, 0
        %v1051 = vsel %vm923, 1, 0
        %v1052 = vsel %vm924, 1, 0
        %v1053 = vsel %vm925, 1, 0
        %v1054 = vsel %vm926, 1, 0
        %v1055 = vsel %vm927, 1, 0
        %v1056 = vsel %vm928, 1, 0
        %v1057 = vsel %vm929, 1, 0
        %v1058 = vsel %vm930, 1, 0
        %v1059 = vsel %vm931, 1, 0
        %v1060 = vsel %vm932, 1, 0
        %v1061 = vsel %vm933, 1, 0
        %v1062 = vsel %vm934, 1, 0
        %v1063 = vsel %vm935, 1, 0
        %v1064 = vsel %vm936, 1, 0
        %v1065 = vsel %vm937, 1, 0
        %v1066 = vsel %vm938, 1, 0
        %v1067 = vsel %vm939, 1, 0
        %v1068 = vsel %vm940, 1, 0
        %v1069 = vsel %vm941, 1, 0
        %v1070 = vsel %vm942, 1, 0
        %v1071 = vsel %vm943, 1, 0
        %v1072 = vsel %vm944, 1, 0
        %v1073 = vsel %vm945, 1, 0
        %v1074 = vsel %vm946, 1, 0
        %v1075 = vsel %vm947, 1, 0
        %v1076 = vsel %vm948, 1, 0
        %v1077 = vsel %vm949, 1, 0
        %v1078 = vsel %vm950, 1, 0
        %v1079 = vsel %vm951, 1, 0
        %v1080 = vsel %vm952, 1, 0
        %v1081 = vsel %vm953, 1, 0
        %v1082 = vsel %vm954, 1, 0
        %v1083 = vsel %vm955, 1, 0
        %v1084 = vsel %vm956, 1, 0
        %v1085 = vsel %vm957, 1, 0
        %v1086 = vsel %vm958, 1, 0
        %v1087 = vsel %vm959, 1, 0
        %v1088 = vsel %vm960, 1, 0
        %v1089 = vsel %vm961, 1, 0
        %v1090 = vsel %vm962, 1, 0
        %v1091 = vsel %vm963, 1, 0
        %v1092 = vsel %vm964, 1, 0
        %v1093 = vsel %vm965, 1, 0
        %v1094 = vsel %vm966, 1, 0
        %v1095 = vsel %vm967, 1, 0
        %v1096 = vsel %vm968, 1, 0
        %v1097 = vsel %vm969, 1, 0
        %v1098 = vsel %vm970, 1, 0
        %v1099 = vsel %vm971, 1, 0
        %v1100 = vsel %vm972, 1, 0
        %v1101 = vsel %vm973, 1, 0
        %v1102 = vsel %vm974, 1, 0
        %v1103 = vsel %vm975, 1, 0
        %v1104 = vcvt.s32.f32 %v976
        %v1105 = vcvt.s32.f32 %v977
        %v1106 = vcvt.s32.f32 %v978
        %v1107 = vcvt.s32.f32 %v979
        %v1108 = vcvt.s32.f32 %v980
        %v1109 = vcvt.s32.f32 %v981
        %v1110 = vcvt.s32.f32 %v982
        %v1111 = vcvt.s32.f32 %v983
        %v1112 = vcvt.s32.f32 %v984
        %v1113 = vcvt.s32.f32 %v985
        %v1114 = vcvt.s32.f32 %v986
        %v1115 = vcvt.s32.f32 %v987
        %v1116 = vcvt.s32.f32 %v988
        %v1117 = vcvt.s32.f32 %v989
        %v1118 = vcvt.s32.f32 %v990
        %v1119 = vcvt.s32.f32 %v991
        %v1120 = vcvt.s32.f32 %v992
        %v1121 = vcvt.s32.f32 %v993
        %v1122 = vcvt.s32.f32 %v994
        %v1123 = vcvt.s32.f32 %v995
        %v1124 = vcvt.s32.f32 %v996
        %v1125 = vcvt.s32.f32 %v997
        %v1126 = vcvt.s32.f32 %v998
        %v1127 = vcvt.s32.f32 %v999
        %v1128 = vcvt.s32.f32 %v1000
        %v1129 = vcvt.s32.f32 %v1001
        %v1130 = vcvt.s32.f32 %v1002
        %v1131 = vcvt.s32.f32 %v1003
        %v1132 = vcvt.s32.f32 %v1004
        %v1133 = vcvt.s32.f32 %v1005
        %v1134 = vcvt.s32.f32 %v1006
        %v1135 = vcvt.s32.f32 %v1007
        %v1136 = vcvt.s32.f32 %v1008
        %v1137 = vcvt.s32.f32 %v1009
        %v1138 = vcvt.s32.f32 %v1010
        %v1139 = vcvt.s32.f32 %v1011
        %v1140 = vcvt.s32.f32 %v1012
        %v1141 = vcvt.s32.f32 %v1013
        %v1142 = vcvt.s32.f32 %v1014
        %v1143 = vcvt.s32.f32 %v1015
        %v1144 = vcvt.s32.f32 %v1016
        %v1145 = vcvt.s32.f32 %v1017
        %v1146 = vcvt.s32.f32 %v1018
        %v1147 = vcvt.s32.f32 %v1019
        %v1148 = vcvt.s32.f32 %v1020
        %v1149 = vcvt.s32.f32 %v1021
        %v1150 = vcvt.s32.f32 %v1022
        %v1151 = vcvt.s32.f32 %v1023
        %v1152 = vcvt.s32.f32 %v1024
        %v1153 = vcvt.s32.f32 %v1025
        %v1154 = vcvt.s32.f32 %v1026
        %v1155 = vcvt.s32.f32 %v1027
        %v1156 = vcvt.s32.f32 %v1028
        %v1157 = vcvt.s32.f32 %v1029
        %v1158 = vcvt.s32.f32 %v1030
        %v1159 = vcvt.s32.f32 %v1031
        %v1160 = vcvt.s32.f32 %v1032
        %v1161 = vcvt.s32.f32 %v1033
        %v1162 = vcvt.s32.f32 %v1034
        %v1163 = vcvt.s32.f32 %v1035
        %v1164 = vcvt.s32.f32 %v1036
        %v1165 = vcvt.s32.f32 %v1037
        %v1166 = vcvt.s32.f32 %v1038
        %v1167 = vcvt.s32.f32 %v1039
        %v1168 = vcvt.s32.f32 %v1040
        %v1169 = vcvt.s32.f32 %v1041
        %v1170 = vcvt.s32.f32 %v1042
        %v1171 = vcvt.s32.f32 %v1043
        %v1172 = vcvt.s32.f32 %v1044
        %v1173 = vcvt.s32.f32 %v1045
        %v1174 = vcvt.s32.f32 %v1046
        %v1175 = vcvt.s32.f32 %v1047
        %v1176 = vcvt.s32.f32 %v1048
        %v1177 = vcvt.s32.f32 %v1049
        %v1178 = vcvt.s32.f32 %v1050
        %v1179 = vcvt.s32.f32 %v1051
        %v1180 = vcvt.s32.f32 %v1052
        %v1181 = vcvt.s32.f32 %v1053
        %v1182 = vcvt.s32.f32 %v1054
        %v1183 = vcvt.s32.f32 %v1055
        %v1184 = vcvt.s32.f32 %v1056
        %v1185 = vcvt.s32.f32 %v1057
        %v1186 = vcvt.s32.f32 %v1058
        %v1187 = vcvt.s32.f32 %v1059
        %v1188 = vcvt.s32.f32 %v1060
        %v1189 = vcvt.s32.f32 %v1061
        %v1190 = vcvt.s32.f32 %v1062
        %v1191 = vcvt.s32.f32 %v1063
        %v1192 = vcvt.s32.f32 %v1064
        %v1193 = vcvt.s32.f32 %v1065
        %v1194 = vcvt.s32.f32 %v1066
        %v1195 = vcvt.s32.f32 %v1067
        %v1196 = vcvt.s32.f32 %v1068
        %v1197 = vcvt.s32.f32 %v1069
        %v1198 = vcvt.s32.f32 %v1070
        %v1199 = vcvt.s32.f32 %v1071
        %v1200 = vcvt.s32.f32 %v1072
        %v1201 = vcvt.s32.f32 %v1073
        %v1202 = vcvt.s32.f32 %v1074
        %v1203 = vcvt.s32.f32 %v1075
        %v1204 = vcvt.s32.f32 %v1076
        %v1205 = vcvt.s32.f32 %v1077
        %v1206 = vcvt.s32.f32 %v1078
        %v1207 = vcvt.s32.f32 %v1079
        %v1208 = vcvt.s32.f32 %v1080
        %v1209 = vcvt.s32.f32 %v1081
        %v1210 = vcvt.s32.f32 %v1082
        %v1211 = vcvt.s32.f32 %v1083
        %v1212 = vcvt.s32.f32 %v1084
        %v1213 = vcvt.s32.f32 %v1085
        %v1214 = vcvt.s32.f32 %v1086
        %v1215 = vcvt.s32.f32 %v1087
        %v1216 = vcvt.s32.f32 %v1088
        %v1217 = vcvt.s32.f32 %v1089
        %v1218 = vcvt.s32.f32 %v1090
        %v1219 = vcvt.s32.f32 %v1091
        %v1220 = vcvt.s32.f32 %v1092
        %v1221 = vcvt.s32.f32 %v1093
        %v1222 = vcvt.s32.f32 %v1094
        %v1223 = vcvt.s32.f32 %v1095
        %v1224 = vcvt.s32.f32 %v1096
        %v1225 = vcvt.s32.f32 %v1097
        %v1226 = vcvt.s32.f32 %v1098
        %v1227 = vcvt.s32.f32 %v1099
        %v1228 = vcvt.s32.f32 %v1100
        %v1229 = vcvt.s32.f32 %v1101
        %v1230 = vcvt.s32.f32 %v1102
        %v1231 = vcvt.s32.f32 %v1103
        %v1232 = vpack.c.bf16 %v336, %v335
        %v1233 = vpack.c.bf16 %v338, %v337
        %v1234 = vpack.c.bf16 %v340, %v339
        %v1235 = vpack.c.bf16 %v342, %v341
        %v1236 = vpack.c.bf16 %v344, %v343
        %v1237 = vpack.c.bf16 %v346, %v345
        %v1238 = vpack.c.bf16 %v348, %v347
        %v1239 = vpack.c.bf16 %v350, %v349
        %v1240 = vpack.c.bf16 %v352, %v351
        %v1241 = vpack.c.bf16 %v354, %v353
        %v1242 = vpack.c.bf16 %v356, %v355
        %v1243 = vpack.c.bf16 %v358, %v357
        %v1244 = vpack.c.bf16 %v360, %v359
        %v1245 = vpack.c.bf16 %v362, %v361
        %v1246 = vpack.c.bf16 %v364, %v363
        %v1247 = vpack.c.bf16 %v366, %v365
        %v1248 = vpack.c.bf16 %v368, %v367
        %v1249 = vpack.c.bf16 %v370, %v369
        %v1250 = vpack.c.bf16 %v372, %v371
        %v1251 = vpack.c.bf16 %v374, %v373
        %v1252 = vpack.c.bf16 %v376, %v375
        %v1253 = vpack.c.bf16 %v378, %v377
        %v1254 = vpack.c.bf16 %v380, %v379
        %v1255 = vpack.c.bf16 %v382, %v381
        %v1256 = vpack.c.bf16 %v384, %v383
        %v1257 = vpack.c.bf16 %v386, %v385
        %v1258 = vpack.c.bf16 %v388, %v387
        %v1259 = vpack.c.bf16 %v390, %v389
        %v1260 = vpack.c.bf16 %v392, %v391
        %v1261 = vpack.c.bf16 %v394, %v393
        %v1262 = vpack.c.bf16 %v396, %v395
        %v1263 = vpack.c.bf16 %v398, %v397
        %v1264 = vpack.c.bf16 %v400, %v399
        %v1265 = vpack.c.bf16 %v402, %v401
        %v1266 = vpack.c.bf16 %v404, %v403
        %v1267 = vpack.c.bf16 %v406, %v405
        %v1268 = vpack.c.bf16 %v408, %v407
        %v1269 = vpack.c.bf16 %v410, %v409
        %v1270 = vpack.c.bf16 %v412, %v411
        %v1271 = vpack.c.bf16 %v414, %v413
        %v1272 = vpack.c.bf16 %v416, %v415
        %v1273 = vpack.c.bf16 %v418, %v417
        %v1274 = vpack.c.bf16 %v420, %v419
        %v1275 = vpack.c.bf16 %v422, %v421
        %v1276 = vpack.c.bf16 %v424, %v423
        %v1277 = vpack.c.bf16 %v426, %v425
        %v1278 = vpack.c.bf16 %v428, %v427
        %v1279 = vpack.c.bf16 %v430, %v429
        %v1280 = vpack.c.bf16 %v432, %v431
        %v1281 = vpack.c.bf16 %v434, %v433
        %v1282 = vpack.c.bf16 %v436, %v435
        %v1283 = vpack.c.bf16 %v438, %v437
        %v1284 = vpack.c.bf16 %v440, %v439
        %v1285 = vpack.c.bf16 %v442, %v441
        %v1286 = vpack.c.bf16 %v444, %v443
        %v1287 = vpack.c.bf16 %v446, %v445
        %v1288 = vpack.c.bf16 %v448, %v447
        %v1289 = vpack.c.bf16 %v450, %v449
        %v1290 = vpack.c.bf16 %v452, %v451
        %v1291 = vpack.c.bf16 %v454, %v453
        %v1292 = vpack.c.bf16 %v456, %v455
        %v1293 = vpack.c.bf16 %v458, %v457
        %v1294 = vpack.c.bf16 %v460, %v459
        %v1295 = vpack.c.bf16 %v462, %v461
        %v1296 = vld [vmem:[%s1] sm:$0xf]
        %v1297 = vld [vmem:[%s2] sm:$0x1]
        %v1299 = vlaneseq
        %v1300 = vshrl.u32 %v1299, 7
        %v1301 = vsub.s32 0, %v1300
        %v1302 = vrot.slane %v1297, %v1301
        %v1305 = vsel %vm463, %v1232, 0
        %v1308 = vsel %vm463, %v1233, 0
        %v1311 = vsel %vm463, %v1234, 0
        %v1314 = vsel %vm463, %v1235, 0
        %v1317 = vsel %vm463, %v1236, 0
        %v1320 = vsel %vm463, %v1237, 0
        %v1323 = vsel %vm463, %v1238, 0
        %v1326 = vsel %vm463, %v1239, 0
        %v1329 = vsel %vm463, %v1240, 0
        %v1332 = vsel %vm463, %v1241, 0
        %v1335 = vsel %vm463, %v1242, 0
        %v1338 = vsel %vm463, %v1243, 0
        %v1341 = vsel %vm463, %v1244, 0
        %v1344 = vsel %vm463, %v1245, 0
        %v1347 = vsel %vm463, %v1246, 0
        %v1350 = vsel %vm463, %v1247, 0
        %v1353 = vsel %vm463, %v1248, 0
        %v1356 = vsel %vm463, %v1249, 0
        %v1359 = vsel %vm463, %v1250, 0
        %v1362 = vsel %vm463, %v1251, 0
        %v1365 = vsel %vm463, %v1252, 0
        %v1368 = vsel %vm463, %v1253, 0
        %v1371 = vsel %vm463, %v1254, 0
        %v1374 = vsel %vm463, %v1255, 0
        %v1377 = vsel %vm463, %v1256, 0
        %v1380 = vsel %vm463, %v1257, 0
        %v1383 = vsel %vm463, %v1258, 0
        %v1386 = vsel %vm463, %v1259, 0
        %v1389 = vsel %vm463, %v1260, 0
        %v1392 = vsel %vm463, %v1261, 0
        %v1395 = vsel %vm463, %v1262, 0
        %v1398 = vsel %vm463, %v1263, 0
        %v1401 = vsel %vm463, %v1264, 0
        %v1404 = vsel %vm463, %v1265, 0
        %v1407 = vsel %vm463, %v1266, 0
        %v1410 = vsel %vm463, %v1267, 0
        %v1413 = vsel %vm463, %v1268, 0
        %v1416 = vsel %vm463, %v1269, 0
        %v1419 = vsel %vm463, %v1270, 0
        %v1422 = vsel %vm463, %v1271, 0
        %v1425 = vsel %vm463, %v1272, 0
        %v1428 = vsel %vm463, %v1273, 0
        %v1431 = vsel %vm463, %v1274, 0
        %v1434 = vsel %vm463, %v1275, 0
        %v1437 = vsel %vm463, %v1276, 0
        %v1440 = vsel %vm463, %v1277, 0
        %v1443 = vsel %vm463, %v1278, 0
        %v1446 = vsel %vm463, %v1279, 0
        %v1449 = vsel %vm463, %v1280, 0
        %v1452 = vsel %vm463, %v1281, 0
        %v1455 = vsel %vm463, %v1282, 0
        %v1458 = vsel %vm463, %v1283, 0
        %v1461 = vsel %vm463, %v1284, 0
        %v1464 = vsel %vm463, %v1285, 0
        %v1467 = vsel %vm463, %v1286, 0
        %v1470 = vsel %vm463, %v1287, 0
        %v1473 = vsel %vm463, %v1288, 0
        %v1476 = vsel %vm463, %v1289, 0
        %v1479 = vsel %vm463, %v1290, 0
        %v1482 = vsel %vm463, %v1291, 0
        %v1485 = vsel %vm463, %v1292, 0
        %v1488 = vsel %vm463, %v1293, 0
        %v1491 = vsel %vm463, %v1294, 0
        %v1494 = vsel %vm463, %v1295, 0
        %vm1496 = vcmask 1042432
        %vm1497 = vcmask 1043456
        %v1498 = vsel %vm1496, 4294967295, 65535
        %v1499 = vsel %vm1497, %v1498, 0
        %v1501 = vand.u32 %v1296, %v1499
        %1503 = vmatprep.subr.bf16.mxu0 0
        %1504 = vmatpush1.bf16.msra.mxu0 %v1501
        %1505 = vmatprep.subr.bf16.mxu0 0
        %1506 = vmatpush1.bf16.msra.mxu0 0
        %1507 = vmatprep.subr.bf16.mxu0 0
        %1508 = vmatpush1.bf16.msra.mxu0 0
        %1509 = vmatprep.subr.bf16.mxu0 0
        %1510 = vmatpush1.bf16.msra.mxu0 0
        %1511 = vmatprep.subr.bf16.mxu0 0
        %1512 = vmatpush1.bf16.msra.mxu0 0
        %1513 = vmatprep.subr.bf16.mxu0 0
        %1514 = vmatpush1.bf16.msra.mxu0 0
        %1515 = vmatprep.subr.bf16.mxu0 0
        %1516 = vmatpush1.bf16.msra.mxu0 0
        %1517 = vmatprep.subr.bf16.mxu0 0
        %1518 = vmatpush1.bf16.msra.mxu0 0
        %1519 = vmatprep.subr.bf16.mxu0 0
        %1520 = vmatpush1.bf16.msra.mxu0 0
        %1521 = vmatprep.subr.bf16.mxu0 0
        %1522 = vmatpush1.bf16.msra.mxu0 0
        %1523 = vmatprep.subr.bf16.mxu0 0
        %1524 = vmatpush1.bf16.msra.mxu0 0
        %1525 = vmatprep.subr.bf16.mxu0 0
        %1526 = vmatpush1.bf16.msra.mxu0 0
        %1527 = vmatprep.subr.bf16.mxu0 0
        %1528 = vmatpush1.bf16.msra.mxu0 0
        %1529 = vmatprep.subr.bf16.mxu0 0
        %1530 = vmatpush1.bf16.msra.mxu0 0
        %1531 = vmatprep.subr.bf16.mxu0 0
        %1532 = vmatpush1.bf16.msra.mxu0 0
        %1533 = vmatprep.subr.bf16.mxu0 0
        %1534 = vmatpush1.bf16.msra.mxu0 0
        %1535 = vmatprep.mubr.bf16.mxu0 0
        %1536 = vmatmul.mubr.bf16.gmra.mrb[0].mxu0 %v1305
        %v1537 = vpop.f32.mrb[0].mxu0
        %v1538 = vadd.f32 %v1302, %v1537
        %v1539 = vpop.f32.mrb[0].mxu0
        %v1540 = vpop.f32.mrb[0].mxu0
        %v1541 = vadd.f32 %v1302, %v1540
        %v1542 = vpop.f32.mrb[0].mxu0
        %1543 = vmatprep.mubr.bf16.mxu0 0
        %1544 = vmatmul.mubr.bf16.gmra.mrb[0].mxu0 %v1308
        %v1545 = vpop.f32.mrb[0].mxu0
        %v1546 = vadd.f32 %v1302, %v1545
        %v1547 = vpop.f32.mrb[0].mxu0
        %v1548 = vpop.f32.mrb[0].mxu0
        %v1549 = vadd.f32 %v1302, %v1548
        %v1550 = vpop.f32.mrb[0].mxu0
        %1551 = vmatprep.mubr.bf16.mxu0 0
        %1552 = vmatmul.mubr.bf16.gmra.mrb[0].mxu0 %v1311
        %v1553 = vpop.f32.mrb[0].mxu0
        %v1554 = vadd.f32 %v1302, %v1553
        %v1555 = vpop.f32.mrb[0].mxu0
        %v1556 = vpop.f32.mrb[0].mxu0
        %v1557 = vadd.f32 %v1302, %v1556
        %v1558 = vpop.f32.mrb[0].mxu0
        %1559 = vmatprep.mubr.bf16.mxu0 0
        %1560 = vmatmul.mubr.bf16.gmra.mrb[0].mxu0 %v1314
        %v1561 = vpop.f32.mrb[0].mxu0
        %v1562 = vadd.f32 %v1302, %v1561
        %v1563 = vpop.f32.mrb[0].mxu0
        %v1564 = vpop.f32.mrb[0].mxu0
        %v1565 = vadd.f32 %v1302, %v1564
        %v1566 = vpop.f32.mrb[0].mxu0
        %1567 = vmatprep.mubr.bf16.mxu0 0
        %1568 = vmatmul.mubr.bf16.gmra.mrb[0].mxu0 %v1317
        %v1569 = vpop.f32.mrb[0].mxu0
        %v1570 = vadd.f32 %v1302, %v1569
        %v1571 = vpop.f32.mrb[0].mxu0
        %v1572 = vpop.f32.mrb[0].mxu0
        %v1573 = vadd.f32 %v1302, %v1572
        %v1574 = vpop.f32.mrb[0].mxu0
        %1575 = vmatprep.mubr.bf16.mxu0 0
        %1576 = vmatmul.mubr.bf16.gmra.mrb[0].mxu0 %v1320
        %v1577 = vpop.f32.mrb[0].mxu0
        %v1578 = vadd.f32 %v1302, %v1577
        %v1579 = vpop.f32.mrb[0].mxu0
        %v1580 = vpop.f32.mrb[0].mxu0
        %v1581 = vadd.f32 %v1302, %v1580
        %v1582 = vpop.f32.mrb[0].mxu0
        %1583 = vmatprep.mubr.bf16.mxu0 0
        %1584 = vmatmul.mubr.bf16.gmra.mrb[0].mxu0 %v1323
        %v1585 = vpop.f32.mrb[0].mxu0
        %v1586 = vadd.f32 %v1302, %v1585
        %v1587 = vpop.f32.mrb[0].mxu0
        %v1588 = vpop.f32.mrb[0].mxu0
        %v1589 = vadd.f32 %v1302, %v1588
        %v1590 = vpop.f32.mrb[0].mxu0
        %1591 = vmatprep.mubr.bf16.mxu0 0
        %1592 = vmatmul.mubr.bf16.gmra.mrb[0].mxu0 %v1326
        %v1593 = vpop.f32.mrb[0].mxu0
        %v1594 = vadd.f32 %v1302, %v1593
        %v1595 = vpop.f32.mrb[0].mxu0
        %v1596 = vpop.f32.mrb[0].mxu0
        %v1597 = vadd.f32 %v1302, %v1596
        %v1598 = vpop.f32.mrb[0].mxu0
        %1599 = vmatprep.mubr.bf16.mxu0 0
        %1600 = vmatmul.mubr.bf16.gmra.mrb[0].mxu0 %v1329
        %v1601 = vpop.f32.mrb[0].mxu0
        %v1602 = vadd.f32 %v1302, %v1601
        %v1603 = vpop.f32.mrb[0].mxu0
        %v1604 = vpop.f32.mrb[0].mxu0
        %v1605 = vadd.f32 %v1302, %v1604
        %v1606 = vpop.f32.mrb[0].mxu0
        %1607 = vmatprep.mubr.bf16.mxu0 0
        %1608 = vmatmul.mubr.bf16.gmra.mrb[0].mxu0 %v1332
        %v1609 = vpop.f32.mrb[0].mxu0
        %v1610 = vadd.f32 %v1302, %v1609
        %v1611 = vpop.f32.mrb[0].mxu0
        %v1612 = vpop.f32.mrb[0].mxu0
        %v1613 = vadd.f32 %v1302, %v1612
        %v1614 = vpop.f32.mrb[0].mxu0
        %1615 = vmatprep.mubr.bf16.mxu0 0
        %1616 = vmatmul.mubr.bf16.gmra.mrb[0].mxu0 %v1335
        %v1617 = vpop.f32.mrb[0].mxu0
        %v1618 = vadd.f32 %v1302, %v1617
        %v1619 = vpop.f32.mrb[0].mxu0
        %v1620 = vpop.f32.mrb[0].mxu0
        %v1621 = vadd.f32 %v1302, %v1620
        %v1622 = vpop.f32.mrb[0].mxu0
        %1623 = vmatprep.mubr.bf16.mxu0 0
        %1624 = vmatmul.mubr.bf16.gmra.mrb[0].mxu0 %v1338
        %v1625 = vpop.f32.mrb[0].mxu0
        %v1626 = vadd.f32 %v1302, %v1625
        %v1627 = vpop.f32.mrb[0].mxu0
        %v1628 = vpop.f32.mrb[0].mxu0
        %v1629 = vadd.f32 %v1302, %v1628
        %v1630 = vpop.f32.mrb[0].mxu0
        %1631 = vmatprep.mubr.bf16.mxu0 0
        %1632 = vmatmul.mubr.bf16.gmra.mrb[0].mxu0 %v1341
        %v1633 = vpop.f32.mrb[0].mxu0
        %v1634 = vadd.f32 %v1302, %v1633
        %v1635 = vpop.f32.mrb[0].mxu0
        %v1636 = vpop.f32.mrb[0].mxu0
        %v1637 = vadd.f32 %v1302, %v1636
        %v1638 = vpop.f32.mrb[0].mxu0
        %1639 = vmatprep.mubr.bf16.mxu0 0
        %1640 = vmatmul.mubr.bf16.gmra.mrb[0].mxu0 %v1344
        %v1641 = vpop.f32.mrb[0].mxu0
        %v1642 = vadd.f32 %v1302, %v1641
        %v1643 = vpop.f32.mrb[0].mxu0
        %v1644 = vpop.f32.mrb[0].mxu0
        %v1645 = vadd.f32 %v1302, %v1644
        %v1646 = vpop.f32.mrb[0].mxu0
        %1647 = vmatprep.mubr.bf16.mxu0 0
        %1648 = vmatmul.mubr.bf16.gmra.mrb[0].mxu0 %v1347
        %v1649 = vpop.f32.mrb[0].mxu0
        %v1650 = vadd.f32 %v1302, %v1649
        %v1651 = vpop.f32.mrb[0].mxu0
        %v1652 = vpop.f32.mrb[0].mxu0
        %v1653 = vadd.f32 %v1302, %v1652
        %v1654 = vpop.f32.mrb[0].mxu0
        %1655 = vmatprep.mubr.bf16.mxu0 0
        %1656 = vmatmul.mubr.bf16.gmra.mrb[0].mxu0 %v1350
        %v1657 = vpop.f32.mrb[0].mxu0
        %v1658 = vadd.f32 %v1302, %v1657
        %v1659 = vpop.f32.mrb[0].mxu0
        %v1660 = vpop.f32.mrb[0].mxu0
        %v1661 = vadd.f32 %v1302, %v1660
        %v1662 = vpop.f32.mrb[0].mxu0
        %1663 = vmatprep.mubr.bf16.mxu0 0
        %1664 = vmatmul.mubr.bf16.gmra.mrb[0].mxu0 %v1353
        %v1665 = vpop.f32.mrb[0].mxu0
        %v1666 = vadd.f32 %v1302, %v1665
        %v1667 = vpop.f32.mrb[0].mxu0
        %v1668 = vpop.f32.mrb[0].mxu0
        %v1669 = vadd.f32 %v1302, %v1668
        %v1670 = vpop.f32.mrb[0].mxu0
        %1671 = vmatprep.mubr.bf16.mxu0 0
        %1672 = vmatmul.mubr.bf16.gmra.mrb[0].mxu0 %v1356
        %v1673 = vpop.f32.mrb[0].mxu0
        %v1674 = vadd.f32 %v1302, %v1673
        %v1675 = vpop.f32.mrb[0].mxu0
        %v1676 = vpop.f32.mrb[0].mxu0
        %v1677 = vadd.f32 %v1302, %v1676
        %v1678 = vpop.f32.mrb[0].mxu0
        %1679 = vmatprep.mubr.bf16.mxu0 0
        %1680 = vmatmul.mubr.bf16.gmra.mrb[0].mxu0 %v1359
        %v1681 = vpop.f32.mrb[0].mxu0
        %v1682 = vadd.f32 %v1302, %v1681
        %v1683 = vpop.f32.mrb[0].mxu0
        %v1684 = vpop.f32.mrb[0].mxu0
        %v1685 = vadd.f32 %v1302, %v1684
        %v1686 = vpop.f32.mrb[0].mxu0
        %1687 = vmatprep.mubr.bf16.mxu0 0
        %1688 = vmatmul.mubr.bf16.gmra.mrb[0].mxu0 %v1362
        %v1689 = vpop.f32.mrb[0].mxu0
        %v1690 = vadd.f32 %v1302, %v1689
        %v1691 = vpop.f32.mrb[0].mxu0
        %v1692 = vpop.f32.mrb[0].mxu0
        %v1693 = vadd.f32 %v1302, %v1692
        %v1694 = vpop.f32.mrb[0].mxu0
        %1695 = vmatprep.mubr.bf16.mxu0 0
        %1696 = vmatmul.mubr.bf16.gmra.mrb[0].mxu0 %v1365
        %v1697 = vpop.f32.mrb[0].mxu0
        %v1698 = vadd.f32 %v1302, %v1697
        %v1699 = vpop.f32.mrb[0].mxu0
        %v1700 = vpop.f32.mrb[0].mxu0
        %v1701 = vadd.f32 %v1302, %v1700
        %v1702 = vpop.f32.mrb[0].mxu0
        %1703 = vmatprep.mubr.bf16.mxu0 0
        %1704 = vmatmul.mubr.bf16.gmra.mrb[0].mxu0 %v1368
        %v1705 = vpop.f32.mrb[0].mxu0
        %v1706 = vadd.f32 %v1302, %v1705
        %v1707 = vpop.f32.mrb[0].mxu0
        %v1708 = vpop.f32.mrb[0].mxu0
        %v1709 = vadd.f32 %v1302, %v1708
        %v1710 = vpop.f32.mrb[0].mxu0
        %1711 = vmatprep.mubr.bf16.mxu0 0
        %1712 = vmatmul.mubr.bf16.gmra.mrb[0].mxu0 %v1371
        %v1713 = vpop.f32.mrb[0].mxu0
        %v1714 = vadd.f32 %v1302, %v1713
        %v1715 = vpop.f32.mrb[0].mxu0
        %v1716 = vpop.f32.mrb[0].mxu0
        %v1717 = vadd.f32 %v1302, %v1716
        %v1718 = vpop.f32.mrb[0].mxu0
        %1719 = vmatprep.mubr.bf16.mxu0 0
        %1720 = vmatmul.mubr.bf16.gmra.mrb[0].mxu0 %v1374
        %v1721 = vpop.f32.mrb[0].mxu0
        %v1722 = vadd.f32 %v1302, %v1721
        %v1723 = vpop.f32.mrb[0].mxu0
        %v1724 = vpop.f32.mrb[0].mxu0
        %v1725 = vadd.f32 %v1302, %v1724
        %v1726 = vpop.f32.mrb[0].mxu0
        %1727 = vmatprep.mubr.bf16.mxu0 0
        %1728 = vmatmul.mubr.bf16.gmra.mrb[0].mxu0 %v1377
        %v1729 = vpop.f32.mrb[0].mxu0
        %v1730 = vadd.f32 %v1302, %v1729
        %v1731 = vpop.f32.mrb[0].mxu0
        %v1732 = vpop.f32.mrb[0].mxu0
        %v1733 = vadd.f32 %v1302, %v1732
        %v1734 = vpop.f32.mrb[0].mxu0
        %1735 = vmatprep.mubr.bf16.mxu0 0
        %1736 = vmatmul.mubr.bf16.gmra.mrb[0].mxu0 %v1380
        %v1737 = vpop.f32.mrb[0].mxu0
        %v1738 = vadd.f32 %v1302, %v1737
        %v1739 = vpop.f32.mrb[0].mxu0
        %v1740 = vpop.f32.mrb[0].mxu0
        %v1741 = vadd.f32 %v1302, %v1740
        %v1742 = vpop.f32.mrb[0].mxu0
        %1743 = vmatprep.mubr.bf16.mxu0 0
        %1744 = vmatmul.mubr.bf16.gmra.mrb[0].mxu0 %v1383
        %v1745 = vpop.f32.mrb[0].mxu0
        %v1746 = vadd.f32 %v1302, %v1745
        %v1747 = vpop.f32.mrb[0].mxu0
        %v1748 = vpop.f32.mrb[0].mxu0
        %v1749 = vadd.f32 %v1302, %v1748
        %v1750 = vpop.f32.mrb[0].mxu0
        %1751 = vmatprep.mubr.bf16.mxu0 0
        %1752 = vmatmul.mubr.bf16.gmra.mrb[0].mxu0 %v1386
        %v1753 = vpop.f32.mrb[0].mxu0
        %v1754 = vadd.f32 %v1302, %v1753
        %v1755 = vpop.f32.mrb[0].mxu0
        %v1756 = vpop.f32.mrb[0].mxu0
        %v1757 = vadd.f32 %v1302, %v1756
        %v1758 = vpop.f32.mrb[0].mxu0
        %1759 = vmatprep.mubr.bf16.mxu0 0
        %1760 = vmatmul.mubr.bf16.gmra.mrb[0].mxu0 %v1389
        %v1761 = vpop.f32.mrb[0].mxu0
        %v1762 = vadd.f32 %v1302, %v1761
        %v1763 = vpop.f32.mrb[0].mxu0
        %v1764 = vpop.f32.mrb[0].mxu0
        %v1765 = vadd.f32 %v1302, %v1764
        %v1766 = vpop.f32.mrb[0].mxu0
        %1767 = vmatprep.mubr.bf16.mxu0 0
        %1768 = vmatmul.mubr.bf16.gmra.mrb[0].mxu0 %v1392
        %v1769 = vpop.f32.mrb[0].mxu0
        %v1770 = vadd.f32 %v1302, %v1769
        %v1771 = vpop.f32.mrb[0].mxu0
        %v1772 = vpop.f32.mrb[0].mxu0
        %v1773 = vadd.f32 %v1302, %v1772
        %v1774 = vpop.f32.mrb[0].mxu0
        %1775 = vmatprep.mubr.bf16.mxu0 0
        %1776 = vmatmul.mubr.bf16.gmra.mrb[0].mxu0 %v1395
        %v1777 = vpop.f32.mrb[0].mxu0
        %v1778 = vadd.f32 %v1302, %v1777
        %v1779 = vpop.f32.mrb[0].mxu0
        %v1780 = vpop.f32.mrb[0].mxu0
        %v1781 = vadd.f32 %v1302, %v1780
        %v1782 = vpop.f32.mrb[0].mxu0
        %1783 = vmatprep.mubr.bf16.mxu0 0
        %1784 = vmatmul.mubr.bf16.gmra.mrb[0].mxu0 %v1398
        %v1785 = vpop.f32.mrb[0].mxu0
        %v1786 = vadd.f32 %v1302, %v1785
        %v1787 = vpop.f32.mrb[0].mxu0
        %v1788 = vpop.f32.mrb[0].mxu0
        %v1789 = vadd.f32 %v1302, %v1788
        %v1790 = vpop.f32.mrb[0].mxu0
        %1791 = vmatprep.mubr.bf16.mxu0 0
        %1792 = vmatmul.mubr.bf16.gmra.mrb[0].mxu0 %v1401
        %v1793 = vpop.f32.mrb[0].mxu0
        %v1794 = vadd.f32 %v1302, %v1793
        %v1795 = vpop.f32.mrb[0].mxu0
        %v1796 = vpop.f32.mrb[0].mxu0
        %v1797 = vadd.f32 %v1302, %v1796
        %v1798 = vpop.f32.mrb[0].mxu0
        %1799 = vmatprep.mubr.bf16.mxu0 0
        %1800 = vmatmul.mubr.bf16.gmra.mrb[0].mxu0 %v1404
        %v1801 = vpop.f32.mrb[0].mxu0
        %v1802 = vadd.f32 %v1302, %v1801
        %v1803 = vpop.f32.mrb[0].mxu0
        %v1804 = vpop.f32.mrb[0].mxu0
        %v1805 = vadd.f32 %v1302, %v1804
        %v1806 = vpop.f32.mrb[0].mxu0
        %1807 = vmatprep.mubr.bf16.mxu0 0
        %1808 = vmatmul.mubr.bf16.gmra.mrb[0].mxu0 %v1407
        %v1809 = vpop.f32.mrb[0].mxu0
        %v1810 = vadd.f32 %v1302, %v1809
        %v1811 = vpop.f32.mrb[0].mxu0
        %v1812 = vpop.f32.mrb[0].mxu0
        %v1813 = vadd.f32 %v1302, %v1812
        %v1814 = vpop.f32.mrb[0].mxu0
        %1815 = vmatprep.mubr.bf16.mxu0 0
        %1816 = vmatmul.mubr.bf16.gmra.mrb[0].mxu0 %v1410
        %v1817 = vpop.f32.mrb[0].mxu0
        %v1818 = vadd.f32 %v1302, %v1817
        %v1819 = vpop.f32.mrb[0].mxu0
        %v1820 = vpop.f32.mrb[0].mxu0
        %v1821 = vadd.f32 %v1302, %v1820
        %v1822 = vpop.f32.mrb[0].mxu0
        %1823 = vmatprep.mubr.bf16.mxu0 0
        %1824 = vmatmul.mubr.bf16.gmra.mrb[0].mxu0 %v1413
        %v1825 = vpop.f32.mrb[0].mxu0
        %v1826 = vadd.f32 %v1302, %v1825
        %v1827 = vpop.f32.mrb[0].mxu0
        %v1828 = vpop.f32.mrb[0].mxu0
        %v1829 = vadd.f32 %v1302, %v1828
        %v1830 = vpop.f32.mrb[0].mxu0
        %1831 = vmatprep.mubr.bf16.mxu0 0
        %1832 = vmatmul.mubr.bf16.gmra.mrb[0].mxu0 %v1416
        %v1833 = vpop.f32.mrb[0].mxu0
        %v1834 = vadd.f32 %v1302, %v1833
        %v1835 = vpop.f32.mrb[0].mxu0
        %v1836 = vpop.f32.mrb[0].mxu0
        %v1837 = vadd.f32 %v1302, %v1836
        %v1838 = vpop.f32.mrb[0].mxu0
        %1839 = vmatprep.mubr.bf16.mxu0 0
        %1840 = vmatmul.mubr.bf16.gmra.mrb[0].mxu0 %v1419
        %v1841 = vpop.f32.mrb[0].mxu0
        %v1842 = vadd.f32 %v1302, %v1841
        %v1843 = vpop.f32.mrb[0].mxu0
        %v1844 = vpop.f32.mrb[0].mxu0
        %v1845 = vadd.f32 %v1302, %v1844
        %v1846 = vpop.f32.mrb[0].mxu0
        %1847 = vmatprep.mubr.bf16.mxu0 0
        %1848 = vmatmul.mubr.bf16.gmra.mrb[0].mxu0 %v1422
        %v1849 = vpop.f32.mrb[0].mxu0
        %v1850 = vadd.f32 %v1302, %v1849
        %v1851 = vpop.f32.mrb[0].mxu0
        %v1852 = vpop.f32.mrb[0].mxu0
        %v1853 = vadd.f32 %v1302, %v1852
        %v1854 = vpop.f32.mrb[0].mxu0
        %1855 = vmatprep.mubr.bf16.mxu0 0
        %1856 = vmatmul.mubr.bf16.gmra.mrb[0].mxu0 %v1425
        %v1857 = vpop.f32.mrb[0].mxu0
        %v1858 = vadd.f32 %v1302, %v1857
        %v1859 = vpop.f32.mrb[0].mxu0
        %v1860 = vpop.f32.mrb[0].mxu0
        %v1861 = vadd.f32 %v1302, %v1860
        %v1862 = vpop.f32.mrb[0].mxu0
        %1863 = vmatprep.mubr.bf16.mxu0 0
        %1864 = vmatmul.mubr.bf16.gmra.mrb[0].mxu0 %v1428
        %v1865 = vpop.f32.mrb[0].mxu0
        %v1866 = vadd.f32 %v1302, %v1865
        %v1867 = vpop.f32.mrb[0].mxu0
        %v1868 = vpop.f32.mrb[0].mxu0
        %v1869 = vadd.f32 %v1302, %v1868
        %v1870 = vpop.f32.mrb[0].mxu0
        %1871 = vmatprep.mubr.bf16.mxu0 0
        %1872 = vmatmul.mubr.bf16.gmra.mrb[0].mxu0 %v1431
        %v1873 = vpop.f32.mrb[0].mxu0
        %v1874 = vadd.f32 %v1302, %v1873
        %v1875 = vpop.f32.mrb[0].mxu0
        %v1876 = vpop.f32.mrb[0].mxu0
        %v1877 = vadd.f32 %v1302, %v1876
        %v1878 = vpop.f32.mrb[0].mxu0
        %1879 = vmatprep.mubr.bf16.mxu0 0
        %1880 = vmatmul.mubr.bf16.gmra.mrb[0].mxu0 %v1434
        %v1881 = vpop.f32.mrb[0].mxu0
        %v1882 = vadd.f32 %v1302, %v1881
        %v1883 = vpop.f32.mrb[0].mxu0
        %v1884 = vpop.f32.mrb[0].mxu0
        %v1885 = vadd.f32 %v1302, %v1884
        %v1886 = vpop.f32.mrb[0].mxu0
        %1887 = vmatprep.mubr.bf16.mxu0 0
        %1888 = vmatmul.mubr.bf16.gmra.mrb[0].mxu0 %v1437
        %v1889 = vpop.f32.mrb[0].mxu0
        %v1890 = vadd.f32 %v1302, %v1889
        %v1891 = vpop.f32.mrb[0].mxu0
        %v1892 = vpop.f32.mrb[0].mxu0
        %v1893 = vadd.f32 %v1302, %v1892
        %v1894 = vpop.f32.mrb[0].mxu0
        %1895 = vmatprep.mubr.bf16.mxu0 0
        %1896 = vmatmul.mubr.bf16.gmra.mrb[0].mxu0 %v1440
        %v1897 = vpop.f32.mrb[0].mxu0
        %v1898 = vadd.f32 %v1302, %v1897
        %v1899 = vpop.f32.mrb[0].mxu0
        %v1900 = vpop.f32.mrb[0].mxu0
        %v1901 = vadd.f32 %v1302, %v1900
        %v1902 = vpop.f32.mrb[0].mxu0
        %1903 = vmatprep.mubr.bf16.mxu0 0
        %1904 = vmatmul.mubr.bf16.gmra.mrb[0].mxu0 %v1443
        %v1905 = vpop.f32.mrb[0].mxu0
        %v1906 = vadd.f32 %v1302, %v1905
        %v1907 = vpop.f32.mrb[0].mxu0
        %v1908 = vpop.f32.mrb[0].mxu0
        %v1909 = vadd.f32 %v1302, %v1908
        %v1910 = vpop.f32.mrb[0].mxu0
        %1911 = vmatprep.mubr.bf16.mxu0 0
        %1912 = vmatmul.mubr.bf16.gmra.mrb[0].mxu0 %v1446
        %v1913 = vpop.f32.mrb[0].mxu0
        %v1914 = vadd.f32 %v1302, %v1913
        %v1915 = vpop.f32.mrb[0].mxu0
        %v1916 = vpop.f32.mrb[0].mxu0
        %v1917 = vadd.f32 %v1302, %v1916
        %v1918 = vpop.f32.mrb[0].mxu0
        %1919 = vmatprep.mubr.bf16.mxu0 0
        %1920 = vmatmul.mubr.bf16.gmra.mrb[0].mxu0 %v1449
        %v1921 = vpop.f32.mrb[0].mxu0
        %v1922 = vadd.f32 %v1302, %v1921
        %v1923 = vpop.f32.mrb[0].mxu0
        %v1924 = vpop.f32.mrb[0].mxu0
        %v1925 = vadd.f32 %v1302, %v1924
        %v1926 = vpop.f32.mrb[0].mxu0
        %1927 = vmatprep.mubr.bf16.mxu0 0
        %1928 = vmatmul.mubr.bf16.gmra.mrb[0].mxu0 %v1452
        %v1929 = vpop.f32.mrb[0].mxu0
        %v1930 = vadd.f32 %v1302, %v1929
        %v1931 = vpop.f32.mrb[0].mxu0
        %v1932 = vpop.f32.mrb[0].mxu0
        %v1933 = vadd.f32 %v1302, %v1932
        %v1934 = vpop.f32.mrb[0].mxu0
        %1935 = vmatprep.mubr.bf16.mxu0 0
        %1936 = vmatmul.mubr.bf16.gmra.mrb[0].mxu0 %v1455
        %v1937 = vpop.f32.mrb[0].mxu0
        %v1938 = vadd.f32 %v1302, %v1937
        %v1939 = vpop.f32.mrb[0].mxu0
        %v1940 = vpop.f32.mrb[0].mxu0
        %v1941 = vadd.f32 %v1302, %v1940
        %v1942 = vpop.f32.mrb[0].mxu0
        %1943 = vmatprep.mubr.bf16.mxu0 0
        %1944 = vmatmul.mubr.bf16.gmra.mrb[0].mxu0 %v1458
        %v1945 = vpop.f32.mrb[0].mxu0
        %v1946 = vadd.f32 %v1302, %v1945
        %v1947 = vpop.f32.mrb[0].mxu0
        %v1948 = vpop.f32.mrb[0].mxu0
        %v1949 = vadd.f32 %v1302, %v1948
        %v1950 = vpop.f32.mrb[0].mxu0
        %1951 = vmatprep.mubr.bf16.mxu0 0
        %1952 = vmatmul.mubr.bf16.gmra.mrb[0].mxu0 %v1461
        %v1953 = vpop.f32.mrb[0].mxu0
        %v1954 = vadd.f32 %v1302, %v1953
        %v1955 = vpop.f32.mrb[0].mxu0
        %v1956 = vpop.f32.mrb[0].mxu0
        %v1957 = vadd.f32 %v1302, %v1956
        %v1958 = vpop.f32.mrb[0].mxu0
        %1959 = vmatprep.mubr.bf16.mxu0 0
        %1960 = vmatmul.mubr.bf16.gmra.mrb[0].mxu0 %v1464
        %v1961 = vpop.f32.mrb[0].mxu0
        %v1962 = vadd.f32 %v1302, %v1961
        %v1963 = vpop.f32.mrb[0].mxu0
        %v1964 = vpop.f32.mrb[0].mxu0
        %v1965 = vadd.f32 %v1302, %v1964
        %v1966 = vpop.f32.mrb[0].mxu0
        %1967 = vmatprep.mubr.bf16.mxu0 0
        %1968 = vmatmul.mubr.bf16.gmra.mrb[0].mxu0 %v1467
        %v1969 = vpop.f32.mrb[0].mxu0
        %v1970 = vadd.f32 %v1302, %v1969
        %v1971 = vpop.f32.mrb[0].mxu0
        %v1972 = vpop.f32.mrb[0].mxu0
        %v1973 = vadd.f32 %v1302, %v1972
        %v1974 = vpop.f32.mrb[0].mxu0
        %1975 = vmatprep.mubr.bf16.mxu0 0
        %1976 = vmatmul.mubr.bf16.gmra.mrb[0].mxu0 %v1470
        %v1977 = vpop.f32.mrb[0].mxu0
        %v1978 = vadd.f32 %v1302, %v1977
        %v1979 = vpop.f32.mrb[0].mxu0
        %v1980 = vpop.f32.mrb[0].mxu0
        %v1981 = vadd.f32 %v1302, %v1980
        %v1982 = vpop.f32.mrb[0].mxu0
        %1983 = vmatprep.mubr.bf16.mxu0 0
        %1984 = vmatmul.mubr.bf16.gmra.mrb[0].mxu0 %v1473
        %v1985 = vpop.f32.mrb[0].mxu0
        %v1986 = vadd.f32 %v1302, %v1985
        %v1987 = vpop.f32.mrb[0].mxu0
        %v1988 = vpop.f32.mrb[0].mxu0
        %v1989 = vadd.f32 %v1302, %v1988
        %v1990 = vpop.f32.mrb[0].mxu0
        %1991 = vmatprep.mubr.bf16.mxu0 0
        %1992 = vmatmul.mubr.bf16.gmra.mrb[0].mxu0 %v1476
        %v1993 = vpop.f32.mrb[0].mxu0
        %v1994 = vadd.f32 %v1302, %v1993
        %v1995 = vpop.f32.mrb[0].mxu0
        %v1996 = vpop.f32.mrb[0].mxu0
        %v1997 = vadd.f32 %v1302, %v1996
        %v1998 = vpop.f32.mrb[0].mxu0
        %1999 = vmatprep.mubr.bf16.mxu0 0
        %2000 = vmatmul.mubr.bf16.gmra.mrb[0].mxu0 %v1479
        %v2001 = vpop.f32.mrb[0].mxu0
        %v2002 = vadd.f32 %v1302, %v2001
        %v2003 = vpop.f32.mrb[0].mxu0
        %v2004 = vpop.f32.mrb[0].mxu0
        %v2005 = vadd.f32 %v1302, %v2004
        %v2006 = vpop.f32.mrb[0].mxu0
        %2007 = vmatprep.mubr.bf16.mxu0 0
        %2008 = vmatmul.mubr.bf16.gmra.mrb[0].mxu0 %v1482
        %v2009 = vpop.f32.mrb[0].mxu0
        %v2010 = vadd.f32 %v1302, %v2009
        %v2011 = vpop.f32.mrb[0].mxu0
        %v2012 = vpop.f32.mrb[0].mxu0
        %v2013 = vadd.f32 %v1302, %v2012
        %v2014 = vpop.f32.mrb[0].mxu0
        %2015 = vmatprep.mubr.bf16.mxu0 0
        %2016 = vmatmul.mubr.bf16.gmra.mrb[0].mxu0 %v1485
        %v2017 = vpop.f32.mrb[0].mxu0
        %v2018 = vadd.f32 %v1302, %v2017
        %v2019 = vpop.f32.mrb[0].mxu0
        %v2020 = vpop.f32.mrb[0].mxu0
        %v2021 = vadd.f32 %v1302, %v2020
        %v2022 = vpop.f32.mrb[0].mxu0
        %2023 = vmatprep.mubr.bf16.mxu0 0
        %2024 = vmatmul.mubr.bf16.gmra.mrb[0].mxu0 %v1488
        %v2025 = vpop.f32.mrb[0].mxu0
        %v2026 = vadd.f32 %v1302, %v2025
        %v2027 = vpop.f32.mrb[0].mxu0
        %v2028 = vpop.f32.mrb[0].mxu0
        %v2029 = vadd.f32 %v1302, %v2028
        %v2030 = vpop.f32.mrb[0].mxu0
        %2031 = vmatprep.mubr.bf16.mxu0 0
        %2032 = vmatmul.mubr.bf16.gmra.mrb[0].mxu0 %v1491
        %v2033 = vpop.f32.mrb[0].mxu0
        %v2034 = vadd.f32 %v1302, %v2033
        %v2035 = vpop.f32.mrb[0].mxu0
        %v2036 = vpop.f32.mrb[0].mxu0
        %v2037 = vadd.f32 %v1302, %v2036
        %v2038 = vpop.f32.mrb[0].mxu0
        %2039 = vmatprep.mubr.bf16.mxu0 0
        %2040 = vmatmul.mubr.bf16.gmra.mrb[0].mxu0 %v1494
        %v2041 = vpop.f32.mrb[0].mxu0
        %v2042 = vadd.f32 %v1302, %v2041
        %v2043 = vpop.f32.mrb[0].mxu0
        %v2044 = vpop.f32.mrb[0].mxu0
        %v2045 = vadd.f32 %v1302, %v2044
        %v2046 = vpop.f32.mrb[0].mxu0
        %2047 = vdwg.mxu0
        %v2048 = vmax.f32 %v1538, 0.0
        %v2049 = vmax.f32 %v1541, 0.0
        %v2050 = vmax.f32 %v1546, 0.0
        %v2051 = vmax.f32 %v1549, 0.0
        %v2052 = vmax.f32 %v1554, 0.0
        %v2053 = vmax.f32 %v1557, 0.0
        %v2054 = vmax.f32 %v1562, 0.0
        %v2055 = vmax.f32 %v1565, 0.0
        %v2056 = vmax.f32 %v1570, 0.0
        %v2057 = vmax.f32 %v1573, 0.0
        %v2058 = vmax.f32 %v1578, 0.0
        %v2059 = vmax.f32 %v1581, 0.0
        %v2060 = vmax.f32 %v1586, 0.0
        %v2061 = vmax.f32 %v1589, 0.0
        %v2062 = vmax.f32 %v1594, 0.0
        %v2063 = vmax.f32 %v1597, 0.0
        %v2064 = vmax.f32 %v1602, 0.0
        %v2065 = vmax.f32 %v1605, 0.0
        %v2066 = vmax.f32 %v1610, 0.0
        %v2067 = vmax.f32 %v1613, 0.0
        %v2068 = vmax.f32 %v1618, 0.0
        %v2069 = vmax.f32 %v1621, 0.0
        %v2070 = vmax.f32 %v1626, 0.0
        %v2071 = vmax.f32 %v1629, 0.0
        %v2072 = vmax.f32 %v1634, 0.0
        %v2073 = vmax.f32 %v1637, 0.0
        %v2074 = vmax.f32 %v1642, 0.0
        %v2075 = vmax.f32 %v1645, 0.0
        %v2076 = vmax.f32 %v1650, 0.0
        %v2077 = vmax.f32 %v1653, 0.0
        %v2078 = vmax.f32 %v1658, 0.0
        %v2079 = vmax.f32 %v1661, 0.0
        %v2080 = vmax.f32 %v1666, 0.0
        %v2081 = vmax.f32 %v1669, 0.0
        %v2082 = vmax.f32 %v1674, 0.0
        %v2083 = vmax.f32 %v1677, 0.0
        %v2084 = vmax.f32 %v1682, 0.0
        %v2085 = vmax.f32 %v1685, 0.0
        %v2086 = vmax.f32 %v1690, 0.0
        %v2087 = vmax.f32 %v1693, 0.0
        %v2088 = vmax.f32 %v1698, 0.0
        %v2089 = vmax.f32 %v1701, 0.0
        %v2090 = vmax.f32 %v1706, 0.0
        %v2091 = vmax.f32 %v1709, 0.0
        %v2092 = vmax.f32 %v1714, 0.0
        %v2093 = vmax.f32 %v1717, 0.0
        %v2094 = vmax.f32 %v1722, 0.0
        %v2095 = vmax.f32 %v1725, 0.0
        %v2096 = vmax.f32 %v1730, 0.0
        %v2097 = vmax.f32 %v1733, 0.0
        %v2098 = vmax.f32 %v1738, 0.0
        %v2099 = vmax.f32 %v1741, 0.0
        %v2100 = vmax.f32 %v1746, 0.0
        %v2101 = vmax.f32 %v1749, 0.0
        %v2102 = vmax.f32 %v1754, 0.0
        %v2103 = vmax.f32 %v1757, 0.0
        %v2104 = vmax.f32 %v1762, 0.0
        %v2105 = vmax.f32 %v1765, 0.0
        %v2106 = vmax.f32 %v1770, 0.0
        %v2107 = vmax.f32 %v1773, 0.0
        %v2108 = vmax.f32 %v1778, 0.0
        %v2109 = vmax.f32 %v1781, 0.0
        %v2110 = vmax.f32 %v1786, 0.0
        %v2111 = vmax.f32 %v1789, 0.0
        %v2112 = vmax.f32 %v1794, 0.0
        %v2113 = vmax.f32 %v1797, 0.0
        %v2114 = vmax.f32 %v1802, 0.0
        %v2115 = vmax.f32 %v1805, 0.0
        %v2116 = vmax.f32 %v1810, 0.0
        %v2117 = vmax.f32 %v1813, 0.0
        %v2118 = vmax.f32 %v1818, 0.0
        %v2119 = vmax.f32 %v1821, 0.0
        %v2120 = vmax.f32 %v1826, 0.0
        %v2121 = vmax.f32 %v1829, 0.0
        %v2122 = vmax.f32 %v1834, 0.0
        %v2123 = vmax.f32 %v1837, 0.0
        %v2124 = vmax.f32 %v1842, 0.0
        %v2125 = vmax.f32 %v1845, 0.0
        %v2126 = vmax.f32 %v1850, 0.0
        %v2127 = vmax.f32 %v1853, 0.0
        %v2128 = vmax.f32 %v1858, 0.0
        %v2129 = vmax.f32 %v1861, 0.0
        %v2130 = vmax.f32 %v1866, 0.0
        %v2131 = vmax.f32 %v1869, 0.0
        %v2132 = vmax.f32 %v1874, 0.0
        %v2133 = vmax.f32 %v1877, 0.0
        %v2134 = vmax.f32 %v1882, 0.0
        %v2135 = vmax.f32 %v1885, 0.0
        %v2136 = vmax.f32 %v1890, 0.0
        %v2137 = vmax.f32 %v1893, 0.0
        %v2138 = vmax.f32 %v1898, 0.0
        %v2139 = vmax.f32 %v1901, 0.0
        %v2140 = vmax.f32 %v1906, 0.0
        %v2141 = vmax.f32 %v1909, 0.0
        %v2142 = vmax.f32 %v1914, 0.0
        %v2143 = vmax.f32 %v1917, 0.0
        %v2144 = vmax.f32 %v1922, 0.0
        %v2145 = vmax.f32 %v1925, 0.0
        %v2146 = vmax.f32 %v1930, 0.0
        %v2147 = vmax.f32 %v1933, 0.0
        %v2148 = vmax.f32 %v1938, 0.0
        %v2149 = vmax.f32 %v1941, 0.0
        %v2150 = vmax.f32 %v1946, 0.0
        %v2151 = vmax.f32 %v1949, 0.0
        %v2152 = vmax.f32 %v1954, 0.0
        %v2153 = vmax.f32 %v1957, 0.0
        %v2154 = vmax.f32 %v1962, 0.0
        %v2155 = vmax.f32 %v1965, 0.0
        %v2156 = vmax.f32 %v1970, 0.0
        %v2157 = vmax.f32 %v1973, 0.0
        %v2158 = vmax.f32 %v1978, 0.0
        %v2159 = vmax.f32 %v1981, 0.0
        %v2160 = vmax.f32 %v1986, 0.0
        %v2161 = vmax.f32 %v1989, 0.0
        %v2162 = vmax.f32 %v1994, 0.0
        %v2163 = vmax.f32 %v1997, 0.0
        %v2164 = vmax.f32 %v2002, 0.0
        %v2165 = vmax.f32 %v2005, 0.0
        %v2166 = vmax.f32 %v2010, 0.0
        %v2167 = vmax.f32 %v2013, 0.0
        %v2168 = vmax.f32 %v2018, 0.0
        %v2169 = vmax.f32 %v2021, 0.0
        %v2170 = vmax.f32 %v2026, 0.0
        %v2171 = vmax.f32 %v2029, 0.0
        %v2172 = vmax.f32 %v2034, 0.0
        %v2173 = vmax.f32 %v2037, 0.0
        %v2174 = vmax.f32 %v2042, 0.0
        %v2175 = vmax.f32 %v2045, 0.0
        %v2176 = vmul.f32 %v2048, %v1104
        %v2177 = vmul.f32 %v2049, %v1105
        %v2178 = vmul.f32 %v2050, %v1106
        %v2179 = vmul.f32 %v2051, %v1107
        %v2180 = vmul.f32 %v2052, %v1108
        %v2181 = vmul.f32 %v2053, %v1109
        %v2182 = vmul.f32 %v2054, %v1110
        %v2183 = vmul.f32 %v2055, %v1111
        %v2184 = vmul.f32 %v2056, %v1112
        %v2185 = vmul.f32 %v2057, %v1113
        %v2186 = vmul.f32 %v2058, %v1114
        %v2187 = vmul.f32 %v2059, %v1115
        %v2188 = vmul.f32 %v2060, %v1116
        %v2189 = vmul.f32 %v2061, %v1117
        %v2190 = vmul.f32 %v2062, %v1118
        %v2191 = vmul.f32 %v2063, %v1119
        %v2192 = vmul.f32 %v2064, %v1120
        %v2193 = vmul.f32 %v2065, %v1121
        %v2194 = vmul.f32 %v2066, %v1122
        %v2195 = vmul.f32 %v2067, %v1123
        %v2196 = vmul.f32 %v2068, %v1124
        %v2197 = vmul.f32 %v2069, %v1125
        %v2198 = vmul.f32 %v2070, %v1126
        %v2199 = vmul.f32 %v2071, %v1127
        %v2200 = vmul.f32 %v2072, %v1128
        %v2201 = vmul.f32 %v2073, %v1129
        %v2202 = vmul.f32 %v2074, %v1130
        %v2203 = vmul.f32 %v2075, %v1131
        %v2204 = vmul.f32 %v2076, %v1132
        %v2205 = vmul.f32 %v2077, %v1133
        %v2206 = vmul.f32 %v2078, %v1134
        %v2207 = vmul.f32 %v2079, %v1135
        %v2208 = vmul.f32 %v2080, %v1136
        %v2209 = vmul.f32 %v2081, %v1137
        %v2210 = vmul.f32 %v2082, %v1138
        %v2211 = vmul.f32 %v2083, %v1139
        %v2212 = vmul.f32 %v2084, %v1140
        %v2213 = vmul.f32 %v2085, %v1141
        %v2214 = vmul.f32 %v2086, %v1142
        %v2215 = vmul.f32 %v2087, %v1143
        %v2216 = vmul.f32 %v2088, %v1144
        %v2217 = vmul.f32 %v2089, %v1145
        %v2218 = vmul.f32 %v2090, %v1146
        %v2219 = vmul.f32 %v2091, %v1147
        %v2220 = vmul.f32 %v2092, %v1148
        %v2221 = vmul.f32 %v2093, %v1149
        %v2222 = vmul.f32 %v2094, %v1150
        %v2223 = vmul.f32 %v2095, %v1151
        %v2224 = vmul.f32 %v2096, %v1152
        %v2225 = vmul.f32 %v2097, %v1153
        %v2226 = vmul.f32 %v2098, %v1154
        %v2227 = vmul.f32 %v2099, %v1155
        %v2228 = vmul.f32 %v2100, %v1156
        %v2229 = vmul.f32 %v2101, %v1157
        %v2230 = vmul.f32 %v2102, %v1158
        %v2231 = vmul.f32 %v2103, %v1159
        %v2232 = vmul.f32 %v2104, %v1160
        %v2233 = vmul.f32 %v2105, %v1161
        %v2234 = vmul.f32 %v2106, %v1162
        %v2235 = vmul.f32 %v2107, %v1163
        %v2236 = vmul.f32 %v2108, %v1164
        %v2237 = vmul.f32 %v2109, %v1165
        %v2238 = vmul.f32 %v2110, %v1166
        %v2239 = vmul.f32 %v2111, %v1167
        %v2240 = vmul.f32 %v2112, %v1168
        %v2241 = vmul.f32 %v2113, %v1169
        %v2242 = vmul.f32 %v2114, %v1170
        %v2243 = vmul.f32 %v2115, %v1171
        %v2244 = vmul.f32 %v2116, %v1172
        %v2245 = vmul.f32 %v2117, %v1173
        %v2246 = vmul.f32 %v2118, %v1174
        %v2247 = vmul.f32 %v2119, %v1175
        %v2248 = vmul.f32 %v2120, %v1176
        %v2249 = vmul.f32 %v2121, %v1177
        %v2250 = vmul.f32 %v2122, %v1178
        %v2251 = vmul.f32 %v2123, %v1179
        %v2252 = vmul.f32 %v2124, %v1180
        %v2253 = vmul.f32 %v2125, %v1181
        %v2254 = vmul.f32 %v2126, %v1182
        %v2255 = vmul.f32 %v2127, %v1183
        %v2256 = vmul.f32 %v2128, %v1184
        %v2257 = vmul.f32 %v2129, %v1185
        %v2258 = vmul.f32 %v2130, %v1186
        %v2259 = vmul.f32 %v2131, %v1187
        %v2260 = vmul.f32 %v2132, %v1188
        %v2261 = vmul.f32 %v2133, %v1189
        %v2262 = vmul.f32 %v2134, %v1190
        %v2263 = vmul.f32 %v2135, %v1191
        %v2264 = vmul.f32 %v2136, %v1192
        %v2265 = vmul.f32 %v2137, %v1193
        %v2266 = vmul.f32 %v2138, %v1194
        %v2267 = vmul.f32 %v2139, %v1195
        %v2268 = vmul.f32 %v2140, %v1196
        %v2269 = vmul.f32 %v2141, %v1197
        %v2270 = vmul.f32 %v2142, %v1198
        %v2271 = vmul.f32 %v2143, %v1199
        %v2272 = vmul.f32 %v2144, %v1200
        %v2273 = vmul.f32 %v2145, %v1201
        %v2274 = vmul.f32 %v2146, %v1202
        %v2275 = vmul.f32 %v2147, %v1203
        %v2276 = vmul.f32 %v2148, %v1204
        %v2277 = vmul.f32 %v2149, %v1205
        %v2278 = vmul.f32 %v2150, %v1206
        %v2279 = vmul.f32 %v2151, %v1207
        %v2280 = vmul.f32 %v2152, %v1208
        %v2281 = vmul.f32 %v2153, %v1209
        %v2282 = vmul.f32 %v2154, %v1210
        %v2283 = vmul.f32 %v2155, %v1211
        %v2284 = vmul.f32 %v2156, %v1212
        %v2285 = vmul.f32 %v2157, %v1213
        %v2286 = vmul.f32 %v2158, %v1214
        %v2287 = vmul.f32 %v2159, %v1215
        %v2288 = vmul.f32 %v2160, %v1216
        %v2289 = vmul.f32 %v2161, %v1217
        %v2290 = vmul.f32 %v2162, %v1218
        %v2291 = vmul.f32 %v2163, %v1219
        %v2292 = vmul.f32 %v2164, %v1220
        %v2293 = vmul.f32 %v2165, %v1221
        %v2294 = vmul.f32 %v2166, %v1222
        %v2295 = vmul.f32 %v2167, %v1223
        %v2296 = vmul.f32 %v2168, %v1224
        %v2297 = vmul.f32 %v2169, %v1225
        %v2298 = vmul.f32 %v2170, %v1226
        %v2299 = vmul.f32 %v2171, %v1227
        %v2300 = vmul.f32 %v2172, %v1228
        %v2301 = vmul.f32 %v2173, %v1229
        %v2302 = vmul.f32 %v2174, %v1230
        %v2303 = vmul.f32 %v2175, %v1231
        %vm2304 = vcmask 130048
        %v2305 = vsel %vm2304, %v2048, -inf
        %v2306 = vrot.slane %v2305, 4
        %v2307 = vmax.f32 %v2305, %v2306
        %v2308 = vrot.slane %v2307, 2
        %v2309 = vmax.f32 %v2307, %v2308
        %v2310 = vrot.slane %v2309, 1
        %v2311 = vmax.f32 %v2309, %v2310
        %v2312 = vsel %vm2304, %v2049, -inf
        %v2313 = vrot.slane %v2312, 4
        %v2314 = vmax.f32 %v2312, %v2313
        %v2315 = vrot.slane %v2314, 2
        %v2316 = vmax.f32 %v2314, %v2315
        %v2317 = vrot.slane %v2316, 1
        %v2318 = vmax.f32 %v2316, %v2317
        %v2319 = vsel %vm2304, %v2050, -inf
        %v2320 = vrot.slane %v2319, 4
        %v2321 = vmax.f32 %v2319, %v2320
        %v2322 = vrot.slane %v2321, 2
        %v2323 = vmax.f32 %v2321, %v2322
        %v2324 = vrot.slane %v2323, 1
        %v2325 = vmax.f32 %v2323, %v2324
        %v2326 = vsel %vm2304, %v2051, -inf
        %v2327 = vrot.slane %v2326, 4
        %v2328 = vmax.f32 %v2326, %v2327
        %v2329 = vrot.slane %v2328, 2
        %v2330 = vmax.f32 %v2328, %v2329
        %v2331 = vrot.slane %v2330, 1
        %v2332 = vmax.f32 %v2330, %v2331
        %v2333 = vsel %vm2304, %v2052, -inf
        %v2334 = vrot.slane %v2333, 4
        %v2335 = vmax.f32 %v2333, %v2334
        %v2336 = vrot.slane %v2335, 2
        %v2337 = vmax.f32 %v2335, %v2336
        %v2338 = vrot.slane %v2337, 1
        %v2339 = vmax.f32 %v2337, %v2338
        %v2340 = vsel %vm2304, %v2053, -inf
        %v2341 = vrot.slane %v2340, 4
        %v2342 = vmax.f32 %v2340, %v2341
        %v2343 = vrot.slane %v2342, 2
        %v2344 = vmax.f32 %v2342, %v2343
        %v2345 = vrot.slane %v2344, 1
        %v2346 = vmax.f32 %v2344, %v2345
        %v2347 = vsel %vm2304, %v2054, -inf
        %v2348 = vrot.slane %v2347, 4
        %v2349 = vmax.f32 %v2347, %v2348
        %v2350 = vrot.slane %v2349, 2
        %v2351 = vmax.f32 %v2349, %v2350
        %v2352 = vrot.slane %v2351, 1
        %v2353 = vmax.f32 %v2351, %v2352
        %v2354 = vsel %vm2304, %v2055, -inf
        %v2355 = vrot.slane %v2354, 4
        %v2356 = vmax.f32 %v2354, %v2355
        %v2357 = vrot.slane %v2356, 2
        %v2358 = vmax.f32 %v2356, %v2357
        %v2359 = vrot.slane %v2358, 1
        %v2360 = vmax.f32 %v2358, %v2359
        %v2361 = vsel %vm2304, %v2056, -inf
        %v2362 = vrot.slane %v2361, 4
        %v2363 = vmax.f32 %v2361, %v2362
        %v2364 = vrot.slane %v2363, 2
        %v2365 = vmax.f32 %v2363, %v2364
        %v2366 = vrot.slane %v2365, 1
        %v2367 = vmax.f32 %v2365, %v2366
        %v2368 = vsel %vm2304, %v2057, -inf
        %v2369 = vrot.slane %v2368, 4
        %v2370 = vmax.f32 %v2368, %v2369
        %v2371 = vrot.slane %v2370, 2
        %v2372 = vmax.f32 %v2370, %v2371
        %v2373 = vrot.slane %v2372, 1
        %v2374 = vmax.f32 %v2372, %v2373
        %v2375 = vsel %vm2304, %v2058, -inf
        %v2376 = vrot.slane %v2375, 4
        %v2377 = vmax.f32 %v2375, %v2376
        %v2378 = vrot.slane %v2377, 2
        %v2379 = vmax.f32 %v2377, %v2378
        %v2380 = vrot.slane %v2379, 1
        %v2381 = vmax.f32 %v2379, %v2380
        %v2382 = vsel %vm2304, %v2059, -inf
        %v2383 = vrot.slane %v2382, 4
        %v2384 = vmax.f32 %v2382, %v2383
        %v2385 = vrot.slane %v2384, 2
        %v2386 = vmax.f32 %v2384, %v2385
        %v2387 = vrot.slane %v2386, 1
        %v2388 = vmax.f32 %v2386, %v2387
        %v2389 = vsel %vm2304, %v2060, -inf
        %v2390 = vrot.slane %v2389, 4
        %v2391 = vmax.f32 %v2389, %v2390
        %v2392 = vrot.slane %v2391, 2
        %v2393 = vmax.f32 %v2391, %v2392
        %v2394 = vrot.slane %v2393, 1
        %v2395 = vmax.f32 %v2393, %v2394
        %v2396 = vsel %vm2304, %v2061, -inf
        %v2397 = vrot.slane %v2396, 4
        %v2398 = vmax.f32 %v2396, %v2397
        %v2399 = vrot.slane %v2398, 2
        %v2400 = vmax.f32 %v2398, %v2399
        %v2401 = vrot.slane %v2400, 1
        %v2402 = vmax.f32 %v2400, %v2401
        %v2403 = vsel %vm2304, %v2062, -inf
        %v2404 = vrot.slane %v2403, 4
        %v2405 = vmax.f32 %v2403, %v2404
        %v2406 = vrot.slane %v2405, 2
        %v2407 = vmax.f32 %v2405, %v2406
        %v2408 = vrot.slane %v2407, 1
        %v2409 = vmax.f32 %v2407, %v2408
        %v2410 = vsel %vm2304, %v2063, -inf
        %v2411 = vrot.slane %v2410, 4
        %v2412 = vmax.f32 %v2410, %v2411
        %v2413 = vrot.slane %v2412, 2
        %v2414 = vmax.f32 %v2412, %v2413
        %v2415 = vrot.slane %v2414, 1
        %v2416 = vmax.f32 %v2414, %v2415
        %v2417 = vsel %vm2304, %v2064, -inf
        %v2418 = vrot.slane %v2417, 4
        %v2419 = vmax.f32 %v2417, %v2418
        %v2420 = vrot.slane %v2419, 2
        %v2421 = vmax.f32 %v2419, %v2420
        %v2422 = vrot.slane %v2421, 1
        %v2423 = vmax.f32 %v2421, %v2422
        %v2424 = vsel %vm2304, %v2065, -inf
        %v2425 = vrot.slane %v2424, 4
        %v2426 = vmax.f32 %v2424, %v2425
        %v2427 = vrot.slane %v2426, 2
        %v2428 = vmax.f32 %v2426, %v2427
        %v2429 = vrot.slane %v2428, 1
        %v2430 = vmax.f32 %v2428, %v2429
        %v2431 = vsel %vm2304, %v2066, -inf
        %v2432 = vrot.slane %v2431, 4
        %v2433 = vmax.f32 %v2431, %v2432
        %v2434 = vrot.slane %v2433, 2
        %v2435 = vmax.f32 %v2433, %v2434
        %v2436 = vrot.slane %v2435, 1
        %v2437 = vmax.f32 %v2435, %v2436
        %v2438 = vsel %vm2304, %v2067, -inf
        %v2439 = vrot.slane %v2438, 4
        %v2440 = vmax.f32 %v2438, %v2439
        %v2441 = vrot.slane %v2440, 2
        %v2442 = vmax.f32 %v2440, %v2441
        %v2443 = vrot.slane %v2442, 1
        %v2444 = vmax.f32 %v2442, %v2443
        %v2445 = vsel %vm2304, %v2068, -inf
        %v2446 = vrot.slane %v2445, 4
        %v2447 = vmax.f32 %v2445, %v2446
        %v2448 = vrot.slane %v2447, 2
        %v2449 = vmax.f32 %v2447, %v2448
        %v2450 = vrot.slane %v2449, 1
        %v2451 = vmax.f32 %v2449, %v2450
        %v2452 = vsel %vm2304, %v2069, -inf
        %v2453 = vrot.slane %v2452, 4
        %v2454 = vmax.f32 %v2452, %v2453
        %v2455 = vrot.slane %v2454, 2
        %v2456 = vmax.f32 %v2454, %v2455
        %v2457 = vrot.slane %v2456, 1
        %v2458 = vmax.f32 %v2456, %v2457
        %v2459 = vsel %vm2304, %v2070, -inf
        %v2460 = vrot.slane %v2459, 4
        %v2461 = vmax.f32 %v2459, %v2460
        %v2462 = vrot.slane %v2461, 2
        %v2463 = vmax.f32 %v2461, %v2462
        %v2464 = vrot.slane %v2463, 1
        %v2465 = vmax.f32 %v2463, %v2464
        %v2466 = vsel %vm2304, %v2071, -inf
        %v2467 = vrot.slane %v2466, 4
        %v2468 = vmax.f32 %v2466, %v2467
        %v2469 = vrot.slane %v2468, 2
        %v2470 = vmax.f32 %v2468, %v2469
        %v2471 = vrot.slane %v2470, 1
        %v2472 = vmax.f32 %v2470, %v2471
        %v2473 = vsel %vm2304, %v2072, -inf
        %v2474 = vrot.slane %v2473, 4
        %v2475 = vmax.f32 %v2473, %v2474
        %v2476 = vrot.slane %v2475, 2
        %v2477 = vmax.f32 %v2475, %v2476
        %v2478 = vrot.slane %v2477, 1
        %v2479 = vmax.f32 %v2477, %v2478
        %v2480 = vsel %vm2304, %v2073, -inf
        %v2481 = vrot.slane %v2480, 4
        %v2482 = vmax.f32 %v2480, %v2481
        %v2483 = vrot.slane %v2482, 2
        %v2484 = vmax.f32 %v2482, %v2483
        %v2485 = vrot.slane %v2484, 1
        %v2486 = vmax.f32 %v2484, %v2485
        %v2487 = vsel %vm2304, %v2074, -inf
        %v2488 = vrot.slane %v2487, 4
        %v2489 = vmax.f32 %v2487, %v2488
        %v2490 = vrot.slane %v2489, 2
        %v2491 = vmax.f32 %v2489, %v2490
        %v2492 = vrot.slane %v2491, 1
        %v2493 = vmax.f32 %v2491, %v2492
        %v2494 = vsel %vm2304, %v2075, -inf
        %v2495 = vrot.slane %v2494, 4
        %v2496 = vmax.f32 %v2494, %v2495
        %v2497 = vrot.slane %v2496, 2
        %v2498 = vmax.f32 %v2496, %v2497
        %v2499 = vrot.slane %v2498, 1
        %v2500 = vmax.f32 %v2498, %v2499
        %v2501 = vsel %vm2304, %v2076, -inf
        %v2502 = vrot.slane %v2501, 4
        %v2503 = vmax.f32 %v2501, %v2502
        %v2504 = vrot.slane %v2503, 2
        %v2505 = vmax.f32 %v2503, %v2504
        %v2506 = vrot.slane %v2505, 1
        %v2507 = vmax.f32 %v2505, %v2506
        %v2508 = vsel %vm2304, %v2077, -inf
        %v2509 = vrot.slane %v2508, 4
        %v2510 = vmax.f32 %v2508, %v2509
        %v2511 = vrot.slane %v2510, 2
        %v2512 = vmax.f32 %v2510, %v2511
        %v2513 = vrot.slane %v2512, 1
        %v2514 = vmax.f32 %v2512, %v2513
        %v2515 = vsel %vm2304, %v2078, -inf
        %v2516 = vrot.slane %v2515, 4
        %v2517 = vmax.f32 %v2515, %v2516
        %v2518 = vrot.slane %v2517, 2
        %v2519 = vmax.f32 %v2517, %v2518
        %v2520 = vrot.slane %v2519, 1
        %v2521 = vmax.f32 %v2519, %v2520
        %v2522 = vsel %vm2304, %v2079, -inf
        %v2523 = vrot.slane %v2522, 4
        %v2524 = vmax.f32 %v2522, %v2523
        %v2525 = vrot.slane %v2524, 2
        %v2526 = vmax.f32 %v2524, %v2525
        %v2527 = vrot.slane %v2526, 1
        %v2528 = vmax.f32 %v2526, %v2527
        %v2529 = vsel %vm2304, %v2080, -inf
        %v2530 = vrot.slane %v2529, 4
        %v2531 = vmax.f32 %v2529, %v2530
        %v2532 = vrot.slane %v2531, 2
        %v2533 = vmax.f32 %v2531, %v2532
        %v2534 = vrot.slane %v2533, 1
        %v2535 = vmax.f32 %v2533, %v2534
        %v2536 = vsel %vm2304, %v2081, -inf
        %v2537 = vrot.slane %v2536, 4
        %v2538 = vmax.f32 %v2536, %v2537
        %v2539 = vrot.slane %v2538, 2
        %v2540 = vmax.f32 %v2538, %v2539
        %v2541 = vrot.slane %v2540, 1
        %v2542 = vmax.f32 %v2540, %v2541
        %v2543 = vsel %vm2304, %v2082, -inf
        %v2544 = vrot.slane %v2543, 4
        %v2545 = vmax.f32 %v2543, %v2544
        %v2546 = vrot.slane %v2545, 2
        %v2547 = vmax.f32 %v2545, %v2546
        %v2548 = vrot.slane %v2547, 1
        %v2549 = vmax.f32 %v2547, %v2548
        %v2550 = vsel %vm2304, %v2083, -inf
        %v2551 = vrot.slane %v2550, 4
        %v2552 = vmax.f32 %v2550, %v2551
        %v2553 = vrot.slane %v2552, 2
        %v2554 = vmax.f32 %v2552, %v2553
        %v2555 = vrot.slane %v2554, 1
        %v2556 = vmax.f32 %v2554, %v2555
        %v2557 = vsel %vm2304, %v2084, -inf
        %v2558 = vrot.slane %v2557, 4
        %v2559 = vmax.f32 %v2557, %v2558
        %v2560 = vrot.slane %v2559, 2
        %v2561 = vmax.f32 %v2559, %v2560
        %v2562 = vrot.slane %v2561, 1
        %v2563 = vmax.f32 %v2561, %v2562
        %v2564 = vsel %vm2304, %v2085, -inf
        %v2565 = vrot.slane %v2564, 4
        %v2566 = vmax.f32 %v2564, %v2565
        %v2567 = vrot.slane %v2566, 2
        %v2568 = vmax.f32 %v2566, %v2567
        %v2569 = vrot.slane %v2568, 1
        %v2570 = vmax.f32 %v2568, %v2569
        %v2571 = vsel %vm2304, %v2086, -inf
        %v2572 = vrot.slane %v2571, 4
        %v2573 = vmax.f32 %v2571, %v2572
        %v2574 = vrot.slane %v2573, 2
        %v2575 = vmax.f32 %v2573, %v2574
        %v2576 = vrot.slane %v2575, 1
        %v2577 = vmax.f32 %v2575, %v2576
        %v2578 = vsel %vm2304, %v2087, -inf
        %v2579 = vrot.slane %v2578, 4
        %v2580 = vmax.f32 %v2578, %v2579
        %v2581 = vrot.slane %v2580, 2
        %v2582 = vmax.f32 %v2580, %v2581
        %v2583 = vrot.slane %v2582, 1
        %v2584 = vmax.f32 %v2582, %v2583
        %v2585 = vsel %vm2304, %v2088, -inf
        %v2586 = vrot.slane %v2585, 4
        %v2587 = vmax.f32 %v2585, %v2586
        %v2588 = vrot.slane %v2587, 2
        %v2589 = vmax.f32 %v2587, %v2588
        %v2590 = vrot.slane %v2589, 1
        %v2591 = vmax.f32 %v2589, %v2590
        %v2592 = vsel %vm2304, %v2089, -inf
        %v2593 = vrot.slane %v2592, 4
        %v2594 = vmax.f32 %v2592, %v2593
        %v2595 = vrot.slane %v2594, 2
        %v2596 = vmax.f32 %v2594, %v2595
        %v2597 = vrot.slane %v2596, 1
        %v2598 = vmax.f32 %v2596, %v2597
        %v2599 = vsel %vm2304, %v2090, -inf
        %v2600 = vrot.slane %v2599, 4
        %v2601 = vmax.f32 %v2599, %v2600
        %v2602 = vrot.slane %v2601, 2
        %v2603 = vmax.f32 %v2601, %v2602
        %v2604 = vrot.slane %v2603, 1
        %v2605 = vmax.f32 %v2603, %v2604
        %v2606 = vsel %vm2304, %v2091, -inf
        %v2607 = vrot.slane %v2606, 4
        %v2608 = vmax.f32 %v2606, %v2607
        %v2609 = vrot.slane %v2608, 2
        %v2610 = vmax.f32 %v2608, %v2609
        %v2611 = vrot.slane %v2610, 1
        %v2612 = vmax.f32 %v2610, %v2611
        %v2613 = vsel %vm2304, %v2092, -inf
        %v2614 = vrot.slane %v2613, 4
        %v2615 = vmax.f32 %v2613, %v2614
        %v2616 = vrot.slane %v2615, 2
        %v2617 = vmax.f32 %v2615, %v2616
        %v2618 = vrot.slane %v2617, 1
        %v2619 = vmax.f32 %v2617, %v2618
        %v2620 = vsel %vm2304, %v2093, -inf
        %v2621 = vrot.slane %v2620, 4
        %v2622 = vmax.f32 %v2620, %v2621
        %v2623 = vrot.slane %v2622, 2
        %v2624 = vmax.f32 %v2622, %v2623
        %v2625 = vrot.slane %v2624, 1
        %v2626 = vmax.f32 %v2624, %v2625
        %v2627 = vsel %vm2304, %v2094, -inf
        %v2628 = vrot.slane %v2627, 4
        %v2629 = vmax.f32 %v2627, %v2628
        %v2630 = vrot.slane %v2629, 2
        %v2631 = vmax.f32 %v2629, %v2630
        %v2632 = vrot.slane %v2631, 1
        %v2633 = vmax.f32 %v2631, %v2632
        %v2634 = vsel %vm2304, %v2095, -inf
        %v2635 = vrot.slane %v2634, 4
        %v2636 = vmax.f32 %v2634, %v2635
        %v2637 = vrot.slane %v2636, 2
        %v2638 = vmax.f32 %v2636, %v2637
        %v2639 = vrot.slane %v2638, 1
        %v2640 = vmax.f32 %v2638, %v2639
        %v2641 = vsel %vm2304, %v2096, -inf
        %v2642 = vrot.slane %v2641, 4
        %v2643 = vmax.f32 %v2641, %v2642
        %v2644 = vrot.slane %v2643, 2
        %v2645 = vmax.f32 %v2643, %v2644
        %v2646 = vrot.slane %v2645, 1
        %v2647 = vmax.f32 %v2645, %v2646
        %v2648 = vsel %vm2304, %v2097, -inf
        %v2649 = vrot.slane %v2648, 4
        %v2650 = vmax.f32 %v2648, %v2649
        %v2651 = vrot.slane %v2650, 2
        %v2652 = vmax.f32 %v2650, %v2651
        %v2653 = vrot.slane %v2652, 1
        %v2654 = vmax.f32 %v2652, %v2653
        %v2655 = vsel %vm2304, %v2098, -inf
        %v2656 = vrot.slane %v2655, 4
        %v2657 = vmax.f32 %v2655, %v2656
        %v2658 = vrot.slane %v2657, 2
        %v2659 = vmax.f32 %v2657, %v2658
        %v2660 = vrot.slane %v2659, 1
        %v2661 = vmax.f32 %v2659, %v2660
        %v2662 = vsel %vm2304, %v2099, -inf
        %v2663 = vrot.slane %v2662, 4
        %v2664 = vmax.f32 %v2662, %v2663
        %v2665 = vrot.slane %v2664, 2
        %v2666 = vmax.f32 %v2664, %v2665
        %v2667 = vrot.slane %v2666, 1
        %v2668 = vmax.f32 %v2666, %v2667
        %v2669 = vsel %vm2304, %v2100, -inf
        %v2670 = vrot.slane %v2669, 4
        %v2671 = vmax.f32 %v2669, %v2670
        %v2672 = vrot.slane %v2671, 2
        %v2673 = vmax.f32 %v2671, %v2672
        %v2674 = vrot.slane %v2673, 1
        %v2675 = vmax.f32 %v2673, %v2674
        %v2676 = vsel %vm2304, %v2101, -inf
        %v2677 = vrot.slane %v2676, 4
        %v2678 = vmax.f32 %v2676, %v2677
        %v2679 = vrot.slane %v2678, 2
        %v2680 = vmax.f32 %v2678, %v2679
        %v2681 = vrot.slane %v2680, 1
        %v2682 = vmax.f32 %v2680, %v2681
        %v2683 = vsel %vm2304, %v2102, -inf
        %v2684 = vrot.slane %v2683, 4
        %v2685 = vmax.f32 %v2683, %v2684
        %v2686 = vrot.slane %v2685, 2
        %v2687 = vmax.f32 %v2685, %v2686
        %v2688 = vrot.slane %v2687, 1
        %v2689 = vmax.f32 %v2687, %v2688
        %v2690 = vsel %vm2304, %v2103, -inf
        %v2691 = vrot.slane %v2690, 4
        %v2692 = vmax.f32 %v2690, %v2691
        %v2693 = vrot.slane %v2692, 2
        %v2694 = vmax.f32 %v2692, %v2693
        %v2695 = vrot.slane %v2694, 1
        %v2696 = vmax.f32 %v2694, %v2695
        %v2697 = vsel %vm2304, %v2104, -inf
        %v2698 = vrot.slane %v2697, 4
        %v2699 = vmax.f32 %v2697, %v2698
        %v2700 = vrot.slane %v2699, 2
        %v2701 = vmax.f32 %v2699, %v2700
        %v2702 = vrot.slane %v2701, 1
        %v2703 = vmax.f32 %v2701, %v2702
        %v2704 = vsel %vm2304, %v2105, -inf
        %v2705 = vrot.slane %v2704, 4
        %v2706 = vmax.f32 %v2704, %v2705
        %v2707 = vrot.slane %v2706, 2
        %v2708 = vmax.f32 %v2706, %v2707
        %v2709 = vrot.slane %v2708, 1
        %v2710 = vmax.f32 %v2708, %v2709
        %v2711 = vsel %vm2304, %v2106, -inf
        %v2712 = vrot.slane %v2711, 4
        %v2713 = vmax.f32 %v2711, %v2712
        %v2714 = vrot.slane %v2713, 2
        %v2715 = vmax.f32 %v2713, %v2714
        %v2716 = vrot.slane %v2715, 1
        %v2717 = vmax.f32 %v2715, %v2716
        %v2718 = vsel %vm2304, %v2107, -inf
        %v2719 = vrot.slane %v2718, 4
        %v2720 = vmax.f32 %v2718, %v2719
        %v2721 = vrot.slane %v2720, 2
        %v2722 = vmax.f32 %v2720, %v2721
        %v2723 = vrot.slane %v2722, 1
        %v2724 = vmax.f32 %v2722, %v2723
        %v2725 = vsel %vm2304, %v2108, -inf
        %v2726 = vrot.slane %v2725, 4
        %v2727 = vmax.f32 %v2725, %v2726
        %v2728 = vrot.slane %v2727, 2
        %v2729 = vmax.f32 %v2727, %v2728
        %v2730 = vrot.slane %v2729, 1
        %v2731 = vmax.f32 %v2729, %v2730
        %v2732 = vsel %vm2304, %v2109, -inf
        %v2733 = vrot.slane %v2732, 4
        %v2734 = vmax.f32 %v2732, %v2733
        %v2735 = vrot.slane %v2734, 2
        %v2736 = vmax.f32 %v2734, %v2735
        %v2737 = vrot.slane %v2736, 1
        %v2738 = vmax.f32 %v2736, %v2737
        %v2739 = vsel %vm2304, %v2110, -inf
        %v2740 = vrot.slane %v2739, 4
        %v2741 = vmax.f32 %v2739, %v2740
        %v2742 = vrot.slane %v2741, 2
        %v2743 = vmax.f32 %v2741, %v2742
        %v2744 = vrot.slane %v2743, 1
        %v2745 = vmax.f32 %v2743, %v2744
        %v2746 = vsel %vm2304, %v2111, -inf
        %v2747 = vrot.slane %v2746, 4
        %v2748 = vmax.f32 %v2746, %v2747
        %v2749 = vrot.slane %v2748, 2
        %v2750 = vmax.f32 %v2748, %v2749
        %v2751 = vrot.slane %v2750, 1
        %v2752 = vmax.f32 %v2750, %v2751
        %v2753 = vsel %vm2304, %v2112, -inf
        %v2754 = vrot.slane %v2753, 4
        %v2755 = vmax.f32 %v2753, %v2754
        %v2756 = vrot.slane %v2755, 2
        %v2757 = vmax.f32 %v2755, %v2756
        %v2758 = vrot.slane %v2757, 1
        %v2759 = vmax.f32 %v2757, %v2758
        %v2760 = vsel %vm2304, %v2113, -inf
        %v2761 = vrot.slane %v2760, 4
        %v2762 = vmax.f32 %v2760, %v2761
        %v2763 = vrot.slane %v2762, 2
        %v2764 = vmax.f32 %v2762, %v2763
        %v2765 = vrot.slane %v2764, 1
        %v2766 = vmax.f32 %v2764, %v2765
        %v2767 = vsel %vm2304, %v2114, -inf
        %v2768 = vrot.slane %v2767, 4
        %v2769 = vmax.f32 %v2767, %v2768
        %v2770 = vrot.slane %v2769, 2
        %v2771 = vmax.f32 %v2769, %v2770
        %v2772 = vrot.slane %v2771, 1
        %v2773 = vmax.f32 %v2771, %v2772
        %v2774 = vsel %vm2304, %v2115, -inf
        %v2775 = vrot.slane %v2774, 4
        %v2776 = vmax.f32 %v2774, %v2775
        %v2777 = vrot.slane %v2776, 2
        %v2778 = vmax.f32 %v2776, %v2777
        %v2779 = vrot.slane %v2778, 1
        %v2780 = vmax.f32 %v2778, %v2779
        %v2781 = vsel %vm2304, %v2116, -inf
        %v2782 = vrot.slane %v2781, 4
        %v2783 = vmax.f32 %v2781, %v2782
        %v2784 = vrot.slane %v2783, 2
        %v2785 = vmax.f32 %v2783, %v2784
        %v2786 = vrot.slane %v2785, 1
        %v2787 = vmax.f32 %v2785, %v2786
        %v2788 = vsel %vm2304, %v2117, -inf
        %v2789 = vrot.slane %v2788, 4
        %v2790 = vmax.f32 %v2788, %v2789
        %v2791 = vrot.slane %v2790, 2
        %v2792 = vmax.f32 %v2790, %v2791
        %v2793 = vrot.slane %v2792, 1
        %v2794 = vmax.f32 %v2792, %v2793
        %v2795 = vsel %vm2304, %v2118, -inf
        %v2796 = vrot.slane %v2795, 4
        %v2797 = vmax.f32 %v2795, %v2796
        %v2798 = vrot.slane %v2797, 2
        %v2799 = vmax.f32 %v2797, %v2798
        %v2800 = vrot.slane %v2799, 1
        %v2801 = vmax.f32 %v2799, %v2800
        %v2802 = vsel %vm2304, %v2119, -inf
        %v2803 = vrot.slane %v2802, 4
        %v2804 = vmax.f32 %v2802, %v2803
        %v2805 = vrot.slane %v2804, 2
        %v2806 = vmax.f32 %v2804, %v2805
        %v2807 = vrot.slane %v2806, 1
        %v2808 = vmax.f32 %v2806, %v2807
        %v2809 = vsel %vm2304, %v2120, -inf
        %v2810 = vrot.slane %v2809, 4
        %v2811 = vmax.f32 %v2809, %v2810
        %v2812 = vrot.slane %v2811, 2
        %v2813 = vmax.f32 %v2811, %v2812
        %v2814 = vrot.slane %v2813, 1
        %v2815 = vmax.f32 %v2813, %v2814
        %v2816 = vsel %vm2304, %v2121, -inf
        %v2817 = vrot.slane %v2816, 4
        %v2818 = vmax.f32 %v2816, %v2817
        %v2819 = vrot.slane %v2818, 2
        %v2820 = vmax.f32 %v2818, %v2819
        %v2821 = vrot.slane %v2820, 1
        %v2822 = vmax.f32 %v2820, %v2821
        %v2823 = vsel %vm2304, %v2122, -inf
        %v2824 = vrot.slane %v2823, 4
        %v2825 = vmax.f32 %v2823, %v2824
        %v2826 = vrot.slane %v2825, 2
        %v2827 = vmax.f32 %v2825, %v2826
        %v2828 = vrot.slane %v2827, 1
        %v2829 = vmax.f32 %v2827, %v2828
        %v2830 = vsel %vm2304, %v2123, -inf
        %v2831 = vrot.slane %v2830, 4
        %v2832 = vmax.f32 %v2830, %v2831
        %v2833 = vrot.slane %v2832, 2
        %v2834 = vmax.f32 %v2832, %v2833
        %v2835 = vrot.slane %v2834, 1
        %v2836 = vmax.f32 %v2834, %v2835
        %v2837 = vsel %vm2304, %v2124, -inf
        %v2838 = vrot.slane %v2837, 4
        %v2839 = vmax.f32 %v2837, %v2838
        %v2840 = vrot.slane %v2839, 2
        %v2841 = vmax.f32 %v2839, %v2840
        %v2842 = vrot.slane %v2841, 1
        %v2843 = vmax.f32 %v2841, %v2842
        %v2844 = vsel %vm2304, %v2125, -inf
        %v2845 = vrot.slane %v2844, 4
        %v2846 = vmax.f32 %v2844, %v2845
        %v2847 = vrot.slane %v2846, 2
        %v2848 = vmax.f32 %v2846, %v2847
        %v2849 = vrot.slane %v2848, 1
        %v2850 = vmax.f32 %v2848, %v2849
        %v2851 = vsel %vm2304, %v2126, -inf
        %v2852 = vrot.slane %v2851, 4
        %v2853 = vmax.f32 %v2851, %v2852
        %v2854 = vrot.slane %v2853, 2
        %v2855 = vmax.f32 %v2853, %v2854
        %v2856 = vrot.slane %v2855, 1
        %v2857 = vmax.f32 %v2855, %v2856
        %v2858 = vsel %vm2304, %v2127, -inf
        %v2859 = vrot.slane %v2858, 4
        %v2860 = vmax.f32 %v2858, %v2859
        %v2861 = vrot.slane %v2860, 2
        %v2862 = vmax.f32 %v2860, %v2861
        %v2863 = vrot.slane %v2862, 1
        %v2864 = vmax.f32 %v2862, %v2863
        %v2865 = vsel %vm2304, %v2128, -inf
        %v2866 = vrot.slane %v2865, 4
        %v2867 = vmax.f32 %v2865, %v2866
        %v2868 = vrot.slane %v2867, 2
        %v2869 = vmax.f32 %v2867, %v2868
        %v2870 = vrot.slane %v2869, 1
        %v2871 = vmax.f32 %v2869, %v2870
        %v2872 = vsel %vm2304, %v2129, -inf
        %v2873 = vrot.slane %v2872, 4
        %v2874 = vmax.f32 %v2872, %v2873
        %v2875 = vrot.slane %v2874, 2
        %v2876 = vmax.f32 %v2874, %v2875
        %v2877 = vrot.slane %v2876, 1
        %v2878 = vmax.f32 %v2876, %v2877
        %v2879 = vsel %vm2304, %v2130, -inf
        %v2880 = vrot.slane %v2879, 4
        %v2881 = vmax.f32 %v2879, %v2880
        %v2882 = vrot.slane %v2881, 2
        %v2883 = vmax.f32 %v2881, %v2882
        %v2884 = vrot.slane %v2883, 1
        %v2885 = vmax.f32 %v2883, %v2884
        %v2886 = vsel %vm2304, %v2131, -inf
        %v2887 = vrot.slane %v2886, 4
        %v2888 = vmax.f32 %v2886, %v2887
        %v2889 = vrot.slane %v2888, 2
        %v2890 = vmax.f32 %v2888, %v2889
        %v2891 = vrot.slane %v2890, 1
        %v2892 = vmax.f32 %v2890, %v2891
        %v2893 = vsel %vm2304, %v2132, -inf
        %v2894 = vrot.slane %v2893, 4
        %v2895 = vmax.f32 %v2893, %v2894
        %v2896 = vrot.slane %v2895, 2
        %v2897 = vmax.f32 %v2895, %v2896
        %v2898 = vrot.slane %v2897, 1
        %v2899 = vmax.f32 %v2897, %v2898
        %v2900 = vsel %vm2304, %v2133, -inf
        %v2901 = vrot.slane %v2900, 4
        %v2902 = vmax.f32 %v2900, %v2901
        %v2903 = vrot.slane %v2902, 2
        %v2904 = vmax.f32 %v2902, %v2903
        %v2905 = vrot.slane %v2904, 1
        %v2906 = vmax.f32 %v2904, %v2905
        %v2907 = vsel %vm2304, %v2134, -inf
        %v2908 = vrot.slane %v2907, 4
        %v2909 = vmax.f32 %v2907, %v2908
        %v2910 = vrot.slane %v2909, 2
        %v2911 = vmax.f32 %v2909, %v2910
        %v2912 = vrot.slane %v2911, 1
        %v2913 = vmax.f32 %v2911, %v2912
        %v2914 = vsel %vm2304, %v2135, -inf
        %v2915 = vrot.slane %v2914, 4
        %v2916 = vmax.f32 %v2914, %v2915
        %v2917 = vrot.slane %v2916, 2
        %v2918 = vmax.f32 %v2916, %v2917
        %v2919 = vrot.slane %v2918, 1
        %v2920 = vmax.f32 %v2918, %v2919
        %v2921 = vsel %vm2304, %v2136, -inf
        %v2922 = vrot.slane %v2921, 4
        %v2923 = vmax.f32 %v2921, %v2922
        %v2924 = vrot.slane %v2923, 2
        %v2925 = vmax.f32 %v2923, %v2924
        %v2926 = vrot.slane %v2925, 1
        %v2927 = vmax.f32 %v2925, %v2926
        %v2928 = vsel %vm2304, %v2137, -inf
        %v2929 = vrot.slane %v2928, 4
        %v2930 = vmax.f32 %v2928, %v2929
        %v2931 = vrot.slane %v2930, 2
        %v2932 = vmax.f32 %v2930, %v2931
        %v2933 = vrot.slane %v2932, 1
        %v2934 = vmax.f32 %v2932, %v2933
        %v2935 = vsel %vm2304, %v2138, -inf
        %v2936 = vrot.slane %v2935, 4
        %v2937 = vmax.f32 %v2935, %v2936
        %v2938 = vrot.slane %v2937, 2
        %v2939 = vmax.f32 %v2937, %v2938
        %v2940 = vrot.slane %v2939, 1
        %v2941 = vmax.f32 %v2939, %v2940
        %v2942 = vsel %vm2304, %v2139, -inf
        %v2943 = vrot.slane %v2942, 4
        %v2944 = vmax.f32 %v2942, %v2943
        %v2945 = vrot.slane %v2944, 2
        %v2946 = vmax.f32 %v2944, %v2945
        %v2947 = vrot.slane %v2946, 1
        %v2948 = vmax.f32 %v2946, %v2947
        %v2949 = vsel %vm2304, %v2140, -inf
        %v2950 = vrot.slane %v2949, 4
        %v2951 = vmax.f32 %v2949, %v2950
        %v2952 = vrot.slane %v2951, 2
        %v2953 = vmax.f32 %v2951, %v2952
        %v2954 = vrot.slane %v2953, 1
        %v2955 = vmax.f32 %v2953, %v2954
        %v2956 = vsel %vm2304, %v2141, -inf
        %v2957 = vrot.slane %v2956, 4
        %v2958 = vmax.f32 %v2956, %v2957
        %v2959 = vrot.slane %v2958, 2
        %v2960 = vmax.f32 %v2958, %v2959
        %v2961 = vrot.slane %v2960, 1
        %v2962 = vmax.f32 %v2960, %v2961
        %v2963 = vsel %vm2304, %v2142, -inf
        %v2964 = vrot.slane %v2963, 4
        %v2965 = vmax.f32 %v2963, %v2964
        %v2966 = vrot.slane %v2965, 2
        %v2967 = vmax.f32 %v2965, %v2966
        %v2968 = vrot.slane %v2967, 1
        %v2969 = vmax.f32 %v2967, %v2968
        %v2970 = vsel %vm2304, %v2143, -inf
        %v2971 = vrot.slane %v2970, 4
        %v2972 = vmax.f32 %v2970, %v2971
        %v2973 = vrot.slane %v2972, 2
        %v2974 = vmax.f32 %v2972, %v2973
        %v2975 = vrot.slane %v2974, 1
        %v2976 = vmax.f32 %v2974, %v2975
        %v2977 = vsel %vm2304, %v2144, -inf
        %v2978 = vrot.slane %v2977, 4
        %v2979 = vmax.f32 %v2977, %v2978
        %v2980 = vrot.slane %v2979, 2
        %v2981 = vmax.f32 %v2979, %v2980
        %v2982 = vrot.slane %v2981, 1
        %v2983 = vmax.f32 %v2981, %v2982
        %v2984 = vsel %vm2304, %v2145, -inf
        %v2985 = vrot.slane %v2984, 4
        %v2986 = vmax.f32 %v2984, %v2985
        %v2987 = vrot.slane %v2986, 2
        %v2988 = vmax.f32 %v2986, %v2987
        %v2989 = vrot.slane %v2988, 1
        %v2990 = vmax.f32 %v2988, %v2989
        %v2991 = vsel %vm2304, %v2146, -inf
        %v2992 = vrot.slane %v2991, 4
        %v2993 = vmax.f32 %v2991, %v2992
        %v2994 = vrot.slane %v2993, 2
        %v2995 = vmax.f32 %v2993, %v2994
        %v2996 = vrot.slane %v2995, 1
        %v2997 = vmax.f32 %v2995, %v2996
        %v2998 = vsel %vm2304, %v2147, -inf
        %v2999 = vrot.slane %v2998, 4
        %v3000 = vmax.f32 %v2998, %v2999
        %v3001 = vrot.slane %v3000, 2
        %v3002 = vmax.f32 %v3000, %v3001
        %v3003 = vrot.slane %v3002, 1
        %v3004 = vmax.f32 %v3002, %v3003
        %v3005 = vsel %vm2304, %v2148, -inf
        %v3006 = vrot.slane %v3005, 4
        %v3007 = vmax.f32 %v3005, %v3006
        %v3008 = vrot.slane %v3007, 2
        %v3009 = vmax.f32 %v3007, %v3008
        %v3010 = vrot.slane %v3009, 1
        %v3011 = vmax.f32 %v3009, %v3010
        %v3012 = vsel %vm2304, %v2149, -inf
        %v3013 = vrot.slane %v3012, 4
        %v3014 = vmax.f32 %v3012, %v3013
        %v3015 = vrot.slane %v3014, 2
        %v3016 = vmax.f32 %v3014, %v3015
        %v3017 = vrot.slane %v3016, 1
        %v3018 = vmax.f32 %v3016, %v3017
        %v3019 = vsel %vm2304, %v2150, -inf
        %v3020 = vrot.slane %v3019, 4
        %v3021 = vmax.f32 %v3019, %v3020
        %v3022 = vrot.slane %v3021, 2
        %v3023 = vmax.f32 %v3021, %v3022
        %v3024 = vrot.slane %v3023, 1
        %v3025 = vmax.f32 %v3023, %v3024
        %v3026 = vsel %vm2304, %v2151, -inf
        %v3027 = vrot.slane %v3026, 4
        %v3028 = vmax.f32 %v3026, %v3027
        %v3029 = vrot.slane %v3028, 2
        %v3030 = vmax.f32 %v3028, %v3029
        %v3031 = vrot.slane %v3030, 1
        %v3032 = vmax.f32 %v3030, %v3031
        %v3033 = vsel %vm2304, %v2152, -inf
        %v3034 = vrot.slane %v3033, 4
        %v3035 = vmax.f32 %v3033, %v3034
        %v3036 = vrot.slane %v3035, 2
        %v3037 = vmax.f32 %v3035, %v3036
        %v3038 = vrot.slane %v3037, 1
        %v3039 = vmax.f32 %v3037, %v3038
        %v3040 = vsel %vm2304, %v2153, -inf
        %v3041 = vrot.slane %v3040, 4
        %v3042 = vmax.f32 %v3040, %v3041
        %v3043 = vrot.slane %v3042, 2
        %v3044 = vmax.f32 %v3042, %v3043
        %v3045 = vrot.slane %v3044, 1
        %v3046 = vmax.f32 %v3044, %v3045
        %v3047 = vsel %vm2304, %v2154, -inf
        %v3048 = vrot.slane %v3047, 4
        %v3049 = vmax.f32 %v3047, %v3048
        %v3050 = vrot.slane %v3049, 2
        %v3051 = vmax.f32 %v3049, %v3050
        %v3052 = vrot.slane %v3051, 1
        %v3053 = vmax.f32 %v3051, %v3052
        %v3054 = vsel %vm2304, %v2155, -inf
        %v3055 = vrot.slane %v3054, 4
        %v3056 = vmax.f32 %v3054, %v3055
        %v3057 = vrot.slane %v3056, 2
        %v3058 = vmax.f32 %v3056, %v3057
        %v3059 = vrot.slane %v3058, 1
        %v3060 = vmax.f32 %v3058, %v3059
        %v3061 = vsel %vm2304, %v2156, -inf
        %v3062 = vrot.slane %v3061, 4
        %v3063 = vmax.f32 %v3061, %v3062
        %v3064 = vrot.slane %v3063, 2
        %v3065 = vmax.f32 %v3063, %v3064
        %v3066 = vrot.slane %v3065, 1
        %v3067 = vmax.f32 %v3065, %v3066
        %v3068 = vsel %vm2304, %v2157, -inf
        %v3069 = vrot.slane %v3068, 4
        %v3070 = vmax.f32 %v3068, %v3069
        %v3071 = vrot.slane %v3070, 2
        %v3072 = vmax.f32 %v3070, %v3071
        %v3073 = vrot.slane %v3072, 1
        %v3074 = vmax.f32 %v3072, %v3073
        %v3075 = vsel %vm2304, %v2158, -inf
        %v3076 = vrot.slane %v3075, 4
        %v3077 = vmax.f32 %v3075, %v3076
        %v3078 = vrot.slane %v3077, 2
        %v3079 = vmax.f32 %v3077, %v3078
        %v3080 = vrot.slane %v3079, 1
        %v3081 = vmax.f32 %v3079, %v3080
        %v3082 = vsel %vm2304, %v2159, -inf
        %v3083 = vrot.slane %v3082, 4
        %v3084 = vmax.f32 %v3082, %v3083
        %v3085 = vrot.slane %v3084, 2
        %v3086 = vmax.f32 %v3084, %v3085
        %v3087 = vrot.slane %v3086, 1
        %v3088 = vmax.f32 %v3086, %v3087
        %v3089 = vsel %vm2304, %v2160, -inf
        %v3090 = vrot.slane %v3089, 4
        %v3091 = vmax.f32 %v3089, %v3090
        %v3092 = vrot.slane %v3091, 2
        %v3093 = vmax.f32 %v3091, %v3092
        %v3094 = vrot.slane %v3093, 1
        %v3095 = vmax.f32 %v3093, %v3094
        %v3096 = vsel %vm2304, %v2161, -inf
        %v3097 = vrot.slane %v3096, 4
        %v3098 = vmax.f32 %v3096, %v3097
        %v3099 = vrot.slane %v3098, 2
        %v3100 = vmax.f32 %v3098, %v3099
        %v3101 = vrot.slane %v3100, 1
        %v3102 = vmax.f32 %v3100, %v3101
        %v3103 = vsel %vm2304, %v2162, -inf
        %v3104 = vrot.slane %v3103, 4
        %v3105 = vmax.f32 %v3103, %v3104
        %v3106 = vrot.slane %v3105, 2
        %v3107 = vmax.f32 %v3105, %v3106
        %v3108 = vrot.slane %v3107, 1
        %v3109 = vmax.f32 %v3107, %v3108
        %v3110 = vsel %vm2304, %v2163, -inf
        %v3111 = vrot.slane %v3110, 4
        %v3112 = vmax.f32 %v3110, %v3111
        %v3113 = vrot.slane %v3112, 2
        %v3114 = vmax.f32 %v3112, %v3113
        %v3115 = vrot.slane %v3114, 1
        %v3116 = vmax.f32 %v3114, %v3115
        %v3117 = vsel %vm2304, %v2164, -inf
        %v3118 = vrot.slane %v3117, 4
        %v3119 = vmax.f32 %v3117, %v3118
        %v3120 = vrot.slane %v3119, 2
        %v3121 = vmax.f32 %v3119, %v3120
        %v3122 = vrot.slane %v3121, 1
        %v3123 = vmax.f32 %v3121, %v3122
        %v3124 = vsel %vm2304, %v2165, -inf
        %v3125 = vrot.slane %v3124, 4
        %v3126 = vmax.f32 %v3124, %v3125
        %v3127 = vrot.slane %v3126, 2
        %v3128 = vmax.f32 %v3126, %v3127
        %v3129 = vrot.slane %v3128, 1
        %v3130 = vmax.f32 %v3128, %v3129
        %v3131 = vsel %vm2304, %v2166, -inf
        %v3132 = vrot.slane %v3131, 4
        %v3133 = vmax.f32 %v3131, %v3132
        %v3134 = vrot.slane %v3133, 2
        %v3135 = vmax.f32 %v3133, %v3134
        %v3136 = vrot.slane %v3135, 1
        %v3137 = vmax.f32 %v3135, %v3136
        %v3138 = vsel %vm2304, %v2167, -inf
        %v3139 = vrot.slane %v3138, 4
        %v3140 = vmax.f32 %v3138, %v3139
        %v3141 = vrot.slane %v3140, 2
        %v3142 = vmax.f32 %v3140, %v3141
        %v3143 = vrot.slane %v3142, 1
        %v3144 = vmax.f32 %v3142, %v3143
        %v3145 = vsel %vm2304, %v2168, -inf
        %v3146 = vrot.slane %v3145, 4
        %v3147 = vmax.f32 %v3145, %v3146
        %v3148 = vrot.slane %v3147, 2
        %v3149 = vmax.f32 %v3147, %v3148
        %v3150 = vrot.slane %v3149, 1
        %v3151 = vmax.f32 %v3149, %v3150
        %v3152 = vsel %vm2304, %v2169, -inf
        %v3153 = vrot.slane %v3152, 4
        %v3154 = vmax.f32 %v3152, %v3153
        %v3155 = vrot.slane %v3154, 2
        %v3156 = vmax.f32 %v3154, %v3155
        %v3157 = vrot.slane %v3156, 1
        %v3158 = vmax.f32 %v3156, %v3157
        %v3159 = vsel %vm2304, %v2170, -inf
        %v3160 = vrot.slane %v3159, 4
        %v3161 = vmax.f32 %v3159, %v3160
        %v3162 = vrot.slane %v3161, 2
        %v3163 = vmax.f32 %v3161, %v3162
        %v3164 = vrot.slane %v3163, 1
        %v3165 = vmax.f32 %v3163, %v3164
        %v3166 = vsel %vm2304, %v2171, -inf
        %v3167 = vrot.slane %v3166, 4
        %v3168 = vmax.f32 %v3166, %v3167
        %v3169 = vrot.slane %v3168, 2
        %v3170 = vmax.f32 %v3168, %v3169
        %v3171 = vrot.slane %v3170, 1
        %v3172 = vmax.f32 %v3170, %v3171
        %v3173 = vsel %vm2304, %v2172, -inf
        %v3174 = vrot.slane %v3173, 4
        %v3175 = vmax.f32 %v3173, %v3174
        %v3176 = vrot.slane %v3175, 2
        %v3177 = vmax.f32 %v3175, %v3176
        %v3178 = vrot.slane %v3177, 1
        %v3179 = vmax.f32 %v3177, %v3178
        %v3180 = vsel %vm2304, %v2173, -inf
        %v3181 = vrot.slane %v3180, 4
        %v3182 = vmax.f32 %v3180, %v3181
        %v3183 = vrot.slane %v3182, 2
        %v3184 = vmax.f32 %v3182, %v3183
        %v3185 = vrot.slane %v3184, 1
        %v3186 = vmax.f32 %v3184, %v3185
        %v3187 = vsel %vm2304, %v2174, -inf
        %v3188 = vrot.slane %v3187, 4
        %v3189 = vmax.f32 %v3187, %v3188
        %v3190 = vrot.slane %v3189, 2
        %v3191 = vmax.f32 %v3189, %v3190
        %v3192 = vrot.slane %v3191, 1
        %v3193 = vmax.f32 %v3191, %v3192
        %v3194 = vsel %vm2304, %v2175, -inf
        %v3195 = vrot.slane %v3194, 4
        %v3196 = vmax.f32 %v3194, %v3195
        %v3197 = vrot.slane %v3196, 2
        %v3198 = vmax.f32 %v3196, %v3197
        %v3199 = vrot.slane %v3198, 1
        %v3200 = vmax.f32 %v3198, %v3199
        %v3201 = vpack.c.bf16 %v2177, %v2176
        %v3202 = vpack.c.bf16 %v2179, %v2178
        %v3203 = vpack.c.bf16 %v2181, %v2180
        %v3204 = vpack.c.bf16 %v2183, %v2182
        %v3205 = vpack.c.bf16 %v2185, %v2184
        %v3206 = vpack.c.bf16 %v2187, %v2186
        %v3207 = vpack.c.bf16 %v2189, %v2188
        %v3208 = vpack.c.bf16 %v2191, %v2190
        %v3209 = vpack.c.bf16 %v2193, %v2192
        %v3210 = vpack.c.bf16 %v2195, %v2194
        %v3211 = vpack.c.bf16 %v2197, %v2196
        %v3212 = vpack.c.bf16 %v2199, %v2198
        %v3213 = vpack.c.bf16 %v2201, %v2200
        %v3214 = vpack.c.bf16 %v2203, %v2202
        %v3215 = vpack.c.bf16 %v2205, %v2204
        %v3216 = vpack.c.bf16 %v2207, %v2206
        %v3217 = vpack.c.bf16 %v2209, %v2208
        %v3218 = vpack.c.bf16 %v2211, %v2210
        %v3219 = vpack.c.bf16 %v2213, %v2212
        %v3220 = vpack.c.bf16 %v2215, %v2214
        %v3221 = vpack.c.bf16 %v2217, %v2216
        %v3222 = vpack.c.bf16 %v2219, %v2218
        %v3223 = vpack.c.bf16 %v2221, %v2220
        %v3224 = vpack.c.bf16 %v2223, %v2222
        %v3225 = vpack.c.bf16 %v2225, %v2224
        %v3226 = vpack.c.bf16 %v2227, %v2226
        %v3227 = vpack.c.bf16 %v2229, %v2228
        %v3228 = vpack.c.bf16 %v2231, %v2230
        %v3229 = vpack.c.bf16 %v2233, %v2232
        %v3230 = vpack.c.bf16 %v2235, %v2234
        %v3231 = vpack.c.bf16 %v2237, %v2236
        %v3232 = vpack.c.bf16 %v2239, %v2238
        %v3233 = vpack.c.bf16 %v2241, %v2240
        %v3234 = vpack.c.bf16 %v2243, %v2242
        %v3235 = vpack.c.bf16 %v2245, %v2244
        %v3236 = vpack.c.bf16 %v2247, %v2246
        %v3237 = vpack.c.bf16 %v2249, %v2248
        %v3238 = vpack.c.bf16 %v2251, %v2250
        %v3239 = vpack.c.bf16 %v2253, %v2252
        %v3240 = vpack.c.bf16 %v2255, %v2254
        %v3241 = vpack.c.bf16 %v2257, %v2256
        %v3242 = vpack.c.bf16 %v2259, %v2258
        %v3243 = vpack.c.bf16 %v2261, %v2260
        %v3244 = vpack.c.bf16 %v2263, %v2262
        %v3245 = vpack.c.bf16 %v2265, %v2264
        %v3246 = vpack.c.bf16 %v2267, %v2266
        %v3247 = vpack.c.bf16 %v2269, %v2268
        %v3248 = vpack.c.bf16 %v2271, %v2270
        %v3249 = vpack.c.bf16 %v2273, %v2272
        %v3250 = vpack.c.bf16 %v2275, %v2274
        %v3251 = vpack.c.bf16 %v2277, %v2276
        %v3252 = vpack.c.bf16 %v2279, %v2278
        %v3253 = vpack.c.bf16 %v2281, %v2280
        %v3254 = vpack.c.bf16 %v2283, %v2282
        %v3255 = vpack.c.bf16 %v2285, %v2284
        %v3256 = vpack.c.bf16 %v2287, %v2286
        %v3257 = vpack.c.bf16 %v2289, %v2288
        %v3258 = vpack.c.bf16 %v2291, %v2290
        %v3259 = vpack.c.bf16 %v2293, %v2292
        %v3260 = vpack.c.bf16 %v2295, %v2294
        %v3261 = vpack.c.bf16 %v2297, %v2296
        %v3262 = vpack.c.bf16 %v2299, %v2298
        %v3263 = vpack.c.bf16 %v2301, %v2300
        %v3264 = vpack.c.bf16 %v2303, %v2302
        %v3265 = vld [vmem:[%s3] sm:$0xf]
        %v3266 = vld [vmem:[%s3 + $0x4] sm:$0xf]
        %v3267 = vpack.c.bf16 %v2311, %v2311
        %v3268 = vpack.c.bf16 %v2318, %v2318
        %v3269 = vpack.c.bf16 %v2325, %v2325
        %v3270 = vpack.c.bf16 %v2332, %v2332
        %v3271 = vpack.c.bf16 %v2339, %v2339
        %v3272 = vpack.c.bf16 %v2346, %v2346
        %v3273 = vpack.c.bf16 %v2353, %v2353
        %v3274 = vpack.c.bf16 %v2360, %v2360
        %v3275 = vpack.c.bf16 %v2367, %v2367
        %v3276 = vpack.c.bf16 %v2374, %v2374
        %v3277 = vpack.c.bf16 %v2381, %v2381
        %v3278 = vpack.c.bf16 %v2388, %v2388
        %v3279 = vpack.c.bf16 %v2395, %v2395
        %v3280 = vpack.c.bf16 %v2402, %v2402
        %v3281 = vpack.c.bf16 %v2409, %v2409
        %v3282 = vpack.c.bf16 %v2416, %v2416
        %v3283 = vpack.c.bf16 %v2423, %v2423
        %v3284 = vpack.c.bf16 %v2430, %v2430
        %v3285 = vpack.c.bf16 %v2437, %v2437
        %v3286 = vpack.c.bf16 %v2444, %v2444
        %v3287 = vpack.c.bf16 %v2451, %v2451
        %v3288 = vpack.c.bf16 %v2458, %v2458
        %v3289 = vpack.c.bf16 %v2465, %v2465
        %v3290 = vpack.c.bf16 %v2472, %v2472
        %v3291 = vpack.c.bf16 %v2479, %v2479
        %v3292 = vpack.c.bf16 %v2486, %v2486
        %v3293 = vpack.c.bf16 %v2493, %v2493
        %v3294 = vpack.c.bf16 %v2500, %v2500
        %v3295 = vpack.c.bf16 %v2507, %v2507
        %v3296 = vpack.c.bf16 %v2514, %v2514
        %v3297 = vpack.c.bf16 %v2521, %v2521
        %v3298 = vpack.c.bf16 %v2528, %v2528
        %v3299 = vpack.c.bf16 %v2535, %v2535
        %v3300 = vpack.c.bf16 %v2542, %v2542
        %v3301 = vpack.c.bf16 %v2549, %v2549
        %v3302 = vpack.c.bf16 %v2556, %v2556
        %v3303 = vpack.c.bf16 %v2563, %v2563
        %v3304 = vpack.c.bf16 %v2570, %v2570
        %v3305 = vpack.c.bf16 %v2577, %v2577
        %v3306 = vpack.c.bf16 %v2584, %v2584
        %v3307 = vpack.c.bf16 %v2591, %v2591
        %v3308 = vpack.c.bf16 %v2598, %v2598
        %v3309 = vpack.c.bf16 %v2605, %v2605
        %v3310 = vpack.c.bf16 %v2612, %v2612
        %v3311 = vpack.c.bf16 %v2619, %v2619
        %v3312 = vpack.c.bf16 %v2626, %v2626
        %v3313 = vpack.c.bf16 %v2633, %v2633
        %v3314 = vpack.c.bf16 %v2640, %v2640
        %v3315 = vpack.c.bf16 %v2647, %v2647
        %v3316 = vpack.c.bf16 %v2654, %v2654
        %v3317 = vpack.c.bf16 %v2661, %v2661
        %v3318 = vpack.c.bf16 %v2668, %v2668
        %v3319 = vpack.c.bf16 %v2675, %v2675
        %v3320 = vpack.c.bf16 %v2682, %v2682
        %v3321 = vpack.c.bf16 %v2689, %v2689
        %v3322 = vpack.c.bf16 %v2696, %v2696
        %v3323 = vpack.c.bf16 %v2703, %v2703
        %v3324 = vpack.c.bf16 %v2710, %v2710
        %v3325 = vpack.c.bf16 %v2717, %v2717
        %v3326 = vpack.c.bf16 %v2724, %v2724
        %v3327 = vpack.c.bf16 %v2731, %v2731
        %v3328 = vpack.c.bf16 %v2738, %v2738
        %v3329 = vpack.c.bf16 %v2745, %v2745
        %v3330 = vpack.c.bf16 %v2752, %v2752
        %v3331 = vpack.c.bf16 %v2759, %v2759
        %v3332 = vpack.c.bf16 %v2766, %v2766
        %v3333 = vpack.c.bf16 %v2773, %v2773
        %v3334 = vpack.c.bf16 %v2780, %v2780
        %v3335 = vpack.c.bf16 %v2787, %v2787
        %v3336 = vpack.c.bf16 %v2794, %v2794
        %v3337 = vpack.c.bf16 %v2801, %v2801
        %v3338 = vpack.c.bf16 %v2808, %v2808
        %v3339 = vpack.c.bf16 %v2815, %v2815
        %v3340 = vpack.c.bf16 %v2822, %v2822
        %v3341 = vpack.c.bf16 %v2829, %v2829
        %v3342 = vpack.c.bf16 %v2836, %v2836
        %v3343 = vpack.c.bf16 %v2843, %v2843
        %v3344 = vpack.c.bf16 %v2850, %v2850
        %v3345 = vpack.c.bf16 %v2857, %v2857
        %v3346 = vpack.c.bf16 %v2864, %v2864
        %v3347 = vpack.c.bf16 %v2871, %v2871
        %v3348 = vpack.c.bf16 %v2878, %v2878
        %v3349 = vpack.c.bf16 %v2885, %v2885
        %v3350 = vpack.c.bf16 %v2892, %v2892
        %v3351 = vpack.c.bf16 %v2899, %v2899
        %v3352 = vpack.c.bf16 %v2906, %v2906
        %v3353 = vpack.c.bf16 %v2913, %v2913
        %v3354 = vpack.c.bf16 %v2920, %v2920
        %v3355 = vpack.c.bf16 %v2927, %v2927
        %v3356 = vpack.c.bf16 %v2934, %v2934
        %v3357 = vpack.c.bf16 %v2941, %v2941
        %v3358 = vpack.c.bf16 %v2948, %v2948
        %v3359 = vpack.c.bf16 %v2955, %v2955
        %v3360 = vpack.c.bf16 %v2962, %v2962
        %v3361 = vpack.c.bf16 %v2969, %v2969
        %v3362 = vpack.c.bf16 %v2976, %v2976
        %v3363 = vpack.c.bf16 %v2983, %v2983
        %v3364 = vpack.c.bf16 %v2990, %v2990
        %v3365 = vpack.c.bf16 %v2997, %v2997
        %v3366 = vpack.c.bf16 %v3004, %v3004
        %v3367 = vpack.c.bf16 %v3011, %v3011
        %v3368 = vpack.c.bf16 %v3018, %v3018
        %v3369 = vpack.c.bf16 %v3025, %v3025
        %v3370 = vpack.c.bf16 %v3032, %v3032
        %v3371 = vpack.c.bf16 %v3039, %v3039
        %v3372 = vpack.c.bf16 %v3046, %v3046
        %v3373 = vpack.c.bf16 %v3053, %v3053
        %v3374 = vpack.c.bf16 %v3060, %v3060
        %v3375 = vpack.c.bf16 %v3067, %v3067
        %v3376 = vpack.c.bf16 %v3074, %v3074
        %v3377 = vpack.c.bf16 %v3081, %v3081
        %v3378 = vpack.c.bf16 %v3088, %v3088
        %v3379 = vpack.c.bf16 %v3095, %v3095
        %v3380 = vpack.c.bf16 %v3102, %v3102
        %v3381 = vpack.c.bf16 %v3109, %v3109
        %v3382 = vpack.c.bf16 %v3116, %v3116
        %v3383 = vpack.c.bf16 %v3123, %v3123
        %v3384 = vpack.c.bf16 %v3130, %v3130
        %v3385 = vpack.c.bf16 %v3137, %v3137
        %v3386 = vpack.c.bf16 %v3144, %v3144
        %v3387 = vpack.c.bf16 %v3151, %v3151
        %v3388 = vpack.c.bf16 %v3158, %v3158
        %v3389 = vpack.c.bf16 %v3165, %v3165
        %v3390 = vpack.c.bf16 %v3172, %v3172
        %v3391 = vpack.c.bf16 %v3179, %v3179
        %v3392 = vpack.c.bf16 %v3186, %v3186
        %v3393 = vpack.c.bf16 %v3193, %v3193
        %v3394 = vpack.c.bf16 %v3200, %v3200
        %v3395 = vld [vmem:[%s4] sm:$0xf]
        %v3396 = vld [vmem:[%s4 + $0x4] sm:$0xf]
        %v3525 = vunpack.c.l.b16 %v3267
        %v3526 = vunpack.c.l.b16 %v3268
        %v3527 = vunpack.c.l.b16 %v3269
        %v3528 = vunpack.c.l.b16 %v3270
        %v3529 = vunpack.c.l.b16 %v3271
        %v3530 = vunpack.c.l.b16 %v3272
        %v3531 = vunpack.c.l.b16 %v3273
        %v3532 = vunpack.c.l.b16 %v3274
        %v3533 = vunpack.c.l.b16 %v3275
        %v3534 = vunpack.c.l.b16 %v3276
        %v3535 = vunpack.c.l.b16 %v3277
        %v3536 = vunpack.c.l.b16 %v3278
        %v3537 = vunpack.c.l.b16 %v3279
        %v3538 = vunpack.c.l.b16 %v3280
        %v3539 = vunpack.c.l.b16 %v3281
        %v3540 = vunpack.c.l.b16 %v3282
        %v3541 = vunpack.c.l.b16 %v3283
        %v3542 = vunpack.c.l.b16 %v3284
        %v3543 = vunpack.c.l.b16 %v3285
        %v3544 = vunpack.c.l.b16 %v3286
        %v3545 = vunpack.c.l.b16 %v3287
        %v3546 = vunpack.c.l.b16 %v3288
        %v3547 = vunpack.c.l.b16 %v3289
        %v3548 = vunpack.c.l.b16 %v3290
        %v3549 = vunpack.c.l.b16 %v3291
        %v3550 = vunpack.c.l.b16 %v3292
        %v3551 = vunpack.c.l.b16 %v3293
        %v3552 = vunpack.c.l.b16 %v3294
        %v3553 = vunpack.c.l.b16 %v3295
        %v3554 = vunpack.c.l.b16 %v3296
        %v3555 = vunpack.c.l.b16 %v3297
        %v3556 = vunpack.c.l.b16 %v3298
        %v3557 = vunpack.c.l.b16 %v3299
        %v3558 = vunpack.c.l.b16 %v3300
        %v3559 = vunpack.c.l.b16 %v3301
        %v3560 = vunpack.c.l.b16 %v3302
        %v3561 = vunpack.c.l.b16 %v3303
        %v3562 = vunpack.c.l.b16 %v3304
        %v3563 = vunpack.c.l.b16 %v3305
        %v3564 = vunpack.c.l.b16 %v3306
        %v3565 = vunpack.c.l.b16 %v3307
        %v3566 = vunpack.c.l.b16 %v3308
        %v3567 = vunpack.c.l.b16 %v3309
        %v3568 = vunpack.c.l.b16 %v3310
        %v3569 = vunpack.c.l.b16 %v3311
        %v3570 = vunpack.c.l.b16 %v3312
        %v3571 = vunpack.c.l.b16 %v3313
        %v3572 = vunpack.c.l.b16 %v3314
        %v3573 = vunpack.c.l.b16 %v3315
        %v3574 = vunpack.c.l.b16 %v3316
        %v3575 = vunpack.c.l.b16 %v3317
        %v3576 = vunpack.c.l.b16 %v3318
        %v3577 = vunpack.c.l.b16 %v3319
        %v3578 = vunpack.c.l.b16 %v3320
        %v3579 = vunpack.c.l.b16 %v3321
        %v3580 = vunpack.c.l.b16 %v3322
        %v3581 = vunpack.c.l.b16 %v3323
        %v3582 = vunpack.c.l.b16 %v3324
        %v3583 = vunpack.c.l.b16 %v3325
        %v3584 = vunpack.c.l.b16 %v3326
        %v3585 = vunpack.c.l.b16 %v3327
        %v3586 = vunpack.c.l.b16 %v3328
        %v3587 = vunpack.c.l.b16 %v3329
        %v3588 = vunpack.c.l.b16 %v3330
        %v3589 = vunpack.c.l.b16 %v3331
        %v3590 = vunpack.c.l.b16 %v3332
        %v3591 = vunpack.c.l.b16 %v3333
        %v3592 = vunpack.c.l.b16 %v3334
        %v3593 = vunpack.c.l.b16 %v3335
        %v3594 = vunpack.c.l.b16 %v3336
        %v3595 = vunpack.c.l.b16 %v3337
        %v3596 = vunpack.c.l.b16 %v3338
        %v3597 = vunpack.c.l.b16 %v3339
        %v3598 = vunpack.c.l.b16 %v3340
        %v3599 = vunpack.c.l.b16 %v3341
        %v3600 = vunpack.c.l.b16 %v3342
        %v3601 = vunpack.c.l.b16 %v3343
        %v3602 = vunpack.c.l.b16 %v3344
        %v3603 = vunpack.c.l.b16 %v3345
        %v3604 = vunpack.c.l.b16 %v3346
        %v3605 = vunpack.c.l.b16 %v3347
        %v3606 = vunpack.c.l.b16 %v3348
        %v3607 = vunpack.c.l.b16 %v3349
        %v3608 = vunpack.c.l.b16 %v3350
        %v3609 = vunpack.c.l.b16 %v3351
        %v3610 = vunpack.c.l.b16 %v3352
        %v3611 = vunpack.c.l.b16 %v3353
        %v3612 = vunpack.c.l.b16 %v3354
        %v3613 = vunpack.c.l.b16 %v3355
        %v3614 = vunpack.c.l.b16 %v3356
        %v3615 = vunpack.c.l.b16 %v3357
        %v3616 = vunpack.c.l.b16 %v3358
        %v3617 = vunpack.c.l.b16 %v3359
        %v3618 = vunpack.c.l.b16 %v3360
        %v3619 = vunpack.c.l.b16 %v3361
        %v3620 = vunpack.c.l.b16 %v3362
        %v3621 = vunpack.c.l.b16 %v3363
        %v3622 = vunpack.c.l.b16 %v3364
        %v3623 = vunpack.c.l.b16 %v3365
        %v3624 = vunpack.c.l.b16 %v3366
        %v3625 = vunpack.c.l.b16 %v3367
        %v3626 = vunpack.c.l.b16 %v3368
        %v3627 = vunpack.c.l.b16 %v3369
        %v3628 = vunpack.c.l.b16 %v3370
        %v3629 = vunpack.c.l.b16 %v3371
        %v3630 = vunpack.c.l.b16 %v3372
        %v3631 = vunpack.c.l.b16 %v3373
        %v3632 = vunpack.c.l.b16 %v3374
        %v3633 = vunpack.c.l.b16 %v3375
        %v3634 = vunpack.c.l.b16 %v3376
        %v3635 = vunpack.c.l.b16 %v3377
        %v3636 = vunpack.c.l.b16 %v3378
        %v3637 = vunpack.c.l.b16 %v3379
        %v3638 = vunpack.c.l.b16 %v3380
        %v3639 = vunpack.c.l.b16 %v3381
        %v3640 = vunpack.c.l.b16 %v3382
        %v3641 = vunpack.c.l.b16 %v3383
        %v3642 = vunpack.c.l.b16 %v3384
        %v3643 = vunpack.c.l.b16 %v3385
        %v3644 = vunpack.c.l.b16 %v3386
        %v3645 = vunpack.c.l.b16 %v3387
        %v3646 = vunpack.c.l.b16 %v3388
        %v3647 = vunpack.c.l.b16 %v3389
        %v3648 = vunpack.c.l.b16 %v3390
        %v3649 = vunpack.c.l.b16 %v3391
        %v3650 = vunpack.c.l.b16 %v3392
        %v3651 = vunpack.c.l.b16 %v3393
        %v3652 = vunpack.c.l.b16 %v3394
        %vm3653 = vcmask 1041409
        %v3654 = vsel %vm3653, %v3526, %v3525
        %vm3655 = vcmask 1042434
        %v3656 = vsel %vm3655, %v3527, %v3654
        %vm3657 = vcmask 1043459
        %v3658 = vsel %vm3657, %v3528, %v3656
        %vm3659 = vcmask 1044484
        %v3660 = vsel %vm3659, %v3529, %v3658
        %vm3661 = vcmask 1045509
        %v3662 = vsel %vm3661, %v3530, %v3660
        %vm3663 = vcmask 1046534
        %v3664 = vsel %vm3663, %v3531, %v3662
        %vm3665 = vcmask 1047559
        %v3666 = vsel %vm3665, %v3532, %v3664
        %v3667 = vsel %vm3653, %v3534, %v3533
        %v3668 = vsel %vm3655, %v3535, %v3667
        %v3669 = vsel %vm3657, %v3536, %v3668
        %v3670 = vsel %vm3659, %v3537, %v3669
        %v3671 = vsel %vm3661, %v3538, %v3670
        %v3672 = vsel %vm3663, %v3539, %v3671
        %v3673 = vsel %vm3665, %v3540, %v3672
        %v3674 = vsel %vm3653, %v3542, %v3541
        %v3675 = vsel %vm3655, %v3543, %v3674
        %v3676 = vsel %vm3657, %v3544, %v3675
        %v3677 = vsel %vm3659, %v3545, %v3676
        %v3678 = vsel %vm3661, %v3546, %v3677
        %v3679 = vsel %vm3663, %v3547, %v3678
        %v3680 = vsel %vm3665, %v3548, %v3679
        %v3681 = vsel %vm3653, %v3550, %v3549
        %v3682 = vsel %vm3655, %v3551, %v3681
        %v3683 = vsel %vm3657, %v3552, %v3682
        %v3684 = vsel %vm3659, %v3553, %v3683
        %v3685 = vsel %vm3661, %v3554, %v3684
        %v3686 = vsel %vm3663, %v3555, %v3685
        %v3687 = vsel %vm3665, %v3556, %v3686
        %v3688 = vsel %vm3653, %v3558, %v3557
        %v3689 = vsel %vm3655, %v3559, %v3688
        %v3690 = vsel %vm3657, %v3560, %v3689
        %v3691 = vsel %vm3659, %v3561, %v3690
        %v3692 = vsel %vm3661, %v3562, %v3691
        %v3693 = vsel %vm3663, %v3563, %v3692
        %v3694 = vsel %vm3665, %v3564, %v3693
        %v3695 = vsel %vm3653, %v3566, %v3565
        %v3696 = vsel %vm3655, %v3567, %v3695
        %v3697 = vsel %vm3657, %v3568, %v3696
        %v3698 = vsel %vm3659, %v3569, %v3697
        %v3699 = vsel %vm3661, %v3570, %v3698
        %v3700 = vsel %vm3663, %v3571, %v3699
        %v3701 = vsel %vm3665, %v3572, %v3700
        %v3702 = vsel %vm3653, %v3574, %v3573
        %v3703 = vsel %vm3655, %v3575, %v3702
        %v3704 = vsel %vm3657, %v3576, %v3703
        %v3705 = vsel %vm3659, %v3577, %v3704
        %v3706 = vsel %vm3661, %v3578, %v3705
        %v3707 = vsel %vm3663, %v3579, %v3706
        %v3708 = vsel %vm3665, %v3580, %v3707
        %v3709 = vsel %vm3653, %v3582, %v3581
        %v3710 = vsel %vm3655, %v3583, %v3709
        %v3711 = vsel %vm3657, %v3584, %v3710
        %v3712 = vsel %vm3659, %v3585, %v3711
        %v3713 = vsel %vm3661, %v3586, %v3712
        %v3714 = vsel %vm3663, %v3587, %v3713
        %v3715 = vsel %vm3665, %v3588, %v3714
        %v3716 = vsel %vm3653, %v3590, %v3589
        %v3717 = vsel %vm3655, %v3591, %v3716
        %v3718 = vsel %vm3657, %v3592, %v3717
        %v3719 = vsel %vm3659, %v3593, %v3718
        %v3720 = vsel %vm3661, %v3594, %v3719
        %v3721 = vsel %vm3663, %v3595, %v3720
        %v3722 = vsel %vm3665, %v3596, %v3721
        %v3723 = vsel %vm3653, %v3598, %v3597
        %v3724 = vsel %vm3655, %v3599, %v3723
        %v3725 = vsel %vm3657, %v3600, %v3724
        %v3726 = vsel %vm3659, %v3601, %v3725
        %v3727 = vsel %vm3661, %v3602, %v3726
        %v3728 = vsel %vm3663, %v3603, %v3727
        %v3729 = vsel %vm3665, %v3604, %v3728
        %v3730 = vsel %vm3653, %v3606, %v3605
        %v3731 = vsel %vm3655, %v3607, %v3730
        %v3732 = vsel %vm3657, %v3608, %v3731
        %v3733 = vsel %vm3659, %v3609, %v3732
        %v3734 = vsel %vm3661, %v3610, %v3733
        %v3735 = vsel %vm3663, %v3611, %v3734
        %v3736 = vsel %vm3665, %v3612, %v3735
        %v3737 = vsel %vm3653, %v3614, %v3613
        %v3738 = vsel %vm3655, %v3615, %v3737
        %v3739 = vsel %vm3657, %v3616, %v3738
        %v3740 = vsel %vm3659, %v3617, %v3739
        %v3741 = vsel %vm3661, %v3618, %v3740
        %v3742 = vsel %vm3663, %v3619, %v3741
        %v3743 = vsel %vm3665, %v3620, %v3742
        %v3744 = vsel %vm3653, %v3622, %v3621
        %v3745 = vsel %vm3655, %v3623, %v3744
        %v3746 = vsel %vm3657, %v3624, %v3745
        %v3747 = vsel %vm3659, %v3625, %v3746
        %v3748 = vsel %vm3661, %v3626, %v3747
        %v3749 = vsel %vm3663, %v3627, %v3748
        %v3750 = vsel %vm3665, %v3628, %v3749
        %v3751 = vsel %vm3653, %v3630, %v3629
        %v3752 = vsel %vm3655, %v3631, %v3751
        %v3753 = vsel %vm3657, %v3632, %v3752
        %v3754 = vsel %vm3659, %v3633, %v3753
        %v3755 = vsel %vm3661, %v3634, %v3754
        %v3756 = vsel %vm3663, %v3635, %v3755
        %v3757 = vsel %vm3665, %v3636, %v3756
        %v3758 = vsel %vm3653, %v3638, %v3637
        %v3759 = vsel %vm3655, %v3639, %v3758
        %v3760 = vsel %vm3657, %v3640, %v3759
        %v3761 = vsel %vm3659, %v3641, %v3760
        %v3762 = vsel %vm3661, %v3642, %v3761
        %v3763 = vsel %vm3663, %v3643, %v3762
        %v3764 = vsel %vm3665, %v3644, %v3763
        %v3765 = vsel %vm3653, %v3646, %v3645
        %v3766 = vsel %vm3655, %v3647, %v3765
        %v3767 = vsel %vm3657, %v3648, %v3766
        %v3768 = vsel %vm3659, %v3649, %v3767
        %v3769 = vsel %vm3661, %v3650, %v3768
        %v3770 = vsel %vm3663, %v3651, %v3769
        %v3771 = vsel %vm3665, %v3652, %v3770
        %v3772 = vpack.c.b16 %v3673, %v3666
        %v3773 = vpack.c.b16 %v3687, %v3680
        %v3774 = vpack.c.b16 %v3701, %v3694
        %v3775 = vpack.c.b16 %v3715, %v3708
        %v3776 = vpack.c.b16 %v3729, %v3722
        %v3777 = vpack.c.b16 %v3743, %v3736
        %v3778 = vpack.c.b16 %v3757, %v3750
        %v3779 = vpack.c.b16 %v3771, %v3764
        %v3782 = vunpack.c.l.b16 %v3395
        %v3783 = vunpack.c.l.b16 %v3396
        %v3784 = vpack.c.b16 %v3783, %v3782
        %v3787 = vsel %vm2304, %v3772, 0
        %v3790 = vsel %vm2304, %v3773, 0
        %v3793 = vsel %vm2304, %v3774, 0
        %v3796 = vsel %vm2304, %v3775, 0
        %v3799 = vsel %vm2304, %v3776, 0
        %v3802 = vsel %vm2304, %v3777, 0
        %v3805 = vsel %vm2304, %v3778, 0
        %v3808 = vsel %vm2304, %v3779, 0
        %3810 = vmatprep.subr.bf16.mxu0 0
        %3811 = vmatpush1.bf16.msra.mxu0 %v3784
        %3812 = vmatprep.subr.bf16.mxu0 0
        %3813 = vmatpush1.bf16.msra.mxu0 0
        %3814 = vmatprep.subr.bf16.mxu0 0
        %3815 = vmatpush1.bf16.msra.mxu0 0
        %3816 = vmatprep.subr.bf16.mxu0 0
        %3817 = vmatpush1.bf16.msra.mxu0 0
        %3818 = vmatprep.subr.bf16.mxu0 0
        %3819 = vmatpush1.bf16.msra.mxu0 0
        %3820 = vmatprep.subr.bf16.mxu0 0
        %3821 = vmatpush1.bf16.msra.mxu0 0
        %3822 = vmatprep.subr.bf16.mxu0 0
        %3823 = vmatpush1.bf16.msra.mxu0 0
        %3824 = vmatprep.subr.bf16.mxu0 0
        %3825 = vmatpush1.bf16.msra.mxu0 0
        %3826 = vmatprep.subr.bf16.mxu0 0
        %3827 = vmatpush1.bf16.msra.mxu0 0
        %3828 = vmatprep.subr.bf16.mxu0 0
        %3829 = vmatpush1.bf16.msra.mxu0 0
        %3830 = vmatprep.subr.bf16.mxu0 0
        %3831 = vmatpush1.bf16.msra.mxu0 0
        %3832 = vmatprep.subr.bf16.mxu0 0
        %3833 = vmatpush1.bf16.msra.mxu0 0
        %3834 = vmatprep.subr.bf16.mxu0 0
        %3835 = vmatpush1.bf16.msra.mxu0 0
        %3836 = vmatprep.subr.bf16.mxu0 0
        %3837 = vmatpush1.bf16.msra.mxu0 0
        %3838 = vmatprep.subr.bf16.mxu0 0
        %3839 = vmatpush1.bf16.msra.mxu0 0
        %3840 = vmatprep.subr.bf16.mxu0 0
        %3841 = vmatpush1.bf16.msra.mxu0 0
        %3842 = vmatprep.mubr.bf16.mxu0 0
        %3843 = vmatmul.mubr.bf16.gmra.mrb[0].mxu0 %v3787
        %v3844 = vpop.f32.mrb[0].mxu0
        %v3845 = vadd.f32 0.0, %v3844
        %v3846 = vpop.f32.mrb[0].mxu0
        %v3847 = vpop.f32.mrb[0].mxu0
        %v3848 = vadd.f32 0.0, %v3847
        %v3849 = vpop.f32.mrb[0].mxu0
        %3850 = vmatprep.mubr.bf16.mxu0 0
        %3851 = vmatmul.mubr.bf16.gmra.mrb[0].mxu0 %v3790
        %v3852 = vpop.f32.mrb[0].mxu0
        %v3853 = vadd.f32 0.0, %v3852
        %v3854 = vpop.f32.mrb[0].mxu0
        %v3855 = vpop.f32.mrb[0].mxu0
        %v3856 = vadd.f32 0.0, %v3855
        %v3857 = vpop.f32.mrb[0].mxu0
        %3858 = vmatprep.mubr.bf16.mxu0 0
        %3859 = vmatmul.mubr.bf16.gmra.mrb[0].mxu0 %v3793
        %v3860 = vpop.f32.mrb[0].mxu0
        %v3861 = vadd.f32 0.0, %v3860
        %v3862 = vpop.f32.mrb[0].mxu0
        %v3863 = vpop.f32.mrb[0].mxu0
        %v3864 = vadd.f32 0.0, %v3863
        %v3865 = vpop.f32.mrb[0].mxu0
        %3866 = vmatprep.mubr.bf16.mxu0 0
        %3867 = vmatmul.mubr.bf16.gmra.mrb[0].mxu0 %v3796
        %v3868 = vpop.f32.mrb[0].mxu0
        %v3869 = vadd.f32 0.0, %v3868
        %v3870 = vpop.f32.mrb[0].mxu0
        %v3871 = vpop.f32.mrb[0].mxu0
        %v3872 = vadd.f32 0.0, %v3871
        %v3873 = vpop.f32.mrb[0].mxu0
        %3874 = vmatprep.mubr.bf16.mxu0 0
        %3875 = vmatmul.mubr.bf16.gmra.mrb[0].mxu0 %v3799
        %v3876 = vpop.f32.mrb[0].mxu0
        %v3877 = vadd.f32 0.0, %v3876
        %v3878 = vpop.f32.mrb[0].mxu0
        %v3879 = vpop.f32.mrb[0].mxu0
        %v3880 = vadd.f32 0.0, %v3879
        %v3881 = vpop.f32.mrb[0].mxu0
        %3882 = vmatprep.mubr.bf16.mxu0 0
        %3883 = vmatmul.mubr.bf16.gmra.mrb[0].mxu0 %v3802
        %v3884 = vpop.f32.mrb[0].mxu0
        %v3885 = vadd.f32 0.0, %v3884
        %v3886 = vpop.f32.mrb[0].mxu0
        %v3887 = vpop.f32.mrb[0].mxu0
        %v3888 = vadd.f32 0.0, %v3887
        %v3889 = vpop.f32.mrb[0].mxu0
        %3890 = vmatprep.mubr.bf16.mxu0 0
        %3891 = vmatmul.mubr.bf16.gmra.mrb[0].mxu0 %v3805
        %v3892 = vpop.f32.mrb[0].mxu0
        %v3893 = vadd.f32 0.0, %v3892
        %v3894 = vpop.f32.mrb[0].mxu0
        %v3895 = vpop.f32.mrb[0].mxu0
        %v3896 = vadd.f32 0.0, %v3895
        %v3897 = vpop.f32.mrb[0].mxu0
        %3898 = vmatprep.mubr.bf16.mxu0 0
        %3899 = vmatmul.mubr.bf16.gmra.mrb[0].mxu0 %v3808
        %v3900 = vpop.f32.mrb[0].mxu0
        %v3901 = vadd.f32 0.0, %v3900
        %v3902 = vpop.f32.mrb[0].mxu0
        %v3903 = vpop.f32.mrb[0].mxu0
        %v3904 = vadd.f32 0.0, %v3903
        %v3905 = vpop.f32.mrb[0].mxu0
        %3906 = vdwg.mxu0
        %v3923 = vcombine.high %v3845, %v3845
        %v3925 = vunpack.c.l.s4 1966171168
        %v3926 = vunpack.c.0.s8 %v3925
        %v3927 = vlaneseq
        %v3928 = vshrl.u32 %v3927, 7
        %v3929 = vsub.s32 %v3926, %v3928
        %v3930 = vrot.slane %v3845, %v3929
        %v3932 = vunpack.c.l.s4 1966171168
        %v3933 = vunpack.c.0.s8 %v3932
        %v3934 = vlaneseq
        %v3935 = vshrl.u32 %v3934, 7
        %v3936 = vsub.s32 %v3933, %v3935
        %v3937 = vrot.slane %v3923, %v3936
        %v3938 = vcombine.high %v3930, %v3930
        %v3939 = vcombine.high %v3937, %v3937
        %v3941 = vunpack.c.l.s4 1966171168
        %v3942 = vunpack.c.0.s8 %v3941
        %v3943 = vlaneseq
        %v3944 = vshrl.u32 %v3943, 7
        %v3945 = vsub.s32 %v3942, %v3944
        %v3946 = vrot.slane %v3930, %v3945
        %v3948 = vunpack.c.l.s4 1966171168
        %v3949 = vunpack.c.0.s8 %v3948
        %v3950 = vlaneseq
        %v3951 = vshrl.u32 %v3950, 7
        %v3952 = vsub.s32 %v3949, %v3951
        %v3953 = vrot.slane %v3937, %v3952
        %v3955 = vunpack.c.l.s4 1966171168
        %v3956 = vunpack.c.0.s8 %v3955
        %v3957 = vlaneseq
        %v3958 = vshrl.u32 %v3957, 7
        %v3959 = vsub.s32 %v3956, %v3958
        %v3960 = vrot.slane %v3938, %v3959
        %v3962 = vunpack.c.l.s4 1966171168
        %v3963 = vunpack.c.0.s8 %v3962
        %v3964 = vlaneseq
        %v3965 = vshrl.u32 %v3964, 7
        %v3966 = vsub.s32 %v3963, %v3965
        %v3967 = vrot.slane %v3939, %v3966
        %v3968 = vcombine.high %v3946, %v3946
        %v3969 = vcombine.high %v3953, %v3953
        %v3970 = vcombine.high %v3960, %v3960
        %v3971 = vcombine.high %v3967, %v3967
        %v3972 = vcombine.high %v3848, %v3848
        %v3974 = vunpack.c.l.s4 1966171168
        %v3975 = vunpack.c.0.s8 %v3974
        %v3976 = vlaneseq
        %v3977 = vshrl.u32 %v3976, 7
        %v3978 = vsub.s32 %v3975, %v3977
        %v3979 = vrot.slane %v3848, %v3978
        %v3981 = vunpack.c.l.s4 1966171168
        %v3982 = vunpack.c.0.s8 %v3981
        %v3983 = vlaneseq
        %v3984 = vshrl.u32 %v3983, 7
        %v3985 = vsub.s32 %v3982, %v3984
        %v3986 = vrot.slane %v3972, %v3985
        %v3987 = vcombine.high %v3979, %v3979
        %v3988 = vcombine.high %v3986, %v3986
        %v3990 = vunpack.c.l.s4 1966171168
        %v3991 = vunpack.c.0.s8 %v3990
        %v3992 = vlaneseq
        %v3993 = vshrl.u32 %v3992, 7
        %v3994 = vsub.s32 %v3991, %v3993
        %v3995 = vrot.slane %v3979, %v3994
        %v3997 = vunpack.c.l.s4 1966171168
        %v3998 = vunpack.c.0.s8 %v3997
        %v3999 = vlaneseq
        %v4000 = vshrl.u32 %v3999, 7
        %v4001 = vsub.s32 %v3998, %v4000
        %v4002 = vrot.slane %v3986, %v4001
        %v4004 = vunpack.c.l.s4 1966171168
        %v4005 = vunpack.c.0.s8 %v4004
        %v4006 = vlaneseq
        %v4007 = vshrl.u32 %v4006, 7
        %v4008 = vsub.s32 %v4005, %v4007
        %v4009 = vrot.slane %v3987, %v4008
        %v4011 = vunpack.c.l.s4 1966171168
        %v4012 = vunpack.c.0.s8 %v4011
        %v4013 = vlaneseq
        %v4014 = vshrl.u32 %v4013, 7
        %v4015 = vsub.s32 %v4012, %v4014
        %v4016 = vrot.slane %v3988, %v4015
        %v4017 = vcombine.high %v3995, %v3995
        %v4018 = vcombine.high %v4002, %v4002
        %v4019 = vcombine.high %v4009, %v4009
        %v4020 = vcombine.high %v4016, %v4016
        %v4021 = vcombine.high %v3853, %v3853
        %v4023 = vunpack.c.l.s4 1966171168
        %v4024 = vunpack.c.0.s8 %v4023
        %v4025 = vlaneseq
        %v4026 = vshrl.u32 %v4025, 7
        %v4027 = vsub.s32 %v4024, %v4026
        %v4028 = vrot.slane %v3853, %v4027
        %v4030 = vunpack.c.l.s4 1966171168
        %v4031 = vunpack.c.0.s8 %v4030
        %v4032 = vlaneseq
        %v4033 = vshrl.u32 %v4032, 7
        %v4034 = vsub.s32 %v4031, %v4033
        %v4035 = vrot.slane %v4021, %v4034
        %v4036 = vcombine.high %v4028, %v4028
        %v4037 = vcombine.high %v4035, %v4035
        %v4039 = vunpack.c.l.s4 1966171168
        %v4040 = vunpack.c.0.s8 %v4039
        %v4041 = vlaneseq
        %v4042 = vshrl.u32 %v4041, 7
        %v4043 = vsub.s32 %v4040, %v4042
        %v4044 = vrot.slane %v4028, %v4043
        %v4046 = vunpack.c.l.s4 1966171168
        %v4047 = vunpack.c.0.s8 %v4046
        %v4048 = vlaneseq
        %v4049 = vshrl.u32 %v4048, 7
        %v4050 = vsub.s32 %v4047, %v4049
        %v4051 = vrot.slane %v4035, %v4050
        %v4053 = vunpack.c.l.s4 1966171168
        %v4054 = vunpack.c.0.s8 %v4053
        %v4055 = vlaneseq
        %v4056 = vshrl.u32 %v4055, 7
        %v4057 = vsub.s32 %v4054, %v4056
        %v4058 = vrot.slane %v4036, %v4057
        %v4060 = vunpack.c.l.s4 1966171168
        %v4061 = vunpack.c.0.s8 %v4060
        %v4062 = vlaneseq
        %v4063 = vshrl.u32 %v4062, 7
        %v4064 = vsub.s32 %v4061, %v4063
        %v4065 = vrot.slane %v4037, %v4064
        %v4066 = vcombine.high %v4044, %v4044
        %v4067 = vcombine.high %v4051, %v4051
        %v4068 = vcombine.high %v4058, %v4058
        %v4069 = vcombine.high %v4065, %v4065
        %v4070 = vcombine.high %v3856, %v3856
        %v4072 = vunpack.c.l.s4 1966171168
        %v4073 = vunpack.c.0.s8 %v4072
        %v4074 = vlaneseq
        %v4075 = vshrl.u32 %v4074, 7
        %v4076 = vsub.s32 %v4073, %v4075
        %v4077 = vrot.slane %v3856, %v4076
        %v4079 = vunpack.c.l.s4 1966171168
        %v4080 = vunpack.c.0.s8 %v4079
        %v4081 = vlaneseq
        %v4082 = vshrl.u32 %v4081, 7
        %v4083 = vsub.s32 %v4080, %v4082
        %v4084 = vrot.slane %v4070, %v4083
        %v4085 = vcombine.high %v4077, %v4077
        %v4086 = vcombine.high %v4084, %v4084
        %v4088 = vunpack.c.l.s4 1966171168
        %v4089 = vunpack.c.0.s8 %v4088
        %v4090 = vlaneseq
        %v4091 = vshrl.u32 %v4090, 7
        %v4092 = vsub.s32 %v4089, %v4091
        %v4093 = vrot.slane %v4077, %v4092
        %v4095 = vunpack.c.l.s4 1966171168
        %v4096 = vunpack.c.0.s8 %v4095
        %v4097 = vlaneseq
        %v4098 = vshrl.u32 %v4097, 7
        %v4099 = vsub.s32 %v4096, %v4098
        %v4100 = vrot.slane %v4084, %v4099
        %v4102 = vunpack.c.l.s4 1966171168
        %v4103 = vunpack.c.0.s8 %v4102
        %v4104 = vlaneseq
        %v4105 = vshrl.u32 %v4104, 7
        %v4106 = vsub.s32 %v4103, %v4105
        %v4107 = vrot.slane %v4085, %v4106
        %v4109 = vunpack.c.l.s4 1966171168
        %v4110 = vunpack.c.0.s8 %v4109
        %v4111 = vlaneseq
        %v4112 = vshrl.u32 %v4111, 7
        %v4113 = vsub.s32 %v4110, %v4112
        %v4114 = vrot.slane %v4086, %v4113
        %v4115 = vcombine.high %v4093, %v4093
        %v4116 = vcombine.high %v4100, %v4100
        %v4117 = vcombine.high %v4107, %v4107
        %v4118 = vcombine.high %v4114, %v4114
        %v4119 = vcombine.high %v3861, %v3861
        %v4121 = vunpack.c.l.s4 1966171168
        %v4122 = vunpack.c.0.s8 %v4121
        %v4123 = vlaneseq
        %v4124 = vshrl.u32 %v4123, 7
        %v4125 = vsub.s32 %v4122, %v4124
        %v4126 = vrot.slane %v3861, %v4125
        %v4128 = vunpack.c.l.s4 1966171168
        %v4129 = vunpack.c.0.s8 %v4128
        %v4130 = vlaneseq
        %v4131 = vshrl.u32 %v4130, 7
        %v4132 = vsub.s32 %v4129, %v4131
        %v4133 = vrot.slane %v4119, %v4132
        %v4134 = vcombine.high %v4126, %v4126
        %v4135 = vcombine.high %v4133, %v4133
        %v4137 = vunpack.c.l.s4 1966171168
        %v4138 = vunpack.c.0.s8 %v4137
        %v4139 = vlaneseq
        %v4140 = vshrl.u32 %v4139, 7
        %v4141 = vsub.s32 %v4138, %v4140
        %v4142 = vrot.slane %v4126, %v4141
        %v4144 = vunpack.c.l.s4 1966171168
        %v4145 = vunpack.c.0.s8 %v4144
        %v4146 = vlaneseq
        %v4147 = vshrl.u32 %v4146, 7
        %v4148 = vsub.s32 %v4145, %v4147
        %v4149 = vrot.slane %v4133, %v4148
        %v4151 = vunpack.c.l.s4 1966171168
        %v4152 = vunpack.c.0.s8 %v4151
        %v4153 = vlaneseq
        %v4154 = vshrl.u32 %v4153, 7
        %v4155 = vsub.s32 %v4152, %v4154
        %v4156 = vrot.slane %v4134, %v4155
        %v4158 = vunpack.c.l.s4 1966171168
        %v4159 = vunpack.c.0.s8 %v4158
        %v4160 = vlaneseq
        %v4161 = vshrl.u32 %v4160, 7
        %v4162 = vsub.s32 %v4159, %v4161
        %v4163 = vrot.slane %v4135, %v4162
        %v4164 = vcombine.high %v4142, %v4142
        %v4165 = vcombine.high %v4149, %v4149
        %v4166 = vcombine.high %v4156, %v4156
        %v4167 = vcombine.high %v4163, %v4163
        %v4168 = vcombine.high %v3864, %v3864
        %v4170 = vunpack.c.l.s4 1966171168
        %v4171 = vunpack.c.0.s8 %v4170
        %v4172 = vlaneseq
        %v4173 = vshrl.u32 %v4172, 7
        %v4174 = vsub.s32 %v4171, %v4173
        %v4175 = vrot.slane %v3864, %v4174
        %v4177 = vunpack.c.l.s4 1966171168
        %v4178 = vunpack.c.0.s8 %v4177
        %v4179 = vlaneseq
        %v4180 = vshrl.u32 %v4179, 7
        %v4181 = vsub.s32 %v4178, %v4180
        %v4182 = vrot.slane %v4168, %v4181
        %v4183 = vcombine.high %v4175, %v4175
        %v4184 = vcombine.high %v4182, %v4182
        %v4186 = vunpack.c.l.s4 1966171168
        %v4187 = vunpack.c.0.s8 %v4186
        %v4188 = vlaneseq
        %v4189 = vshrl.u32 %v4188, 7
        %v4190 = vsub.s32 %v4187, %v4189
        %v4191 = vrot.slane %v4175, %v4190
        %v4193 = vunpack.c.l.s4 1966171168
        %v4194 = vunpack.c.0.s8 %v4193
        %v4195 = vlaneseq
        %v4196 = vshrl.u32 %v4195, 7
        %v4197 = vsub.s32 %v4194, %v4196
        %v4198 = vrot.slane %v4182, %v4197
        %v4200 = vunpack.c.l.s4 1966171168
        %v4201 = vunpack.c.0.s8 %v4200
        %v4202 = vlaneseq
        %v4203 = vshrl.u32 %v4202, 7
        %v4204 = vsub.s32 %v4201, %v4203
        %v4205 = vrot.slane %v4183, %v4204
        %v4207 = vunpack.c.l.s4 1966171168
        %v4208 = vunpack.c.0.s8 %v4207
        %v4209 = vlaneseq
        %v4210 = vshrl.u32 %v4209, 7
        %v4211 = vsub.s32 %v4208, %v4210
        %v4212 = vrot.slane %v4184, %v4211
        %v4213 = vcombine.high %v4191, %v4191
        %v4214 = vcombine.high %v4198, %v4198
        %v4215 = vcombine.high %v4205, %v4205
        %v4216 = vcombine.high %v4212, %v4212
        %v4217 = vcombine.high %v3869, %v3869
        %v4219 = vunpack.c.l.s4 1966171168
        %v4220 = vunpack.c.0.s8 %v4219
        %v4221 = vlaneseq
        %v4222 = vshrl.u32 %v4221, 7
        %v4223 = vsub.s32 %v4220, %v4222
        %v4224 = vrot.slane %v3869, %v4223
        %v4226 = vunpack.c.l.s4 1966171168
        %v4227 = vunpack.c.0.s8 %v4226
        %v4228 = vlaneseq
        %v4229 = vshrl.u32 %v4228, 7
        %v4230 = vsub.s32 %v4227, %v4229
        %v4231 = vrot.slane %v4217, %v4230
        %v4232 = vcombine.high %v4224, %v4224
        %v4233 = vcombine.high %v4231, %v4231
        %v4235 = vunpack.c.l.s4 1966171168
        %v4236 = vunpack.c.0.s8 %v4235
        %v4237 = vlaneseq
        %v4238 = vshrl.u32 %v4237, 7
        %v4239 = vsub.s32 %v4236, %v4238
        %v4240 = vrot.slane %v4224, %v4239
        %v4242 = vunpack.c.l.s4 1966171168
        %v4243 = vunpack.c.0.s8 %v4242
        %v4244 = vlaneseq
        %v4245 = vshrl.u32 %v4244, 7
        %v4246 = vsub.s32 %v4243, %v4245
        %v4247 = vrot.slane %v4231, %v4246
        %v4249 = vunpack.c.l.s4 1966171168
        %v4250 = vunpack.c.0.s8 %v4249
        %v4251 = vlaneseq
        %v4252 = vshrl.u32 %v4251, 7
        %v4253 = vsub.s32 %v4250, %v4252
        %v4254 = vrot.slane %v4232, %v4253
        %v4256 = vunpack.c.l.s4 1966171168
        %v4257 = vunpack.c.0.s8 %v4256
        %v4258 = vlaneseq
        %v4259 = vshrl.u32 %v4258, 7
        %v4260 = vsub.s32 %v4257, %v4259
        %v4261 = vrot.slane %v4233, %v4260
        %v4262 = vcombine.high %v4240, %v4240
        %v4263 = vcombine.high %v4247, %v4247
        %v4264 = vcombine.high %v4254, %v4254
        %v4265 = vcombine.high %v4261, %v4261
        %v4266 = vcombine.high %v3872, %v3872
        %v4268 = vunpack.c.l.s4 1966171168
        %v4269 = vunpack.c.0.s8 %v4268
        %v4270 = vlaneseq
        %v4271 = vshrl.u32 %v4270, 7
        %v4272 = vsub.s32 %v4269, %v4271
        %v4273 = vrot.slane %v3872, %v4272
        %v4275 = vunpack.c.l.s4 1966171168
        %v4276 = vunpack.c.0.s8 %v4275
        %v4277 = vlaneseq
        %v4278 = vshrl.u32 %v4277, 7
        %v4279 = vsub.s32 %v4276, %v4278
        %v4280 = vrot.slane %v4266, %v4279
        %v4281 = vcombine.high %v4273, %v4273
        %v4282 = vcombine.high %v4280, %v4280
        %v4284 = vunpack.c.l.s4 1966171168
        %v4285 = vunpack.c.0.s8 %v4284
        %v4286 = vlaneseq
        %v4287 = vshrl.u32 %v4286, 7
        %v4288 = vsub.s32 %v4285, %v4287
        %v4289 = vrot.slane %v4273, %v4288
        %v4291 = vunpack.c.l.s4 1966171168
        %v4292 = vunpack.c.0.s8 %v4291
        %v4293 = vlaneseq
        %v4294 = vshrl.u32 %v4293, 7
        %v4295 = vsub.s32 %v4292, %v4294
        %v4296 = vrot.slane %v4280, %v4295
        %v4298 = vunpack.c.l.s4 1966171168
        %v4299 = vunpack.c.0.s8 %v4298
        %v4300 = vlaneseq
        %v4301 = vshrl.u32 %v4300, 7
        %v4302 = vsub.s32 %v4299, %v4301
        %v4303 = vrot.slane %v4281, %v4302
        %v4305 = vunpack.c.l.s4 1966171168
        %v4306 = vunpack.c.0.s8 %v4305
        %v4307 = vlaneseq
        %v4308 = vshrl.u32 %v4307, 7
        %v4309 = vsub.s32 %v4306, %v4308
        %v4310 = vrot.slane %v4282, %v4309
        %v4311 = vcombine.high %v4289, %v4289
        %v4312 = vcombine.high %v4296, %v4296
        %v4313 = vcombine.high %v4303, %v4303
        %v4314 = vcombine.high %v4310, %v4310
        %v4315 = vcombine.high %v3877, %v3877
        %v4317 = vunpack.c.l.s4 1966171168
        %v4318 = vunpack.c.0.s8 %v4317
        %v4319 = vlaneseq
        %v4320 = vshrl.u32 %v4319, 7
        %v4321 = vsub.s32 %v4318, %v4320
        %v4322 = vrot.slane %v3877, %v4321
        %v4324 = vunpack.c.l.s4 1966171168
        %v4325 = vunpack.c.0.s8 %v4324
        %v4326 = vlaneseq
        %v4327 = vshrl.u32 %v4326, 7
        %v4328 = vsub.s32 %v4325, %v4327
        %v4329 = vrot.slane %v4315, %v4328
        %v4330 = vcombine.high %v4322, %v4322
        %v4331 = vcombine.high %v4329, %v4329
        %v4333 = vunpack.c.l.s4 1966171168
        %v4334 = vunpack.c.0.s8 %v4333
        %v4335 = vlaneseq
        %v4336 = vshrl.u32 %v4335, 7
        %v4337 = vsub.s32 %v4334, %v4336
        %v4338 = vrot.slane %v4322, %v4337
        %v4340 = vunpack.c.l.s4 1966171168
        %v4341 = vunpack.c.0.s8 %v4340
        %v4342 = vlaneseq
        %v4343 = vshrl.u32 %v4342, 7
        %v4344 = vsub.s32 %v4341, %v4343
        %v4345 = vrot.slane %v4329, %v4344
        %v4347 = vunpack.c.l.s4 1966171168
        %v4348 = vunpack.c.0.s8 %v4347
        %v4349 = vlaneseq
        %v4350 = vshrl.u32 %v4349, 7
        %v4351 = vsub.s32 %v4348, %v4350
        %v4352 = vrot.slane %v4330, %v4351
        %v4354 = vunpack.c.l.s4 1966171168
        %v4355 = vunpack.c.0.s8 %v4354
        %v4356 = vlaneseq
        %v4357 = vshrl.u32 %v4356, 7
        %v4358 = vsub.s32 %v4355, %v4357
        %v4359 = vrot.slane %v4331, %v4358
        %v4360 = vcombine.high %v4338, %v4338
        %v4361 = vcombine.high %v4345, %v4345
        %v4362 = vcombine.high %v4352, %v4352
        %v4363 = vcombine.high %v4359, %v4359
        %v4364 = vcombine.high %v3880, %v3880
        %v4366 = vunpack.c.l.s4 1966171168
        %v4367 = vunpack.c.0.s8 %v4366
        %v4368 = vlaneseq
        %v4369 = vshrl.u32 %v4368, 7
        %v4370 = vsub.s32 %v4367, %v4369
        %v4371 = vrot.slane %v3880, %v4370
        %v4373 = vunpack.c.l.s4 1966171168
        %v4374 = vunpack.c.0.s8 %v4373
        %v4375 = vlaneseq
        %v4376 = vshrl.u32 %v4375, 7
        %v4377 = vsub.s32 %v4374, %v4376
        %v4378 = vrot.slane %v4364, %v4377
        %v4379 = vcombine.high %v4371, %v4371
        %v4380 = vcombine.high %v4378, %v4378
        %v4382 = vunpack.c.l.s4 1966171168
        %v4383 = vunpack.c.0.s8 %v4382
        %v4384 = vlaneseq
        %v4385 = vshrl.u32 %v4384, 7
        %v4386 = vsub.s32 %v4383, %v4385
        %v4387 = vrot.slane %v4371, %v4386
        %v4389 = vunpack.c.l.s4 1966171168
        %v4390 = vunpack.c.0.s8 %v4389
        %v4391 = vlaneseq
        %v4392 = vshrl.u32 %v4391, 7
        %v4393 = vsub.s32 %v4390, %v4392
        %v4394 = vrot.slane %v4378, %v4393
        %v4396 = vunpack.c.l.s4 1966171168
        %v4397 = vunpack.c.0.s8 %v4396
        %v4398 = vlaneseq
        %v4399 = vshrl.u32 %v4398, 7
        %v4400 = vsub.s32 %v4397, %v4399
        %v4401 = vrot.slane %v4379, %v4400
        %v4403 = vunpack.c.l.s4 1966171168
        %v4404 = vunpack.c.0.s8 %v4403
        %v4405 = vlaneseq
        %v4406 = vshrl.u32 %v4405, 7
        %v4407 = vsub.s32 %v4404, %v4406
        %v4408 = vrot.slane %v4380, %v4407
        %v4409 = vcombine.high %v4387, %v4387
        %v4410 = vcombine.high %v4394, %v4394
        %v4411 = vcombine.high %v4401, %v4401
        %v4412 = vcombine.high %v4408, %v4408
        %v4413 = vcombine.high %v3885, %v3885
        %v4415 = vunpack.c.l.s4 1966171168
        %v4416 = vunpack.c.0.s8 %v4415
        %v4417 = vlaneseq
        %v4418 = vshrl.u32 %v4417, 7
        %v4419 = vsub.s32 %v4416, %v4418
        %v4420 = vrot.slane %v3885, %v4419
        %v4422 = vunpack.c.l.s4 1966171168
        %v4423 = vunpack.c.0.s8 %v4422
        %v4424 = vlaneseq
        %v4425 = vshrl.u32 %v4424, 7
        %v4426 = vsub.s32 %v4423, %v4425
        %v4427 = vrot.slane %v4413, %v4426
        %v4428 = vcombine.high %v4420, %v4420
        %v4429 = vcombine.high %v4427, %v4427
        %v4431 = vunpack.c.l.s4 1966171168
        %v4432 = vunpack.c.0.s8 %v4431
        %v4433 = vlaneseq
        %v4434 = vshrl.u32 %v4433, 7
        %v4435 = vsub.s32 %v4432, %v4434
        %v4436 = vrot.slane %v4420, %v4435
        %v4438 = vunpack.c.l.s4 1966171168
        %v4439 = vunpack.c.0.s8 %v4438
        %v4440 = vlaneseq
        %v4441 = vshrl.u32 %v4440, 7
        %v4442 = vsub.s32 %v4439, %v4441
        %v4443 = vrot.slane %v4427, %v4442
        %v4445 = vunpack.c.l.s4 1966171168
        %v4446 = vunpack.c.0.s8 %v4445
        %v4447 = vlaneseq
        %v4448 = vshrl.u32 %v4447, 7
        %v4449 = vsub.s32 %v4446, %v4448
        %v4450 = vrot.slane %v4428, %v4449
        %v4452 = vunpack.c.l.s4 1966171168
        %v4453 = vunpack.c.0.s8 %v4452
        %v4454 = vlaneseq
        %v4455 = vshrl.u32 %v4454, 7
        %v4456 = vsub.s32 %v4453, %v4455
        %v4457 = vrot.slane %v4429, %v4456
        %v4458 = vcombine.high %v4436, %v4436
        %v4459 = vcombine.high %v4443, %v4443
        %v4460 = vcombine.high %v4450, %v4450
        %v4461 = vcombine.high %v4457, %v4457
        %v4462 = vcombine.high %v3888, %v3888
        %v4464 = vunpack.c.l.s4 1966171168
        %v4465 = vunpack.c.0.s8 %v4464
        %v4466 = vlaneseq
        %v4467 = vshrl.u32 %v4466, 7
        %v4468 = vsub.s32 %v4465, %v4467
        %v4469 = vrot.slane %v3888, %v4468
        %v4471 = vunpack.c.l.s4 1966171168
        %v4472 = vunpack.c.0.s8 %v4471
        %v4473 = vlaneseq
        %v4474 = vshrl.u32 %v4473, 7
        %v4475 = vsub.s32 %v4472, %v4474
        %v4476 = vrot.slane %v4462, %v4475
        %v4477 = vcombine.high %v4469, %v4469
        %v4478 = vcombine.high %v4476, %v4476
        %v4480 = vunpack.c.l.s4 1966171168
        %v4481 = vunpack.c.0.s8 %v4480
        %v4482 = vlaneseq
        %v4483 = vshrl.u32 %v4482, 7
        %v4484 = vsub.s32 %v4481, %v4483
        %v4485 = vrot.slane %v4469, %v4484
        %v4487 = vunpack.c.l.s4 1966171168
        %v4488 = vunpack.c.0.s8 %v4487
        %v4489 = vlaneseq
        %v4490 = vshrl.u32 %v4489, 7
        %v4491 = vsub.s32 %v4488, %v4490
        %v4492 = vrot.slane %v4476, %v4491
        %v4494 = vunpack.c.l.s4 1966171168
        %v4495 = vunpack.c.0.s8 %v4494
        %v4496 = vlaneseq
        %v4497 = vshrl.u32 %v4496, 7
        %v4498 = vsub.s32 %v4495, %v4497
        %v4499 = vrot.slane %v4477, %v4498
        %v4501 = vunpack.c.l.s4 1966171168
        %v4502 = vunpack.c.0.s8 %v4501
        %v4503 = vlaneseq
        %v4504 = vshrl.u32 %v4503, 7
        %v4505 = vsub.s32 %v4502, %v4504
        %v4506 = vrot.slane %v4478, %v4505
        %v4507 = vcombine.high %v4485, %v4485
        %v4508 = vcombine.high %v4492, %v4492
        %v4509 = vcombine.high %v4499, %v4499
        %v4510 = vcombine.high %v4506, %v4506
        %v4511 = vcombine.high %v3893, %v3893
        %v4513 = vunpack.c.l.s4 1966171168
        %v4514 = vunpack.c.0.s8 %v4513
        %v4515 = vlaneseq
        %v4516 = vshrl.u32 %v4515, 7
        %v4517 = vsub.s32 %v4514, %v4516
        %v4518 = vrot.slane %v3893, %v4517
        %v4520 = vunpack.c.l.s4 1966171168
        %v4521 = vunpack.c.0.s8 %v4520
        %v4522 = vlaneseq
        %v4523 = vshrl.u32 %v4522, 7
        %v4524 = vsub.s32 %v4521, %v4523
        %v4525 = vrot.slane %v4511, %v4524
        %v4526 = vcombine.high %v4518, %v4518
        %v4527 = vcombine.high %v4525, %v4525
        %v4529 = vunpack.c.l.s4 1966171168
        %v4530 = vunpack.c.0.s8 %v4529
        %v4531 = vlaneseq
        %v4532 = vshrl.u32 %v4531, 7
        %v4533 = vsub.s32 %v4530, %v4532
        %v4534 = vrot.slane %v4518, %v4533
        %v4536 = vunpack.c.l.s4 1966171168
        %v4537 = vunpack.c.0.s8 %v4536
        %v4538 = vlaneseq
        %v4539 = vshrl.u32 %v4538, 7
        %v4540 = vsub.s32 %v4537, %v4539
        %v4541 = vrot.slane %v4525, %v4540
        %v4543 = vunpack.c.l.s4 1966171168
        %v4544 = vunpack.c.0.s8 %v4543
        %v4545 = vlaneseq
        %v4546 = vshrl.u32 %v4545, 7
        %v4547 = vsub.s32 %v4544, %v4546
        %v4548 = vrot.slane %v4526, %v4547
        %v4550 = vunpack.c.l.s4 1966171168
        %v4551 = vunpack.c.0.s8 %v4550
        %v4552 = vlaneseq
        %v4553 = vshrl.u32 %v4552, 7
        %v4554 = vsub.s32 %v4551, %v4553
        %v4555 = vrot.slane %v4527, %v4554
        %v4556 = vcombine.high %v4534, %v4534
        %v4557 = vcombine.high %v4541, %v4541
        %v4558 = vcombine.high %v4548, %v4548
        %v4559 = vcombine.high %v4555, %v4555
        %v4560 = vcombine.high %v3896, %v3896
        %v4562 = vunpack.c.l.s4 1966171168
        %v4563 = vunpack.c.0.s8 %v4562
        %v4564 = vlaneseq
        %v4565 = vshrl.u32 %v4564, 7
        %v4566 = vsub.s32 %v4563, %v4565
        %v4567 = vrot.slane %v3896, %v4566
        %v4569 = vunpack.c.l.s4 1966171168
        %v4570 = vunpack.c.0.s8 %v4569
        %v4571 = vlaneseq
        %v4572 = vshrl.u32 %v4571, 7
        %v4573 = vsub.s32 %v4570, %v4572
        %v4574 = vrot.slane %v4560, %v4573
        %v4575 = vcombine.high %v4567, %v4567
        %v4576 = vcombine.high %v4574, %v4574
        %v4578 = vunpack.c.l.s4 1966171168
        %v4579 = vunpack.c.0.s8 %v4578
        %v4580 = vlaneseq
        %v4581 = vshrl.u32 %v4580, 7
        %v4582 = vsub.s32 %v4579, %v4581
        %v4583 = vrot.slane %v4567, %v4582
        %v4585 = vunpack.c.l.s4 1966171168
        %v4586 = vunpack.c.0.s8 %v4585
        %v4587 = vlaneseq
        %v4588 = vshrl.u32 %v4587, 7
        %v4589 = vsub.s32 %v4586, %v4588
        %v4590 = vrot.slane %v4574, %v4589
        %v4592 = vunpack.c.l.s4 1966171168
        %v4593 = vunpack.c.0.s8 %v4592
        %v4594 = vlaneseq
        %v4595 = vshrl.u32 %v4594, 7
        %v4596 = vsub.s32 %v4593, %v4595
        %v4597 = vrot.slane %v4575, %v4596
        %v4599 = vunpack.c.l.s4 1966171168
        %v4600 = vunpack.c.0.s8 %v4599
        %v4601 = vlaneseq
        %v4602 = vshrl.u32 %v4601, 7
        %v4603 = vsub.s32 %v4600, %v4602
        %v4604 = vrot.slane %v4576, %v4603
        %v4605 = vcombine.high %v4583, %v4583
        %v4606 = vcombine.high %v4590, %v4590
        %v4607 = vcombine.high %v4597, %v4597
        %v4608 = vcombine.high %v4604, %v4604
        %v4609 = vcombine.high %v3901, %v3901
        %v4611 = vunpack.c.l.s4 1966171168
        %v4612 = vunpack.c.0.s8 %v4611
        %v4613 = vlaneseq
        %v4614 = vshrl.u32 %v4613, 7
        %v4615 = vsub.s32 %v4612, %v4614
        %v4616 = vrot.slane %v3901, %v4615
        %v4618 = vunpack.c.l.s4 1966171168
        %v4619 = vunpack.c.0.s8 %v4618
        %v4620 = vlaneseq
        %v4621 = vshrl.u32 %v4620, 7
        %v4622 = vsub.s32 %v4619, %v4621
        %v4623 = vrot.slane %v4609, %v4622
        %v4624 = vcombine.high %v4616, %v4616
        %v4625 = vcombine.high %v4623, %v4623
        %v4627 = vunpack.c.l.s4 1966171168
        %v4628 = vunpack.c.0.s8 %v4627
        %v4629 = vlaneseq
        %v4630 = vshrl.u32 %v4629, 7
        %v4631 = vsub.s32 %v4628, %v4630
        %v4632 = vrot.slane %v4616, %v4631
        %v4634 = vunpack.c.l.s4 1966171168
        %v4635 = vunpack.c.0.s8 %v4634
        %v4636 = vlaneseq
        %v4637 = vshrl.u32 %v4636, 7
        %v4638 = vsub.s32 %v4635, %v4637
        %v4639 = vrot.slane %v4623, %v4638
        %v4641 = vunpack.c.l.s4 1966171168
        %v4642 = vunpack.c.0.s8 %v4641
        %v4643 = vlaneseq
        %v4644 = vshrl.u32 %v4643, 7
        %v4645 = vsub.s32 %v4642, %v4644
        %v4646 = vrot.slane %v4624, %v4645
        %v4648 = vunpack.c.l.s4 1966171168
        %v4649 = vunpack.c.0.s8 %v4648
        %v4650 = vlaneseq
        %v4651 = vshrl.u32 %v4650, 7
        %v4652 = vsub.s32 %v4649, %v4651
        %v4653 = vrot.slane %v4625, %v4652
        %v4654 = vcombine.high %v4632, %v4632
        %v4655 = vcombine.high %v4639, %v4639
        %v4656 = vcombine.high %v4646, %v4646
        %v4657 = vcombine.high %v4653, %v4653
        %v4658 = vcombine.high %v3904, %v3904
        %v4660 = vunpack.c.l.s4 1966171168
        %v4661 = vunpack.c.0.s8 %v4660
        %v4662 = vlaneseq
        %v4663 = vshrl.u32 %v4662, 7
        %v4664 = vsub.s32 %v4661, %v4663
        %v4665 = vrot.slane %v3904, %v4664
        %v4667 = vunpack.c.l.s4 1966171168
        %v4668 = vunpack.c.0.s8 %v4667
        %v4669 = vlaneseq
        %v4670 = vshrl.u32 %v4669, 7
        %v4671 = vsub.s32 %v4668, %v4670
        %v4672 = vrot.slane %v4658, %v4671
        %v4673 = vcombine.high %v4665, %v4665
        %v4674 = vcombine.high %v4672, %v4672
        %v4676 = vunpack.c.l.s4 1966171168
        %v4677 = vunpack.c.0.s8 %v4676
        %v4678 = vlaneseq
        %v4679 = vshrl.u32 %v4678, 7
        %v4680 = vsub.s32 %v4677, %v4679
        %v4681 = vrot.slane %v4665, %v4680
        %v4683 = vunpack.c.l.s4 1966171168
        %v4684 = vunpack.c.0.s8 %v4683
        %v4685 = vlaneseq
        %v4686 = vshrl.u32 %v4685, 7
        %v4687 = vsub.s32 %v4684, %v4686
        %v4688 = vrot.slane %v4672, %v4687
        %v4690 = vunpack.c.l.s4 1966171168
        %v4691 = vunpack.c.0.s8 %v4690
        %v4692 = vlaneseq
        %v4693 = vshrl.u32 %v4692, 7
        %v4694 = vsub.s32 %v4691, %v4693
        %v4695 = vrot.slane %v4673, %v4694
        %v4697 = vunpack.c.l.s4 1966171168
        %v4698 = vunpack.c.0.s8 %v4697
        %v4699 = vlaneseq
        %v4700 = vshrl.u32 %v4699, 7
        %v4701 = vsub.s32 %v4698, %v4700
        %v4702 = vrot.slane %v4674, %v4701
        %v4703 = vcombine.high %v4681, %v4681
        %v4704 = vcombine.high %v4688, %v4688
        %v4705 = vcombine.high %v4695, %v4695
        %v4706 = vcombine.high %v4702, %v4702
        %v4707 = vlaneseq
        %v4708 = vshrl.u32 %v4707, 7
        %v4709 = vsub.s32 0, %v4708
        %v4710 = vrot.slane %v3946, %v4709
        %v4711 = vlaneseq
        %v4712 = vshrl.u32 %v4711, 7
        %v4713 = vsub.s32 0, %v4712
        %v4714 = vrot.slane %v3960, %v4713
        %v4715 = vlaneseq
        %v4716 = vshrl.u32 %v4715, 7
        %v4717 = vsub.s32 0, %v4716
        %v4718 = vrot.slane %v3968, %v4717
        %v4719 = vlaneseq
        %v4720 = vshrl.u32 %v4719, 7
        %v4721 = vsub.s32 0, %v4720
        %v4722 = vrot.slane %v3970, %v4721
        %v4723 = vlaneseq
        %v4724 = vshrl.u32 %v4723, 7
        %v4725 = vsub.s32 0, %v4724
        %v4726 = vrot.slane %v3953, %v4725
        %v4727 = vlaneseq
        %v4728 = vshrl.u32 %v4727, 7
        %v4729 = vsub.s32 0, %v4728
        %v4730 = vrot.slane %v3967, %v4729
        %v4731 = vlaneseq
        %v4732 = vshrl.u32 %v4731, 7
        %v4733 = vsub.s32 0, %v4732
        %v4734 = vrot.slane %v3969, %v4733
        %v4735 = vlaneseq
        %v4736 = vshrl.u32 %v4735, 7
        %v4737 = vsub.s32 0, %v4736
        %v4738 = vrot.slane %v3971, %v4737
        %v4739 = vlaneseq
        %v4740 = vshrl.u32 %v4739, 7
        %v4741 = vsub.s32 0, %v4740
        %v4742 = vrot.slane %v3995, %v4741
        %v4743 = vlaneseq
        %v4744 = vshrl.u32 %v4743, 7
        %v4745 = vsub.s32 0, %v4744
        %v4746 = vrot.slane %v4009, %v4745
        %v4747 = vlaneseq
        %v4748 = vshrl.u32 %v4747, 7
        %v4749 = vsub.s32 0, %v4748
        %v4750 = vrot.slane %v4017, %v4749
        %v4751 = vlaneseq
        %v4752 = vshrl.u32 %v4751, 7
        %v4753 = vsub.s32 0, %v4752
        %v4754 = vrot.slane %v4019, %v4753
        %v4755 = vlaneseq
        %v4756 = vshrl.u32 %v4755, 7
        %v4757 = vsub.s32 0, %v4756
        %v4758 = vrot.slane %v4002, %v4757
        %v4759 = vlaneseq
        %v4760 = vshrl.u32 %v4759, 7
        %v4761 = vsub.s32 0, %v4760
        %v4762 = vrot.slane %v4016, %v4761
        %v4763 = vlaneseq
        %v4764 = vshrl.u32 %v4763, 7
        %v4765 = vsub.s32 0, %v4764
        %v4766 = vrot.slane %v4018, %v4765
        %v4767 = vlaneseq
        %v4768 = vshrl.u32 %v4767, 7
        %v4769 = vsub.s32 0, %v4768
        %v4770 = vrot.slane %v4020, %v4769
        %v4771 = vlaneseq
        %v4772 = vshrl.u32 %v4771, 7
        %v4773 = vsub.s32 0, %v4772
        %v4774 = vrot.slane %v4044, %v4773
        %v4775 = vlaneseq
        %v4776 = vshrl.u32 %v4775, 7
        %v4777 = vsub.s32 0, %v4776
        %v4778 = vrot.slane %v4058, %v4777
        %v4779 = vlaneseq
        %v4780 = vshrl.u32 %v4779, 7
        %v4781 = vsub.s32 0, %v4780
        %v4782 = vrot.slane %v4066, %v4781
        %v4783 = vlaneseq
        %v4784 = vshrl.u32 %v4783, 7
        %v4785 = vsub.s32 0, %v4784
        %v4786 = vrot.slane %v4068, %v4785
        %v4787 = vlaneseq
        %v4788 = vshrl.u32 %v4787, 7
        %v4789 = vsub.s32 0, %v4788
        %v4790 = vrot.slane %v4051, %v4789
        %v4791 = vlaneseq
        %v4792 = vshrl.u32 %v4791, 7
        %v4793 = vsub.s32 0, %v4792
        %v4794 = vrot.slane %v4065, %v4793
        %v4795 = vlaneseq
        %v4796 = vshrl.u32 %v4795, 7
        %v4797 = vsub.s32 0, %v4796
        %v4798 = vrot.slane %v4067, %v4797
        %v4799 = vlaneseq
        %v4800 = vshrl.u32 %v4799, 7
        %v4801 = vsub.s32 0, %v4800
        %v4802 = vrot.slane %v4069, %v4801
        %v4803 = vlaneseq
        %v4804 = vshrl.u32 %v4803, 7
        %v4805 = vsub.s32 0, %v4804
        %v4806 = vrot.slane %v4093, %v4805
        %v4807 = vlaneseq
        %v4808 = vshrl.u32 %v4807, 7
        %v4809 = vsub.s32 0, %v4808
        %v4810 = vrot.slane %v4107, %v4809
        %v4811 = vlaneseq
        %v4812 = vshrl.u32 %v4811, 7
        %v4813 = vsub.s32 0, %v4812
        %v4814 = vrot.slane %v4115, %v4813
        %v4815 = vlaneseq
        %v4816 = vshrl.u32 %v4815, 7
        %v4817 = vsub.s32 0, %v4816
        %v4818 = vrot.slane %v4117, %v4817
        %v4819 = vlaneseq
        %v4820 = vshrl.u32 %v4819, 7
        %v4821 = vsub.s32 0, %v4820
        %v4822 = vrot.slane %v4100, %v4821
        %v4823 = vlaneseq
        %v4824 = vshrl.u32 %v4823, 7
        %v4825 = vsub.s32 0, %v4824
        %v4826 = vrot.slane %v4114, %v4825
        %v4827 = vlaneseq
        %v4828 = vshrl.u32 %v4827, 7
        %v4829 = vsub.s32 0, %v4828
        %v4830 = vrot.slane %v4116, %v4829
        %v4831 = vlaneseq
        %v4832 = vshrl.u32 %v4831, 7
        %v4833 = vsub.s32 0, %v4832
        %v4834 = vrot.slane %v4118, %v4833
        %v4835 = vlaneseq
        %v4836 = vshrl.u32 %v4835, 7
        %v4837 = vsub.s32 0, %v4836
        %v4838 = vrot.slane %v4142, %v4837
        %v4839 = vlaneseq
        %v4840 = vshrl.u32 %v4839, 7
        %v4841 = vsub.s32 0, %v4840
        %v4842 = vrot.slane %v4156, %v4841
        %v4843 = vlaneseq
        %v4844 = vshrl.u32 %v4843, 7
        %v4845 = vsub.s32 0, %v4844
        %v4846 = vrot.slane %v4164, %v4845
        %v4847 = vlaneseq
        %v4848 = vshrl.u32 %v4847, 7
        %v4849 = vsub.s32 0, %v4848
        %v4850 = vrot.slane %v4166, %v4849
        %v4851 = vlaneseq
        %v4852 = vshrl.u32 %v4851, 7
        %v4853 = vsub.s32 0, %v4852
        %v4854 = vrot.slane %v4149, %v4853
        %v4855 = vlaneseq
        %v4856 = vshrl.u32 %v4855, 7
        %v4857 = vsub.s32 0, %v4856
        %v4858 = vrot.slane %v4163, %v4857
        %v4859 = vlaneseq
        %v4860 = vshrl.u32 %v4859, 7
        %v4861 = vsub.s32 0, %v4860
        %v4862 = vrot.slane %v4165, %v4861
        %v4863 = vlaneseq
        %v4864 = vshrl.u32 %v4863, 7
        %v4865 = vsub.s32 0, %v4864
        %v4866 = vrot.slane %v4167, %v4865
        %v4867 = vlaneseq
        %v4868 = vshrl.u32 %v4867, 7
        %v4869 = vsub.s32 0, %v4868
        %v4870 = vrot.slane %v4191, %v4869
        %v4871 = vlaneseq
        %v4872 = vshrl.u32 %v4871, 7
        %v4873 = vsub.s32 0, %v4872
        %v4874 = vrot.slane %v4205, %v4873
        %v4875 = vlaneseq
        %v4876 = vshrl.u32 %v4875, 7
        %v4877 = vsub.s32 0, %v4876
        %v4878 = vrot.slane %v4213, %v4877
        %v4879 = vlaneseq
        %v4880 = vshrl.u32 %v4879, 7
        %v4881 = vsub.s32 0, %v4880
        %v4882 = vrot.slane %v4215, %v4881
        %v4883 = vlaneseq
        %v4884 = vshrl.u32 %v4883, 7
        %v4885 = vsub.s32 0, %v4884
        %v4886 = vrot.slane %v4198, %v4885
        %v4887 = vlaneseq
        %v4888 = vshrl.u32 %v4887, 7
        %v4889 = vsub.s32 0, %v4888
        %v4890 = vrot.slane %v4212, %v4889
        %v4891 = vlaneseq
        %v4892 = vshrl.u32 %v4891, 7
        %v4893 = vsub.s32 0, %v4892
        %v4894 = vrot.slane %v4214, %v4893
        %v4895 = vlaneseq
        %v4896 = vshrl.u32 %v4895, 7
        %v4897 = vsub.s32 0, %v4896
        %v4898 = vrot.slane %v4216, %v4897
        %v4899 = vlaneseq
        %v4900 = vshrl.u32 %v4899, 7
        %v4901 = vsub.s32 0, %v4900
        %v4902 = vrot.slane %v4240, %v4901
        %v4903 = vlaneseq
        %v4904 = vshrl.u32 %v4903, 7
        %v4905 = vsub.s32 0, %v4904
        %v4906 = vrot.slane %v4254, %v4905
        %v4907 = vlaneseq
        %v4908 = vshrl.u32 %v4907, 7
        %v4909 = vsub.s32 0, %v4908
        %v4910 = vrot.slane %v4262, %v4909
        %v4911 = vlaneseq
        %v4912 = vshrl.u32 %v4911, 7
        %v4913 = vsub.s32 0, %v4912
        %v4914 = vrot.slane %v4264, %v4913
        %v4915 = vlaneseq
        %v4916 = vshrl.u32 %v4915, 7
        %v4917 = vsub.s32 0, %v4916
        %v4918 = vrot.slane %v4247, %v4917
        %v4919 = vlaneseq
        %v4920 = vshrl.u32 %v4919, 7
        %v4921 = vsub.s32 0, %v4920
        %v4922 = vrot.slane %v4261, %v4921
        %v4923 = vlaneseq
        %v4924 = vshrl.u32 %v4923, 7
        %v4925 = vsub.s32 0, %v4924
        %v4926 = vrot.slane %v4263, %v4925
        %v4927 = vlaneseq
        %v4928 = vshrl.u32 %v4927, 7
        %v4929 = vsub.s32 0, %v4928
        %v4930 = vrot.slane %v4265, %v4929
        %v4931 = vlaneseq
        %v4932 = vshrl.u32 %v4931, 7
        %v4933 = vsub.s32 0, %v4932
        %v4934 = vrot.slane %v4289, %v4933
        %v4935 = vlaneseq
        %v4936 = vshrl.u32 %v4935, 7
        %v4937 = vsub.s32 0, %v4936
        %v4938 = vrot.slane %v4303, %v4937
        %v4939 = vlaneseq
        %v4940 = vshrl.u32 %v4939, 7
        %v4941 = vsub.s32 0, %v4940
        %v4942 = vrot.slane %v4311, %v4941
        %v4943 = vlaneseq
        %v4944 = vshrl.u32 %v4943, 7
        %v4945 = vsub.s32 0, %v4944
        %v4946 = vrot.slane %v4313, %v4945
        %v4947 = vlaneseq
        %v4948 = vshrl.u32 %v4947, 7
        %v4949 = vsub.s32 0, %v4948
        %v4950 = vrot.slane %v4296, %v4949
        %v4951 = vlaneseq
        %v4952 = vshrl.u32 %v4951, 7
        %v4953 = vsub.s32 0, %v4952
        %v4954 = vrot.slane %v4310, %v4953
        %v4955 = vlaneseq
        %v4956 = vshrl.u32 %v4955, 7
        %v4957 = vsub.s32 0, %v4956
        %v4958 = vrot.slane %v4312, %v4957
        %v4959 = vlaneseq
        %v4960 = vshrl.u32 %v4959, 7
        %v4961 = vsub.s32 0, %v4960
        %v4962 = vrot.slane %v4314, %v4961
        %v4963 = vlaneseq
        %v4964 = vshrl.u32 %v4963, 7
        %v4965 = vsub.s32 0, %v4964
        %v4966 = vrot.slane %v4338, %v4965
        %v4967 = vlaneseq
        %v4968 = vshrl.u32 %v4967, 7
        %v4969 = vsub.s32 0, %v4968
        %v4970 = vrot.slane %v4352, %v4969
        %v4971 = vlaneseq
        %v4972 = vshrl.u32 %v4971, 7
        %v4973 = vsub.s32 0, %v4972
        %v4974 = vrot.slane %v4360, %v4973
        %v4975 = vlaneseq
        %v4976 = vshrl.u32 %v4975, 7
        %v4977 = vsub.s32 0, %v4976
        %v4978 = vrot.slane %v4362, %v4977
        %v4979 = vlaneseq
        %v4980 = vshrl.u32 %v4979, 7
        %v4981 = vsub.s32 0, %v4980
        %v4982 = vrot.slane %v4345, %v4981
        %v4983 = vlaneseq
        %v4984 = vshrl.u32 %v4983, 7
        %v4985 = vsub.s32 0, %v4984
        %v4986 = vrot.slane %v4359, %v4985
        %v4987 = vlaneseq
        %v4988 = vshrl.u32 %v4987, 7
        %v4989 = vsub.s32 0, %v4988
        %v4990 = vrot.slane %v4361, %v4989
        %v4991 = vlaneseq
        %v4992 = vshrl.u32 %v4991, 7
        %v4993 = vsub.s32 0, %v4992
        %v4994 = vrot.slane %v4363, %v4993
        %v4995 = vlaneseq
        %v4996 = vshrl.u32 %v4995, 7
        %v4997 = vsub.s32 0, %v4996
        %v4998 = vrot.slane %v4387, %v4997
        %v4999 = vlaneseq
        %v5000 = vshrl.u32 %v4999, 7
        %v5001 = vsub.s32 0, %v5000
        %v5002 = vrot.slane %v4401, %v5001
        %v5003 = vlaneseq
        %v5004 = vshrl.u32 %v5003, 7
        %v5005 = vsub.s32 0, %v5004
        %v5006 = vrot.slane %v4409, %v5005
        %v5007 = vlaneseq
        %v5008 = vshrl.u32 %v5007, 7
        %v5009 = vsub.s32 0, %v5008
        %v5010 = vrot.slane %v4411, %v5009
        %v5011 = vlaneseq
        %v5012 = vshrl.u32 %v5011, 7
        %v5013 = vsub.s32 0, %v5012
        %v5014 = vrot.slane %v4394, %v5013
        %v5015 = vlaneseq
        %v5016 = vshrl.u32 %v5015, 7
        %v5017 = vsub.s32 0, %v5016
        %v5018 = vrot.slane %v4408, %v5017
        %v5019 = vlaneseq
        %v5020 = vshrl.u32 %v5019, 7
        %v5021 = vsub.s32 0, %v5020
        %v5022 = vrot.slane %v4410, %v5021
        %v5023 = vlaneseq
        %v5024 = vshrl.u32 %v5023, 7
        %v5025 = vsub.s32 0, %v5024
        %v5026 = vrot.slane %v4412, %v5025
        %v5027 = vlaneseq
        %v5028 = vshrl.u32 %v5027, 7
        %v5029 = vsub.s32 0, %v5028
        %v5030 = vrot.slane %v4436, %v5029
        %v5031 = vlaneseq
        %v5032 = vshrl.u32 %v5031, 7
        %v5033 = vsub.s32 0, %v5032
        %v5034 = vrot.slane %v4450, %v5033
        %v5035 = vlaneseq
        %v5036 = vshrl.u32 %v5035, 7
        %v5037 = vsub.s32 0, %v5036
        %v5038 = vrot.slane %v4458, %v5037
        %v5039 = vlaneseq
        %v5040 = vshrl.u32 %v5039, 7
        %v5041 = vsub.s32 0, %v5040
        %v5042 = vrot.slane %v4460, %v5041
        %v5043 = vlaneseq
        %v5044 = vshrl.u32 %v5043, 7
        %v5045 = vsub.s32 0, %v5044
        %v5046 = vrot.slane %v4443, %v5045
        %v5047 = vlaneseq
        %v5048 = vshrl.u32 %v5047, 7
        %v5049 = vsub.s32 0, %v5048
        %v5050 = vrot.slane %v4457, %v5049
        %v5051 = vlaneseq
        %v5052 = vshrl.u32 %v5051, 7
        %v5053 = vsub.s32 0, %v5052
        %v5054 = vrot.slane %v4459, %v5053
        %v5055 = vlaneseq
        %v5056 = vshrl.u32 %v5055, 7
        %v5057 = vsub.s32 0, %v5056
        %v5058 = vrot.slane %v4461, %v5057
        %v5059 = vlaneseq
        %v5060 = vshrl.u32 %v5059, 7
        %v5061 = vsub.s32 0, %v5060
        %v5062 = vrot.slane %v4485, %v5061
        %v5063 = vlaneseq
        %v5064 = vshrl.u32 %v5063, 7
        %v5065 = vsub.s32 0, %v5064
        %v5066 = vrot.slane %v4499, %v5065
        %v5067 = vlaneseq
        %v5068 = vshrl.u32 %v5067, 7
        %v5069 = vsub.s32 0, %v5068
        %v5070 = vrot.slane %v4507, %v5069
        %v5071 = vlaneseq
        %v5072 = vshrl.u32 %v5071, 7
        %v5073 = vsub.s32 0, %v5072
        %v5074 = vrot.slane %v4509, %v5073
        %v5075 = vlaneseq
        %v5076 = vshrl.u32 %v5075, 7
        %v5077 = vsub.s32 0, %v5076
        %v5078 = vrot.slane %v4492, %v5077
        %v5079 = vlaneseq
        %v5080 = vshrl.u32 %v5079, 7
        %v5081 = vsub.s32 0, %v5080
        %v5082 = vrot.slane %v4506, %v5081
        %v5083 = vlaneseq
        %v5084 = vshrl.u32 %v5083, 7
        %v5085 = vsub.s32 0, %v5084
        %v5086 = vrot.slane %v4508, %v5085
        %v5087 = vlaneseq
        %v5088 = vshrl.u32 %v5087, 7
        %v5089 = vsub.s32 0, %v5088
        %v5090 = vrot.slane %v4510, %v5089
        %v5091 = vlaneseq
        %v5092 = vshrl.u32 %v5091, 7
        %v5093 = vsub.s32 0, %v5092
        %v5094 = vrot.slane %v4534, %v5093
        %v5095 = vlaneseq
        %v5096 = vshrl.u32 %v5095, 7
        %v5097 = vsub.s32 0, %v5096
        %v5098 = vrot.slane %v4548, %v5097
        %v5099 = vlaneseq
        %v5100 = vshrl.u32 %v5099, 7
        %v5101 = vsub.s32 0, %v5100
        %v5102 = vrot.slane %v4556, %v5101
        %v5103 = vlaneseq
        %v5104 = vshrl.u32 %v5103, 7
        %v5105 = vsub.s32 0, %v5104
        %v5106 = vrot.slane %v4558, %v5105
        %v5107 = vlaneseq
        %v5108 = vshrl.u32 %v5107, 7
        %v5109 = vsub.s32 0, %v5108
        %v5110 = vrot.slane %v4541, %v5109
        %v5111 = vlaneseq
        %v5112 = vshrl.u32 %v5111, 7
        %v5113 = vsub.s32 0, %v5112
        %v5114 = vrot.slane %v4555, %v5113
        %v5115 = vlaneseq
        %v5116 = vshrl.u32 %v5115, 7
        %v5117 = vsub.s32 0, %v5116
        %v5118 = vrot.slane %v4557, %v5117
        %v5119 = vlaneseq
        %v5120 = vshrl.u32 %v5119, 7
        %v5121 = vsub.s32 0, %v5120
        %v5122 = vrot.slane %v4559, %v5121
        %v5123 = vlaneseq
        %v5124 = vshrl.u32 %v5123, 7
        %v5125 = vsub.s32 0, %v5124
        %v5126 = vrot.slane %v4583, %v5125
        %v5127 = vlaneseq
        %v5128 = vshrl.u32 %v5127, 7
        %v5129 = vsub.s32 0, %v5128
        %v5130 = vrot.slane %v4597, %v5129
        %v5131 = vlaneseq
        %v5132 = vshrl.u32 %v5131, 7
        %v5133 = vsub.s32 0, %v5132
        %v5134 = vrot.slane %v4605, %v5133
        %v5135 = vlaneseq
        %v5136 = vshrl.u32 %v5135, 7
        %v5137 = vsub.s32 0, %v5136
        %v5138 = vrot.slane %v4607, %v5137
        %v5139 = vlaneseq
        %v5140 = vshrl.u32 %v5139, 7
        %v5141 = vsub.s32 0, %v5140
        %v5142 = vrot.slane %v4590, %v5141
        %v5143 = vlaneseq
        %v5144 = vshrl.u32 %v5143, 7
        %v5145 = vsub.s32 0, %v5144
        %v5146 = vrot.slane %v4604, %v5145
        %v5147 = vlaneseq
        %v5148 = vshrl.u32 %v5147, 7
        %v5149 = vsub.s32 0, %v5148
        %v5150 = vrot.slane %v4606, %v5149
        %v5151 = vlaneseq
        %v5152 = vshrl.u32 %v5151, 7
        %v5153 = vsub.s32 0, %v5152
        %v5154 = vrot.slane %v4608, %v5153
        %v5155 = vlaneseq
        %v5156 = vshrl.u32 %v5155, 7
        %v5157 = vsub.s32 0, %v5156
        %v5158 = vrot.slane %v4632, %v5157
        %v5159 = vlaneseq
        %v5160 = vshrl.u32 %v5159, 7
        %v5161 = vsub.s32 0, %v5160
        %v5162 = vrot.slane %v4646, %v5161
        %v5163 = vlaneseq
        %v5164 = vshrl.u32 %v5163, 7
        %v5165 = vsub.s32 0, %v5164
        %v5166 = vrot.slane %v4654, %v5165
        %v5167 = vlaneseq
        %v5168 = vshrl.u32 %v5167, 7
        %v5169 = vsub.s32 0, %v5168
        %v5170 = vrot.slane %v4656, %v5169
        %v5171 = vlaneseq
        %v5172 = vshrl.u32 %v5171, 7
        %v5173 = vsub.s32 0, %v5172
        %v5174 = vrot.slane %v4639, %v5173
        %v5175 = vlaneseq
        %v5176 = vshrl.u32 %v5175, 7
        %v5177 = vsub.s32 0, %v5176
        %v5178 = vrot.slane %v4653, %v5177
        %v5179 = vlaneseq
        %v5180 = vshrl.u32 %v5179, 7
        %v5181 = vsub.s32 0, %v5180
        %v5182 = vrot.slane %v4655, %v5181
        %v5183 = vlaneseq
        %v5184 = vshrl.u32 %v5183, 7
        %v5185 = vsub.s32 0, %v5184
        %v5186 = vrot.slane %v4657, %v5185
        %v5187 = vlaneseq
        %v5188 = vshrl.u32 %v5187, 7
        %v5189 = vsub.s32 0, %v5188
        %v5190 = vrot.slane %v4681, %v5189
        %v5191 = vlaneseq
        %v5192 = vshrl.u32 %v5191, 7
        %v5193 = vsub.s32 0, %v5192
        %v5194 = vrot.slane %v4695, %v5193
        %v5195 = vlaneseq
        %v5196 = vshrl.u32 %v5195, 7
        %v5197 = vsub.s32 0, %v5196
        %v5198 = vrot.slane %v4703, %v5197
        %v5199 = vlaneseq
        %v5200 = vshrl.u32 %v5199, 7
        %v5201 = vsub.s32 0, %v5200
        %v5202 = vrot.slane %v4705, %v5201
        %v5203 = vlaneseq
        %v5204 = vshrl.u32 %v5203, 7
        %v5205 = vsub.s32 0, %v5204
        %v5206 = vrot.slane %v4688, %v5205
        %v5207 = vlaneseq
        %v5208 = vshrl.u32 %v5207, 7
        %v5209 = vsub.s32 0, %v5208
        %v5210 = vrot.slane %v4702, %v5209
        %v5211 = vlaneseq
        %v5212 = vshrl.u32 %v5211, 7
        %v5213 = vsub.s32 0, %v5212
        %v5214 = vrot.slane %v4704, %v5213
        %v5215 = vlaneseq
        %v5216 = vshrl.u32 %v5215, 7
        %v5217 = vsub.s32 0, %v5216
        %v5218 = vrot.slane %v4706, %v5217
        %v5347 = vmul.f32 %v1104, %v4710
        %v5348 = vmul.f32 %v1105, %v4714
        %v5349 = vmul.f32 %v1106, %v4718
        %v5350 = vmul.f32 %v1107, %v4722
        %v5351 = vmul.f32 %v1108, %v4726
        %v5352 = vmul.f32 %v1109, %v4730
        %v5353 = vmul.f32 %v1110, %v4734
        %v5354 = vmul.f32 %v1111, %v4738
        %v5355 = vmul.f32 %v1112, %v4742
        %v5356 = vmul.f32 %v1113, %v4746
        %v5357 = vmul.f32 %v1114, %v4750
        %v5358 = vmul.f32 %v1115, %v4754
        %v5359 = vmul.f32 %v1116, %v4758
        %v5360 = vmul.f32 %v1117, %v4762
        %v5361 = vmul.f32 %v1118, %v4766
        %v5362 = vmul.f32 %v1119, %v4770
        %v5363 = vmul.f32 %v1120, %v4774
        %v5364 = vmul.f32 %v1121, %v4778
        %v5365 = vmul.f32 %v1122, %v4782
        %v5366 = vmul.f32 %v1123, %v4786
        %v5367 = vmul.f32 %v1124, %v4790
        %v5368 = vmul.f32 %v1125, %v4794
        %v5369 = vmul.f32 %v1126, %v4798
        %v5370 = vmul.f32 %v1127, %v4802
        %v5371 = vmul.f32 %v1128, %v4806
        %v5372 = vmul.f32 %v1129, %v4810
        %v5373 = vmul.f32 %v1130, %v4814
        %v5374 = vmul.f32 %v1131, %v4818
        %v5375 = vmul.f32 %v1132, %v4822
        %v5376 = vmul.f32 %v1133, %v4826
        %v5377 = vmul.f32 %v1134, %v4830
        %v5378 = vmul.f32 %v1135, %v4834
        %v5379 = vmul.f32 %v1136, %v4838
        %v5380 = vmul.f32 %v1137, %v4842
        %v5381 = vmul.f32 %v1138, %v4846
        %v5382 = vmul.f32 %v1139, %v4850
        %v5383 = vmul.f32 %v1140, %v4854
        %v5384 = vmul.f32 %v1141, %v4858
        %v5385 = vmul.f32 %v1142, %v4862
        %v5386 = vmul.f32 %v1143, %v4866
        %v5387 = vmul.f32 %v1144, %v4870
        %v5388 = vmul.f32 %v1145, %v4874
        %v5389 = vmul.f32 %v1146, %v4878
        %v5390 = vmul.f32 %v1147, %v4882
        %v5391 = vmul.f32 %v1148, %v4886
        %v5392 = vmul.f32 %v1149, %v4890
        %v5393 = vmul.f32 %v1150, %v4894
        %v5394 = vmul.f32 %v1151, %v4898
        %v5395 = vmul.f32 %v1152, %v4902
        %v5396 = vmul.f32 %v1153, %v4906
        %v5397 = vmul.f32 %v1154, %v4910
        %v5398 = vmul.f32 %v1155, %v4914
        %v5399 = vmul.f32 %v1156, %v4918
        %v5400 = vmul.f32 %v1157, %v4922
        %v5401 = vmul.f32 %v1158, %v4926
        %v5402 = vmul.f32 %v1159, %v4930
        %v5403 = vmul.f32 %v1160, %v4934
        %v5404 = vmul.f32 %v1161, %v4938
        %v5405 = vmul.f32 %v1162, %v4942
        %v5406 = vmul.f32 %v1163, %v4946
        %v5407 = vmul.f32 %v1164, %v4950
        %v5408 = vmul.f32 %v1165, %v4954
        %v5409 = vmul.f32 %v1166, %v4958
        %v5410 = vmul.f32 %v1167, %v4962
        %v5411 = vmul.f32 %v1168, %v4966
        %v5412 = vmul.f32 %v1169, %v4970
        %v5413 = vmul.f32 %v1170, %v4974
        %v5414 = vmul.f32 %v1171, %v4978
        %v5415 = vmul.f32 %v1172, %v4982
        %v5416 = vmul.f32 %v1173, %v4986
        %v5417 = vmul.f32 %v1174, %v4990
        %v5418 = vmul.f32 %v1175, %v4994
        %v5419 = vmul.f32 %v1176, %v4998
        %v5420 = vmul.f32 %v1177, %v5002
        %v5421 = vmul.f32 %v1178, %v5006
        %v5422 = vmul.f32 %v1179, %v5010
        %v5423 = vmul.f32 %v1180, %v5014
        %v5424 = vmul.f32 %v1181, %v5018
        %v5425 = vmul.f32 %v1182, %v5022
        %v5426 = vmul.f32 %v1183, %v5026
        %v5427 = vmul.f32 %v1184, %v5030
        %v5428 = vmul.f32 %v1185, %v5034
        %v5429 = vmul.f32 %v1186, %v5038
        %v5430 = vmul.f32 %v1187, %v5042
        %v5431 = vmul.f32 %v1188, %v5046
        %v5432 = vmul.f32 %v1189, %v5050
        %v5433 = vmul.f32 %v1190, %v5054
        %v5434 = vmul.f32 %v1191, %v5058
        %v5435 = vmul.f32 %v1192, %v5062
        %v5436 = vmul.f32 %v1193, %v5066
        %v5437 = vmul.f32 %v1194, %v5070
        %v5438 = vmul.f32 %v1195, %v5074
        %v5439 = vmul.f32 %v1196, %v5078
        %v5440 = vmul.f32 %v1197, %v5082
        %v5441 = vmul.f32 %v1198, %v5086
        %v5442 = vmul.f32 %v1199, %v5090
        %v5443 = vmul.f32 %v1200, %v5094
        %v5444 = vmul.f32 %v1201, %v5098
        %v5445 = vmul.f32 %v1202, %v5102
        %v5446 = vmul.f32 %v1203, %v5106
        %v5447 = vmul.f32 %v1204, %v5110
        %v5448 = vmul.f32 %v1205, %v5114
        %v5449 = vmul.f32 %v1206, %v5118
        %v5450 = vmul.f32 %v1207, %v5122
        %v5451 = vmul.f32 %v1208, %v5126
        %v5452 = vmul.f32 %v1209, %v5130
        %v5453 = vmul.f32 %v1210, %v5134
        %v5454 = vmul.f32 %v1211, %v5138
        %v5455 = vmul.f32 %v1212, %v5142
        %v5456 = vmul.f32 %v1213, %v5146
        %v5457 = vmul.f32 %v1214, %v5150
        %v5458 = vmul.f32 %v1215, %v5154
        %v5459 = vmul.f32 %v1216, %v5158
        %v5460 = vmul.f32 %v1217, %v5162
        %v5461 = vmul.f32 %v1218, %v5166
        %v5462 = vmul.f32 %v1219, %v5170
        %v5463 = vmul.f32 %v1220, %v5174
        %v5464 = vmul.f32 %v1221, %v5178
        %v5465 = vmul.f32 %v1222, %v5182
        %v5466 = vmul.f32 %v1223, %v5186
        %v5467 = vmul.f32 %v1224, %v5190
        %v5468 = vmul.f32 %v1225, %v5194
        %v5469 = vmul.f32 %v1226, %v5198
        %v5470 = vmul.f32 %v1227, %v5202
        %v5471 = vmul.f32 %v1228, %v5206
        %v5472 = vmul.f32 %v1229, %v5210
        %v5473 = vmul.f32 %v1230, %v5214
        %v5474 = vmul.f32 %v1231, %v5218
        %v5477 = vunpack.c.l.b16 %v3265
        %v5478 = vunpack.c.l.b16 %v3266
        %v5479 = vpack.c.b16 %v5478, %v5477
        %v5482 = vsel %vm2304, %v3201, 0
        %v5485 = vsel %vm2304, %v3202, 0
        %v5488 = vsel %vm2304, %v3203, 0
        %v5491 = vsel %vm2304, %v3204, 0
        %v5494 = vsel %vm2304, %v3205, 0
        %v5497 = vsel %vm2304, %v3206, 0
        %v5500 = vsel %vm2304, %v3207, 0
        %v5503 = vsel %vm2304, %v3208, 0
        %v5506 = vsel %vm2304, %v3209, 0
        %v5509 = vsel %vm2304, %v3210, 0
        %v5512 = vsel %vm2304, %v3211, 0
        %v5515 = vsel %vm2304, %v3212, 0
        %v5518 = vsel %vm2304, %v3213, 0
        %v5521 = vsel %vm2304, %v3214, 0
        %v5524 = vsel %vm2304, %v3215, 0
        %v5527 = vsel %vm2304, %v3216, 0
        %v5530 = vsel %vm2304, %v3217, 0
        %v5533 = vsel %vm2304, %v3218, 0
        %v5536 = vsel %vm2304, %v3219, 0
        %v5539 = vsel %vm2304, %v3220, 0
        %v5542 = vsel %vm2304, %v3221, 0
        %v5545 = vsel %vm2304, %v3222, 0
        %v5548 = vsel %vm2304, %v3223, 0
        %v5551 = vsel %vm2304, %v3224, 0
        %v5554 = vsel %vm2304, %v3225, 0
        %v5557 = vsel %vm2304, %v3226, 0
        %v5560 = vsel %vm2304, %v3227, 0
        %v5563 = vsel %vm2304, %v3228, 0
        %v5566 = vsel %vm2304, %v3229, 0
        %v5569 = vsel %vm2304, %v3230, 0
        %v5572 = vsel %vm2304, %v3231, 0
        %v5575 = vsel %vm2304, %v3232, 0
        %v5578 = vsel %vm2304, %v3233, 0
        %v5581 = vsel %vm2304, %v3234, 0
        %v5584 = vsel %vm2304, %v3235, 0
        %v5587 = vsel %vm2304, %v3236, 0
        %v5590 = vsel %vm2304, %v3237, 0
        %v5593 = vsel %vm2304, %v3238, 0
        %v5596 = vsel %vm2304, %v3239, 0
        %v5599 = vsel %vm2304, %v3240, 0
        %v5602 = vsel %vm2304, %v3241, 0
        %v5605 = vsel %vm2304, %v3242, 0
        %v5608 = vsel %vm2304, %v3243, 0
        %v5611 = vsel %vm2304, %v3244, 0
        %v5614 = vsel %vm2304, %v3245, 0
        %v5617 = vsel %vm2304, %v3246, 0
        %v5620 = vsel %vm2304, %v3247, 0
        %v5623 = vsel %vm2304, %v3248, 0
        %v5626 = vsel %vm2304, %v3249, 0
        %v5629 = vsel %vm2304, %v3250, 0
        %v5632 = vsel %vm2304, %v3251, 0
        %v5635 = vsel %vm2304, %v3252, 0
        %v5638 = vsel %vm2304, %v3253, 0
        %v5641 = vsel %vm2304, %v3254, 0
        %v5644 = vsel %vm2304, %v3255, 0
        %v5647 = vsel %vm2304, %v3256, 0
        %v5650 = vsel %vm2304, %v3257, 0
        %v5653 = vsel %vm2304, %v3258, 0
        %v5656 = vsel %vm2304, %v3259, 0
        %v5659 = vsel %vm2304, %v3260, 0
        %v5662 = vsel %vm2304, %v3261, 0
        %v5665 = vsel %vm2304, %v3262, 0
        %v5668 = vsel %vm2304, %v3263, 0
        %v5671 = vsel %vm2304, %v3264, 0
        %5673 = vmatprep.subr.bf16.mxu0 0
        %5674 = vmatpush1.bf16.msra.mxu0 %v5479
        %5675 = vmatprep.subr.bf16.mxu0 0
        %5676 = vmatpush1.bf16.msra.mxu0 0
        %5677 = vmatprep.subr.bf16.mxu0 0
        %5678 = vmatpush1.bf16.msra.mxu0 0
        %5679 = vmatprep.subr.bf16.mxu0 0
        %5680 = vmatpush1.bf16.msra.mxu0 0
        %5681 = vmatprep.subr.bf16.mxu0 0
        %5682 = vmatpush1.bf16.msra.mxu0 0
        %5683 = vmatprep.subr.bf16.mxu0 0
        %5684 = vmatpush1.bf16.msra.mxu0 0
        %5685 = vmatprep.subr.bf16.mxu0 0
        %5686 = vmatpush1.bf16.msra.mxu0 0
        %5687 = vmatprep.subr.bf16.mxu0 0
        %5688 = vmatpush1.bf16.msra.mxu0 0
        %5689 = vmatprep.subr.bf16.mxu0 0
        %5690 = vmatpush1.bf16.msra.mxu0 0
        %5691 = vmatprep.subr.bf16.mxu0 0
        %5692 = vmatpush1.bf16.msra.mxu0 0
        %5693 = vmatprep.subr.bf16.mxu0 0
        %5694 = vmatpush1.bf16.msra.mxu0 0
        %5695 = vmatprep.subr.bf16.mxu0 0
        %5696 = vmatpush1.bf16.msra.mxu0 0
        %5697 = vmatprep.subr.bf16.mxu0 0
        %5698 = vmatpush1.bf16.msra.mxu0 0
        %5699 = vmatprep.subr.bf16.mxu0 0
        %5700 = vmatpush1.bf16.msra.mxu0 0
        %5701 = vmatprep.subr.bf16.mxu0 0
        %5702 = vmatpush1.bf16.msra.mxu0 0
        %5703 = vmatprep.subr.bf16.mxu0 0
        %5704 = vmatpush1.bf16.msra.mxu0 0
        %5705 = vmatprep.mubr.bf16.mxu0 0
        %5706 = vmatmul.mubr.bf16.gmra.mrb[0].mxu0 %v5482
        %v5707 = vpop.f32.mrb[0].mxu0
        %v5708 = vadd.f32 %v5347, %v5707
        %v5709 = vpop.f32.mrb[0].mxu0
        %v5710 = vpop.f32.mrb[0].mxu0
        %v5711 = vadd.f32 %v5348, %v5710
        %v5712 = vpop.f32.mrb[0].mxu0
        %5713 = vmatprep.mubr.bf16.mxu0 0
        %5714 = vmatmul.mubr.bf16.gmra.mrb[0].mxu0 %v5485
        %v5715 = vpop.f32.mrb[0].mxu0
        %v5716 = vadd.f32 %v5349, %v5715
        %v5717 = vpop.f32.mrb[0].mxu0
        %v5718 = vpop.f32.mrb[0].mxu0
        %v5719 = vadd.f32 %v5350, %v5718
        %v5720 = vpop.f32.mrb[0].mxu0
        %5721 = vmatprep.mubr.bf16.mxu0 0
        %5722 = vmatmul.mubr.bf16.gmra.mrb[0].mxu0 %v5488
        %v5723 = vpop.f32.mrb[0].mxu0
        %v5724 = vadd.f32 %v5351, %v5723
        %v5725 = vpop.f32.mrb[0].mxu0
        %v5726 = vpop.f32.mrb[0].mxu0
        %v5727 = vadd.f32 %v5352, %v5726
        %v5728 = vpop.f32.mrb[0].mxu0
        %5729 = vmatprep.mubr.bf16.mxu0 0
        %5730 = vmatmul.mubr.bf16.gmra.mrb[0].mxu0 %v5491
        %v5731 = vpop.f32.mrb[0].mxu0
        %v5732 = vadd.f32 %v5353, %v5731
        %v5733 = vpop.f32.mrb[0].mxu0
        %v5734 = vpop.f32.mrb[0].mxu0
        %v5735 = vadd.f32 %v5354, %v5734
        %v5736 = vpop.f32.mrb[0].mxu0
        %5737 = vmatprep.mubr.bf16.mxu0 0
        %5738 = vmatmul.mubr.bf16.gmra.mrb[0].mxu0 %v5494
        %v5739 = vpop.f32.mrb[0].mxu0
        %v5740 = vadd.f32 %v5355, %v5739
        %v5741 = vpop.f32.mrb[0].mxu0
        %v5742 = vpop.f32.mrb[0].mxu0
        %v5743 = vadd.f32 %v5356, %v5742
        %v5744 = vpop.f32.mrb[0].mxu0
        %5745 = vmatprep.mubr.bf16.mxu0 0
        %5746 = vmatmul.mubr.bf16.gmra.mrb[0].mxu0 %v5497
        %v5747 = vpop.f32.mrb[0].mxu0
        %v5748 = vadd.f32 %v5357, %v5747
        %v5749 = vpop.f32.mrb[0].mxu0
        %v5750 = vpop.f32.mrb[0].mxu0
        %v5751 = vadd.f32 %v5358, %v5750
        %v5752 = vpop.f32.mrb[0].mxu0
        %5753 = vmatprep.mubr.bf16.mxu0 0
        %5754 = vmatmul.mubr.bf16.gmra.mrb[0].mxu0 %v5500
        %v5755 = vpop.f32.mrb[0].mxu0
        %v5756 = vadd.f32 %v5359, %v5755
        %v5757 = vpop.f32.mrb[0].mxu0
        %v5758 = vpop.f32.mrb[0].mxu0
        %v5759 = vadd.f32 %v5360, %v5758
        %v5760 = vpop.f32.mrb[0].mxu0
        %5761 = vmatprep.mubr.bf16.mxu0 0
        %5762 = vmatmul.mubr.bf16.gmra.mrb[0].mxu0 %v5503
        %v5763 = vpop.f32.mrb[0].mxu0
        %v5764 = vadd.f32 %v5361, %v5763
        %v5765 = vpop.f32.mrb[0].mxu0
        %v5766 = vpop.f32.mrb[0].mxu0
        %v5767 = vadd.f32 %v5362, %v5766
        %v5768 = vpop.f32.mrb[0].mxu0
        %5769 = vmatprep.mubr.bf16.mxu0 0
        %5770 = vmatmul.mubr.bf16.gmra.mrb[0].mxu0 %v5506
        %v5771 = vpop.f32.mrb[0].mxu0
        %v5772 = vadd.f32 %v5363, %v5771
        %v5773 = vpop.f32.mrb[0].mxu0
        %v5774 = vpop.f32.mrb[0].mxu0
        %v5775 = vadd.f32 %v5364, %v5774
        %v5776 = vpop.f32.mrb[0].mxu0
        %5777 = vmatprep.mubr.bf16.mxu0 0
        %5778 = vmatmul.mubr.bf16.gmra.mrb[0].mxu0 %v5509
        %v5779 = vpop.f32.mrb[0].mxu0
        %v5780 = vadd.f32 %v5365, %v5779
        %v5781 = vpop.f32.mrb[0].mxu0
        %v5782 = vpop.f32.mrb[0].mxu0
        %v5783 = vadd.f32 %v5366, %v5782
        %v5784 = vpop.f32.mrb[0].mxu0
        %5785 = vmatprep.mubr.bf16.mxu0 0
        %5786 = vmatmul.mubr.bf16.gmra.mrb[0].mxu0 %v5512
        %v5787 = vpop.f32.mrb[0].mxu0
        %v5788 = vadd.f32 %v5367, %v5787
        %v5789 = vpop.f32.mrb[0].mxu0
        %v5790 = vpop.f32.mrb[0].mxu0
        %v5791 = vadd.f32 %v5368, %v5790
        %v5792 = vpop.f32.mrb[0].mxu0
        %5793 = vmatprep.mubr.bf16.mxu0 0
        %5794 = vmatmul.mubr.bf16.gmra.mrb[0].mxu0 %v5515
        %v5795 = vpop.f32.mrb[0].mxu0
        %v5796 = vadd.f32 %v5369, %v5795
        %v5797 = vpop.f32.mrb[0].mxu0
        %v5798 = vpop.f32.mrb[0].mxu0
        %v5799 = vadd.f32 %v5370, %v5798
        %v5800 = vpop.f32.mrb[0].mxu0
        %5801 = vmatprep.mubr.bf16.mxu0 0
        %5802 = vmatmul.mubr.bf16.gmra.mrb[0].mxu0 %v5518
        %v5803 = vpop.f32.mrb[0].mxu0
        %v5804 = vadd.f32 %v5371, %v5803
        %v5805 = vpop.f32.mrb[0].mxu0
        %v5806 = vpop.f32.mrb[0].mxu0
        %v5807 = vadd.f32 %v5372, %v5806
        %v5808 = vpop.f32.mrb[0].mxu0
        %5809 = vmatprep.mubr.bf16.mxu0 0
        %5810 = vmatmul.mubr.bf16.gmra.mrb[0].mxu0 %v5521
        %v5811 = vpop.f32.mrb[0].mxu0
        %v5812 = vadd.f32 %v5373, %v5811
        %v5813 = vpop.f32.mrb[0].mxu0
        %v5814 = vpop.f32.mrb[0].mxu0
        %v5815 = vadd.f32 %v5374, %v5814
        %v5816 = vpop.f32.mrb[0].mxu0
        %5817 = vmatprep.mubr.bf16.mxu0 0
        %5818 = vmatmul.mubr.bf16.gmra.mrb[0].mxu0 %v5524
        %v5819 = vpop.f32.mrb[0].mxu0
        %v5820 = vadd.f32 %v5375, %v5819
        %v5821 = vpop.f32.mrb[0].mxu0
        %v5822 = vpop.f32.mrb[0].mxu0
        %v5823 = vadd.f32 %v5376, %v5822
        %v5824 = vpop.f32.mrb[0].mxu0
        %5825 = vmatprep.mubr.bf16.mxu0 0
        %5826 = vmatmul.mubr.bf16.gmra.mrb[0].mxu0 %v5527
        %v5827 = vpop.f32.mrb[0].mxu0
        %v5828 = vadd.f32 %v5377, %v5827
        %v5829 = vpop.f32.mrb[0].mxu0
        %v5830 = vpop.f32.mrb[0].mxu0
        %v5831 = vadd.f32 %v5378, %v5830
        %v5832 = vpop.f32.mrb[0].mxu0
        %5833 = vmatprep.mubr.bf16.mxu0 0
        %5834 = vmatmul.mubr.bf16.gmra.mrb[0].mxu0 %v5530
        %v5835 = vpop.f32.mrb[0].mxu0
        %v5836 = vadd.f32 %v5379, %v5835
        %v5837 = vpop.f32.mrb[0].mxu0
        %v5838 = vpop.f32.mrb[0].mxu0
        %v5839 = vadd.f32 %v5380, %v5838
        %v5840 = vpop.f32.mrb[0].mxu0
        %5841 = vmatprep.mubr.bf16.mxu0 0
        %5842 = vmatmul.mubr.bf16.gmra.mrb[0].mxu0 %v5533
        %v5843 = vpop.f32.mrb[0].mxu0
        %v5844 = vadd.f32 %v5381, %v5843
        %v5845 = vpop.f32.mrb[0].mxu0
        %v5846 = vpop.f32.mrb[0].mxu0
        %v5847 = vadd.f32 %v5382, %v5846
        %v5848 = vpop.f32.mrb[0].mxu0
        %5849 = vmatprep.mubr.bf16.mxu0 0
        %5850 = vmatmul.mubr.bf16.gmra.mrb[0].mxu0 %v5536
        %v5851 = vpop.f32.mrb[0].mxu0
        %v5852 = vadd.f32 %v5383, %v5851
        %v5853 = vpop.f32.mrb[0].mxu0
        %v5854 = vpop.f32.mrb[0].mxu0
        %v5855 = vadd.f32 %v5384, %v5854
        %v5856 = vpop.f32.mrb[0].mxu0
        %5857 = vmatprep.mubr.bf16.mxu0 0
        %5858 = vmatmul.mubr.bf16.gmra.mrb[0].mxu0 %v5539
        %v5859 = vpop.f32.mrb[0].mxu0
        %v5860 = vadd.f32 %v5385, %v5859
        %v5861 = vpop.f32.mrb[0].mxu0
        %v5862 = vpop.f32.mrb[0].mxu0
        %v5863 = vadd.f32 %v5386, %v5862
        %v5864 = vpop.f32.mrb[0].mxu0
        %5865 = vmatprep.mubr.bf16.mxu0 0
        %5866 = vmatmul.mubr.bf16.gmra.mrb[0].mxu0 %v5542
        %v5867 = vpop.f32.mrb[0].mxu0
        %v5868 = vadd.f32 %v5387, %v5867
        %v5869 = vpop.f32.mrb[0].mxu0
        %v5870 = vpop.f32.mrb[0].mxu0
        %v5871 = vadd.f32 %v5388, %v5870
        %v5872 = vpop.f32.mrb[0].mxu0
        %5873 = vmatprep.mubr.bf16.mxu0 0
        %5874 = vmatmul.mubr.bf16.gmra.mrb[0].mxu0 %v5545
        %v5875 = vpop.f32.mrb[0].mxu0
        %v5876 = vadd.f32 %v5389, %v5875
        %v5877 = vpop.f32.mrb[0].mxu0
        %v5878 = vpop.f32.mrb[0].mxu0
        %v5879 = vadd.f32 %v5390, %v5878
        %v5880 = vpop.f32.mrb[0].mxu0
        %5881 = vmatprep.mubr.bf16.mxu0 0
        %5882 = vmatmul.mubr.bf16.gmra.mrb[0].mxu0 %v5548
        %v5883 = vpop.f32.mrb[0].mxu0
        %v5884 = vadd.f32 %v5391, %v5883
        %v5885 = vpop.f32.mrb[0].mxu0
        %v5886 = vpop.f32.mrb[0].mxu0
        %v5887 = vadd.f32 %v5392, %v5886
        %v5888 = vpop.f32.mrb[0].mxu0
        %5889 = vmatprep.mubr.bf16.mxu0 0
        %5890 = vmatmul.mubr.bf16.gmra.mrb[0].mxu0 %v5551
        %v5891 = vpop.f32.mrb[0].mxu0
        %v5892 = vadd.f32 %v5393, %v5891
        %v5893 = vpop.f32.mrb[0].mxu0
        %v5894 = vpop.f32.mrb[0].mxu0
        %v5895 = vadd.f32 %v5394, %v5894
        %v5896 = vpop.f32.mrb[0].mxu0
        %5897 = vmatprep.mubr.bf16.mxu0 0
        %5898 = vmatmul.mubr.bf16.gmra.mrb[0].mxu0 %v5554
        %v5899 = vpop.f32.mrb[0].mxu0
        %v5900 = vadd.f32 %v5395, %v5899
        %v5901 = vpop.f32.mrb[0].mxu0
        %v5902 = vpop.f32.mrb[0].mxu0
        %v5903 = vadd.f32 %v5396, %v5902
        %v5904 = vpop.f32.mrb[0].mxu0
        %5905 = vmatprep.mubr.bf16.mxu0 0
        %5906 = vmatmul.mubr.bf16.gmra.mrb[0].mxu0 %v5557
        %v5907 = vpop.f32.mrb[0].mxu0
        %v5908 = vadd.f32 %v5397, %v5907
        %v5909 = vpop.f32.mrb[0].mxu0
        %v5910 = vpop.f32.mrb[0].mxu0
        %v5911 = vadd.f32 %v5398, %v5910
        %v5912 = vpop.f32.mrb[0].mxu0
        %5913 = vmatprep.mubr.bf16.mxu0 0
        %5914 = vmatmul.mubr.bf16.gmra.mrb[0].mxu0 %v5560
        %v5915 = vpop.f32.mrb[0].mxu0
        %v5916 = vadd.f32 %v5399, %v5915
        %v5917 = vpop.f32.mrb[0].mxu0
        %v5918 = vpop.f32.mrb[0].mxu0
        %v5919 = vadd.f32 %v5400, %v5918
        %v5920 = vpop.f32.mrb[0].mxu0
        %5921 = vmatprep.mubr.bf16.mxu0 0
        %5922 = vmatmul.mubr.bf16.gmra.mrb[0].mxu0 %v5563
        %v5923 = vpop.f32.mrb[0].mxu0
        %v5924 = vadd.f32 %v5401, %v5923
        %v5925 = vpop.f32.mrb[0].mxu0
        %v5926 = vpop.f32.mrb[0].mxu0
        %v5927 = vadd.f32 %v5402, %v5926
        %v5928 = vpop.f32.mrb[0].mxu0
        %5929 = vmatprep.mubr.bf16.mxu0 0
        %5930 = vmatmul.mubr.bf16.gmra.mrb[0].mxu0 %v5566
        %v5931 = vpop.f32.mrb[0].mxu0
        %v5932 = vadd.f32 %v5403, %v5931
        %v5933 = vpop.f32.mrb[0].mxu0
        %v5934 = vpop.f32.mrb[0].mxu0
        %v5935 = vadd.f32 %v5404, %v5934
        %v5936 = vpop.f32.mrb[0].mxu0
        %5937 = vmatprep.mubr.bf16.mxu0 0
        %5938 = vmatmul.mubr.bf16.gmra.mrb[0].mxu0 %v5569
        %v5939 = vpop.f32.mrb[0].mxu0
        %v5940 = vadd.f32 %v5405, %v5939
        %v5941 = vpop.f32.mrb[0].mxu0
        %v5942 = vpop.f32.mrb[0].mxu0
        %v5943 = vadd.f32 %v5406, %v5942
        %v5944 = vpop.f32.mrb[0].mxu0
        %5945 = vmatprep.mubr.bf16.mxu0 0
        %5946 = vmatmul.mubr.bf16.gmra.mrb[0].mxu0 %v5572
        %v5947 = vpop.f32.mrb[0].mxu0
        %v5948 = vadd.f32 %v5407, %v5947
        %v5949 = vpop.f32.mrb[0].mxu0
        %v5950 = vpop.f32.mrb[0].mxu0
        %v5951 = vadd.f32 %v5408, %v5950
        %v5952 = vpop.f32.mrb[0].mxu0
        %5953 = vmatprep.mubr.bf16.mxu0 0
        %5954 = vmatmul.mubr.bf16.gmra.mrb[0].mxu0 %v5575
        %v5955 = vpop.f32.mrb[0].mxu0
        %v5956 = vadd.f32 %v5409, %v5955
        %v5957 = vpop.f32.mrb[0].mxu0
        %v5958 = vpop.f32.mrb[0].mxu0
        %v5959 = vadd.f32 %v5410, %v5958
        %v5960 = vpop.f32.mrb[0].mxu0
        %5961 = vmatprep.mubr.bf16.mxu0 0
        %5962 = vmatmul.mubr.bf16.gmra.mrb[0].mxu0 %v5578
        %v5963 = vpop.f32.mrb[0].mxu0
        %v5964 = vadd.f32 %v5411, %v5963
        %v5965 = vpop.f32.mrb[0].mxu0
        %v5966 = vpop.f32.mrb[0].mxu0
        %v5967 = vadd.f32 %v5412, %v5966
        %v5968 = vpop.f32.mrb[0].mxu0
        %5969 = vmatprep.mubr.bf16.mxu0 0
        %5970 = vmatmul.mubr.bf16.gmra.mrb[0].mxu0 %v5581
        %v5971 = vpop.f32.mrb[0].mxu0
        %v5972 = vadd.f32 %v5413, %v5971
        %v5973 = vpop.f32.mrb[0].mxu0
        %v5974 = vpop.f32.mrb[0].mxu0
        %v5975 = vadd.f32 %v5414, %v5974
        %v5976 = vpop.f32.mrb[0].mxu0
        %5977 = vmatprep.mubr.bf16.mxu0 0
        %5978 = vmatmul.mubr.bf16.gmra.mrb[0].mxu0 %v5584
        %v5979 = vpop.f32.mrb[0].mxu0
        %v5980 = vadd.f32 %v5415, %v5979
        %v5981 = vpop.f32.mrb[0].mxu0
        %v5982 = vpop.f32.mrb[0].mxu0
        %v5983 = vadd.f32 %v5416, %v5982
        %v5984 = vpop.f32.mrb[0].mxu0
        %5985 = vmatprep.mubr.bf16.mxu0 0
        %5986 = vmatmul.mubr.bf16.gmra.mrb[0].mxu0 %v5587
        %v5987 = vpop.f32.mrb[0].mxu0
        %v5988 = vadd.f32 %v5417, %v5987
        %v5989 = vpop.f32.mrb[0].mxu0
        %v5990 = vpop.f32.mrb[0].mxu0
        %v5991 = vadd.f32 %v5418, %v5990
        %v5992 = vpop.f32.mrb[0].mxu0
        %5993 = vmatprep.mubr.bf16.mxu0 0
        %5994 = vmatmul.mubr.bf16.gmra.mrb[0].mxu0 %v5590
        %v5995 = vpop.f32.mrb[0].mxu0
        %v5996 = vadd.f32 %v5419, %v5995
        %v5997 = vpop.f32.mrb[0].mxu0
        %v5998 = vpop.f32.mrb[0].mxu0
        %v5999 = vadd.f32 %v5420, %v5998
        %v6000 = vpop.f32.mrb[0].mxu0
        %6001 = vmatprep.mubr.bf16.mxu0 0
        %6002 = vmatmul.mubr.bf16.gmra.mrb[0].mxu0 %v5593
        %v6003 = vpop.f32.mrb[0].mxu0
        %v6004 = vadd.f32 %v5421, %v6003
        %v6005 = vpop.f32.mrb[0].mxu0
        %v6006 = vpop.f32.mrb[0].mxu0
        %v6007 = vadd.f32 %v5422, %v6006
        %v6008 = vpop.f32.mrb[0].mxu0
        %6009 = vmatprep.mubr.bf16.mxu0 0
        %6010 = vmatmul.mubr.bf16.gmra.mrb[0].mxu0 %v5596
        %v6011 = vpop.f32.mrb[0].mxu0
        %v6012 = vadd.f32 %v5423, %v6011
        %v6013 = vpop.f32.mrb[0].mxu0
        %v6014 = vpop.f32.mrb[0].mxu0
        %v6015 = vadd.f32 %v5424, %v6014
        %v6016 = vpop.f32.mrb[0].mxu0
        %6017 = vmatprep.mubr.bf16.mxu0 0
        %6018 = vmatmul.mubr.bf16.gmra.mrb[0].mxu0 %v5599
        %v6019 = vpop.f32.mrb[0].mxu0
        %v6020 = vadd.f32 %v5425, %v6019
        %v6021 = vpop.f32.mrb[0].mxu0
        %v6022 = vpop.f32.mrb[0].mxu0
        %v6023 = vadd.f32 %v5426, %v6022
        %v6024 = vpop.f32.mrb[0].mxu0
        %6025 = vmatprep.mubr.bf16.mxu0 0
        %6026 = vmatmul.mubr.bf16.gmra.mrb[0].mxu0 %v5602
        %v6027 = vpop.f32.mrb[0].mxu0
        %v6028 = vadd.f32 %v5427, %v6027
        %v6029 = vpop.f32.mrb[0].mxu0
        %v6030 = vpop.f32.mrb[0].mxu0
        %v6031 = vadd.f32 %v5428, %v6030
        %v6032 = vpop.f32.mrb[0].mxu0
        %6033 = vmatprep.mubr.bf16.mxu0 0
        %6034 = vmatmul.mubr.bf16.gmra.mrb[0].mxu0 %v5605
        %v6035 = vpop.f32.mrb[0].mxu0
        %v6036 = vadd.f32 %v5429, %v6035
        %v6037 = vpop.f32.mrb[0].mxu0
        %v6038 = vpop.f32.mrb[0].mxu0
        %v6039 = vadd.f32 %v5430, %v6038
        %v6040 = vpop.f32.mrb[0].mxu0
        %6041 = vmatprep.mubr.bf16.mxu0 0
        %6042 = vmatmul.mubr.bf16.gmra.mrb[0].mxu0 %v5608
        %v6043 = vpop.f32.mrb[0].mxu0
        %v6044 = vadd.f32 %v5431, %v6043
        %v6045 = vpop.f32.mrb[0].mxu0
        %v6046 = vpop.f32.mrb[0].mxu0
        %v6047 = vadd.f32 %v5432, %v6046
        %v6048 = vpop.f32.mrb[0].mxu0
        %6049 = vmatprep.mubr.bf16.mxu0 0
        %6050 = vmatmul.mubr.bf16.gmra.mrb[0].mxu0 %v5611
        %v6051 = vpop.f32.mrb[0].mxu0
        %v6052 = vadd.f32 %v5433, %v6051
        %v6053 = vpop.f32.mrb[0].mxu0
        %v6054 = vpop.f32.mrb[0].mxu0
        %v6055 = vadd.f32 %v5434, %v6054
        %v6056 = vpop.f32.mrb[0].mxu0
        %6057 = vmatprep.mubr.bf16.mxu0 0
        %6058 = vmatmul.mubr.bf16.gmra.mrb[0].mxu0 %v5614
        %v6059 = vpop.f32.mrb[0].mxu0
        %v6060 = vadd.f32 %v5435, %v6059
        %v6061 = vpop.f32.mrb[0].mxu0
        %v6062 = vpop.f32.mrb[0].mxu0
        %v6063 = vadd.f32 %v5436, %v6062
        %v6064 = vpop.f32.mrb[0].mxu0
        %6065 = vmatprep.mubr.bf16.mxu0 0
        %6066 = vmatmul.mubr.bf16.gmra.mrb[0].mxu0 %v5617
        %v6067 = vpop.f32.mrb[0].mxu0
        %v6068 = vadd.f32 %v5437, %v6067
        %v6069 = vpop.f32.mrb[0].mxu0
        %v6070 = vpop.f32.mrb[0].mxu0
        %v6071 = vadd.f32 %v5438, %v6070
        %v6072 = vpop.f32.mrb[0].mxu0
        %6073 = vmatprep.mubr.bf16.mxu0 0
        %6074 = vmatmul.mubr.bf16.gmra.mrb[0].mxu0 %v5620
        %v6075 = vpop.f32.mrb[0].mxu0
        %v6076 = vadd.f32 %v5439, %v6075
        %v6077 = vpop.f32.mrb[0].mxu0
        %v6078 = vpop.f32.mrb[0].mxu0
        %v6079 = vadd.f32 %v5440, %v6078
        %v6080 = vpop.f32.mrb[0].mxu0
        %6081 = vmatprep.mubr.bf16.mxu0 0
        %6082 = vmatmul.mubr.bf16.gmra.mrb[0].mxu0 %v5623
        %v6083 = vpop.f32.mrb[0].mxu0
        %v6084 = vadd.f32 %v5441, %v6083
        %v6085 = vpop.f32.mrb[0].mxu0
        %v6086 = vpop.f32.mrb[0].mxu0
        %v6087 = vadd.f32 %v5442, %v6086
        %v6088 = vpop.f32.mrb[0].mxu0
        %6089 = vmatprep.mubr.bf16.mxu0 0
        %6090 = vmatmul.mubr.bf16.gmra.mrb[0].mxu0 %v5626
        %v6091 = vpop.f32.mrb[0].mxu0
        %v6092 = vadd.f32 %v5443, %v6091
        %v6093 = vpop.f32.mrb[0].mxu0
        %v6094 = vpop.f32.mrb[0].mxu0
        %v6095 = vadd.f32 %v5444, %v6094
        %v6096 = vpop.f32.mrb[0].mxu0
        %6097 = vmatprep.mubr.bf16.mxu0 0
        %6098 = vmatmul.mubr.bf16.gmra.mrb[0].mxu0 %v5629
        %v6099 = vpop.f32.mrb[0].mxu0
        %v6100 = vadd.f32 %v5445, %v6099
        %v6101 = vpop.f32.mrb[0].mxu0
        %v6102 = vpop.f32.mrb[0].mxu0
        %v6103 = vadd.f32 %v5446, %v6102
        %v6104 = vpop.f32.mrb[0].mxu0
        %6105 = vmatprep.mubr.bf16.mxu0 0
        %6106 = vmatmul.mubr.bf16.gmra.mrb[0].mxu0 %v5632
        %v6107 = vpop.f32.mrb[0].mxu0
        %v6108 = vadd.f32 %v5447, %v6107
        %v6109 = vpop.f32.mrb[0].mxu0
        %v6110 = vpop.f32.mrb[0].mxu0
        %v6111 = vadd.f32 %v5448, %v6110
        %v6112 = vpop.f32.mrb[0].mxu0
        %6113 = vmatprep.mubr.bf16.mxu0 0
        %6114 = vmatmul.mubr.bf16.gmra.mrb[0].mxu0 %v5635
        %v6115 = vpop.f32.mrb[0].mxu0
        %v6116 = vadd.f32 %v5449, %v6115
        %v6117 = vpop.f32.mrb[0].mxu0
        %v6118 = vpop.f32.mrb[0].mxu0
        %v6119 = vadd.f32 %v5450, %v6118
        %v6120 = vpop.f32.mrb[0].mxu0
        %6121 = vmatprep.mubr.bf16.mxu0 0
        %6122 = vmatmul.mubr.bf16.gmra.mrb[0].mxu0 %v5638
        %v6123 = vpop.f32.mrb[0].mxu0
        %v6124 = vadd.f32 %v5451, %v6123
        %v6125 = vpop.f32.mrb[0].mxu0
        %v6126 = vpop.f32.mrb[0].mxu0
        %v6127 = vadd.f32 %v5452, %v6126
        %v6128 = vpop.f32.mrb[0].mxu0
        %6129 = vmatprep.mubr.bf16.mxu0 0
        %6130 = vmatmul.mubr.bf16.gmra.mrb[0].mxu0 %v5641
        %v6131 = vpop.f32.mrb[0].mxu0
        %v6132 = vadd.f32 %v5453, %v6131
        %v6133 = vpop.f32.mrb[0].mxu0
        %v6134 = vpop.f32.mrb[0].mxu0
        %v6135 = vadd.f32 %v5454, %v6134
        %v6136 = vpop.f32.mrb[0].mxu0
        %6137 = vmatprep.mubr.bf16.mxu0 0
        %6138 = vmatmul.mubr.bf16.gmra.mrb[0].mxu0 %v5644
        %v6139 = vpop.f32.mrb[0].mxu0
        %v6140 = vadd.f32 %v5455, %v6139
        %v6141 = vpop.f32.mrb[0].mxu0
        %v6142 = vpop.f32.mrb[0].mxu0
        %v6143 = vadd.f32 %v5456, %v6142
        %v6144 = vpop.f32.mrb[0].mxu0
        %6145 = vmatprep.mubr.bf16.mxu0 0
        %6146 = vmatmul.mubr.bf16.gmra.mrb[0].mxu0 %v5647
        %v6147 = vpop.f32.mrb[0].mxu0
        %v6148 = vadd.f32 %v5457, %v6147
        %v6149 = vpop.f32.mrb[0].mxu0
        %v6150 = vpop.f32.mrb[0].mxu0
        %v6151 = vadd.f32 %v5458, %v6150
        %v6152 = vpop.f32.mrb[0].mxu0
        %6153 = vmatprep.mubr.bf16.mxu0 0
        %6154 = vmatmul.mubr.bf16.gmra.mrb[0].mxu0 %v5650
        %v6155 = vpop.f32.mrb[0].mxu0
        %v6156 = vadd.f32 %v5459, %v6155
        %v6157 = vpop.f32.mrb[0].mxu0
        %v6158 = vpop.f32.mrb[0].mxu0
        %v6159 = vadd.f32 %v5460, %v6158
        %v6160 = vpop.f32.mrb[0].mxu0
        %6161 = vmatprep.mubr.bf16.mxu0 0
        %6162 = vmatmul.mubr.bf16.gmra.mrb[0].mxu0 %v5653
        %v6163 = vpop.f32.mrb[0].mxu0
        %v6164 = vadd.f32 %v5461, %v6163
        %v6165 = vpop.f32.mrb[0].mxu0
        %v6166 = vpop.f32.mrb[0].mxu0
        %v6167 = vadd.f32 %v5462, %v6166
        %v6168 = vpop.f32.mrb[0].mxu0
        %6169 = vmatprep.mubr.bf16.mxu0 0
        %6170 = vmatmul.mubr.bf16.gmra.mrb[0].mxu0 %v5656
        %v6171 = vpop.f32.mrb[0].mxu0
        %v6172 = vadd.f32 %v5463, %v6171
        %v6173 = vpop.f32.mrb[0].mxu0
        %v6174 = vpop.f32.mrb[0].mxu0
        %v6175 = vadd.f32 %v5464, %v6174
        %v6176 = vpop.f32.mrb[0].mxu0
        %6177 = vmatprep.mubr.bf16.mxu0 0
        %6178 = vmatmul.mubr.bf16.gmra.mrb[0].mxu0 %v5659
        %v6179 = vpop.f32.mrb[0].mxu0
        %v6180 = vadd.f32 %v5465, %v6179
        %v6181 = vpop.f32.mrb[0].mxu0
        %v6182 = vpop.f32.mrb[0].mxu0
        %v6183 = vadd.f32 %v5466, %v6182
        %v6184 = vpop.f32.mrb[0].mxu0
        %6185 = vmatprep.mubr.bf16.mxu0 0
        %6186 = vmatmul.mubr.bf16.gmra.mrb[0].mxu0 %v5662
        %v6187 = vpop.f32.mrb[0].mxu0
        %v6188 = vadd.f32 %v5467, %v6187
        %v6189 = vpop.f32.mrb[0].mxu0
        %v6190 = vpop.f32.mrb[0].mxu0
        %v6191 = vadd.f32 %v5468, %v6190
        %v6192 = vpop.f32.mrb[0].mxu0
        %6193 = vmatprep.mubr.bf16.mxu0 0
        %6194 = vmatmul.mubr.bf16.gmra.mrb[0].mxu0 %v5665
        %v6195 = vpop.f32.mrb[0].mxu0
        %v6196 = vadd.f32 %v5469, %v6195
        %v6197 = vpop.f32.mrb[0].mxu0
        %v6198 = vpop.f32.mrb[0].mxu0
        %v6199 = vadd.f32 %v5470, %v6198
        %v6200 = vpop.f32.mrb[0].mxu0
        %6201 = vmatprep.mubr.bf16.mxu0 0
        %6202 = vmatmul.mubr.bf16.gmra.mrb[0].mxu0 %v5668
        %v6203 = vpop.f32.mrb[0].mxu0
        %v6204 = vadd.f32 %v5471, %v6203
        %v6205 = vpop.f32.mrb[0].mxu0
        %v6206 = vpop.f32.mrb[0].mxu0
        %v6207 = vadd.f32 %v5472, %v6206
        %v6208 = vpop.f32.mrb[0].mxu0
        %6209 = vmatprep.mubr.bf16.mxu0 0
        %6210 = vmatmul.mubr.bf16.gmra.mrb[0].mxu0 %v5671
        %v6211 = vpop.f32.mrb[0].mxu0
        %v6212 = vadd.f32 %v5473, %v6211
        %v6213 = vpop.f32.mrb[0].mxu0
        %v6214 = vpop.f32.mrb[0].mxu0
        %v6215 = vadd.f32 %v5474, %v6214
        %v6216 = vpop.f32.mrb[0].mxu0
        %6217 = vdwg.mxu0
        %v6218 = vld [vmem:[%s5] sm:$0x1]
        %v6220 = vlaneseq
        %v6221 = vshrl.u32 %v6220, 7
        %v6222 = vsub.s32 0, %v6221
        %v6223 = vrot.slane %v6218, %v6222
        %v6225 = vadd.f32 %v5708, %v6223
        %v6226 = vadd.f32 %v5711, %v6223
        %v6227 = vadd.f32 %v5716, %v6223
        %v6228 = vadd.f32 %v5719, %v6223
        %v6229 = vadd.f32 %v5724, %v6223
        %v6230 = vadd.f32 %v5727, %v6223
        %v6231 = vadd.f32 %v5732, %v6223
        %v6232 = vadd.f32 %v5735, %v6223
        %v6233 = vadd.f32 %v5740, %v6223
        %v6234 = vadd.f32 %v5743, %v6223
        %v6235 = vadd.f32 %v5748, %v6223
        %v6236 = vadd.f32 %v5751, %v6223
        %v6237 = vadd.f32 %v5756, %v6223
        %v6238 = vadd.f32 %v5759, %v6223
        %v6239 = vadd.f32 %v5764, %v6223
        %v6240 = vadd.f32 %v5767, %v6223
        %v6241 = vadd.f32 %v5772, %v6223
        %v6242 = vadd.f32 %v5775, %v6223
        %v6243 = vadd.f32 %v5780, %v6223
        %v6244 = vadd.f32 %v5783, %v6223
        %v6245 = vadd.f32 %v5788, %v6223
        %v6246 = vadd.f32 %v5791, %v6223
        %v6247 = vadd.f32 %v5796, %v6223
        %v6248 = vadd.f32 %v5799, %v6223
        %v6249 = vadd.f32 %v5804, %v6223
        %v6250 = vadd.f32 %v5807, %v6223
        %v6251 = vadd.f32 %v5812, %v6223
        %v6252 = vadd.f32 %v5815, %v6223
        %v6253 = vadd.f32 %v5820, %v6223
        %v6254 = vadd.f32 %v5823, %v6223
        %v6255 = vadd.f32 %v5828, %v6223
        %v6256 = vadd.f32 %v5831, %v6223
        %v6257 = vadd.f32 %v5836, %v6223
        %v6258 = vadd.f32 %v5839, %v6223
        %v6259 = vadd.f32 %v5844, %v6223
        %v6260 = vadd.f32 %v5847, %v6223
        %v6261 = vadd.f32 %v5852, %v6223
        %v6262 = vadd.f32 %v5855, %v6223
        %v6263 = vadd.f32 %v5860, %v6223
        %v6264 = vadd.f32 %v5863, %v6223
        %v6265 = vadd.f32 %v5868, %v6223
        %v6266 = vadd.f32 %v5871, %v6223
        %v6267 = vadd.f32 %v5876, %v6223
        %v6268 = vadd.f32 %v5879, %v6223
        %v6269 = vadd.f32 %v5884, %v6223
        %v6270 = vadd.f32 %v5887, %v6223
        %v6271 = vadd.f32 %v5892, %v6223
        %v6272 = vadd.f32 %v5895, %v6223
        %v6273 = vadd.f32 %v5900, %v6223
        %v6274 = vadd.f32 %v5903, %v6223
        %v6275 = vadd.f32 %v5908, %v6223
        %v6276 = vadd.f32 %v5911, %v6223
        %v6277 = vadd.f32 %v5916, %v6223
        %v6278 = vadd.f32 %v5919, %v6223
        %v6279 = vadd.f32 %v5924, %v6223
        %v6280 = vadd.f32 %v5927, %v6223
        %v6281 = vadd.f32 %v5932, %v6223
        %v6282 = vadd.f32 %v5935, %v6223
        %v6283 = vadd.f32 %v5940, %v6223
        %v6284 = vadd.f32 %v5943, %v6223
        %v6285 = vadd.f32 %v5948, %v6223
        %v6286 = vadd.f32 %v5951, %v6223
        %v6287 = vadd.f32 %v5956, %v6223
        %v6288 = vadd.f32 %v5959, %v6223
        %v6289 = vadd.f32 %v5964, %v6223
        %v6290 = vadd.f32 %v5967, %v6223
        %v6291 = vadd.f32 %v5972, %v6223
        %v6292 = vadd.f32 %v5975, %v6223
        %v6293 = vadd.f32 %v5980, %v6223
        %v6294 = vadd.f32 %v5983, %v6223
        %v6295 = vadd.f32 %v5988, %v6223
        %v6296 = vadd.f32 %v5991, %v6223
        %v6297 = vadd.f32 %v5996, %v6223
        %v6298 = vadd.f32 %v5999, %v6223
        %v6299 = vadd.f32 %v6004, %v6223
        %v6300 = vadd.f32 %v6007, %v6223
        %v6301 = vadd.f32 %v6012, %v6223
        %v6302 = vadd.f32 %v6015, %v6223
        %v6303 = vadd.f32 %v6020, %v6223
        %v6304 = vadd.f32 %v6023, %v6223
        %v6305 = vadd.f32 %v6028, %v6223
        %v6306 = vadd.f32 %v6031, %v6223
        %v6307 = vadd.f32 %v6036, %v6223
        %v6308 = vadd.f32 %v6039, %v6223
        %v6309 = vadd.f32 %v6044, %v6223
        %v6310 = vadd.f32 %v6047, %v6223
        %v6311 = vadd.f32 %v6052, %v6223
        %v6312 = vadd.f32 %v6055, %v6223
        %v6313 = vadd.f32 %v6060, %v6223
        %v6314 = vadd.f32 %v6063, %v6223
        %v6315 = vadd.f32 %v6068, %v6223
        %v6316 = vadd.f32 %v6071, %v6223
        %v6317 = vadd.f32 %v6076, %v6223
        %v6318 = vadd.f32 %v6079, %v6223
        %v6319 = vadd.f32 %v6084, %v6223
        %v6320 = vadd.f32 %v6087, %v6223
        %v6321 = vadd.f32 %v6092, %v6223
        %v6322 = vadd.f32 %v6095, %v6223
        %v6323 = vadd.f32 %v6100, %v6223
        %v6324 = vadd.f32 %v6103, %v6223
        %v6325 = vadd.f32 %v6108, %v6223
        %v6326 = vadd.f32 %v6111, %v6223
        %v6327 = vadd.f32 %v6116, %v6223
        %v6328 = vadd.f32 %v6119, %v6223
        %v6329 = vadd.f32 %v6124, %v6223
        %v6330 = vadd.f32 %v6127, %v6223
        %v6331 = vadd.f32 %v6132, %v6223
        %v6332 = vadd.f32 %v6135, %v6223
        %v6333 = vadd.f32 %v6140, %v6223
        %v6334 = vadd.f32 %v6143, %v6223
        %v6335 = vadd.f32 %v6148, %v6223
        %v6336 = vadd.f32 %v6151, %v6223
        %v6337 = vadd.f32 %v6156, %v6223
        %v6338 = vadd.f32 %v6159, %v6223
        %v6339 = vadd.f32 %v6164, %v6223
        %v6340 = vadd.f32 %v6167, %v6223
        %v6341 = vadd.f32 %v6172, %v6223
        %v6342 = vadd.f32 %v6175, %v6223
        %v6343 = vadd.f32 %v6180, %v6223
        %v6344 = vadd.f32 %v6183, %v6223
        %v6345 = vadd.f32 %v6188, %v6223
        %v6346 = vadd.f32 %v6191, %v6223
        %v6347 = vadd.f32 %v6196, %v6223
        %v6348 = vadd.f32 %v6199, %v6223
        %v6349 = vadd.f32 %v6204, %v6223
        %v6350 = vadd.f32 %v6207, %v6223
        %v6351 = vadd.f32 %v6212, %v6223
        %v6352 = vadd.f32 %v6215, %v6223
        %v6353 = vmax.f32 %v6225, 0.0
        %v6354 = vmax.f32 %v6226, 0.0
        %v6355 = vmax.f32 %v6227, 0.0
        %v6356 = vmax.f32 %v6228, 0.0
        %v6357 = vmax.f32 %v6229, 0.0
        %v6358 = vmax.f32 %v6230, 0.0
        %v6359 = vmax.f32 %v6231, 0.0
        %v6360 = vmax.f32 %v6232, 0.0
        %v6361 = vmax.f32 %v6233, 0.0
        %v6362 = vmax.f32 %v6234, 0.0
        %v6363 = vmax.f32 %v6235, 0.0
        %v6364 = vmax.f32 %v6236, 0.0
        %v6365 = vmax.f32 %v6237, 0.0
        %v6366 = vmax.f32 %v6238, 0.0
        %v6367 = vmax.f32 %v6239, 0.0
        %v6368 = vmax.f32 %v6240, 0.0
        %v6369 = vmax.f32 %v6241, 0.0
        %v6370 = vmax.f32 %v6242, 0.0
        %v6371 = vmax.f32 %v6243, 0.0
        %v6372 = vmax.f32 %v6244, 0.0
        %v6373 = vmax.f32 %v6245, 0.0
        %v6374 = vmax.f32 %v6246, 0.0
        %v6375 = vmax.f32 %v6247, 0.0
        %v6376 = vmax.f32 %v6248, 0.0
        %v6377 = vmax.f32 %v6249, 0.0
        %v6378 = vmax.f32 %v6250, 0.0
        %v6379 = vmax.f32 %v6251, 0.0
        %v6380 = vmax.f32 %v6252, 0.0
        %v6381 = vmax.f32 %v6253, 0.0
        %v6382 = vmax.f32 %v6254, 0.0
        %v6383 = vmax.f32 %v6255, 0.0
        %v6384 = vmax.f32 %v6256, 0.0
        %v6385 = vmax.f32 %v6257, 0.0
        %v6386 = vmax.f32 %v6258, 0.0
        %v6387 = vmax.f32 %v6259, 0.0
        %v6388 = vmax.f32 %v6260, 0.0
        %v6389 = vmax.f32 %v6261, 0.0
        %v6390 = vmax.f32 %v6262, 0.0
        %v6391 = vmax.f32 %v6263, 0.0
        %v6392 = vmax.f32 %v6264, 0.0
        %v6393 = vmax.f32 %v6265, 0.0
        %v6394 = vmax.f32 %v6266, 0.0
        %v6395 = vmax.f32 %v6267, 0.0
        %v6396 = vmax.f32 %v6268, 0.0
        %v6397 = vmax.f32 %v6269, 0.0
        %v6398 = vmax.f32 %v6270, 0.0
        %v6399 = vmax.f32 %v6271, 0.0
        %v6400 = vmax.f32 %v6272, 0.0
        %v6401 = vmax.f32 %v6273, 0.0
        %v6402 = vmax.f32 %v6274, 0.0
        %v6403 = vmax.f32 %v6275, 0.0
        %v6404 = vmax.f32 %v6276, 0.0
        %v6405 = vmax.f32 %v6277, 0.0
        %v6406 = vmax.f32 %v6278, 0.0
        %v6407 = vmax.f32 %v6279, 0.0
        %v6408 = vmax.f32 %v6280, 0.0
        %v6409 = vmax.f32 %v6281, 0.0
        %v6410 = vmax.f32 %v6282, 0.0
        %v6411 = vmax.f32 %v6283, 0.0
        %v6412 = vmax.f32 %v6284, 0.0
        %v6413 = vmax.f32 %v6285, 0.0
        %v6414 = vmax.f32 %v6286, 0.0
        %v6415 = vmax.f32 %v6287, 0.0
        %v6416 = vmax.f32 %v6288, 0.0
        %v6417 = vmax.f32 %v6289, 0.0
        %v6418 = vmax.f32 %v6290, 0.0
        %v6419 = vmax.f32 %v6291, 0.0
        %v6420 = vmax.f32 %v6292, 0.0
        %v6421 = vmax.f32 %v6293, 0.0
        %v6422 = vmax.f32 %v6294, 0.0
        %v6423 = vmax.f32 %v6295, 0.0
        %v6424 = vmax.f32 %v6296, 0.0
        %v6425 = vmax.f32 %v6297, 0.0
        %v6426 = vmax.f32 %v6298, 0.0
        %v6427 = vmax.f32 %v6299, 0.0
        %v6428 = vmax.f32 %v6300, 0.0
        %v6429 = vmax.f32 %v6301, 0.0
        %v6430 = vmax.f32 %v6302, 0.0
        %v6431 = vmax.f32 %v6303, 0.0
        %v6432 = vmax.f32 %v6304, 0.0
        %v6433 = vmax.f32 %v6305, 0.0
        %v6434 = vmax.f32 %v6306, 0.0
        %v6435 = vmax.f32 %v6307, 0.0
        %v6436 = vmax.f32 %v6308, 0.0
        %v6437 = vmax.f32 %v6309, 0.0
        %v6438 = vmax.f32 %v6310, 0.0
        %v6439 = vmax.f32 %v6311, 0.0
        %v6440 = vmax.f32 %v6312, 0.0
        %v6441 = vmax.f32 %v6313, 0.0
        %v6442 = vmax.f32 %v6314, 0.0
        %v6443 = vmax.f32 %v6315, 0.0
        %v6444 = vmax.f32 %v6316, 0.0
        %v6445 = vmax.f32 %v6317, 0.0
        %v6446 = vmax.f32 %v6318, 0.0
        %v6447 = vmax.f32 %v6319, 0.0
        %v6448 = vmax.f32 %v6320, 0.0
        %v6449 = vmax.f32 %v6321, 0.0
        %v6450 = vmax.f32 %v6322, 0.0
        %v6451 = vmax.f32 %v6323, 0.0
        %v6452 = vmax.f32 %v6324, 0.0
        %v6453 = vmax.f32 %v6325, 0.0
        %v6454 = vmax.f32 %v6326, 0.0
        %v6455 = vmax.f32 %v6327, 0.0
        %v6456 = vmax.f32 %v6328, 0.0
        %v6457 = vmax.f32 %v6329, 0.0
        %v6458 = vmax.f32 %v6330, 0.0
        %v6459 = vmax.f32 %v6331, 0.0
        %v6460 = vmax.f32 %v6332, 0.0
        %v6461 = vmax.f32 %v6333, 0.0
        %v6462 = vmax.f32 %v6334, 0.0
        %v6463 = vmax.f32 %v6335, 0.0
        %v6464 = vmax.f32 %v6336, 0.0
        %v6465 = vmax.f32 %v6337, 0.0
        %v6466 = vmax.f32 %v6338, 0.0
        %v6467 = vmax.f32 %v6339, 0.0
        %v6468 = vmax.f32 %v6340, 0.0
        %v6469 = vmax.f32 %v6341, 0.0
        %v6470 = vmax.f32 %v6342, 0.0
        %v6471 = vmax.f32 %v6343, 0.0
        %v6472 = vmax.f32 %v6344, 0.0
        %v6473 = vmax.f32 %v6345, 0.0
        %v6474 = vmax.f32 %v6346, 0.0
        %v6475 = vmax.f32 %v6347, 0.0
        %v6476 = vmax.f32 %v6348, 0.0
        %v6477 = vmax.f32 %v6349, 0.0
        %v6478 = vmax.f32 %v6350, 0.0
        %v6479 = vmax.f32 %v6351, 0.0
        %v6480 = vmax.f32 %v6352, 0.0
        %v6481 = vmul.f32 %v6353, %v1104
        %v6482 = vmul.f32 %v6354, %v1105
        %v6483 = vmul.f32 %v6355, %v1106
        %v6484 = vmul.f32 %v6356, %v1107
        %v6485 = vmul.f32 %v6357, %v1108
        %v6486 = vmul.f32 %v6358, %v1109
        %v6487 = vmul.f32 %v6359, %v1110
        %v6488 = vmul.f32 %v6360, %v1111
        %v6489 = vmul.f32 %v6361, %v1112
        %v6490 = vmul.f32 %v6362, %v1113
        %v6491 = vmul.f32 %v6363, %v1114
        %v6492 = vmul.f32 %v6364, %v1115
        %v6493 = vmul.f32 %v6365, %v1116
        %v6494 = vmul.f32 %v6366, %v1117
        %v6495 = vmul.f32 %v6367, %v1118
        %v6496 = vmul.f32 %v6368, %v1119
        %v6497 = vmul.f32 %v6369, %v1120
        %v6498 = vmul.f32 %v6370, %v1121
        %v6499 = vmul.f32 %v6371, %v1122
        %v6500 = vmul.f32 %v6372, %v1123
        %v6501 = vmul.f32 %v6373, %v1124
        %v6502 = vmul.f32 %v6374, %v1125
        %v6503 = vmul.f32 %v6375, %v1126
        %v6504 = vmul.f32 %v6376, %v1127
        %v6505 = vmul.f32 %v6377, %v1128
        %v6506 = vmul.f32 %v6378, %v1129
        %v6507 = vmul.f32 %v6379, %v1130
        %v6508 = vmul.f32 %v6380, %v1131
        %v6509 = vmul.f32 %v6381, %v1132
        %v6510 = vmul.f32 %v6382, %v1133
        %v6511 = vmul.f32 %v6383, %v1134
        %v6512 = vmul.f32 %v6384, %v1135
        %v6513 = vmul.f32 %v6385, %v1136
        %v6514 = vmul.f32 %v6386, %v1137
        %v6515 = vmul.f32 %v6387, %v1138
        %v6516 = vmul.f32 %v6388, %v1139
        %v6517 = vmul.f32 %v6389, %v1140
        %v6518 = vmul.f32 %v6390, %v1141
        %v6519 = vmul.f32 %v6391, %v1142
        %v6520 = vmul.f32 %v6392, %v1143
        %v6521 = vmul.f32 %v6393, %v1144
        %v6522 = vmul.f32 %v6394, %v1145
        %v6523 = vmul.f32 %v6395, %v1146
        %v6524 = vmul.f32 %v6396, %v1147
        %v6525 = vmul.f32 %v6397, %v1148
        %v6526 = vmul.f32 %v6398, %v1149
        %v6527 = vmul.f32 %v6399, %v1150
        %v6528 = vmul.f32 %v6400, %v1151
        %v6529 = vmul.f32 %v6401, %v1152
        %v6530 = vmul.f32 %v6402, %v1153
        %v6531 = vmul.f32 %v6403, %v1154
        %v6532 = vmul.f32 %v6404, %v1155
        %v6533 = vmul.f32 %v6405, %v1156
        %v6534 = vmul.f32 %v6406, %v1157
        %v6535 = vmul.f32 %v6407, %v1158
        %v6536 = vmul.f32 %v6408, %v1159
        %v6537 = vmul.f32 %v6409, %v1160
        %v6538 = vmul.f32 %v6410, %v1161
        %v6539 = vmul.f32 %v6411, %v1162
        %v6540 = vmul.f32 %v6412, %v1163
        %v6541 = vmul.f32 %v6413, %v1164
        %v6542 = vmul.f32 %v6414, %v1165
        %v6543 = vmul.f32 %v6415, %v1166
        %v6544 = vmul.f32 %v6416, %v1167
        %v6545 = vmul.f32 %v6417, %v1168
        %v6546 = vmul.f32 %v6418, %v1169
        %v6547 = vmul.f32 %v6419, %v1170
        %v6548 = vmul.f32 %v6420, %v1171
        %v6549 = vmul.f32 %v6421, %v1172
        %v6550 = vmul.f32 %v6422, %v1173
        %v6551 = vmul.f32 %v6423, %v1174
        %v6552 = vmul.f32 %v6424, %v1175
        %v6553 = vmul.f32 %v6425, %v1176
        %v6554 = vmul.f32 %v6426, %v1177
        %v6555 = vmul.f32 %v6427, %v1178
        %v6556 = vmul.f32 %v6428, %v1179
        %v6557 = vmul.f32 %v6429, %v1180
        %v6558 = vmul.f32 %v6430, %v1181
        %v6559 = vmul.f32 %v6431, %v1182
        %v6560 = vmul.f32 %v6432, %v1183
        %v6561 = vmul.f32 %v6433, %v1184
        %v6562 = vmul.f32 %v6434, %v1185
        %v6563 = vmul.f32 %v6435, %v1186
        %v6564 = vmul.f32 %v6436, %v1187
        %v6565 = vmul.f32 %v6437, %v1188
        %v6566 = vmul.f32 %v6438, %v1189
        %v6567 = vmul.f32 %v6439, %v1190
        %v6568 = vmul.f32 %v6440, %v1191
        %v6569 = vmul.f32 %v6441, %v1192
        %v6570 = vmul.f32 %v6442, %v1193
        %v6571 = vmul.f32 %v6443, %v1194
        %v6572 = vmul.f32 %v6444, %v1195
        %v6573 = vmul.f32 %v6445, %v1196
        %v6574 = vmul.f32 %v6446, %v1197
        %v6575 = vmul.f32 %v6447, %v1198
        %v6576 = vmul.f32 %v6448, %v1199
        %v6577 = vmul.f32 %v6449, %v1200
        %v6578 = vmul.f32 %v6450, %v1201
        %v6579 = vmul.f32 %v6451, %v1202
        %v6580 = vmul.f32 %v6452, %v1203
        %v6581 = vmul.f32 %v6453, %v1204
        %v6582 = vmul.f32 %v6454, %v1205
        %v6583 = vmul.f32 %v6455, %v1206
        %v6584 = vmul.f32 %v6456, %v1207
        %v6585 = vmul.f32 %v6457, %v1208
        %v6586 = vmul.f32 %v6458, %v1209
        %v6587 = vmul.f32 %v6459, %v1210
        %v6588 = vmul.f32 %v6460, %v1211
        %v6589 = vmul.f32 %v6461, %v1212
        %v6590 = vmul.f32 %v6462, %v1213
        %v6591 = vmul.f32 %v6463, %v1214
        %v6592 = vmul.f32 %v6464, %v1215
        %v6593 = vmul.f32 %v6465, %v1216
        %v6594 = vmul.f32 %v6466, %v1217
        %v6595 = vmul.f32 %v6467, %v1218
        %v6596 = vmul.f32 %v6468, %v1219
        %v6597 = vmul.f32 %v6469, %v1220
        %v6598 = vmul.f32 %v6470, %v1221
        %v6599 = vmul.f32 %v6471, %v1222
        %v6600 = vmul.f32 %v6472, %v1223
        %v6601 = vmul.f32 %v6473, %v1224
        %v6602 = vmul.f32 %v6474, %v1225
        %v6603 = vmul.f32 %v6475, %v1226
        %v6604 = vmul.f32 %v6476, %v1227
        %v6605 = vmul.f32 %v6477, %v1228
        %v6606 = vmul.f32 %v6478, %v1229
        %v6607 = vmul.f32 %v6479, %v1230
        %v6608 = vmul.f32 %v6480, %v1231
        %vm6609 = vcmask 523264
        %v6610 = vsel %vm6609, %v6353, -inf
        %v6611 = vrot.slane %v6610, 4
        %v6612 = vmax.f32 %v6610, %v6611
        %v6613 = vrot.slane %v6612, 2
        %v6614 = vmax.f32 %v6612, %v6613
        %v6615 = vrot.slane %v6614, 1
        %v6616 = vmax.f32 %v6614, %v6615
        %v6617 = vsel %vm6609, %v6354, -inf
        %v6618 = vrot.slane %v6617, 4
        %v6619 = vmax.f32 %v6617, %v6618
        %v6620 = vrot.slane %v6619, 2
        %v6621 = vmax.f32 %v6619, %v6620
        %v6622 = vrot.slane %v6621, 1
        %v6623 = vmax.f32 %v6621, %v6622
        %v6624 = vsel %vm6609, %v6355, -inf
        %v6625 = vrot.slane %v6624, 4
        %v6626 = vmax.f32 %v6624, %v6625
        %v6627 = vrot.slane %v6626, 2
        %v6628 = vmax.f32 %v6626, %v6627
        %v6629 = vrot.slane %v6628, 1
        %v6630 = vmax.f32 %v6628, %v6629
        %v6631 = vsel %vm6609, %v6356, -inf
        %v6632 = vrot.slane %v6631, 4
        %v6633 = vmax.f32 %v6631, %v6632
        %v6634 = vrot.slane %v6633, 2
        %v6635 = vmax.f32 %v6633, %v6634
        %v6636 = vrot.slane %v6635, 1
        %v6637 = vmax.f32 %v6635, %v6636
        %v6638 = vsel %vm6609, %v6357, -inf
        %v6639 = vrot.slane %v6638, 4
        %v6640 = vmax.f32 %v6638, %v6639
        %v6641 = vrot.slane %v6640, 2
        %v6642 = vmax.f32 %v6640, %v6641
        %v6643 = vrot.slane %v6642, 1
        %v6644 = vmax.f32 %v6642, %v6643
        %v6645 = vsel %vm6609, %v6358, -inf
        %v6646 = vrot.slane %v6645, 4
        %v6647 = vmax.f32 %v6645, %v6646
        %v6648 = vrot.slane %v6647, 2
        %v6649 = vmax.f32 %v6647, %v6648
        %v6650 = vrot.slane %v6649, 1
        %v6651 = vmax.f32 %v6649, %v6650
        %v6652 = vsel %vm6609, %v6359, -inf
        %v6653 = vrot.slane %v6652, 4
        %v6654 = vmax.f32 %v6652, %v6653
        %v6655 = vrot.slane %v6654, 2
        %v6656 = vmax.f32 %v6654, %v6655
        %v6657 = vrot.slane %v6656, 1
        %v6658 = vmax.f32 %v6656, %v6657
        %v6659 = vsel %vm6609, %v6360, -inf
        %v6660 = vrot.slane %v6659, 4
        %v6661 = vmax.f32 %v6659, %v6660
        %v6662 = vrot.slane %v6661, 2
        %v6663 = vmax.f32 %v6661, %v6662
        %v6664 = vrot.slane %v6663, 1
        %v6665 = vmax.f32 %v6663, %v6664
        %v6666 = vsel %vm6609, %v6361, -inf
        %v6667 = vrot.slane %v6666, 4
        %v6668 = vmax.f32 %v6666, %v6667
        %v6669 = vrot.slane %v6668, 2
        %v6670 = vmax.f32 %v6668, %v6669
        %v6671 = vrot.slane %v6670, 1
        %v6672 = vmax.f32 %v6670, %v6671
        %v6673 = vsel %vm6609, %v6362, -inf
        %v6674 = vrot.slane %v6673, 4
        %v6675 = vmax.f32 %v6673, %v6674
        %v6676 = vrot.slane %v6675, 2
        %v6677 = vmax.f32 %v6675, %v6676
        %v6678 = vrot.slane %v6677, 1
        %v6679 = vmax.f32 %v6677, %v6678
        %v6680 = vsel %vm6609, %v6363, -inf
        %v6681 = vrot.slane %v6680, 4
        %v6682 = vmax.f32 %v6680, %v6681
        %v6683 = vrot.slane %v6682, 2
        %v6684 = vmax.f32 %v6682, %v6683
        %v6685 = vrot.slane %v6684, 1
        %v6686 = vmax.f32 %v6684, %v6685
        %v6687 = vsel %vm6609, %v6364, -inf
        %v6688 = vrot.slane %v6687, 4
        %v6689 = vmax.f32 %v6687, %v6688
        %v6690 = vrot.slane %v6689, 2
        %v6691 = vmax.f32 %v6689, %v6690
        %v6692 = vrot.slane %v6691, 1
        %v6693 = vmax.f32 %v6691, %v6692
        %v6694 = vsel %vm6609, %v6365, -inf
        %v6695 = vrot.slane %v6694, 4
        %v6696 = vmax.f32 %v6694, %v6695
        %v6697 = vrot.slane %v6696, 2
        %v6698 = vmax.f32 %v6696, %v6697
        %v6699 = vrot.slane %v6698, 1
        %v6700 = vmax.f32 %v6698, %v6699
        %v6701 = vsel %vm6609, %v6366, -inf
        %v6702 = vrot.slane %v6701, 4
        %v6703 = vmax.f32 %v6701, %v6702
        %v6704 = vrot.slane %v6703, 2
        %v6705 = vmax.f32 %v6703, %v6704
        %v6706 = vrot.slane %v6705, 1
        %v6707 = vmax.f32 %v6705, %v6706
        %v6708 = vsel %vm6609, %v6367, -inf
        %v6709 = vrot.slane %v6708, 4
        %v6710 = vmax.f32 %v6708, %v6709
        %v6711 = vrot.slane %v6710, 2
        %v6712 = vmax.f32 %v6710, %v6711
        %v6713 = vrot.slane %v6712, 1
        %v6714 = vmax.f32 %v6712, %v6713
        %v6715 = vsel %vm6609, %v6368, -inf
        %v6716 = vrot.slane %v6715, 4
        %v6717 = vmax.f32 %v6715, %v6716
        %v6718 = vrot.slane %v6717, 2
        %v6719 = vmax.f32 %v6717, %v6718
        %v6720 = vrot.slane %v6719, 1
        %v6721 = vmax.f32 %v6719, %v6720
        %v6722 = vsel %vm6609, %v6369, -inf
        %v6723 = vrot.slane %v6722, 4
        %v6724 = vmax.f32 %v6722, %v6723
        %v6725 = vrot.slane %v6724, 2
        %v6726 = vmax.f32 %v6724, %v6725
        %v6727 = vrot.slane %v6726, 1
        %v6728 = vmax.f32 %v6726, %v6727
        %v6729 = vsel %vm6609, %v6370, -inf
        %v6730 = vrot.slane %v6729, 4
        %v6731 = vmax.f32 %v6729, %v6730
        %v6732 = vrot.slane %v6731, 2
        %v6733 = vmax.f32 %v6731, %v6732
        %v6734 = vrot.slane %v6733, 1
        %v6735 = vmax.f32 %v6733, %v6734
        %v6736 = vsel %vm6609, %v6371, -inf
        %v6737 = vrot.slane %v6736, 4
        %v6738 = vmax.f32 %v6736, %v6737
        %v6739 = vrot.slane %v6738, 2
        %v6740 = vmax.f32 %v6738, %v6739
        %v6741 = vrot.slane %v6740, 1
        %v6742 = vmax.f32 %v6740, %v6741
        %v6743 = vsel %vm6609, %v6372, -inf
        %v6744 = vrot.slane %v6743, 4
        %v6745 = vmax.f32 %v6743, %v6744
        %v6746 = vrot.slane %v6745, 2
        %v6747 = vmax.f32 %v6745, %v6746
        %v6748 = vrot.slane %v6747, 1
        %v6749 = vmax.f32 %v6747, %v6748
        %v6750 = vsel %vm6609, %v6373, -inf
        %v6751 = vrot.slane %v6750, 4
        %v6752 = vmax.f32 %v6750, %v6751
        %v6753 = vrot.slane %v6752, 2
        %v6754 = vmax.f32 %v6752, %v6753
        %v6755 = vrot.slane %v6754, 1
        %v6756 = vmax.f32 %v6754, %v6755
        %v6757 = vsel %vm6609, %v6374, -inf
        %v6758 = vrot.slane %v6757, 4
        %v6759 = vmax.f32 %v6757, %v6758
        %v6760 = vrot.slane %v6759, 2
        %v6761 = vmax.f32 %v6759, %v6760
        %v6762 = vrot.slane %v6761, 1
        %v6763 = vmax.f32 %v6761, %v6762
        %v6764 = vsel %vm6609, %v6375, -inf
        %v6765 = vrot.slane %v6764, 4
        %v6766 = vmax.f32 %v6764, %v6765
        %v6767 = vrot.slane %v6766, 2
        %v6768 = vmax.f32 %v6766, %v6767
        %v6769 = vrot.slane %v6768, 1
        %v6770 = vmax.f32 %v6768, %v6769
        %v6771 = vsel %vm6609, %v6376, -inf
        %v6772 = vrot.slane %v6771, 4
        %v6773 = vmax.f32 %v6771, %v6772
        %v6774 = vrot.slane %v6773, 2
        %v6775 = vmax.f32 %v6773, %v6774
        %v6776 = vrot.slane %v6775, 1
        %v6777 = vmax.f32 %v6775, %v6776
        %v6778 = vsel %vm6609, %v6377, -inf
        %v6779 = vrot.slane %v6778, 4
        %v6780 = vmax.f32 %v6778, %v6779
        %v6781 = vrot.slane %v6780, 2
        %v6782 = vmax.f32 %v6780, %v6781
        %v6783 = vrot.slane %v6782, 1
        %v6784 = vmax.f32 %v6782, %v6783
        %v6785 = vsel %vm6609, %v6378, -inf
        %v6786 = vrot.slane %v6785, 4
        %v6787 = vmax.f32 %v6785, %v6786
        %v6788 = vrot.slane %v6787, 2
        %v6789 = vmax.f32 %v6787, %v6788
        %v6790 = vrot.slane %v6789, 1
        %v6791 = vmax.f32 %v6789, %v6790
        %v6792 = vsel %vm6609, %v6379, -inf
        %v6793 = vrot.slane %v6792, 4
        %v6794 = vmax.f32 %v6792, %v6793
        %v6795 = vrot.slane %v6794, 2
        %v6796 = vmax.f32 %v6794, %v6795
        %v6797 = vrot.slane %v6796, 1
        %v6798 = vmax.f32 %v6796, %v6797
        %v6799 = vsel %vm6609, %v6380, -inf
        %v6800 = vrot.slane %v6799, 4
        %v6801 = vmax.f32 %v6799, %v6800
        %v6802 = vrot.slane %v6801, 2
        %v6803 = vmax.f32 %v6801, %v6802
        %v6804 = vrot.slane %v6803, 1
        %v6805 = vmax.f32 %v6803, %v6804
        %v6806 = vsel %vm6609, %v6381, -inf
        %v6807 = vrot.slane %v6806, 4
        %v6808 = vmax.f32 %v6806, %v6807
        %v6809 = vrot.slane %v6808, 2
        %v6810 = vmax.f32 %v6808, %v6809
        %v6811 = vrot.slane %v6810, 1
        %v6812 = vmax.f32 %v6810, %v6811
        %v6813 = vsel %vm6609, %v6382, -inf
        %v6814 = vrot.slane %v6813, 4
        %v6815 = vmax.f32 %v6813, %v6814
        %v6816 = vrot.slane %v6815, 2
        %v6817 = vmax.f32 %v6815, %v6816
        %v6818 = vrot.slane %v6817, 1
        %v6819 = vmax.f32 %v6817, %v6818
        %v6820 = vsel %vm6609, %v6383, -inf
        %v6821 = vrot.slane %v6820, 4
        %v6822 = vmax.f32 %v6820, %v6821
        %v6823 = vrot.slane %v6822, 2
        %v6824 = vmax.f32 %v6822, %v6823
        %v6825 = vrot.slane %v6824, 1
        %v6826 = vmax.f32 %v6824, %v6825
        %v6827 = vsel %vm6609, %v6384, -inf
        %v6828 = vrot.slane %v6827, 4
        %v6829 = vmax.f32 %v6827, %v6828
        %v6830 = vrot.slane %v6829, 2
        %v6831 = vmax.f32 %v6829, %v6830
        %v6832 = vrot.slane %v6831, 1
        %v6833 = vmax.f32 %v6831, %v6832
        %v6834 = vsel %vm6609, %v6385, -inf
        %v6835 = vrot.slane %v6834, 4
        %v6836 = vmax.f32 %v6834, %v6835
        %v6837 = vrot.slane %v6836, 2
        %v6838 = vmax.f32 %v6836, %v6837
        %v6839 = vrot.slane %v6838, 1
        %v6840 = vmax.f32 %v6838, %v6839
        %v6841 = vsel %vm6609, %v6386, -inf
        %v6842 = vrot.slane %v6841, 4
        %v6843 = vmax.f32 %v6841, %v6842
        %v6844 = vrot.slane %v6843, 2
        %v6845 = vmax.f32 %v6843, %v6844
        %v6846 = vrot.slane %v6845, 1
        %v6847 = vmax.f32 %v6845, %v6846
        %v6848 = vsel %vm6609, %v6387, -inf
        %v6849 = vrot.slane %v6848, 4
        %v6850 = vmax.f32 %v6848, %v6849
        %v6851 = vrot.slane %v6850, 2
        %v6852 = vmax.f32 %v6850, %v6851
        %v6853 = vrot.slane %v6852, 1
        %v6854 = vmax.f32 %v6852, %v6853
        %v6855 = vsel %vm6609, %v6388, -inf
        %v6856 = vrot.slane %v6855, 4
        %v6857 = vmax.f32 %v6855, %v6856
        %v6858 = vrot.slane %v6857, 2
        %v6859 = vmax.f32 %v6857, %v6858
        %v6860 = vrot.slane %v6859, 1
        %v6861 = vmax.f32 %v6859, %v6860
        %v6862 = vsel %vm6609, %v6389, -inf
        %v6863 = vrot.slane %v6862, 4
        %v6864 = vmax.f32 %v6862, %v6863
        %v6865 = vrot.slane %v6864, 2
        %v6866 = vmax.f32 %v6864, %v6865
        %v6867 = vrot.slane %v6866, 1
        %v6868 = vmax.f32 %v6866, %v6867
        %v6869 = vsel %vm6609, %v6390, -inf
        %v6870 = vrot.slane %v6869, 4
        %v6871 = vmax.f32 %v6869, %v6870
        %v6872 = vrot.slane %v6871, 2
        %v6873 = vmax.f32 %v6871, %v6872
        %v6874 = vrot.slane %v6873, 1
        %v6875 = vmax.f32 %v6873, %v6874
        %v6876 = vsel %vm6609, %v6391, -inf
        %v6877 = vrot.slane %v6876, 4
        %v6878 = vmax.f32 %v6876, %v6877
        %v6879 = vrot.slane %v6878, 2
        %v6880 = vmax.f32 %v6878, %v6879
        %v6881 = vrot.slane %v6880, 1
        %v6882 = vmax.f32 %v6880, %v6881
        %v6883 = vsel %vm6609, %v6392, -inf
        %v6884 = vrot.slane %v6883, 4
        %v6885 = vmax.f32 %v6883, %v6884
        %v6886 = vrot.slane %v6885, 2
        %v6887 = vmax.f32 %v6885, %v6886
        %v6888 = vrot.slane %v6887, 1
        %v6889 = vmax.f32 %v6887, %v6888
        %v6890 = vsel %vm6609, %v6393, -inf
        %v6891 = vrot.slane %v6890, 4
        %v6892 = vmax.f32 %v6890, %v6891
        %v6893 = vrot.slane %v6892, 2
        %v6894 = vmax.f32 %v6892, %v6893
        %v6895 = vrot.slane %v6894, 1
        %v6896 = vmax.f32 %v6894, %v6895
        %v6897 = vsel %vm6609, %v6394, -inf
        %v6898 = vrot.slane %v6897, 4
        %v6899 = vmax.f32 %v6897, %v6898
        %v6900 = vrot.slane %v6899, 2
        %v6901 = vmax.f32 %v6899, %v6900
        %v6902 = vrot.slane %v6901, 1
        %v6903 = vmax.f32 %v6901, %v6902
        %v6904 = vsel %vm6609, %v6395, -inf
        %v6905 = vrot.slane %v6904, 4
        %v6906 = vmax.f32 %v6904, %v6905
        %v6907 = vrot.slane %v6906, 2
        %v6908 = vmax.f32 %v6906, %v6907
        %v6909 = vrot.slane %v6908, 1
        %v6910 = vmax.f32 %v6908, %v6909
        %v6911 = vsel %vm6609, %v6396, -inf
        %v6912 = vrot.slane %v6911, 4
        %v6913 = vmax.f32 %v6911, %v6912
        %v6914 = vrot.slane %v6913, 2
        %v6915 = vmax.f32 %v6913, %v6914
        %v6916 = vrot.slane %v6915, 1
        %v6917 = vmax.f32 %v6915, %v6916
        %v6918 = vsel %vm6609, %v6397, -inf
        %v6919 = vrot.slane %v6918, 4
        %v6920 = vmax.f32 %v6918, %v6919
        %v6921 = vrot.slane %v6920, 2
        %v6922 = vmax.f32 %v6920, %v6921
        %v6923 = vrot.slane %v6922, 1
        %v6924 = vmax.f32 %v6922, %v6923
        %v6925 = vsel %vm6609, %v6398, -inf
        %v6926 = vrot.slane %v6925, 4
        %v6927 = vmax.f32 %v6925, %v6926
        %v6928 = vrot.slane %v6927, 2
        %v6929 = vmax.f32 %v6927, %v6928
        %v6930 = vrot.slane %v6929, 1
        %v6931 = vmax.f32 %v6929, %v6930
        %v6932 = vsel %vm6609, %v6399, -inf
        %v6933 = vrot.slane %v6932, 4
        %v6934 = vmax.f32 %v6932, %v6933
        %v6935 = vrot.slane %v6934, 2
        %v6936 = vmax.f32 %v6934, %v6935
        %v6937 = vrot.slane %v6936, 1
        %v6938 = vmax.f32 %v6936, %v6937
        %v6939 = vsel %vm6609, %v6400, -inf
        %v6940 = vrot.slane %v6939, 4
        %v6941 = vmax.f32 %v6939, %v6940
        %v6942 = vrot.slane %v6941, 2
        %v6943 = vmax.f32 %v6941, %v6942
        %v6944 = vrot.slane %v6943, 1
        %v6945 = vmax.f32 %v6943, %v6944
        %v6946 = vsel %vm6609, %v6401, -inf
        %v6947 = vrot.slane %v6946, 4
        %v6948 = vmax.f32 %v6946, %v6947
        %v6949 = vrot.slane %v6948, 2
        %v6950 = vmax.f32 %v6948, %v6949
        %v6951 = vrot.slane %v6950, 1
        %v6952 = vmax.f32 %v6950, %v6951
        %v6953 = vsel %vm6609, %v6402, -inf
        %v6954 = vrot.slane %v6953, 4
        %v6955 = vmax.f32 %v6953, %v6954
        %v6956 = vrot.slane %v6955, 2
        %v6957 = vmax.f32 %v6955, %v6956
        %v6958 = vrot.slane %v6957, 1
        %v6959 = vmax.f32 %v6957, %v6958
        %v6960 = vsel %vm6609, %v6403, -inf
        %v6961 = vrot.slane %v6960, 4
        %v6962 = vmax.f32 %v6960, %v6961
        %v6963 = vrot.slane %v6962, 2
        %v6964 = vmax.f32 %v6962, %v6963
        %v6965 = vrot.slane %v6964, 1
        %v6966 = vmax.f32 %v6964, %v6965
        %v6967 = vsel %vm6609, %v6404, -inf
        %v6968 = vrot.slane %v6967, 4
        %v6969 = vmax.f32 %v6967, %v6968
        %v6970 = vrot.slane %v6969, 2
        %v6971 = vmax.f32 %v6969, %v6970
        %v6972 = vrot.slane %v6971, 1
        %v6973 = vmax.f32 %v6971, %v6972
        %v6974 = vsel %vm6609, %v6405, -inf
        %v6975 = vrot.slane %v6974, 4
        %v6976 = vmax.f32 %v6974, %v6975
        %v6977 = vrot.slane %v6976, 2
        %v6978 = vmax.f32 %v6976, %v6977
        %v6979 = vrot.slane %v6978, 1
        %v6980 = vmax.f32 %v6978, %v6979
        %v6981 = vsel %vm6609, %v6406, -inf
        %v6982 = vrot.slane %v6981, 4
        %v6983 = vmax.f32 %v6981, %v6982
        %v6984 = vrot.slane %v6983, 2
        %v6985 = vmax.f32 %v6983, %v6984
        %v6986 = vrot.slane %v6985, 1
        %v6987 = vmax.f32 %v6985, %v6986
        %v6988 = vsel %vm6609, %v6407, -inf
        %v6989 = vrot.slane %v6988, 4
        %v6990 = vmax.f32 %v6988, %v6989
        %v6991 = vrot.slane %v6990, 2
        %v6992 = vmax.f32 %v6990, %v6991
        %v6993 = vrot.slane %v6992, 1
        %v6994 = vmax.f32 %v6992, %v6993
        %v6995 = vsel %vm6609, %v6408, -inf
        %v6996 = vrot.slane %v6995, 4
        %v6997 = vmax.f32 %v6995, %v6996
        %v6998 = vrot.slane %v6997, 2
        %v6999 = vmax.f32 %v6997, %v6998
        %v7000 = vrot.slane %v6999, 1
        %v7001 = vmax.f32 %v6999, %v7000
        %v7002 = vsel %vm6609, %v6409, -inf
        %v7003 = vrot.slane %v7002, 4
        %v7004 = vmax.f32 %v7002, %v7003
        %v7005 = vrot.slane %v7004, 2
        %v7006 = vmax.f32 %v7004, %v7005
        %v7007 = vrot.slane %v7006, 1
        %v7008 = vmax.f32 %v7006, %v7007
        %v7009 = vsel %vm6609, %v6410, -inf
        %v7010 = vrot.slane %v7009, 4
        %v7011 = vmax.f32 %v7009, %v7010
        %v7012 = vrot.slane %v7011, 2
        %v7013 = vmax.f32 %v7011, %v7012
        %v7014 = vrot.slane %v7013, 1
        %v7015 = vmax.f32 %v7013, %v7014
        %v7016 = vsel %vm6609, %v6411, -inf
        %v7017 = vrot.slane %v7016, 4
        %v7018 = vmax.f32 %v7016, %v7017
        %v7019 = vrot.slane %v7018, 2
        %v7020 = vmax.f32 %v7018, %v7019
        %v7021 = vrot.slane %v7020, 1
        %v7022 = vmax.f32 %v7020, %v7021
        %v7023 = vsel %vm6609, %v6412, -inf
        %v7024 = vrot.slane %v7023, 4
        %v7025 = vmax.f32 %v7023, %v7024
        %v7026 = vrot.slane %v7025, 2
        %v7027 = vmax.f32 %v7025, %v7026
        %v7028 = vrot.slane %v7027, 1
        %v7029 = vmax.f32 %v7027, %v7028
        %v7030 = vsel %vm6609, %v6413, -inf
        %v7031 = vrot.slane %v7030, 4
        %v7032 = vmax.f32 %v7030, %v7031
        %v7033 = vrot.slane %v7032, 2
        %v7034 = vmax.f32 %v7032, %v7033
        %v7035 = vrot.slane %v7034, 1
        %v7036 = vmax.f32 %v7034, %v7035
        %v7037 = vsel %vm6609, %v6414, -inf
        %v7038 = vrot.slane %v7037, 4
        %v7039 = vmax.f32 %v7037, %v7038
        %v7040 = vrot.slane %v7039, 2
        %v7041 = vmax.f32 %v7039, %v7040
        %v7042 = vrot.slane %v7041, 1
        %v7043 = vmax.f32 %v7041, %v7042
        %v7044 = vsel %vm6609, %v6415, -inf
        %v7045 = vrot.slane %v7044, 4
        %v7046 = vmax.f32 %v7044, %v7045
        %v7047 = vrot.slane %v7046, 2
        %v7048 = vmax.f32 %v7046, %v7047
        %v7049 = vrot.slane %v7048, 1
        %v7050 = vmax.f32 %v7048, %v7049
        %v7051 = vsel %vm6609, %v6416, -inf
        %v7052 = vrot.slane %v7051, 4
        %v7053 = vmax.f32 %v7051, %v7052
        %v7054 = vrot.slane %v7053, 2
        %v7055 = vmax.f32 %v7053, %v7054
        %v7056 = vrot.slane %v7055, 1
        %v7057 = vmax.f32 %v7055, %v7056
        %v7058 = vsel %vm6609, %v6417, -inf
        %v7059 = vrot.slane %v7058, 4
        %v7060 = vmax.f32 %v7058, %v7059
        %v7061 = vrot.slane %v7060, 2
        %v7062 = vmax.f32 %v7060, %v7061
        %v7063 = vrot.slane %v7062, 1
        %v7064 = vmax.f32 %v7062, %v7063
        %v7065 = vsel %vm6609, %v6418, -inf
        %v7066 = vrot.slane %v7065, 4
        %v7067 = vmax.f32 %v7065, %v7066
        %v7068 = vrot.slane %v7067, 2
        %v7069 = vmax.f32 %v7067, %v7068
        %v7070 = vrot.slane %v7069, 1
        %v7071 = vmax.f32 %v7069, %v7070
        %v7072 = vsel %vm6609, %v6419, -inf
        %v7073 = vrot.slane %v7072, 4
        %v7074 = vmax.f32 %v7072, %v7073
        %v7075 = vrot.slane %v7074, 2
        %v7076 = vmax.f32 %v7074, %v7075
        %v7077 = vrot.slane %v7076, 1
        %v7078 = vmax.f32 %v7076, %v7077
        %v7079 = vsel %vm6609, %v6420, -inf
        %v7080 = vrot.slane %v7079, 4
        %v7081 = vmax.f32 %v7079, %v7080
        %v7082 = vrot.slane %v7081, 2
        %v7083 = vmax.f32 %v7081, %v7082
        %v7084 = vrot.slane %v7083, 1
        %v7085 = vmax.f32 %v7083, %v7084
        %v7086 = vsel %vm6609, %v6421, -inf
        %v7087 = vrot.slane %v7086, 4
        %v7088 = vmax.f32 %v7086, %v7087
        %v7089 = vrot.slane %v7088, 2
        %v7090 = vmax.f32 %v7088, %v7089
        %v7091 = vrot.slane %v7090, 1
        %v7092 = vmax.f32 %v7090, %v7091
        %v7093 = vsel %vm6609, %v6422, -inf
        %v7094 = vrot.slane %v7093, 4
        %v7095 = vmax.f32 %v7093, %v7094
        %v7096 = vrot.slane %v7095, 2
        %v7097 = vmax.f32 %v7095, %v7096
        %v7098 = vrot.slane %v7097, 1
        %v7099 = vmax.f32 %v7097, %v7098
        %v7100 = vsel %vm6609, %v6423, -inf
        %v7101 = vrot.slane %v7100, 4
        %v7102 = vmax.f32 %v7100, %v7101
        %v7103 = vrot.slane %v7102, 2
        %v7104 = vmax.f32 %v7102, %v7103
        %v7105 = vrot.slane %v7104, 1
        %v7106 = vmax.f32 %v7104, %v7105
        %v7107 = vsel %vm6609, %v6424, -inf
        %v7108 = vrot.slane %v7107, 4
        %v7109 = vmax.f32 %v7107, %v7108
        %v7110 = vrot.slane %v7109, 2
        %v7111 = vmax.f32 %v7109, %v7110
        %v7112 = vrot.slane %v7111, 1
        %v7113 = vmax.f32 %v7111, %v7112
        %v7114 = vsel %vm6609, %v6425, -inf
        %v7115 = vrot.slane %v7114, 4
        %v7116 = vmax.f32 %v7114, %v7115
        %v7117 = vrot.slane %v7116, 2
        %v7118 = vmax.f32 %v7116, %v7117
        %v7119 = vrot.slane %v7118, 1
        %v7120 = vmax.f32 %v7118, %v7119
        %v7121 = vsel %vm6609, %v6426, -inf
        %v7122 = vrot.slane %v7121, 4
        %v7123 = vmax.f32 %v7121, %v7122
        %v7124 = vrot.slane %v7123, 2
        %v7125 = vmax.f32 %v7123, %v7124
        %v7126 = vrot.slane %v7125, 1
        %v7127 = vmax.f32 %v7125, %v7126
        %v7128 = vsel %vm6609, %v6427, -inf
        %v7129 = vrot.slane %v7128, 4
        %v7130 = vmax.f32 %v7128, %v7129
        %v7131 = vrot.slane %v7130, 2
        %v7132 = vmax.f32 %v7130, %v7131
        %v7133 = vrot.slane %v7132, 1
        %v7134 = vmax.f32 %v7132, %v7133
        %v7135 = vsel %vm6609, %v6428, -inf
        %v7136 = vrot.slane %v7135, 4
        %v7137 = vmax.f32 %v7135, %v7136
        %v7138 = vrot.slane %v7137, 2
        %v7139 = vmax.f32 %v7137, %v7138
        %v7140 = vrot.slane %v7139, 1
        %v7141 = vmax.f32 %v7139, %v7140
        %v7142 = vsel %vm6609, %v6429, -inf
        %v7143 = vrot.slane %v7142, 4
        %v7144 = vmax.f32 %v7142, %v7143
        %v7145 = vrot.slane %v7144, 2
        %v7146 = vmax.f32 %v7144, %v7145
        %v7147 = vrot.slane %v7146, 1
        %v7148 = vmax.f32 %v7146, %v7147
        %v7149 = vsel %vm6609, %v6430, -inf
        %v7150 = vrot.slane %v7149, 4
        %v7151 = vmax.f32 %v7149, %v7150
        %v7152 = vrot.slane %v7151, 2
        %v7153 = vmax.f32 %v7151, %v7152
        %v7154 = vrot.slane %v7153, 1
        %v7155 = vmax.f32 %v7153, %v7154
        %v7156 = vsel %vm6609, %v6431, -inf
        %v7157 = vrot.slane %v7156, 4
        %v7158 = vmax.f32 %v7156, %v7157
        %v7159 = vrot.slane %v7158, 2
        %v7160 = vmax.f32 %v7158, %v7159
        %v7161 = vrot.slane %v7160, 1
        %v7162 = vmax.f32 %v7160, %v7161
        %v7163 = vsel %vm6609, %v6432, -inf
        %v7164 = vrot.slane %v7163, 4
        %v7165 = vmax.f32 %v7163, %v7164
        %v7166 = vrot.slane %v7165, 2
        %v7167 = vmax.f32 %v7165, %v7166
        %v7168 = vrot.slane %v7167, 1
        %v7169 = vmax.f32 %v7167, %v7168
        %v7170 = vsel %vm6609, %v6433, -inf
        %v7171 = vrot.slane %v7170, 4
        %v7172 = vmax.f32 %v7170, %v7171
        %v7173 = vrot.slane %v7172, 2
        %v7174 = vmax.f32 %v7172, %v7173
        %v7175 = vrot.slane %v7174, 1
        %v7176 = vmax.f32 %v7174, %v7175
        %v7177 = vsel %vm6609, %v6434, -inf
        %v7178 = vrot.slane %v7177, 4
        %v7179 = vmax.f32 %v7177, %v7178
        %v7180 = vrot.slane %v7179, 2
        %v7181 = vmax.f32 %v7179, %v7180
        %v7182 = vrot.slane %v7181, 1
        %v7183 = vmax.f32 %v7181, %v7182
        %v7184 = vsel %vm6609, %v6435, -inf
        %v7185 = vrot.slane %v7184, 4
        %v7186 = vmax.f32 %v7184, %v7185
        %v7187 = vrot.slane %v7186, 2
        %v7188 = vmax.f32 %v7186, %v7187
        %v7189 = vrot.slane %v7188, 1
        %v7190 = vmax.f32 %v7188, %v7189
        %v7191 = vsel %vm6609, %v6436, -inf
        %v7192 = vrot.slane %v7191, 4
        %v7193 = vmax.f32 %v7191, %v7192
        %v7194 = vrot.slane %v7193, 2
        %v7195 = vmax.f32 %v7193, %v7194
        %v7196 = vrot.slane %v7195, 1
        %v7197 = vmax.f32 %v7195, %v7196
        %v7198 = vsel %vm6609, %v6437, -inf
        %v7199 = vrot.slane %v7198, 4
        %v7200 = vmax.f32 %v7198, %v7199
        %v7201 = vrot.slane %v7200, 2
        %v7202 = vmax.f32 %v7200, %v7201
        %v7203 = vrot.slane %v7202, 1
        %v7204 = vmax.f32 %v7202, %v7203
        %v7205 = vsel %vm6609, %v6438, -inf
        %v7206 = vrot.slane %v7205, 4
        %v7207 = vmax.f32 %v7205, %v7206
        %v7208 = vrot.slane %v7207, 2
        %v7209 = vmax.f32 %v7207, %v7208
        %v7210 = vrot.slane %v7209, 1
        %v7211 = vmax.f32 %v7209, %v7210
        %v7212 = vsel %vm6609, %v6439, -inf
        %v7213 = vrot.slane %v7212, 4
        %v7214 = vmax.f32 %v7212, %v7213
        %v7215 = vrot.slane %v7214, 2
        %v7216 = vmax.f32 %v7214, %v7215
        %v7217 = vrot.slane %v7216, 1
        %v7218 = vmax.f32 %v7216, %v7217
        %v7219 = vsel %vm6609, %v6440, -inf
        %v7220 = vrot.slane %v7219, 4
        %v7221 = vmax.f32 %v7219, %v7220
        %v7222 = vrot.slane %v7221, 2
        %v7223 = vmax.f32 %v7221, %v7222
        %v7224 = vrot.slane %v7223, 1
        %v7225 = vmax.f32 %v7223, %v7224
        %v7226 = vsel %vm6609, %v6441, -inf
        %v7227 = vrot.slane %v7226, 4
        %v7228 = vmax.f32 %v7226, %v7227
        %v7229 = vrot.slane %v7228, 2
        %v7230 = vmax.f32 %v7228, %v7229
        %v7231 = vrot.slane %v7230, 1
        %v7232 = vmax.f32 %v7230, %v7231
        %v7233 = vsel %vm6609, %v6442, -inf
        %v7234 = vrot.slane %v7233, 4
        %v7235 = vmax.f32 %v7233, %v7234
        %v7236 = vrot.slane %v7235, 2
        %v7237 = vmax.f32 %v7235, %v7236
        %v7238 = vrot.slane %v7237, 1
        %v7239 = vmax.f32 %v7237, %v7238
        %v7240 = vsel %vm6609, %v6443, -inf
        %v7241 = vrot.slane %v7240, 4
        %v7242 = vmax.f32 %v7240, %v7241
        %v7243 = vrot.slane %v7242, 2
        %v7244 = vmax.f32 %v7242, %v7243
        %v7245 = vrot.slane %v7244, 1
        %v7246 = vmax.f32 %v7244, %v7245
        %v7247 = vsel %vm6609, %v6444, -inf
        %v7248 = vrot.slane %v7247, 4
        %v7249 = vmax.f32 %v7247, %v7248
        %v7250 = vrot.slane %v7249, 2
        %v7251 = vmax.f32 %v7249, %v7250
        %v7252 = vrot.slane %v7251, 1
        %v7253 = vmax.f32 %v7251, %v7252
        %v7254 = vsel %vm6609, %v6445, -inf
        %v7255 = vrot.slane %v7254, 4
        %v7256 = vmax.f32 %v7254, %v7255
        %v7257 = vrot.slane %v7256, 2
        %v7258 = vmax.f32 %v7256, %v7257
        %v7259 = vrot.slane %v7258, 1
        %v7260 = vmax.f32 %v7258, %v7259
        %v7261 = vsel %vm6609, %v6446, -inf
        %v7262 = vrot.slane %v7261, 4
        %v7263 = vmax.f32 %v7261, %v7262
        %v7264 = vrot.slane %v7263, 2
        %v7265 = vmax.f32 %v7263, %v7264
        %v7266 = vrot.slane %v7265, 1
        %v7267 = vmax.f32 %v7265, %v7266
        %v7268 = vsel %vm6609, %v6447, -inf
        %v7269 = vrot.slane %v7268, 4
        %v7270 = vmax.f32 %v7268, %v7269
        %v7271 = vrot.slane %v7270, 2
        %v7272 = vmax.f32 %v7270, %v7271
        %v7273 = vrot.slane %v7272, 1
        %v7274 = vmax.f32 %v7272, %v7273
        %v7275 = vsel %vm6609, %v6448, -inf
        %v7276 = vrot.slane %v7275, 4
        %v7277 = vmax.f32 %v7275, %v7276
        %v7278 = vrot.slane %v7277, 2
        %v7279 = vmax.f32 %v7277, %v7278
        %v7280 = vrot.slane %v7279, 1
        %v7281 = vmax.f32 %v7279, %v7280
        %v7282 = vsel %vm6609, %v6449, -inf
        %v7283 = vrot.slane %v7282, 4
        %v7284 = vmax.f32 %v7282, %v7283
        %v7285 = vrot.slane %v7284, 2
        %v7286 = vmax.f32 %v7284, %v7285
        %v7287 = vrot.slane %v7286, 1
        %v7288 = vmax.f32 %v7286, %v7287
        %v7289 = vsel %vm6609, %v6450, -inf
        %v7290 = vrot.slane %v7289, 4
        %v7291 = vmax.f32 %v7289, %v7290
        %v7292 = vrot.slane %v7291, 2
        %v7293 = vmax.f32 %v7291, %v7292
        %v7294 = vrot.slane %v7293, 1
        %v7295 = vmax.f32 %v7293, %v7294
        %v7296 = vsel %vm6609, %v6451, -inf
        %v7297 = vrot.slane %v7296, 4
        %v7298 = vmax.f32 %v7296, %v7297
        %v7299 = vrot.slane %v7298, 2
        %v7300 = vmax.f32 %v7298, %v7299
        %v7301 = vrot.slane %v7300, 1
        %v7302 = vmax.f32 %v7300, %v7301
        %v7303 = vsel %vm6609, %v6452, -inf
        %v7304 = vrot.slane %v7303, 4
        %v7305 = vmax.f32 %v7303, %v7304
        %v7306 = vrot.slane %v7305, 2
        %v7307 = vmax.f32 %v7305, %v7306
        %v7308 = vrot.slane %v7307, 1
        %v7309 = vmax.f32 %v7307, %v7308
        %v7310 = vsel %vm6609, %v6453, -inf
        %v7311 = vrot.slane %v7310, 4
        %v7312 = vmax.f32 %v7310, %v7311
        %v7313 = vrot.slane %v7312, 2
        %v7314 = vmax.f32 %v7312, %v7313
        %v7315 = vrot.slane %v7314, 1
        %v7316 = vmax.f32 %v7314, %v7315
        %v7317 = vsel %vm6609, %v6454, -inf
        %v7318 = vrot.slane %v7317, 4
        %v7319 = vmax.f32 %v7317, %v7318
        %v7320 = vrot.slane %v7319, 2
        %v7321 = vmax.f32 %v7319, %v7320
        %v7322 = vrot.slane %v7321, 1
        %v7323 = vmax.f32 %v7321, %v7322
        %v7324 = vsel %vm6609, %v6455, -inf
        %v7325 = vrot.slane %v7324, 4
        %v7326 = vmax.f32 %v7324, %v7325
        %v7327 = vrot.slane %v7326, 2
        %v7328 = vmax.f32 %v7326, %v7327
        %v7329 = vrot.slane %v7328, 1
        %v7330 = vmax.f32 %v7328, %v7329
        %v7331 = vsel %vm6609, %v6456, -inf
        %v7332 = vrot.slane %v7331, 4
        %v7333 = vmax.f32 %v7331, %v7332
        %v7334 = vrot.slane %v7333, 2
        %v7335 = vmax.f32 %v7333, %v7334
        %v7336 = vrot.slane %v7335, 1
        %v7337 = vmax.f32 %v7335, %v7336
        %v7338 = vsel %vm6609, %v6457, -inf
        %v7339 = vrot.slane %v7338, 4
        %v7340 = vmax.f32 %v7338, %v7339
        %v7341 = vrot.slane %v7340, 2
        %v7342 = vmax.f32 %v7340, %v7341
        %v7343 = vrot.slane %v7342, 1
        %v7344 = vmax.f32 %v7342, %v7343
        %v7345 = vsel %vm6609, %v6458, -inf
        %v7346 = vrot.slane %v7345, 4
        %v7347 = vmax.f32 %v7345, %v7346
        %v7348 = vrot.slane %v7347, 2
        %v7349 = vmax.f32 %v7347, %v7348
        %v7350 = vrot.slane %v7349, 1
        %v7351 = vmax.f32 %v7349, %v7350
        %v7352 = vsel %vm6609, %v6459, -inf
        %v7353 = vrot.slane %v7352, 4
        %v7354 = vmax.f32 %v7352, %v7353
        %v7355 = vrot.slane %v7354, 2
        %v7356 = vmax.f32 %v7354, %v7355
        %v7357 = vrot.slane %v7356, 1
        %v7358 = vmax.f32 %v7356, %v7357
        %v7359 = vsel %vm6609, %v6460, -inf
        %v7360 = vrot.slane %v7359, 4
        %v7361 = vmax.f32 %v7359, %v7360
        %v7362 = vrot.slane %v7361, 2
        %v7363 = vmax.f32 %v7361, %v7362
        %v7364 = vrot.slane %v7363, 1
        %v7365 = vmax.f32 %v7363, %v7364
        %v7366 = vsel %vm6609, %v6461, -inf
        %v7367 = vrot.slane %v7366, 4
        %v7368 = vmax.f32 %v7366, %v7367
        %v7369 = vrot.slane %v7368, 2
        %v7370 = vmax.f32 %v7368, %v7369
        %v7371 = vrot.slane %v7370, 1
        %v7372 = vmax.f32 %v7370, %v7371
        %v7373 = vsel %vm6609, %v6462, -inf
        %v7374 = vrot.slane %v7373, 4
        %v7375 = vmax.f32 %v7373, %v7374
        %v7376 = vrot.slane %v7375, 2
        %v7377 = vmax.f32 %v7375, %v7376
        %v7378 = vrot.slane %v7377, 1
        %v7379 = vmax.f32 %v7377, %v7378
        %v7380 = vsel %vm6609, %v6463, -inf
        %v7381 = vrot.slane %v7380, 4
        %v7382 = vmax.f32 %v7380, %v7381
        %v7383 = vrot.slane %v7382, 2
        %v7384 = vmax.f32 %v7382, %v7383
        %v7385 = vrot.slane %v7384, 1
        %v7386 = vmax.f32 %v7384, %v7385
        %v7387 = vsel %vm6609, %v6464, -inf
        %v7388 = vrot.slane %v7387, 4
        %v7389 = vmax.f32 %v7387, %v7388
        %v7390 = vrot.slane %v7389, 2
        %v7391 = vmax.f32 %v7389, %v7390
        %v7392 = vrot.slane %v7391, 1
        %v7393 = vmax.f32 %v7391, %v7392
        %v7394 = vsel %vm6609, %v6465, -inf
        %v7395 = vrot.slane %v7394, 4
        %v7396 = vmax.f32 %v7394, %v7395
        %v7397 = vrot.slane %v7396, 2
        %v7398 = vmax.f32 %v7396, %v7397
        %v7399 = vrot.slane %v7398, 1
        %v7400 = vmax.f32 %v7398, %v7399
        %v7401 = vsel %vm6609, %v6466, -inf
        %v7402 = vrot.slane %v7401, 4
        %v7403 = vmax.f32 %v7401, %v7402
        %v7404 = vrot.slane %v7403, 2
        %v7405 = vmax.f32 %v7403, %v7404
        %v7406 = vrot.slane %v7405, 1
        %v7407 = vmax.f32 %v7405, %v7406
        %v7408 = vsel %vm6609, %v6467, -inf
        %v7409 = vrot.slane %v7408, 4
        %v7410 = vmax.f32 %v7408, %v7409
        %v7411 = vrot.slane %v7410, 2
        %v7412 = vmax.f32 %v7410, %v7411
        %v7413 = vrot.slane %v7412, 1
        %v7414 = vmax.f32 %v7412, %v7413
        %v7415 = vsel %vm6609, %v6468, -inf
        %v7416 = vrot.slane %v7415, 4
        %v7417 = vmax.f32 %v7415, %v7416
        %v7418 = vrot.slane %v7417, 2
        %v7419 = vmax.f32 %v7417, %v7418
        %v7420 = vrot.slane %v7419, 1
        %v7421 = vmax.f32 %v7419, %v7420
        %v7422 = vsel %vm6609, %v6469, -inf
        %v7423 = vrot.slane %v7422, 4
        %v7424 = vmax.f32 %v7422, %v7423
        %v7425 = vrot.slane %v7424, 2
        %v7426 = vmax.f32 %v7424, %v7425
        %v7427 = vrot.slane %v7426, 1
        %v7428 = vmax.f32 %v7426, %v7427
        %v7429 = vsel %vm6609, %v6470, -inf
        %v7430 = vrot.slane %v7429, 4
        %v7431 = vmax.f32 %v7429, %v7430
        %v7432 = vrot.slane %v7431, 2
        %v7433 = vmax.f32 %v7431, %v7432
        %v7434 = vrot.slane %v7433, 1
        %v7435 = vmax.f32 %v7433, %v7434
        %v7436 = vsel %vm6609, %v6471, -inf
        %v7437 = vrot.slane %v7436, 4
        %v7438 = vmax.f32 %v7436, %v7437
        %v7439 = vrot.slane %v7438, 2
        %v7440 = vmax.f32 %v7438, %v7439
        %v7441 = vrot.slane %v7440, 1
        %v7442 = vmax.f32 %v7440, %v7441
        %v7443 = vsel %vm6609, %v6472, -inf
        %v7444 = vrot.slane %v7443, 4
        %v7445 = vmax.f32 %v7443, %v7444
        %v7446 = vrot.slane %v7445, 2
        %v7447 = vmax.f32 %v7445, %v7446
        %v7448 = vrot.slane %v7447, 1
        %v7449 = vmax.f32 %v7447, %v7448
        %v7450 = vsel %vm6609, %v6473, -inf
        %v7451 = vrot.slane %v7450, 4
        %v7452 = vmax.f32 %v7450, %v7451
        %v7453 = vrot.slane %v7452, 2
        %v7454 = vmax.f32 %v7452, %v7453
        %v7455 = vrot.slane %v7454, 1
        %v7456 = vmax.f32 %v7454, %v7455
        %v7457 = vsel %vm6609, %v6474, -inf
        %v7458 = vrot.slane %v7457, 4
        %v7459 = vmax.f32 %v7457, %v7458
        %v7460 = vrot.slane %v7459, 2
        %v7461 = vmax.f32 %v7459, %v7460
        %v7462 = vrot.slane %v7461, 1
        %v7463 = vmax.f32 %v7461, %v7462
        %v7464 = vsel %vm6609, %v6475, -inf
        %v7465 = vrot.slane %v7464, 4
        %v7466 = vmax.f32 %v7464, %v7465
        %v7467 = vrot.slane %v7466, 2
        %v7468 = vmax.f32 %v7466, %v7467
        %v7469 = vrot.slane %v7468, 1
        %v7470 = vmax.f32 %v7468, %v7469
        %v7471 = vsel %vm6609, %v6476, -inf
        %v7472 = vrot.slane %v7471, 4
        %v7473 = vmax.f32 %v7471, %v7472
        %v7474 = vrot.slane %v7473, 2
        %v7475 = vmax.f32 %v7473, %v7474
        %v7476 = vrot.slane %v7475, 1
        %v7477 = vmax.f32 %v7475, %v7476
        %v7478 = vsel %vm6609, %v6477, -inf
        %v7479 = vrot.slane %v7478, 4
        %v7480 = vmax.f32 %v7478, %v7479
        %v7481 = vrot.slane %v7480, 2
        %v7482 = vmax.f32 %v7480, %v7481
        %v7483 = vrot.slane %v7482, 1
        %v7484 = vmax.f32 %v7482, %v7483
        %v7485 = vsel %vm6609, %v6478, -inf
        %v7486 = vrot.slane %v7485, 4
        %v7487 = vmax.f32 %v7485, %v7486
        %v7488 = vrot.slane %v7487, 2
        %v7489 = vmax.f32 %v7487, %v7488
        %v7490 = vrot.slane %v7489, 1
        %v7491 = vmax.f32 %v7489, %v7490
        %v7492 = vsel %vm6609, %v6479, -inf
        %v7493 = vrot.slane %v7492, 4
        %v7494 = vmax.f32 %v7492, %v7493
        %v7495 = vrot.slane %v7494, 2
        %v7496 = vmax.f32 %v7494, %v7495
        %v7497 = vrot.slane %v7496, 1
        %v7498 = vmax.f32 %v7496, %v7497
        %v7499 = vsel %vm6609, %v6480, -inf
        %v7500 = vrot.slane %v7499, 4
        %v7501 = vmax.f32 %v7499, %v7500
        %v7502 = vrot.slane %v7501, 2
        %v7503 = vmax.f32 %v7501, %v7502
        %v7504 = vrot.slane %v7503, 1
        %v7505 = vmax.f32 %v7503, %v7504
        %v7506 = vpack.c.bf16 %v6482, %v6481
        %v7507 = vpack.c.bf16 %v6484, %v6483
        %v7508 = vpack.c.bf16 %v6486, %v6485
        %v7509 = vpack.c.bf16 %v6488, %v6487
        %v7510 = vpack.c.bf16 %v6490, %v6489
        %v7511 = vpack.c.bf16 %v6492, %v6491
        %v7512 = vpack.c.bf16 %v6494, %v6493
        %v7513 = vpack.c.bf16 %v6496, %v6495
        %v7514 = vpack.c.bf16 %v6498, %v6497
        %v7515 = vpack.c.bf16 %v6500, %v6499
        %v7516 = vpack.c.bf16 %v6502, %v6501
        %v7517 = vpack.c.bf16 %v6504, %v6503
        %v7518 = vpack.c.bf16 %v6506, %v6505
        %v7519 = vpack.c.bf16 %v6508, %v6507
        %v7520 = vpack.c.bf16 %v6510, %v6509
        %v7521 = vpack.c.bf16 %v6512, %v6511
        %v7522 = vpack.c.bf16 %v6514, %v6513
        %v7523 = vpack.c.bf16 %v6516, %v6515
        %v7524 = vpack.c.bf16 %v6518, %v6517
        %v7525 = vpack.c.bf16 %v6520, %v6519
        %v7526 = vpack.c.bf16 %v6522, %v6521
        %v7527 = vpack.c.bf16 %v6524, %v6523
        %v7528 = vpack.c.bf16 %v6526, %v6525
        %v7529 = vpack.c.bf16 %v6528, %v6527
        %v7530 = vpack.c.bf16 %v6530, %v6529
        %v7531 = vpack.c.bf16 %v6532, %v6531
        %v7532 = vpack.c.bf16 %v6534, %v6533
        %v7533 = vpack.c.bf16 %v6536, %v6535
        %v7534 = vpack.c.bf16 %v6538, %v6537
        %v7535 = vpack.c.bf16 %v6540, %v6539
        %v7536 = vpack.c.bf16 %v6542, %v6541
        %v7537 = vpack.c.bf16 %v6544, %v6543
        %v7538 = vpack.c.bf16 %v6546, %v6545
        %v7539 = vpack.c.bf16 %v6548, %v6547
        %v7540 = vpack.c.bf16 %v6550, %v6549
        %v7541 = vpack.c.bf16 %v6552, %v6551
        %v7542 = vpack.c.bf16 %v6554, %v6553
        %v7543 = vpack.c.bf16 %v6556, %v6555
        %v7544 = vpack.c.bf16 %v6558, %v6557
        %v7545 = vpack.c.bf16 %v6560, %v6559
        %v7546 = vpack.c.bf16 %v6562, %v6561
        %v7547 = vpack.c.bf16 %v6564, %v6563
        %v7548 = vpack.c.bf16 %v6566, %v6565
        %v7549 = vpack.c.bf16 %v6568, %v6567
        %v7550 = vpack.c.bf16 %v6570, %v6569
        %v7551 = vpack.c.bf16 %v6572, %v6571
        %v7552 = vpack.c.bf16 %v6574, %v6573
        %v7553 = vpack.c.bf16 %v6576, %v6575
        %v7554 = vpack.c.bf16 %v6578, %v6577
        %v7555 = vpack.c.bf16 %v6580, %v6579
        %v7556 = vpack.c.bf16 %v6582, %v6581
        %v7557 = vpack.c.bf16 %v6584, %v6583
        %v7558 = vpack.c.bf16 %v6586, %v6585
        %v7559 = vpack.c.bf16 %v6588, %v6587
        %v7560 = vpack.c.bf16 %v6590, %v6589
        %v7561 = vpack.c.bf16 %v6592, %v6591
        %v7562 = vpack.c.bf16 %v6594, %v6593
        %v7563 = vpack.c.bf16 %v6596, %v6595
        %v7564 = vpack.c.bf16 %v6598, %v6597
        %v7565 = vpack.c.bf16 %v6600, %v6599
        %v7566 = vpack.c.bf16 %v6602, %v6601
        %v7567 = vpack.c.bf16 %v6604, %v6603
        %v7568 = vpack.c.bf16 %v6606, %v6605
        %v7569 = vpack.c.bf16 %v6608, %v6607
        %v7570 = vld [vmem:[%s6] sm:$0xf]
        %v7571 = vld [vmem:[%s6 + $0x4] sm:$0xf]
        %v7572 = vld [vmem:[%s6 + $0x8] sm:$0xf]
        %v7573 = vld [vmem:[%s6 + $0xc] sm:$0xf]
        %v7574 = vld [vmem:[%s6 + $0x10] sm:$0xf]
        %v7575 = vld [vmem:[%s6 + $0x14] sm:$0xf]
        %v7576 = vld [vmem:[%s6 + $0x18] sm:$0xf]
        %v7577 = vld [vmem:[%s6 + $0x1c] sm:$0xf]
        %v7578 = vpack.c.bf16 %v6616, %v6616
        %v7579 = vpack.c.bf16 %v6623, %v6623
        %v7580 = vpack.c.bf16 %v6630, %v6630
        %v7581 = vpack.c.bf16 %v6637, %v6637
        %v7582 = vpack.c.bf16 %v6644, %v6644
        %v7583 = vpack.c.bf16 %v6651, %v6651
        %v7584 = vpack.c.bf16 %v6658, %v6658
        %v7585 = vpack.c.bf16 %v6665, %v6665
        %v7586 = vpack.c.bf16 %v6672, %v6672
        %v7587 = vpack.c.bf16 %v6679, %v6679
        %v7588 = vpack.c.bf16 %v6686, %v6686
        %v7589 = vpack.c.bf16 %v6693, %v6693
        %v7590 = vpack.c.bf16 %v6700, %v6700
        %v7591 = vpack.c.bf16 %v6707, %v6707
        %v7592 = vpack.c.bf16 %v6714, %v6714
        %v7593 = vpack.c.bf16 %v6721, %v6721
        %v7594 = vpack.c.bf16 %v6728, %v6728
        %v7595 = vpack.c.bf16 %v6735, %v6735
        %v7596 = vpack.c.bf16 %v6742, %v6742
        %v7597 = vpack.c.bf16 %v6749, %v6749
        %v7598 = vpack.c.bf16 %v6756, %v6756
        %v7599 = vpack.c.bf16 %v6763, %v6763
        %v7600 = vpack.c.bf16 %v6770, %v6770
        %v7601 = vpack.c.bf16 %v6777, %v6777
        %v7602 = vpack.c.bf16 %v6784, %v6784
        %v7603 = vpack.c.bf16 %v6791, %v6791
        %v7604 = vpack.c.bf16 %v6798, %v6798
        %v7605 = vpack.c.bf16 %v6805, %v6805
        %v7606 = vpack.c.bf16 %v6812, %v6812
        %v7607 = vpack.c.bf16 %v6819, %v6819
        %v7608 = vpack.c.bf16 %v6826, %v6826
        %v7609 = vpack.c.bf16 %v6833, %v6833
        %v7610 = vpack.c.bf16 %v6840, %v6840
        %v7611 = vpack.c.bf16 %v6847, %v6847
        %v7612 = vpack.c.bf16 %v6854, %v6854
        %v7613 = vpack.c.bf16 %v6861, %v6861
        %v7614 = vpack.c.bf16 %v6868, %v6868
        %v7615 = vpack.c.bf16 %v6875, %v6875
        %v7616 = vpack.c.bf16 %v6882, %v6882
        %v7617 = vpack.c.bf16 %v6889, %v6889
        %v7618 = vpack.c.bf16 %v6896, %v6896
        %v7619 = vpack.c.bf16 %v6903, %v6903
        %v7620 = vpack.c.bf16 %v6910, %v6910
        %v7621 = vpack.c.bf16 %v6917, %v6917
        %v7622 = vpack.c.bf16 %v6924, %v6924
        %v7623 = vpack.c.bf16 %v6931, %v6931
        %v7624 = vpack.c.bf16 %v6938, %v6938
        %v7625 = vpack.c.bf16 %v6945, %v6945
        %v7626 = vpack.c.bf16 %v6952, %v6952
        %v7627 = vpack.c.bf16 %v6959, %v6959
        %v7628 = vpack.c.bf16 %v6966, %v6966
        %v7629 = vpack.c.bf16 %v6973, %v6973
        %v7630 = vpack.c.bf16 %v6980, %v6980
        %v7631 = vpack.c.bf16 %v6987, %v6987
        %v7632 = vpack.c.bf16 %v6994, %v6994
        %v7633 = vpack.c.bf16 %v7001, %v7001
        %v7634 = vpack.c.bf16 %v7008, %v7008
        %v7635 = vpack.c.bf16 %v7015, %v7015
        %v7636 = vpack.c.bf16 %v7022, %v7022
        %v7637 = vpack.c.bf16 %v7029, %v7029
        %v7638 = vpack.c.bf16 %v7036, %v7036
        %v7639 = vpack.c.bf16 %v7043, %v7043
        %v7640 = vpack.c.bf16 %v7050, %v7050
        %v7641 = vpack.c.bf16 %v7057, %v7057
        %v7642 = vpack.c.bf16 %v7064, %v7064
        %v7643 = vpack.c.bf16 %v7071, %v7071
        %v7644 = vpack.c.bf16 %v7078, %v7078
        %v7645 = vpack.c.bf16 %v7085, %v7085
        %v7646 = vpack.c.bf16 %v7092, %v7092
        %v7647 = vpack.c.bf16 %v7099, %v7099
        %v7648 = vpack.c.bf16 %v7106, %v7106
        %v7649 = vpack.c.bf16 %v7113, %v7113
        %v7650 = vpack.c.bf16 %v7120, %v7120
        %v7651 = vpack.c.bf16 %v7127, %v7127
        %v7652 = vpack.c.bf16 %v7134, %v7134
        %v7653 = vpack.c.bf16 %v7141, %v7141
        %v7654 = vpack.c.bf16 %v7148, %v7148
        %v7655 = vpack.c.bf16 %v7155, %v7155
        %v7656 = vpack.c.bf16 %v7162, %v7162
        %v7657 = vpack.c.bf16 %v7169, %v7169
        %v7658 = vpack.c.bf16 %v7176, %v7176
        %v7659 = vpack.c.bf16 %v7183, %v7183
        %v7660 = vpack.c.bf16 %v7190, %v7190
        %v7661 = vpack.c.bf16 %v7197, %v7197
        %v7662 = vpack.c.bf16 %v7204, %v7204
        %v7663 = vpack.c.bf16 %v7211, %v7211
        %v7664 = vpack.c.bf16 %v7218, %v7218
        %v7665 = vpack.c.bf16 %v7225, %v7225
        %v7666 = vpack.c.bf16 %v7232, %v7232
        %v7667 = vpack.c.bf16 %v7239, %v7239
        %v7668 = vpack.c.bf16 %v7246, %v7246
        %v7669 = vpack.c.bf16 %v7253, %v7253
        %v7670 = vpack.c.bf16 %v7260, %v7260
        %v7671 = vpack.c.bf16 %v7267, %v7267
        %v7672 = vpack.c.bf16 %v7274, %v7274
        %v7673 = vpack.c.bf16 %v7281, %v7281
        %v7674 = vpack.c.bf16 %v7288, %v7288
        %v7675 = vpack.c.bf16 %v7295, %v7295
        %v7676 = vpack.c.bf16 %v7302, %v7302
        %v7677 = vpack.c.bf16 %v7309, %v7309
        %v7678 = vpack.c.bf16 %v7316, %v7316
        %v7679 = vpack.c.bf16 %v7323, %v7323
        %v7680 = vpack.c.bf16 %v7330, %v7330
        %v7681 = vpack.c.bf16 %v7337, %v7337
        %v7682 = vpack.c.bf16 %v7344, %v7344
        %v7683 = vpack.c.bf16 %v7351, %v7351
        %v7684 = vpack.c.bf16 %v7358, %v7358
        %v7685 = vpack.c.bf16 %v7365, %v7365
        %v7686 = vpack.c.bf16 %v7372, %v7372
        %v7687 = vpack.c.bf16 %v7379, %v7379
        %v7688 = vpack.c.bf16 %v7386, %v7386
        %v7689 = vpack.c.bf16 %v7393, %v7393
        %v7690 = vpack.c.bf16 %v7400, %v7400
        %v7691 = vpack.c.bf16 %v7407, %v7407
        %v7692 = vpack.c.bf16 %v7414, %v7414
        %v7693 = vpack.c.bf16 %v7421, %v7421
        %v7694 = vpack.c.bf16 %v7428, %v7428
        %v7695 = vpack.c.bf16 %v7435, %v7435
        %v7696 = vpack.c.bf16 %v7442, %v7442
        %v7697 = vpack.c.bf16 %v7449, %v7449
        %v7698 = vpack.c.bf16 %v7456, %v7456
        %v7699 = vpack.c.bf16 %v7463, %v7463
        %v7700 = vpack.c.bf16 %v7470, %v7470
        %v7701 = vpack.c.bf16 %v7477, %v7477
        %v7702 = vpack.c.bf16 %v7484, %v7484
        %v7703 = vpack.c.bf16 %v7491, %v7491
        %v7704 = vpack.c.bf16 %v7498, %v7498
        %v7705 = vpack.c.bf16 %v7505, %v7505
        %v7706 = vld [vmem:[%s7] sm:$0xf]
        %v7707 = vld [vmem:[%s7 + $0x4] sm:$0xf]
        %v7708 = vld [vmem:[%s7 + $0x8] sm:$0xf]
        %v7709 = vld [vmem:[%s7 + $0xc] sm:$0xf]
        %v7710 = vld [vmem:[%s7 + $0x10] sm:$0xf]
        %v7711 = vld [vmem:[%s7 + $0x14] sm:$0xf]
        %v7712 = vld [vmem:[%s7 + $0x18] sm:$0xf]
        %v7713 = vld [vmem:[%s7 + $0x1c] sm:$0xf]
        %v7842 = vunpack.c.l.b16 %v7578
        %v7843 = vunpack.c.l.b16 %v7579
        %v7844 = vunpack.c.l.b16 %v7580
        %v7845 = vunpack.c.l.b16 %v7581
        %v7846 = vunpack.c.l.b16 %v7582
        %v7847 = vunpack.c.l.b16 %v7583
        %v7848 = vunpack.c.l.b16 %v7584
        %v7849 = vunpack.c.l.b16 %v7585
        %v7850 = vunpack.c.l.b16 %v7586
        %v7851 = vunpack.c.l.b16 %v7587
        %v7852 = vunpack.c.l.b16 %v7588
        %v7853 = vunpack.c.l.b16 %v7589
        %v7854 = vunpack.c.l.b16 %v7590
        %v7855 = vunpack.c.l.b16 %v7591
        %v7856 = vunpack.c.l.b16 %v7592
        %v7857 = vunpack.c.l.b16 %v7593
        %v7858 = vunpack.c.l.b16 %v7594
        %v7859 = vunpack.c.l.b16 %v7595
        %v7860 = vunpack.c.l.b16 %v7596
        %v7861 = vunpack.c.l.b16 %v7597
        %v7862 = vunpack.c.l.b16 %v7598
        %v7863 = vunpack.c.l.b16 %v7599
        %v7864 = vunpack.c.l.b16 %v7600
        %v7865 = vunpack.c.l.b16 %v7601
        %v7866 = vunpack.c.l.b16 %v7602
        %v7867 = vunpack.c.l.b16 %v7603
        %v7868 = vunpack.c.l.b16 %v7604
        %v7869 = vunpack.c.l.b16 %v7605
        %v7870 = vunpack.c.l.b16 %v7606
        %v7871 = vunpack.c.l.b16 %v7607
        %v7872 = vunpack.c.l.b16 %v7608
        %v7873 = vunpack.c.l.b16 %v7609
        %v7874 = vunpack.c.l.b16 %v7610
        %v7875 = vunpack.c.l.b16 %v7611
        %v7876 = vunpack.c.l.b16 %v7612
        %v7877 = vunpack.c.l.b16 %v7613
        %v7878 = vunpack.c.l.b16 %v7614
        %v7879 = vunpack.c.l.b16 %v7615
        %v7880 = vunpack.c.l.b16 %v7616
        %v7881 = vunpack.c.l.b16 %v7617
        %v7882 = vunpack.c.l.b16 %v7618
        %v7883 = vunpack.c.l.b16 %v7619
        %v7884 = vunpack.c.l.b16 %v7620
        %v7885 = vunpack.c.l.b16 %v7621
        %v7886 = vunpack.c.l.b16 %v7622
        %v7887 = vunpack.c.l.b16 %v7623
        %v7888 = vunpack.c.l.b16 %v7624
        %v7889 = vunpack.c.l.b16 %v7625
        %v7890 = vunpack.c.l.b16 %v7626
        %v7891 = vunpack.c.l.b16 %v7627
        %v7892 = vunpack.c.l.b16 %v7628
        %v7893 = vunpack.c.l.b16 %v7629
        %v7894 = vunpack.c.l.b16 %v7630
        %v7895 = vunpack.c.l.b16 %v7631
        %v7896 = vunpack.c.l.b16 %v7632
        %v7897 = vunpack.c.l.b16 %v7633
        %v7898 = vunpack.c.l.b16 %v7634
        %v7899 = vunpack.c.l.b16 %v7635
        %v7900 = vunpack.c.l.b16 %v7636
        %v7901 = vunpack.c.l.b16 %v7637
        %v7902 = vunpack.c.l.b16 %v7638
        %v7903 = vunpack.c.l.b16 %v7639
        %v7904 = vunpack.c.l.b16 %v7640
        %v7905 = vunpack.c.l.b16 %v7641
        %v7906 = vunpack.c.l.b16 %v7642
        %v7907 = vunpack.c.l.b16 %v7643
        %v7908 = vunpack.c.l.b16 %v7644
        %v7909 = vunpack.c.l.b16 %v7645
        %v7910 = vunpack.c.l.b16 %v7646
        %v7911 = vunpack.c.l.b16 %v7647
        %v7912 = vunpack.c.l.b16 %v7648
        %v7913 = vunpack.c.l.b16 %v7649
        %v7914 = vunpack.c.l.b16 %v7650
        %v7915 = vunpack.c.l.b16 %v7651
        %v7916 = vunpack.c.l.b16 %v7652
        %v7917 = vunpack.c.l.b16 %v7653
        %v7918 = vunpack.c.l.b16 %v7654
        %v7919 = vunpack.c.l.b16 %v7655
        %v7920 = vunpack.c.l.b16 %v7656
        %v7921 = vunpack.c.l.b16 %v7657
        %v7922 = vunpack.c.l.b16 %v7658
        %v7923 = vunpack.c.l.b16 %v7659
        %v7924 = vunpack.c.l.b16 %v7660
        %v7925 = vunpack.c.l.b16 %v7661
        %v7926 = vunpack.c.l.b16 %v7662
        %v7927 = vunpack.c.l.b16 %v7663
        %v7928 = vunpack.c.l.b16 %v7664
        %v7929 = vunpack.c.l.b16 %v7665
        %v7930 = vunpack.c.l.b16 %v7666
        %v7931 = vunpack.c.l.b16 %v7667
        %v7932 = vunpack.c.l.b16 %v7668
        %v7933 = vunpack.c.l.b16 %v7669
        %v7934 = vunpack.c.l.b16 %v7670
        %v7935 = vunpack.c.l.b16 %v7671
        %v7936 = vunpack.c.l.b16 %v7672
        %v7937 = vunpack.c.l.b16 %v7673
        %v7938 = vunpack.c.l.b16 %v7674
        %v7939 = vunpack.c.l.b16 %v7675
        %v7940 = vunpack.c.l.b16 %v7676
        %v7941 = vunpack.c.l.b16 %v7677
        %v7942 = vunpack.c.l.b16 %v7678
        %v7943 = vunpack.c.l.b16 %v7679
        %v7944 = vunpack.c.l.b16 %v7680
        %v7945 = vunpack.c.l.b16 %v7681
        %v7946 = vunpack.c.l.b16 %v7682
        %v7947 = vunpack.c.l.b16 %v7683
        %v7948 = vunpack.c.l.b16 %v7684
        %v7949 = vunpack.c.l.b16 %v7685
        %v7950 = vunpack.c.l.b16 %v7686
        %v7951 = vunpack.c.l.b16 %v7687
        %v7952 = vunpack.c.l.b16 %v7688
        %v7953 = vunpack.c.l.b16 %v7689
        %v7954 = vunpack.c.l.b16 %v7690
        %v7955 = vunpack.c.l.b16 %v7691
        %v7956 = vunpack.c.l.b16 %v7692
        %v7957 = vunpack.c.l.b16 %v7693
        %v7958 = vunpack.c.l.b16 %v7694
        %v7959 = vunpack.c.l.b16 %v7695
        %v7960 = vunpack.c.l.b16 %v7696
        %v7961 = vunpack.c.l.b16 %v7697
        %v7962 = vunpack.c.l.b16 %v7698
        %v7963 = vunpack.c.l.b16 %v7699
        %v7964 = vunpack.c.l.b16 %v7700
        %v7965 = vunpack.c.l.b16 %v7701
        %v7966 = vunpack.c.l.b16 %v7702
        %v7967 = vunpack.c.l.b16 %v7703
        %v7968 = vunpack.c.l.b16 %v7704
        %v7969 = vunpack.c.l.b16 %v7705
        %v7970 = vsel %vm3653, %v7843, %v7842
        %v7971 = vsel %vm3655, %v7844, %v7970
        %v7972 = vsel %vm3657, %v7845, %v7971
        %v7973 = vsel %vm3659, %v7846, %v7972
        %v7974 = vsel %vm3661, %v7847, %v7973
        %v7975 = vsel %vm3663, %v7848, %v7974
        %v7976 = vsel %vm3665, %v7849, %v7975
        %v7977 = vsel %vm3653, %v7851, %v7850
        %v7978 = vsel %vm3655, %v7852, %v7977
        %v7979 = vsel %vm3657, %v7853, %v7978
        %v7980 = vsel %vm3659, %v7854, %v7979
        %v7981 = vsel %vm3661, %v7855, %v7980
        %v7982 = vsel %vm3663, %v7856, %v7981
        %v7983 = vsel %vm3665, %v7857, %v7982
        %v7984 = vsel %vm3653, %v7859, %v7858
        %v7985 = vsel %vm3655, %v7860, %v7984
        %v7986 = vsel %vm3657, %v7861, %v7985
        %v7987 = vsel %vm3659, %v7862, %v7986
        %v7988 = vsel %vm3661, %v7863, %v7987
        %v7989 = vsel %vm3663, %v7864, %v7988
        %v7990 = vsel %vm3665, %v7865, %v7989
        %v7991 = vsel %vm3653, %v7867, %v7866
        %v7992 = vsel %vm3655, %v7868, %v7991
        %v7993 = vsel %vm3657, %v7869, %v7992
        %v7994 = vsel %vm3659, %v7870, %v7993
        %v7995 = vsel %vm3661, %v7871, %v7994
        %v7996 = vsel %vm3663, %v7872, %v7995
        %v7997 = vsel %vm3665, %v7873, %v7996
        %v7998 = vsel %vm3653, %v7875, %v7874
        %v7999 = vsel %vm3655, %v7876, %v7998
        %v8000 = vsel %vm3657, %v7877, %v7999
        %v8001 = vsel %vm3659, %v7878, %v8000
        %v8002 = vsel %vm3661, %v7879, %v8001
        %v8003 = vsel %vm3663, %v7880, %v8002
        %v8004 = vsel %vm3665, %v7881, %v8003
        %v8005 = vsel %vm3653, %v7883, %v7882
        %v8006 = vsel %vm3655, %v7884, %v8005
        %v8007 = vsel %vm3657, %v7885, %v8006
        %v8008 = vsel %vm3659, %v7886, %v8007
        %v8009 = vsel %vm3661, %v7887, %v8008
        %v8010 = vsel %vm3663, %v7888, %v8009
        %v8011 = vsel %vm3665, %v7889, %v8010
        %v8012 = vsel %vm3653, %v7891, %v7890
        %v8013 = vsel %vm3655, %v7892, %v8012
        %v8014 = vsel %vm3657, %v7893, %v8013
        %v8015 = vsel %vm3659, %v7894, %v8014
        %v8016 = vsel %vm3661, %v7895, %v8015
        %v8017 = vsel %vm3663, %v7896, %v8016
        %v8018 = vsel %vm3665, %v7897, %v8017
        %v8019 = vsel %vm3653, %v7899, %v7898
        %v8020 = vsel %vm3655, %v7900, %v8019
        %v8021 = vsel %vm3657, %v7901, %v8020
        %v8022 = vsel %vm3659, %v7902, %v8021
        %v8023 = vsel %vm3661, %v7903, %v8022
        %v8024 = vsel %vm3663, %v7904, %v8023
        %v8025 = vsel %vm3665, %v7905, %v8024
        %v8026 = vsel %vm3653, %v7907, %v7906
        %v8027 = vsel %vm3655, %v7908, %v8026
        %v8028 = vsel %vm3657, %v7909, %v8027
        %v8029 = vsel %vm3659, %v7910, %v8028
        %v8030 = vsel %vm3661, %v7911, %v8029
        %v8031 = vsel %vm3663, %v7912, %v8030
        %v8032 = vsel %vm3665, %v7913, %v8031
        %v8033 = vsel %vm3653, %v7915, %v7914
        %v8034 = vsel %vm3655, %v7916, %v8033
        %v8035 = vsel %vm3657, %v7917, %v8034
        %v8036 = vsel %vm3659, %v7918, %v8035
        %v8037 = vsel %vm3661, %v7919, %v8036
        %v8038 = vsel %vm3663, %v7920, %v8037
        %v8039 = vsel %vm3665, %v7921, %v8038
        %v8040 = vsel %vm3653, %v7923, %v7922
        %v8041 = vsel %vm3655, %v7924, %v8040
        %v8042 = vsel %vm3657, %v7925, %v8041
        %v8043 = vsel %vm3659, %v7926, %v8042
        %v8044 = vsel %vm3661, %v7927, %v8043
        %v8045 = vsel %vm3663, %v7928, %v8044
        %v8046 = vsel %vm3665, %v7929, %v8045
        %v8047 = vsel %vm3653, %v7931, %v7930
        %v8048 = vsel %vm3655, %v7932, %v8047
        %v8049 = vsel %vm3657, %v7933, %v8048
        %v8050 = vsel %vm3659, %v7934, %v8049
        %v8051 = vsel %vm3661, %v7935, %v8050
        %v8052 = vsel %vm3663, %v7936, %v8051
        %v8053 = vsel %vm3665, %v7937, %v8052
        %v8054 = vsel %vm3653, %v7939, %v7938
        %v8055 = vsel %vm3655, %v7940, %v8054
        %v8056 = vsel %vm3657, %v7941, %v8055
        %v8057 = vsel %vm3659, %v7942, %v8056
        %v8058 = vsel %vm3661, %v7943, %v8057
        %v8059 = vsel %vm3663, %v7944, %v8058
        %v8060 = vsel %vm3665, %v7945, %v8059
        %v8061 = vsel %vm3653, %v7947, %v7946
        %v8062 = vsel %vm3655, %v7948, %v8061
        %v8063 = vsel %vm3657, %v7949, %v8062
        %v8064 = vsel %vm3659, %v7950, %v8063
        %v8065 = vsel %vm3661, %v7951, %v8064
        %v8066 = vsel %vm3663, %v7952, %v8065
        %v8067 = vsel %vm3665, %v7953, %v8066
        %v8068 = vsel %vm3653, %v7955, %v7954
        %v8069 = vsel %vm3655, %v7956, %v8068
        %v8070 = vsel %vm3657, %v7957, %v8069
        %v8071 = vsel %vm3659, %v7958, %v8070
        %v8072 = vsel %vm3661, %v7959, %v8071
        %v8073 = vsel %vm3663, %v7960, %v8072
        %v8074 = vsel %vm3665, %v7961, %v8073
        %v8075 = vsel %vm3653, %v7963, %v7962
        %v8076 = vsel %vm3655, %v7964, %v8075
        %v8077 = vsel %vm3657, %v7965, %v8076
        %v8078 = vsel %vm3659, %v7966, %v8077
        %v8079 = vsel %vm3661, %v7967, %v8078
        %v8080 = vsel %vm3663, %v7968, %v8079
        %v8081 = vsel %vm3665, %v7969, %v8080
        %v8082 = vpack.c.b16 %v7983, %v7976
        %v8083 = vpack.c.b16 %v7997, %v7990
        %v8084 = vpack.c.b16 %v8011, %v8004
        %v8085 = vpack.c.b16 %v8025, %v8018
        %v8086 = vpack.c.b16 %v8039, %v8032
        %v8087 = vpack.c.b16 %v8053, %v8046
        %v8088 = vpack.c.b16 %v8067, %v8060
        %v8089 = vpack.c.b16 %v8081, %v8074
        %v8098 = vunpack.c.l.b16 %v7706
        %v8099 = vunpack.c.l.b16 %v7707
        %v8100 = vunpack.c.l.b16 %v7708
        %v8101 = vunpack.c.l.b16 %v7709
        %v8102 = vunpack.c.l.b16 %v7710
        %v8103 = vunpack.c.l.b16 %v7711
        %v8104 = vunpack.c.l.b16 %v7712
        %v8105 = vunpack.c.l.b16 %v7713
        %v8106 = vpack.c.b16 %v8099, %v8098
        %v8107 = vpack.c.b16 %v8101, %v8100
        %v8108 = vpack.c.b16 %v8103, %v8102
        %v8109 = vpack.c.b16 %v8105, %v8104
        %v8115 = vsel %vm6609, %v8082, 0
        %v8118 = vsel %vm6609, %v8083, 0
        %v8121 = vsel %vm6609, %v8084, 0
        %v8124 = vsel %vm6609, %v8085, 0
        %v8127 = vsel %vm6609, %v8086, 0
        %v8130 = vsel %vm6609, %v8087, 0
        %v8133 = vsel %vm6609, %v8088, 0
        %v8136 = vsel %vm6609, %v8089, 0
        %8138 = vmatprep.subr.bf16.mxu0 0
        %8139 = vmatpush1.bf16.msra.mxu0 %v8106
        %8140 = vmatprep.subr.bf16.mxu0 0
        %8141 = vmatpush1.bf16.msra.mxu0 %v8107
        %8142 = vmatprep.subr.bf16.mxu0 0
        %8143 = vmatpush1.bf16.msra.mxu0 %v8108
        %8144 = vmatprep.subr.bf16.mxu0 0
        %8145 = vmatpush1.bf16.msra.mxu0 %v8109
        %8146 = vmatprep.subr.bf16.mxu0 0
        %8147 = vmatpush1.bf16.msra.mxu0 0
        %8148 = vmatprep.subr.bf16.mxu0 0
        %8149 = vmatpush1.bf16.msra.mxu0 0
        %8150 = vmatprep.subr.bf16.mxu0 0
        %8151 = vmatpush1.bf16.msra.mxu0 0
        %8152 = vmatprep.subr.bf16.mxu0 0
        %8153 = vmatpush1.bf16.msra.mxu0 0
        %8154 = vmatprep.subr.bf16.mxu0 0
        %8155 = vmatpush1.bf16.msra.mxu0 0
        %8156 = vmatprep.subr.bf16.mxu0 0
        %8157 = vmatpush1.bf16.msra.mxu0 0
        %8158 = vmatprep.subr.bf16.mxu0 0
        %8159 = vmatpush1.bf16.msra.mxu0 0
        %8160 = vmatprep.subr.bf16.mxu0 0
        %8161 = vmatpush1.bf16.msra.mxu0 0
        %8162 = vmatprep.subr.bf16.mxu0 0
        %8163 = vmatpush1.bf16.msra.mxu0 0
        %8164 = vmatprep.subr.bf16.mxu0 0
        %8165 = vmatpush1.bf16.msra.mxu0 0
        %8166 = vmatprep.subr.bf16.mxu0 0
        %8167 = vmatpush1.bf16.msra.mxu0 0
        %8168 = vmatprep.subr.bf16.mxu0 0
        %8169 = vmatpush1.bf16.msra.mxu0 0
        %8170 = vmatprep.mubr.bf16.mxu0 0
        %8171 = vmatmul.mubr.bf16.gmra.mrb[0].mxu0 %v8115
        %v8172 = vpop.f32.mrb[0].mxu0
        %v8173 = vadd.f32 0.0, %v8172
        %v8174 = vpop.f32.mrb[0].mxu0
        %v8175 = vpop.f32.mrb[0].mxu0
        %v8176 = vadd.f32 0.0, %v8175
        %v8177 = vpop.f32.mrb[0].mxu0
        %8178 = vmatprep.mubr.bf16.mxu0 0
        %8179 = vmatmul.mubr.bf16.gmra.mrb[0].mxu0 %v8118
        %v8180 = vpop.f32.mrb[0].mxu0
        %v8181 = vadd.f32 0.0, %v8180
        %v8182 = vpop.f32.mrb[0].mxu0
        %v8183 = vpop.f32.mrb[0].mxu0
        %v8184 = vadd.f32 0.0, %v8183
        %v8185 = vpop.f32.mrb[0].mxu0
        %8186 = vmatprep.mubr.bf16.mxu0 0
        %8187 = vmatmul.mubr.bf16.gmra.mrb[0].mxu0 %v8121
        %v8188 = vpop.f32.mrb[0].mxu0
        %v8189 = vadd.f32 0.0, %v8188
        %v8190 = vpop.f32.mrb[0].mxu0
        %v8191 = vpop.f32.mrb[0].mxu0
        %v8192 = vadd.f32 0.0, %v8191
        %v8193 = vpop.f32.mrb[0].mxu0
        %8194 = vmatprep.mubr.bf16.mxu0 0
        %8195 = vmatmul.mubr.bf16.gmra.mrb[0].mxu0 %v8124
        %v8196 = vpop.f32.mrb[0].mxu0
        %v8197 = vadd.f32 0.0, %v8196
        %v8198 = vpop.f32.mrb[0].mxu0
        %v8199 = vpop.f32.mrb[0].mxu0
        %v8200 = vadd.f32 0.0, %v8199
        %v8201 = vpop.f32.mrb[0].mxu0
        %8202 = vmatprep.mubr.bf16.mxu0 0
        %8203 = vmatmul.mubr.bf16.gmra.mrb[0].mxu0 %v8127
        %v8204 = vpop.f32.mrb[0].mxu0
        %v8205 = vadd.f32 0.0, %v8204
        %v8206 = vpop.f32.mrb[0].mxu0
        %v8207 = vpop.f32.mrb[0].mxu0
        %v8208 = vadd.f32 0.0, %v8207
        %v8209 = vpop.f32.mrb[0].mxu0
        %8210 = vmatprep.mubr.bf16.mxu0 0
        %8211 = vmatmul.mubr.bf16.gmra.mrb[0].mxu0 %v8130
        %v8212 = vpop.f32.mrb[0].mxu0
        %v8213 = vadd.f32 0.0, %v8212
        %v8214 = vpop.f32.mrb[0].mxu0
        %v8215 = vpop.f32.mrb[0].mxu0
        %v8216 = vadd.f32 0.0, %v8215
        %v8217 = vpop.f32.mrb[0].mxu0
        %8218 = vmatprep.mubr.bf16.mxu0 0
        %8219 = vmatmul.mubr.bf16.gmra.mrb[0].mxu0 %v8133
        %v8220 = vpop.f32.mrb[0].mxu0
        %v8221 = vadd.f32 0.0, %v8220
        %v8222 = vpop.f32.mrb[0].mxu0
        %v8223 = vpop.f32.mrb[0].mxu0
        %v8224 = vadd.f32 0.0, %v8223
        %v8225 = vpop.f32.mrb[0].mxu0
        %8226 = vmatprep.mubr.bf16.mxu0 0
        %8227 = vmatmul.mubr.bf16.gmra.mrb[0].mxu0 %v8136
        %v8228 = vpop.f32.mrb[0].mxu0
        %v8229 = vadd.f32 0.0, %v8228
        %v8230 = vpop.f32.mrb[0].mxu0
        %v8231 = vpop.f32.mrb[0].mxu0
        %v8232 = vadd.f32 0.0, %v8231
        %v8233 = vpop.f32.mrb[0].mxu0
        %8234 = vdwg.mxu0
        %v8251 = vcombine.high %v8173, %v8173
        %v8253 = vunpack.c.l.s4 1966171168
        %v8254 = vunpack.c.0.s8 %v8253
        %v8255 = vlaneseq
        %v8256 = vshrl.u32 %v8255, 7
        %v8257 = vsub.s32 %v8254, %v8256
        %v8258 = vrot.slane %v8173, %v8257
        %v8260 = vunpack.c.l.s4 1966171168
        %v8261 = vunpack.c.0.s8 %v8260
        %v8262 = vlaneseq
        %v8263 = vshrl.u32 %v8262, 7
        %v8264 = vsub.s32 %v8261, %v8263
        %v8265 = vrot.slane %v8251, %v8264
        %v8266 = vcombine.high %v8258, %v8258
        %v8267 = vcombine.high %v8265, %v8265
        %v8269 = vunpack.c.l.s4 1966171168
        %v8270 = vunpack.c.0.s8 %v8269
        %v8271 = vlaneseq
        %v8272 = vshrl.u32 %v8271, 7
        %v8273 = vsub.s32 %v8270, %v8272
        %v8274 = vrot.slane %v8258, %v8273
        %v8276 = vunpack.c.l.s4 1966171168
        %v8277 = vunpack.c.0.s8 %v8276
        %v8278 = vlaneseq
        %v8279 = vshrl.u32 %v8278, 7
        %v8280 = vsub.s32 %v8277, %v8279
        %v8281 = vrot.slane %v8265, %v8280
        %v8283 = vunpack.c.l.s4 1966171168
        %v8284 = vunpack.c.0.s8 %v8283
        %v8285 = vlaneseq
        %v8286 = vshrl.u32 %v8285, 7
        %v8287 = vsub.s32 %v8284, %v8286
        %v8288 = vrot.slane %v8266, %v8287
        %v8290 = vunpack.c.l.s4 1966171168
        %v8291 = vunpack.c.0.s8 %v8290
        %v8292 = vlaneseq
        %v8293 = vshrl.u32 %v8292, 7
        %v8294 = vsub.s32 %v8291, %v8293
        %v8295 = vrot.slane %v8267, %v8294
        %v8296 = vcombine.high %v8274, %v8274
        %v8297 = vcombine.high %v8281, %v8281
        %v8298 = vcombine.high %v8288, %v8288
        %v8299 = vcombine.high %v8295, %v8295
        %v8300 = vcombine.high %v8176, %v8176
        %v8302 = vunpack.c.l.s4 1966171168
        %v8303 = vunpack.c.0.s8 %v8302
        %v8304 = vlaneseq
        %v8305 = vshrl.u32 %v8304, 7
        %v8306 = vsub.s32 %v8303, %v8305
        %v8307 = vrot.slane %v8176, %v8306
        %v8309 = vunpack.c.l.s4 1966171168
        %v8310 = vunpack.c.0.s8 %v8309
        %v8311 = vlaneseq
        %v8312 = vshrl.u32 %v8311, 7
        %v8313 = vsub.s32 %v8310, %v8312
        %v8314 = vrot.slane %v8300, %v8313
        %v8315 = vcombine.high %v8307, %v8307
        %v8316 = vcombine.high %v8314, %v8314
        %v8318 = vunpack.c.l.s4 1966171168
        %v8319 = vunpack.c.0.s8 %v8318
        %v8320 = vlaneseq
        %v8321 = vshrl.u32 %v8320, 7
        %v8322 = vsub.s32 %v8319, %v8321
        %v8323 = vrot.slane %v8307, %v8322
        %v8325 = vunpack.c.l.s4 1966171168
        %v8326 = vunpack.c.0.s8 %v8325
        %v8327 = vlaneseq
        %v8328 = vshrl.u32 %v8327, 7
        %v8329 = vsub.s32 %v8326, %v8328
        %v8330 = vrot.slane %v8314, %v8329
        %v8332 = vunpack.c.l.s4 1966171168
        %v8333 = vunpack.c.0.s8 %v8332
        %v8334 = vlaneseq
        %v8335 = vshrl.u32 %v8334, 7
        %v8336 = vsub.s32 %v8333, %v8335
        %v8337 = vrot.slane %v8315, %v8336
        %v8339 = vunpack.c.l.s4 1966171168
        %v8340 = vunpack.c.0.s8 %v8339
        %v8341 = vlaneseq
        %v8342 = vshrl.u32 %v8341, 7
        %v8343 = vsub.s32 %v8340, %v8342
        %v8344 = vrot.slane %v8316, %v8343
        %v8345 = vcombine.high %v8323, %v8323
        %v8346 = vcombine.high %v8330, %v8330
        %v8347 = vcombine.high %v8337, %v8337
        %v8348 = vcombine.high %v8344, %v8344
        %v8349 = vcombine.high %v8181, %v8181
        %v8351 = vunpack.c.l.s4 1966171168
        %v8352 = vunpack.c.0.s8 %v8351
        %v8353 = vlaneseq
        %v8354 = vshrl.u32 %v8353, 7
        %v8355 = vsub.s32 %v8352, %v8354
        %v8356 = vrot.slane %v8181, %v8355
        %v8358 = vunpack.c.l.s4 1966171168
        %v8359 = vunpack.c.0.s8 %v8358
        %v8360 = vlaneseq
        %v8361 = vshrl.u32 %v8360, 7
        %v8362 = vsub.s32 %v8359, %v8361
        %v8363 = vrot.slane %v8349, %v8362
        %v8364 = vcombine.high %v8356, %v8356
        %v8365 = vcombine.high %v8363, %v8363
        %v8367 = vunpack.c.l.s4 1966171168
        %v8368 = vunpack.c.0.s8 %v8367
        %v8369 = vlaneseq
        %v8370 = vshrl.u32 %v8369, 7
        %v8371 = vsub.s32 %v8368, %v8370
        %v8372 = vrot.slane %v8356, %v8371
        %v8374 = vunpack.c.l.s4 1966171168
        %v8375 = vunpack.c.0.s8 %v8374
        %v8376 = vlaneseq
        %v8377 = vshrl.u32 %v8376, 7
        %v8378 = vsub.s32 %v8375, %v8377
        %v8379 = vrot.slane %v8363, %v8378
        %v8381 = vunpack.c.l.s4 1966171168
        %v8382 = vunpack.c.0.s8 %v8381
        %v8383 = vlaneseq
        %v8384 = vshrl.u32 %v8383, 7
        %v8385 = vsub.s32 %v8382, %v8384
        %v8386 = vrot.slane %v8364, %v8385
        %v8388 = vunpack.c.l.s4 1966171168
        %v8389 = vunpack.c.0.s8 %v8388
        %v8390 = vlaneseq
        %v8391 = vshrl.u32 %v8390, 7
        %v8392 = vsub.s32 %v8389, %v8391
        %v8393 = vrot.slane %v8365, %v8392
        %v8394 = vcombine.high %v8372, %v8372
        %v8395 = vcombine.high %v8379, %v8379
        %v8396 = vcombine.high %v8386, %v8386
        %v8397 = vcombine.high %v8393, %v8393
        %v8398 = vcombine.high %v8184, %v8184
        %v8400 = vunpack.c.l.s4 1966171168
        %v8401 = vunpack.c.0.s8 %v8400
        %v8402 = vlaneseq
        %v8403 = vshrl.u32 %v8402, 7
        %v8404 = vsub.s32 %v8401, %v8403
        %v8405 = vrot.slane %v8184, %v8404
        %v8407 = vunpack.c.l.s4 1966171168
        %v8408 = vunpack.c.0.s8 %v8407
        %v8409 = vlaneseq
        %v8410 = vshrl.u32 %v8409, 7
        %v8411 = vsub.s32 %v8408, %v8410
        %v8412 = vrot.slane %v8398, %v8411
        %v8413 = vcombine.high %v8405, %v8405
        %v8414 = vcombine.high %v8412, %v8412
        %v8416 = vunpack.c.l.s4 1966171168
        %v8417 = vunpack.c.0.s8 %v8416
        %v8418 = vlaneseq
        %v8419 = vshrl.u32 %v8418, 7
        %v8420 = vsub.s32 %v8417, %v8419
        %v8421 = vrot.slane %v8405, %v8420
        %v8423 = vunpack.c.l.s4 1966171168
        %v8424 = vunpack.c.0.s8 %v8423
        %v8425 = vlaneseq
        %v8426 = vshrl.u32 %v8425, 7
        %v8427 = vsub.s32 %v8424, %v8426
        %v8428 = vrot.slane %v8412, %v8427
        %v8430 = vunpack.c.l.s4 1966171168
        %v8431 = vunpack.c.0.s8 %v8430
        %v8432 = vlaneseq
        %v8433 = vshrl.u32 %v8432, 7
        %v8434 = vsub.s32 %v8431, %v8433
        %v8435 = vrot.slane %v8413, %v8434
        %v8437 = vunpack.c.l.s4 1966171168
        %v8438 = vunpack.c.0.s8 %v8437
        %v8439 = vlaneseq
        %v8440 = vshrl.u32 %v8439, 7
        %v8441 = vsub.s32 %v8438, %v8440
        %v8442 = vrot.slane %v8414, %v8441
        %v8443 = vcombine.high %v8421, %v8421
        %v8444 = vcombine.high %v8428, %v8428
        %v8445 = vcombine.high %v8435, %v8435
        %v8446 = vcombine.high %v8442, %v8442
        %v8447 = vcombine.high %v8189, %v8189
        %v8449 = vunpack.c.l.s4 1966171168
        %v8450 = vunpack.c.0.s8 %v8449
        %v8451 = vlaneseq
        %v8452 = vshrl.u32 %v8451, 7
        %v8453 = vsub.s32 %v8450, %v8452
        %v8454 = vrot.slane %v8189, %v8453
        %v8456 = vunpack.c.l.s4 1966171168
        %v8457 = vunpack.c.0.s8 %v8456
        %v8458 = vlaneseq
        %v8459 = vshrl.u32 %v8458, 7
        %v8460 = vsub.s32 %v8457, %v8459
        %v8461 = vrot.slane %v8447, %v8460
        %v8462 = vcombine.high %v8454, %v8454
        %v8463 = vcombine.high %v8461, %v8461
        %v8465 = vunpack.c.l.s4 1966171168
        %v8466 = vunpack.c.0.s8 %v8465
        %v8467 = vlaneseq
        %v8468 = vshrl.u32 %v8467, 7
        %v8469 = vsub.s32 %v8466, %v8468
        %v8470 = vrot.slane %v8454, %v8469
        %v8472 = vunpack.c.l.s4 1966171168
        %v8473 = vunpack.c.0.s8 %v8472
        %v8474 = vlaneseq
        %v8475 = vshrl.u32 %v8474, 7
        %v8476 = vsub.s32 %v8473, %v8475
        %v8477 = vrot.slane %v8461, %v8476
        %v8479 = vunpack.c.l.s4 1966171168
        %v8480 = vunpack.c.0.s8 %v8479
        %v8481 = vlaneseq
        %v8482 = vshrl.u32 %v8481, 7
        %v8483 = vsub.s32 %v8480, %v8482
        %v8484 = vrot.slane %v8462, %v8483
        %v8486 = vunpack.c.l.s4 1966171168
        %v8487 = vunpack.c.0.s8 %v8486
        %v8488 = vlaneseq
        %v8489 = vshrl.u32 %v8488, 7
        %v8490 = vsub.s32 %v8487, %v8489
        %v8491 = vrot.slane %v8463, %v8490
        %v8492 = vcombine.high %v8470, %v8470
        %v8493 = vcombine.high %v8477, %v8477
        %v8494 = vcombine.high %v8484, %v8484
        %v8495 = vcombine.high %v8491, %v8491
        %v8496 = vcombine.high %v8192, %v8192
        %v8498 = vunpack.c.l.s4 1966171168
        %v8499 = vunpack.c.0.s8 %v8498
        %v8500 = vlaneseq
        %v8501 = vshrl.u32 %v8500, 7
        %v8502 = vsub.s32 %v8499, %v8501
        %v8503 = vrot.slane %v8192, %v8502
        %v8505 = vunpack.c.l.s4 1966171168
        %v8506 = vunpack.c.0.s8 %v8505
        %v8507 = vlaneseq
        %v8508 = vshrl.u32 %v8507, 7
        %v8509 = vsub.s32 %v8506, %v8508
        %v8510 = vrot.slane %v8496, %v8509
        %v8511 = vcombine.high %v8503, %v8503
        %v8512 = vcombine.high %v8510, %v8510
        %v8514 = vunpack.c.l.s4 1966171168
        %v8515 = vunpack.c.0.s8 %v8514
        %v8516 = vlaneseq
        %v8517 = vshrl.u32 %v8516, 7
        %v8518 = vsub.s32 %v8515, %v8517
        %v8519 = vrot.slane %v8503, %v8518
        %v8521 = vunpack.c.l.s4 1966171168
        %v8522 = vunpack.c.0.s8 %v8521
        %v8523 = vlaneseq
        %v8524 = vshrl.u32 %v8523, 7
        %v8525 = vsub.s32 %v8522, %v8524
        %v8526 = vrot.slane %v8510, %v8525
        %v8528 = vunpack.c.l.s4 1966171168
        %v8529 = vunpack.c.0.s8 %v8528
        %v8530 = vlaneseq
        %v8531 = vshrl.u32 %v8530, 7
        %v8532 = vsub.s32 %v8529, %v8531
        %v8533 = vrot.slane %v8511, %v8532
        %v8535 = vunpack.c.l.s4 1966171168
        %v8536 = vunpack.c.0.s8 %v8535
        %v8537 = vlaneseq
        %v8538 = vshrl.u32 %v8537, 7
        %v8539 = vsub.s32 %v8536, %v8538
        %v8540 = vrot.slane %v8512, %v8539
        %v8541 = vcombine.high %v8519, %v8519
        %v8542 = vcombine.high %v8526, %v8526
        %v8543 = vcombine.high %v8533, %v8533
        %v8544 = vcombine.high %v8540, %v8540
        %v8545 = vcombine.high %v8197, %v8197
        %v8547 = vunpack.c.l.s4 1966171168
        %v8548 = vunpack.c.0.s8 %v8547
        %v8549 = vlaneseq
        %v8550 = vshrl.u32 %v8549, 7
        %v8551 = vsub.s32 %v8548, %v8550
        %v8552 = vrot.slane %v8197, %v8551
        %v8554 = vunpack.c.l.s4 1966171168
        %v8555 = vunpack.c.0.s8 %v8554
        %v8556 = vlaneseq
        %v8557 = vshrl.u32 %v8556, 7
        %v8558 = vsub.s32 %v8555, %v8557
        %v8559 = vrot.slane %v8545, %v8558
        %v8560 = vcombine.high %v8552, %v8552
        %v8561 = vcombine.high %v8559, %v8559
        %v8563 = vunpack.c.l.s4 1966171168
        %v8564 = vunpack.c.0.s8 %v8563
        %v8565 = vlaneseq
        %v8566 = vshrl.u32 %v8565, 7
        %v8567 = vsub.s32 %v8564, %v8566
        %v8568 = vrot.slane %v8552, %v8567
        %v8570 = vunpack.c.l.s4 1966171168
        %v8571 = vunpack.c.0.s8 %v8570
        %v8572 = vlaneseq
        %v8573 = vshrl.u32 %v8572, 7
        %v8574 = vsub.s32 %v8571, %v8573
        %v8575 = vrot.slane %v8559, %v8574
        %v8577 = vunpack.c.l.s4 1966171168
        %v8578 = vunpack.c.0.s8 %v8577
        %v8579 = vlaneseq
        %v8580 = vshrl.u32 %v8579, 7
        %v8581 = vsub.s32 %v8578, %v8580
        %v8582 = vrot.slane %v8560, %v8581
        %v8584 = vunpack.c.l.s4 1966171168
        %v8585 = vunpack.c.0.s8 %v8584
        %v8586 = vlaneseq
        %v8587 = vshrl.u32 %v8586, 7
        %v8588 = vsub.s32 %v8585, %v8587
        %v8589 = vrot.slane %v8561, %v8588
        %v8590 = vcombine.high %v8568, %v8568
        %v8591 = vcombine.high %v8575, %v8575
        %v8592 = vcombine.high %v8582, %v8582
        %v8593 = vcombine.high %v8589, %v8589
        %v8594 = vcombine.high %v8200, %v8200
        %v8596 = vunpack.c.l.s4 1966171168
        %v8597 = vunpack.c.0.s8 %v8596
        %v8598 = vlaneseq
        %v8599 = vshrl.u32 %v8598, 7
        %v8600 = vsub.s32 %v8597, %v8599
        %v8601 = vrot.slane %v8200, %v8600
        %v8603 = vunpack.c.l.s4 1966171168
        %v8604 = vunpack.c.0.s8 %v8603
        %v8605 = vlaneseq
        %v8606 = vshrl.u32 %v8605, 7
        %v8607 = vsub.s32 %v8604, %v8606
        %v8608 = vrot.slane %v8594, %v8607
        %v8609 = vcombine.high %v8601, %v8601
        %v8610 = vcombine.high %v8608, %v8608
        %v8612 = vunpack.c.l.s4 1966171168
        %v8613 = vunpack.c.0.s8 %v8612
        %v8614 = vlaneseq
        %v8615 = vshrl.u32 %v8614, 7
        %v8616 = vsub.s32 %v8613, %v8615
        %v8617 = vrot.slane %v8601, %v8616
        %v8619 = vunpack.c.l.s4 1966171168
        %v8620 = vunpack.c.0.s8 %v8619
        %v8621 = vlaneseq
        %v8622 = vshrl.u32 %v8621, 7
        %v8623 = vsub.s32 %v8620, %v8622
        %v8624 = vrot.slane %v8608, %v8623
        %v8626 = vunpack.c.l.s4 1966171168
        %v8627 = vunpack.c.0.s8 %v8626
        %v8628 = vlaneseq
        %v8629 = vshrl.u32 %v8628, 7
        %v8630 = vsub.s32 %v8627, %v8629
        %v8631 = vrot.slane %v8609, %v8630
        %v8633 = vunpack.c.l.s4 1966171168
        %v8634 = vunpack.c.0.s8 %v8633
        %v8635 = vlaneseq
        %v8636 = vshrl.u32 %v8635, 7
        %v8637 = vsub.s32 %v8634, %v8636
        %v8638 = vrot.slane %v8610, %v8637
        %v8639 = vcombine.high %v8617, %v8617
        %v8640 = vcombine.high %v8624, %v8624
        %v8641 = vcombine.high %v8631, %v8631
        %v8642 = vcombine.high %v8638, %v8638
        %v8643 = vcombine.high %v8205, %v8205
        %v8645 = vunpack.c.l.s4 1966171168
        %v8646 = vunpack.c.0.s8 %v8645
        %v8647 = vlaneseq
        %v8648 = vshrl.u32 %v8647, 7
        %v8649 = vsub.s32 %v8646, %v8648
        %v8650 = vrot.slane %v8205, %v8649
        %v8652 = vunpack.c.l.s4 1966171168
        %v8653 = vunpack.c.0.s8 %v8652
        %v8654 = vlaneseq
        %v8655 = vshrl.u32 %v8654, 7
        %v8656 = vsub.s32 %v8653, %v8655
        %v8657 = vrot.slane %v8643, %v8656
        %v8658 = vcombine.high %v8650, %v8650
        %v8659 = vcombine.high %v8657, %v8657
        %v8661 = vunpack.c.l.s4 1966171168
        %v8662 = vunpack.c.0.s8 %v8661
        %v8663 = vlaneseq
        %v8664 = vshrl.u32 %v8663, 7
        %v8665 = vsub.s32 %v8662, %v8664
        %v8666 = vrot.slane %v8650, %v8665
        %v8668 = vunpack.c.l.s4 1966171168
        %v8669 = vunpack.c.0.s8 %v8668
        %v8670 = vlaneseq
        %v8671 = vshrl.u32 %v8670, 7
        %v8672 = vsub.s32 %v8669, %v8671
        %v8673 = vrot.slane %v8657, %v8672
        %v8675 = vunpack.c.l.s4 1966171168
        %v8676 = vunpack.c.0.s8 %v8675
        %v8677 = vlaneseq
        %v8678 = vshrl.u32 %v8677, 7
        %v8679 = vsub.s32 %v8676, %v8678
        %v8680 = vrot.slane %v8658, %v8679
        %v8682 = vunpack.c.l.s4 1966171168
        %v8683 = vunpack.c.0.s8 %v8682
        %v8684 = vlaneseq
        %v8685 = vshrl.u32 %v8684, 7
        %v8686 = vsub.s32 %v8683, %v8685
        %v8687 = vrot.slane %v8659, %v8686
        %v8688 = vcombine.high %v8666, %v8666
        %v8689 = vcombine.high %v8673, %v8673
        %v8690 = vcombine.high %v8680, %v8680
        %v8691 = vcombine.high %v8687, %v8687
        %v8692 = vcombine.high %v8208, %v8208
        %v8694 = vunpack.c.l.s4 1966171168
        %v8695 = vunpack.c.0.s8 %v8694
        %v8696 = vlaneseq
        %v8697 = vshrl.u32 %v8696, 7
        %v8698 = vsub.s32 %v8695, %v8697
        %v8699 = vrot.slane %v8208, %v8698
        %v8701 = vunpack.c.l.s4 1966171168
        %v8702 = vunpack.c.0.s8 %v8701
        %v8703 = vlaneseq
        %v8704 = vshrl.u32 %v8703, 7
        %v8705 = vsub.s32 %v8702, %v8704
        %v8706 = vrot.slane %v8692, %v8705
        %v8707 = vcombine.high %v8699, %v8699
        %v8708 = vcombine.high %v8706, %v8706
        %v8710 = vunpack.c.l.s4 1966171168
        %v8711 = vunpack.c.0.s8 %v8710
        %v8712 = vlaneseq
        %v8713 = vshrl.u32 %v8712, 7
        %v8714 = vsub.s32 %v8711, %v8713
        %v8715 = vrot.slane %v8699, %v8714
        %v8717 = vunpack.c.l.s4 1966171168
        %v8718 = vunpack.c.0.s8 %v8717
        %v8719 = vlaneseq
        %v8720 = vshrl.u32 %v8719, 7
        %v8721 = vsub.s32 %v8718, %v8720
        %v8722 = vrot.slane %v8706, %v8721
        %v8724 = vunpack.c.l.s4 1966171168
        %v8725 = vunpack.c.0.s8 %v8724
        %v8726 = vlaneseq
        %v8727 = vshrl.u32 %v8726, 7
        %v8728 = vsub.s32 %v8725, %v8727
        %v8729 = vrot.slane %v8707, %v8728
        %v8731 = vunpack.c.l.s4 1966171168
        %v8732 = vunpack.c.0.s8 %v8731
        %v8733 = vlaneseq
        %v8734 = vshrl.u32 %v8733, 7
        %v8735 = vsub.s32 %v8732, %v8734
        %v8736 = vrot.slane %v8708, %v8735
        %v8737 = vcombine.high %v8715, %v8715
        %v8738 = vcombine.high %v8722, %v8722
        %v8739 = vcombine.high %v8729, %v8729
        %v8740 = vcombine.high %v8736, %v8736
        %v8741 = vcombine.high %v8213, %v8213
        %v8743 = vunpack.c.l.s4 1966171168
        %v8744 = vunpack.c.0.s8 %v8743
        %v8745 = vlaneseq
        %v8746 = vshrl.u32 %v8745, 7
        %v8747 = vsub.s32 %v8744, %v8746
        %v8748 = vrot.slane %v8213, %v8747
        %v8750 = vunpack.c.l.s4 1966171168
        %v8751 = vunpack.c.0.s8 %v8750
        %v8752 = vlaneseq
        %v8753 = vshrl.u32 %v8752, 7
        %v8754 = vsub.s32 %v8751, %v8753
        %v8755 = vrot.slane %v8741, %v8754
        %v8756 = vcombine.high %v8748, %v8748
        %v8757 = vcombine.high %v8755, %v8755
        %v8759 = vunpack.c.l.s4 1966171168
        %v8760 = vunpack.c.0.s8 %v8759
        %v8761 = vlaneseq
        %v8762 = vshrl.u32 %v8761, 7
        %v8763 = vsub.s32 %v8760, %v8762
        %v8764 = vrot.slane %v8748, %v8763
        %v8766 = vunpack.c.l.s4 1966171168
        %v8767 = vunpack.c.0.s8 %v8766
        %v8768 = vlaneseq
        %v8769 = vshrl.u32 %v8768, 7
        %v8770 = vsub.s32 %v8767, %v8769
        %v8771 = vrot.slane %v8755, %v8770
        %v8773 = vunpack.c.l.s4 1966171168
        %v8774 = vunpack.c.0.s8 %v8773
        %v8775 = vlaneseq
        %v8776 = vshrl.u32 %v8775, 7
        %v8777 = vsub.s32 %v8774, %v8776
        %v8778 = vrot.slane %v8756, %v8777
        %v8780 = vunpack.c.l.s4 1966171168
        %v8781 = vunpack.c.0.s8 %v8780
        %v8782 = vlaneseq
        %v8783 = vshrl.u32 %v8782, 7
        %v8784 = vsub.s32 %v8781, %v8783
        %v8785 = vrot.slane %v8757, %v8784
        %v8786 = vcombine.high %v8764, %v8764
        %v8787 = vcombine.high %v8771, %v8771
        %v8788 = vcombine.high %v8778, %v8778
        %v8789 = vcombine.high %v8785, %v8785
        %v8790 = vcombine.high %v8216, %v8216
        %v8792 = vunpack.c.l.s4 1966171168
        %v8793 = vunpack.c.0.s8 %v8792
        %v8794 = vlaneseq
        %v8795 = vshrl.u32 %v8794, 7
        %v8796 = vsub.s32 %v8793, %v8795
        %v8797 = vrot.slane %v8216, %v8796
        %v8799 = vunpack.c.l.s4 1966171168
        %v8800 = vunpack.c.0.s8 %v8799
        %v8801 = vlaneseq
        %v8802 = vshrl.u32 %v8801, 7
        %v8803 = vsub.s32 %v8800, %v8802
        %v8804 = vrot.slane %v8790, %v8803
        %v8805 = vcombine.high %v8797, %v8797
        %v8806 = vcombine.high %v8804, %v8804
        %v8808 = vunpack.c.l.s4 1966171168
        %v8809 = vunpack.c.0.s8 %v8808
        %v8810 = vlaneseq
        %v8811 = vshrl.u32 %v8810, 7
        %v8812 = vsub.s32 %v8809, %v8811
        %v8813 = vrot.slane %v8797, %v8812
        %v8815 = vunpack.c.l.s4 1966171168
        %v8816 = vunpack.c.0.s8 %v8815
        %v8817 = vlaneseq
        %v8818 = vshrl.u32 %v8817, 7
        %v8819 = vsub.s32 %v8816, %v8818
        %v8820 = vrot.slane %v8804, %v8819
        %v8822 = vunpack.c.l.s4 1966171168
        %v8823 = vunpack.c.0.s8 %v8822
        %v8824 = vlaneseq
        %v8825 = vshrl.u32 %v8824, 7
        %v8826 = vsub.s32 %v8823, %v8825
        %v8827 = vrot.slane %v8805, %v8826
        %v8829 = vunpack.c.l.s4 1966171168
        %v8830 = vunpack.c.0.s8 %v8829
        %v8831 = vlaneseq
        %v8832 = vshrl.u32 %v8831, 7
        %v8833 = vsub.s32 %v8830, %v8832
        %v8834 = vrot.slane %v8806, %v8833
        %v8835 = vcombine.high %v8813, %v8813
        %v8836 = vcombine.high %v8820, %v8820
        %v8837 = vcombine.high %v8827, %v8827
        %v8838 = vcombine.high %v8834, %v8834
        %v8839 = vcombine.high %v8221, %v8221
        %v8841 = vunpack.c.l.s4 1966171168
        %v8842 = vunpack.c.0.s8 %v8841
        %v8843 = vlaneseq
        %v8844 = vshrl.u32 %v8843, 7
        %v8845 = vsub.s32 %v8842, %v8844
        %v8846 = vrot.slane %v8221, %v8845
        %v8848 = vunpack.c.l.s4 1966171168
        %v8849 = vunpack.c.0.s8 %v8848
        %v8850 = vlaneseq
        %v8851 = vshrl.u32 %v8850, 7
        %v8852 = vsub.s32 %v8849, %v8851
        %v8853 = vrot.slane %v8839, %v8852
        %v8854 = vcombine.high %v8846, %v8846
        %v8855 = vcombine.high %v8853, %v8853
        %v8857 = vunpack.c.l.s4 1966171168
        %v8858 = vunpack.c.0.s8 %v8857
        %v8859 = vlaneseq
        %v8860 = vshrl.u32 %v8859, 7
        %v8861 = vsub.s32 %v8858, %v8860
        %v8862 = vrot.slane %v8846, %v8861
        %v8864 = vunpack.c.l.s4 1966171168
        %v8865 = vunpack.c.0.s8 %v8864
        %v8866 = vlaneseq
        %v8867 = vshrl.u32 %v8866, 7
        %v8868 = vsub.s32 %v8865, %v8867
        %v8869 = vrot.slane %v8853, %v8868
        %v8871 = vunpack.c.l.s4 1966171168
        %v8872 = vunpack.c.0.s8 %v8871
        %v8873 = vlaneseq
        %v8874 = vshrl.u32 %v8873, 7
        %v8875 = vsub.s32 %v8872, %v8874
        %v8876 = vrot.slane %v8854, %v8875
        %v8878 = vunpack.c.l.s4 1966171168
        %v8879 = vunpack.c.0.s8 %v8878
        %v8880 = vlaneseq
        %v8881 = vshrl.u32 %v8880, 7
        %v8882 = vsub.s32 %v8879, %v8881
        %v8883 = vrot.slane %v8855, %v8882
        %v8884 = vcombine.high %v8862, %v8862
        %v8885 = vcombine.high %v8869, %v8869
        %v8886 = vcombine.high %v8876, %v8876
        %v8887 = vcombine.high %v8883, %v8883
        %v8888 = vcombine.high %v8224, %v8224
        %v8890 = vunpack.c.l.s4 1966171168
        %v8891 = vunpack.c.0.s8 %v8890
        %v8892 = vlaneseq
        %v8893 = vshrl.u32 %v8892, 7
        %v8894 = vsub.s32 %v8891, %v8893
        %v8895 = vrot.slane %v8224, %v8894
        %v8897 = vunpack.c.l.s4 1966171168
        %v8898 = vunpack.c.0.s8 %v8897
        %v8899 = vlaneseq
        %v8900 = vshrl.u32 %v8899, 7
        %v8901 = vsub.s32 %v8898, %v8900
        %v8902 = vrot.slane %v8888, %v8901
        %v8903 = vcombine.high %v8895, %v8895
        %v8904 = vcombine.high %v8902, %v8902
        %v8906 = vunpack.c.l.s4 1966171168
        %v8907 = vunpack.c.0.s8 %v8906
        %v8908 = vlaneseq
        %v8909 = vshrl.u32 %v8908, 7
        %v8910 = vsub.s32 %v8907, %v8909
        %v8911 = vrot.slane %v8895, %v8910
        %v8913 = vunpack.c.l.s4 1966171168
        %v8914 = vunpack.c.0.s8 %v8913
        %v8915 = vlaneseq
        %v8916 = vshrl.u32 %v8915, 7
        %v8917 = vsub.s32 %v8914, %v8916
        %v8918 = vrot.slane %v8902, %v8917
        %v8920 = vunpack.c.l.s4 1966171168
        %v8921 = vunpack.c.0.s8 %v8920
        %v8922 = vlaneseq
        %v8923 = vshrl.u32 %v8922, 7
        %v8924 = vsub.s32 %v8921, %v8923
        %v8925 = vrot.slane %v8903, %v8924
        %v8927 = vunpack.c.l.s4 1966171168
        %v8928 = vunpack.c.0.s8 %v8927
        %v8929 = vlaneseq
        %v8930 = vshrl.u32 %v8929, 7
        %v8931 = vsub.s32 %v8928, %v8930
        %v8932 = vrot.slane %v8904, %v8931
        %v8933 = vcombine.high %v8911, %v8911
        %v8934 = vcombine.high %v8918, %v8918
        %v8935 = vcombine.high %v8925, %v8925
        %v8936 = vcombine.high %v8932, %v8932
        %v8937 = vcombine.high %v8229, %v8229
        %v8939 = vunpack.c.l.s4 1966171168
        %v8940 = vunpack.c.0.s8 %v8939
        %v8941 = vlaneseq
        %v8942 = vshrl.u32 %v8941, 7
        %v8943 = vsub.s32 %v8940, %v8942
        %v8944 = vrot.slane %v8229, %v8943
        %v8946 = vunpack.c.l.s4 1966171168
        %v8947 = vunpack.c.0.s8 %v8946
        %v8948 = vlaneseq
        %v8949 = vshrl.u32 %v8948, 7
        %v8950 = vsub.s32 %v8947, %v8949
        %v8951 = vrot.slane %v8937, %v8950
        %v8952 = vcombine.high %v8944, %v8944
        %v8953 = vcombine.high %v8951, %v8951
        %v8955 = vunpack.c.l.s4 1966171168
        %v8956 = vunpack.c.0.s8 %v8955
        %v8957 = vlaneseq
        %v8958 = vshrl.u32 %v8957, 7
        %v8959 = vsub.s32 %v8956, %v8958
        %v8960 = vrot.slane %v8944, %v8959
        %v8962 = vunpack.c.l.s4 1966171168
        %v8963 = vunpack.c.0.s8 %v8962
        %v8964 = vlaneseq
        %v8965 = vshrl.u32 %v8964, 7
        %v8966 = vsub.s32 %v8963, %v8965
        %v8967 = vrot.slane %v8951, %v8966
        %v8969 = vunpack.c.l.s4 1966171168
        %v8970 = vunpack.c.0.s8 %v8969
        %v8971 = vlaneseq
        %v8972 = vshrl.u32 %v8971, 7
        %v8973 = vsub.s32 %v8970, %v8972
        %v8974 = vrot.slane %v8952, %v8973
        %v8976 = vunpack.c.l.s4 1966171168
        %v8977 = vunpack.c.0.s8 %v8976
        %v8978 = vlaneseq
        %v8979 = vshrl.u32 %v8978, 7
        %v8980 = vsub.s32 %v8977, %v8979
        %v8981 = vrot.slane %v8953, %v8980
        %v8982 = vcombine.high %v8960, %v8960
        %v8983 = vcombine.high %v8967, %v8967
        %v8984 = vcombine.high %v8974, %v8974
        %v8985 = vcombine.high %v8981, %v8981
        %v8986 = vcombine.high %v8232, %v8232
        %v8988 = vunpack.c.l.s4 1966171168
        %v8989 = vunpack.c.0.s8 %v8988
        %v8990 = vlaneseq
        %v8991 = vshrl.u32 %v8990, 7
        %v8992 = vsub.s32 %v8989, %v8991
        %v8993 = vrot.slane %v8232, %v8992
        %v8995 = vunpack.c.l.s4 1966171168
        %v8996 = vunpack.c.0.s8 %v8995
        %v8997 = vlaneseq
        %v8998 = vshrl.u32 %v8997, 7
        %v8999 = vsub.s32 %v8996, %v8998
        %v9000 = vrot.slane %v8986, %v8999
        %v9001 = vcombine.high %v8993, %v8993
        %v9002 = vcombine.high %v9000, %v9000
        %v9004 = vunpack.c.l.s4 1966171168
        %v9005 = vunpack.c.0.s8 %v9004
        %v9006 = vlaneseq
        %v9007 = vshrl.u32 %v9006, 7
        %v9008 = vsub.s32 %v9005, %v9007
        %v9009 = vrot.slane %v8993, %v9008
        %v9011 = vunpack.c.l.s4 1966171168
        %v9012 = vunpack.c.0.s8 %v9011
        %v9013 = vlaneseq
        %v9014 = vshrl.u32 %v9013, 7
        %v9015 = vsub.s32 %v9012, %v9014
        %v9016 = vrot.slane %v9000, %v9015
        %v9018 = vunpack.c.l.s4 1966171168
        %v9019 = vunpack.c.0.s8 %v9018
        %v9020 = vlaneseq
        %v9021 = vshrl.u32 %v9020, 7
        %v9022 = vsub.s32 %v9019, %v9021
        %v9023 = vrot.slane %v9001, %v9022
        %v9025 = vunpack.c.l.s4 1966171168
        %v9026 = vunpack.c.0.s8 %v9025
        %v9027 = vlaneseq
        %v9028 = vshrl.u32 %v9027, 7
        %v9029 = vsub.s32 %v9026, %v9028
        %v9030 = vrot.slane %v9002, %v9029
        %v9031 = vcombine.high %v9009, %v9009
        %v9032 = vcombine.high %v9016, %v9016
        %v9033 = vcombine.high %v9023, %v9023
        %v9034 = vcombine.high %v9030, %v9030
        %v9035 = vlaneseq
        %v9036 = vshrl.u32 %v9035, 7
        %v9037 = vsub.s32 0, %v9036
        %v9038 = vrot.slane %v8274, %v9037
        %v9039 = vlaneseq
        %v9040 = vshrl.u32 %v9039, 7
        %v9041 = vsub.s32 0, %v9040
        %v9042 = vrot.slane %v8288, %v9041
        %v9043 = vlaneseq
        %v9044 = vshrl.u32 %v9043, 7
        %v9045 = vsub.s32 0, %v9044
        %v9046 = vrot.slane %v8296, %v9045
        %v9047 = vlaneseq
        %v9048 = vshrl.u32 %v9047, 7
        %v9049 = vsub.s32 0, %v9048
        %v9050 = vrot.slane %v8298, %v9049
        %v9051 = vlaneseq
        %v9052 = vshrl.u32 %v9051, 7
        %v9053 = vsub.s32 0, %v9052
        %v9054 = vrot.slane %v8281, %v9053
        %v9055 = vlaneseq
        %v9056 = vshrl.u32 %v9055, 7
        %v9057 = vsub.s32 0, %v9056
        %v9058 = vrot.slane %v8295, %v9057
        %v9059 = vlaneseq
        %v9060 = vshrl.u32 %v9059, 7
        %v9061 = vsub.s32 0, %v9060
        %v9062 = vrot.slane %v8297, %v9061
        %v9063 = vlaneseq
        %v9064 = vshrl.u32 %v9063, 7
        %v9065 = vsub.s32 0, %v9064
        %v9066 = vrot.slane %v8299, %v9065
        %v9067 = vlaneseq
        %v9068 = vshrl.u32 %v9067, 7
        %v9069 = vsub.s32 0, %v9068
        %v9070 = vrot.slane %v8323, %v9069
        %v9071 = vlaneseq
        %v9072 = vshrl.u32 %v9071, 7
        %v9073 = vsub.s32 0, %v9072
        %v9074 = vrot.slane %v8337, %v9073
        %v9075 = vlaneseq
        %v9076 = vshrl.u32 %v9075, 7
        %v9077 = vsub.s32 0, %v9076
        %v9078 = vrot.slane %v8345, %v9077
        %v9079 = vlaneseq
        %v9080 = vshrl.u32 %v9079, 7
        %v9081 = vsub.s32 0, %v9080
        %v9082 = vrot.slane %v8347, %v9081
        %v9083 = vlaneseq
        %v9084 = vshrl.u32 %v9083, 7
        %v9085 = vsub.s32 0, %v9084
        %v9086 = vrot.slane %v8330, %v9085
        %v9087 = vlaneseq
        %v9088 = vshrl.u32 %v9087, 7
        %v9089 = vsub.s32 0, %v9088
        %v9090 = vrot.slane %v8344, %v9089
        %v9091 = vlaneseq
        %v9092 = vshrl.u32 %v9091, 7
        %v9093 = vsub.s32 0, %v9092
        %v9094 = vrot.slane %v8346, %v9093
        %v9095 = vlaneseq
        %v9096 = vshrl.u32 %v9095, 7
        %v9097 = vsub.s32 0, %v9096
        %v9098 = vrot.slane %v8348, %v9097
        %v9099 = vlaneseq
        %v9100 = vshrl.u32 %v9099, 7
        %v9101 = vsub.s32 0, %v9100
        %v9102 = vrot.slane %v8372, %v9101
        %v9103 = vlaneseq
        %v9104 = vshrl.u32 %v9103, 7
        %v9105 = vsub.s32 0, %v9104
        %v9106 = vrot.slane %v8386, %v9105
        %v9107 = vlaneseq
        %v9108 = vshrl.u32 %v9107, 7
        %v9109 = vsub.s32 0, %v9108
        %v9110 = vrot.slane %v8394, %v9109
        %v9111 = vlaneseq
        %v9112 = vshrl.u32 %v9111, 7
        %v9113 = vsub.s32 0, %v9112
        %v9114 = vrot.slane %v8396, %v9113
        %v9115 = vlaneseq
        %v9116 = vshrl.u32 %v9115, 7
        %v9117 = vsub.s32 0, %v9116
        %v9118 = vrot.slane %v8379, %v9117
        %v9119 = vlaneseq
        %v9120 = vshrl.u32 %v9119, 7
        %v9121 = vsub.s32 0, %v9120
        %v9122 = vrot.slane %v8393, %v9121
        %v9123 = vlaneseq
        %v9124 = vshrl.u32 %v9123, 7
        %v9125 = vsub.s32 0, %v9124
        %v9126 = vrot.slane %v8395, %v9125
        %v9127 = vlaneseq
        %v9128 = vshrl.u32 %v9127, 7
        %v9129 = vsub.s32 0, %v9128
        %v9130 = vrot.slane %v8397, %v9129
        %v9131 = vlaneseq
        %v9132 = vshrl.u32 %v9131, 7
        %v9133 = vsub.s32 0, %v9132
        %v9134 = vrot.slane %v8421, %v9133
        %v9135 = vlaneseq
        %v9136 = vshrl.u32 %v9135, 7
        %v9137 = vsub.s32 0, %v9136
        %v9138 = vrot.slane %v8435, %v9137
        %v9139 = vlaneseq
        %v9140 = vshrl.u32 %v9139, 7
        %v9141 = vsub.s32 0, %v9140
        %v9142 = vrot.slane %v8443, %v9141
        %v9143 = vlaneseq
        %v9144 = vshrl.u32 %v9143, 7
        %v9145 = vsub.s32 0, %v9144
        %v9146 = vrot.slane %v8445, %v9145
        %v9147 = vlaneseq
        %v9148 = vshrl.u32 %v9147, 7
        %v9149 = vsub.s32 0, %v9148
        %v9150 = vrot.slane %v8428, %v9149
        %v9151 = vlaneseq
        %v9152 = vshrl.u32 %v9151, 7
        %v9153 = vsub.s32 0, %v9152
        %v9154 = vrot.slane %v8442, %v9153
        %v9155 = vlaneseq
        %v9156 = vshrl.u32 %v9155, 7
        %v9157 = vsub.s32 0, %v9156
        %v9158 = vrot.slane %v8444, %v9157
        %v9159 = vlaneseq
        %v9160 = vshrl.u32 %v9159, 7
        %v9161 = vsub.s32 0, %v9160
        %v9162 = vrot.slane %v8446, %v9161
        %v9163 = vlaneseq
        %v9164 = vshrl.u32 %v9163, 7
        %v9165 = vsub.s32 0, %v9164
        %v9166 = vrot.slane %v8470, %v9165
        %v9167 = vlaneseq
        %v9168 = vshrl.u32 %v9167, 7
        %v9169 = vsub.s32 0, %v9168
        %v9170 = vrot.slane %v8484, %v9169
        %v9171 = vlaneseq
        %v9172 = vshrl.u32 %v9171, 7
        %v9173 = vsub.s32 0, %v9172
        %v9174 = vrot.slane %v8492, %v9173
        %v9175 = vlaneseq
        %v9176 = vshrl.u32 %v9175, 7
        %v9177 = vsub.s32 0, %v9176
        %v9178 = vrot.slane %v8494, %v9177
        %v9179 = vlaneseq
        %v9180 = vshrl.u32 %v9179, 7
        %v9181 = vsub.s32 0, %v9180
        %v9182 = vrot.slane %v8477, %v9181
        %v9183 = vlaneseq
        %v9184 = vshrl.u32 %v9183, 7
        %v9185 = vsub.s32 0, %v9184
        %v9186 = vrot.slane %v8491, %v9185
        %v9187 = vlaneseq
        %v9188 = vshrl.u32 %v9187, 7
        %v9189 = vsub.s32 0, %v9188
        %v9190 = vrot.slane %v8493, %v9189
        %v9191 = vlaneseq
        %v9192 = vshrl.u32 %v9191, 7
        %v9193 = vsub.s32 0, %v9192
        %v9194 = vrot.slane %v8495, %v9193
        %v9195 = vlaneseq
        %v9196 = vshrl.u32 %v9195, 7
        %v9197 = vsub.s32 0, %v9196
        %v9198 = vrot.slane %v8519, %v9197
        %v9199 = vlaneseq
        %v9200 = vshrl.u32 %v9199, 7
        %v9201 = vsub.s32 0, %v9200
        %v9202 = vrot.slane %v8533, %v9201
        %v9203 = vlaneseq
        %v9204 = vshrl.u32 %v9203, 7
        %v9205 = vsub.s32 0, %v9204
        %v9206 = vrot.slane %v8541, %v9205
        %v9207 = vlaneseq
        %v9208 = vshrl.u32 %v9207, 7
        %v9209 = vsub.s32 0, %v9208
        %v9210 = vrot.slane %v8543, %v9209
        %v9211 = vlaneseq
        %v9212 = vshrl.u32 %v9211, 7
        %v9213 = vsub.s32 0, %v9212
        %v9214 = vrot.slane %v8526, %v9213
        %v9215 = vlaneseq
        %v9216 = vshrl.u32 %v9215, 7
        %v9217 = vsub.s32 0, %v9216
        %v9218 = vrot.slane %v8540, %v9217
        %v9219 = vlaneseq
        %v9220 = vshrl.u32 %v9219, 7
        %v9221 = vsub.s32 0, %v9220
        %v9222 = vrot.slane %v8542, %v9221
        %v9223 = vlaneseq
        %v9224 = vshrl.u32 %v9223, 7
        %v9225 = vsub.s32 0, %v9224
        %v9226 = vrot.slane %v8544, %v9225
        %v9227 = vlaneseq
        %v9228 = vshrl.u32 %v9227, 7
        %v9229 = vsub.s32 0, %v9228
        %v9230 = vrot.slane %v8568, %v9229
        %v9231 = vlaneseq
        %v9232 = vshrl.u32 %v9231, 7
        %v9233 = vsub.s32 0, %v9232
        %v9234 = vrot.slane %v8582, %v9233
        %v9235 = vlaneseq
        %v9236 = vshrl.u32 %v9235, 7
        %v9237 = vsub.s32 0, %v9236
        %v9238 = vrot.slane %v8590, %v9237
        %v9239 = vlaneseq
        %v9240 = vshrl.u32 %v9239, 7
        %v9241 = vsub.s32 0, %v9240
        %v9242 = vrot.slane %v8592, %v9241
        %v9243 = vlaneseq
        %v9244 = vshrl.u32 %v9243, 7
        %v9245 = vsub.s32 0, %v9244
        %v9246 = vrot.slane %v8575, %v9245
        %v9247 = vlaneseq
        %v9248 = vshrl.u32 %v9247, 7
        %v9249 = vsub.s32 0, %v9248
        %v9250 = vrot.slane %v8589, %v9249
        %v9251 = vlaneseq
        %v9252 = vshrl.u32 %v9251, 7
        %v9253 = vsub.s32 0, %v9252
        %v9254 = vrot.slane %v8591, %v9253
        %v9255 = vlaneseq
        %v9256 = vshrl.u32 %v9255, 7
        %v9257 = vsub.s32 0, %v9256
        %v9258 = vrot.slane %v8593, %v9257
        %v9259 = vlaneseq
        %v9260 = vshrl.u32 %v9259, 7
        %v9261 = vsub.s32 0, %v9260
        %v9262 = vrot.slane %v8617, %v9261
        %v9263 = vlaneseq
        %v9264 = vshrl.u32 %v9263, 7
        %v9265 = vsub.s32 0, %v9264
        %v9266 = vrot.slane %v8631, %v9265
        %v9267 = vlaneseq
        %v9268 = vshrl.u32 %v9267, 7
        %v9269 = vsub.s32 0, %v9268
        %v9270 = vrot.slane %v8639, %v9269
        %v9271 = vlaneseq
        %v9272 = vshrl.u32 %v9271, 7
        %v9273 = vsub.s32 0, %v9272
        %v9274 = vrot.slane %v8641, %v9273
        %v9275 = vlaneseq
        %v9276 = vshrl.u32 %v9275, 7
        %v9277 = vsub.s32 0, %v9276
        %v9278 = vrot.slane %v8624, %v9277
        %v9279 = vlaneseq
        %v9280 = vshrl.u32 %v9279, 7
        %v9281 = vsub.s32 0, %v9280
        %v9282 = vrot.slane %v8638, %v9281
        %v9283 = vlaneseq
        %v9284 = vshrl.u32 %v9283, 7
        %v9285 = vsub.s32 0, %v9284
        %v9286 = vrot.slane %v8640, %v9285
        %v9287 = vlaneseq
        %v9288 = vshrl.u32 %v9287, 7
        %v9289 = vsub.s32 0, %v9288
        %v9290 = vrot.slane %v8642, %v9289
        %v9291 = vlaneseq
        %v9292 = vshrl.u32 %v9291, 7
        %v9293 = vsub.s32 0, %v9292
        %v9294 = vrot.slane %v8666, %v9293
        %v9295 = vlaneseq
        %v9296 = vshrl.u32 %v9295, 7
        %v9297 = vsub.s32 0, %v9296
        %v9298 = vrot.slane %v8680, %v9297
        %v9299 = vlaneseq
        %v9300 = vshrl.u32 %v9299, 7
        %v9301 = vsub.s32 0, %v9300
        %v9302 = vrot.slane %v8688, %v9301
        %v9303 = vlaneseq
        %v9304 = vshrl.u32 %v9303, 7
        %v9305 = vsub.s32 0, %v9304
        %v9306 = vrot.slane %v8690, %v9305
        %v9307 = vlaneseq
        %v9308 = vshrl.u32 %v9307, 7
        %v9309 = vsub.s32 0, %v9308
        %v9310 = vrot.slane %v8673, %v9309
        %v9311 = vlaneseq
        %v9312 = vshrl.u32 %v9311, 7
        %v9313 = vsub.s32 0, %v9312
        %v9314 = vrot.slane %v8687, %v9313
        %v9315 = vlaneseq
        %v9316 = vshrl.u32 %v9315, 7
        %v9317 = vsub.s32 0, %v9316
        %v9318 = vrot.slane %v8689, %v9317
        %v9319 = vlaneseq
        %v9320 = vshrl.u32 %v9319, 7
        %v9321 = vsub.s32 0, %v9320
        %v9322 = vrot.slane %v8691, %v9321
        %v9323 = vlaneseq
        %v9324 = vshrl.u32 %v9323, 7
        %v9325 = vsub.s32 0, %v9324
        %v9326 = vrot.slane %v8715, %v9325
        %v9327 = vlaneseq
        %v9328 = vshrl.u32 %v9327, 7
        %v9329 = vsub.s32 0, %v9328
        %v9330 = vrot.slane %v8729, %v9329
        %v9331 = vlaneseq
        %v9332 = vshrl.u32 %v9331, 7
        %v9333 = vsub.s32 0, %v9332
        %v9334 = vrot.slane %v8737, %v9333
        %v9335 = vlaneseq
        %v9336 = vshrl.u32 %v9335, 7
        %v9337 = vsub.s32 0, %v9336
        %v9338 = vrot.slane %v8739, %v9337
        %v9339 = vlaneseq
        %v9340 = vshrl.u32 %v9339, 7
        %v9341 = vsub.s32 0, %v9340
        %v9342 = vrot.slane %v8722, %v9341
        %v9343 = vlaneseq
        %v9344 = vshrl.u32 %v9343, 7
        %v9345 = vsub.s32 0, %v9344
        %v9346 = vrot.slane %v8736, %v9345
        %v9347 = vlaneseq
        %v9348 = vshrl.u32 %v9347, 7
        %v9349 = vsub.s32 0, %v9348
        %v9350 = vrot.slane %v8738, %v9349
        %v9351 = vlaneseq
        %v9352 = vshrl.u32 %v9351, 7
        %v9353 = vsub.s32 0, %v9352
        %v9354 = vrot.slane %v8740, %v9353
        %v9355 = vlaneseq
        %v9356 = vshrl.u32 %v9355, 7
        %v9357 = vsub.s32 0, %v9356
        %v9358 = vrot.slane %v8764, %v9357
        %v9359 = vlaneseq
        %v9360 = vshrl.u32 %v9359, 7
        %v9361 = vsub.s32 0, %v9360
        %v9362 = vrot.slane %v8778, %v9361
        %v9363 = vlaneseq
        %v9364 = vshrl.u32 %v9363, 7
        %v9365 = vsub.s32 0, %v9364
        %v9366 = vrot.slane %v8786, %v9365
        %v9367 = vlaneseq
        %v9368 = vshrl.u32 %v9367, 7
        %v9369 = vsub.s32 0, %v9368
        %v9370 = vrot.slane %v8788, %v9369
        %v9371 = vlaneseq
        %v9372 = vshrl.u32 %v9371, 7
        %v9373 = vsub.s32 0, %v9372
        %v9374 = vrot.slane %v8771, %v9373
        %v9375 = vlaneseq
        %v9376 = vshrl.u32 %v9375, 7
        %v9377 = vsub.s32 0, %v9376
        %v9378 = vrot.slane %v8785, %v9377
        %v9379 = vlaneseq
        %v9380 = vshrl.u32 %v9379, 7
        %v9381 = vsub.s32 0, %v9380
        %v9382 = vrot.slane %v8787, %v9381
        %v9383 = vlaneseq
        %v9384 = vshrl.u32 %v9383, 7
        %v9385 = vsub.s32 0, %v9384
        %v9386 = vrot.slane %v8789, %v9385
        %v9387 = vlaneseq
        %v9388 = vshrl.u32 %v9387, 7
        %v9389 = vsub.s32 0, %v9388
        %v9390 = vrot.slane %v8813, %v9389
        %v9391 = vlaneseq
        %v9392 = vshrl.u32 %v9391, 7
        %v9393 = vsub.s32 0, %v9392
        %v9394 = vrot.slane %v8827, %v9393
        %v9395 = vlaneseq
        %v9396 = vshrl.u32 %v9395, 7
        %v9397 = vsub.s32 0, %v9396
        %v9398 = vrot.slane %v8835, %v9397
        %v9399 = vlaneseq
        %v9400 = vshrl.u32 %v9399, 7
        %v9401 = vsub.s32 0, %v9400
        %v9402 = vrot.slane %v8837, %v9401
        %v9403 = vlaneseq
        %v9404 = vshrl.u32 %v9403, 7
        %v9405 = vsub.s32 0, %v9404
        %v9406 = vrot.slane %v8820, %v9405
        %v9407 = vlaneseq
        %v9408 = vshrl.u32 %v9407, 7
        %v9409 = vsub.s32 0, %v9408
        %v9410 = vrot.slane %v8834, %v9409
        %v9411 = vlaneseq
        %v9412 = vshrl.u32 %v9411, 7
        %v9413 = vsub.s32 0, %v9412
        %v9414 = vrot.slane %v8836, %v9413
        %v9415 = vlaneseq
        %v9416 = vshrl.u32 %v9415, 7
        %v9417 = vsub.s32 0, %v9416
        %v9418 = vrot.slane %v8838, %v9417
        %v9419 = vlaneseq
        %v9420 = vshrl.u32 %v9419, 7
        %v9421 = vsub.s32 0, %v9420
        %v9422 = vrot.slane %v8862, %v9421
        %v9423 = vlaneseq
        %v9424 = vshrl.u32 %v9423, 7
        %v9425 = vsub.s32 0, %v9424
        %v9426 = vrot.slane %v8876, %v9425
        %v9427 = vlaneseq
        %v9428 = vshrl.u32 %v9427, 7
        %v9429 = vsub.s32 0, %v9428
        %v9430 = vrot.slane %v8884, %v9429
        %v9431 = vlaneseq
        %v9432 = vshrl.u32 %v9431, 7
        %v9433 = vsub.s32 0, %v9432
        %v9434 = vrot.slane %v8886, %v9433
        %v9435 = vlaneseq
        %v9436 = vshrl.u32 %v9435, 7
        %v9437 = vsub.s32 0, %v9436
        %v9438 = vrot.slane %v8869, %v9437
        %v9439 = vlaneseq
        %v9440 = vshrl.u32 %v9439, 7
        %v9441 = vsub.s32 0, %v9440
        %v9442 = vrot.slane %v8883, %v9441
        %v9443 = vlaneseq
        %v9444 = vshrl.u32 %v9443, 7
        %v9445 = vsub.s32 0, %v9444
        %v9446 = vrot.slane %v8885, %v9445
        %v9447 = vlaneseq
        %v9448 = vshrl.u32 %v9447, 7
        %v9449 = vsub.s32 0, %v9448
        %v9450 = vrot.slane %v8887, %v9449
        %v9451 = vlaneseq
        %v9452 = vshrl.u32 %v9451, 7
        %v9453 = vsub.s32 0, %v9452
        %v9454 = vrot.slane %v8911, %v9453
        %v9455 = vlaneseq
        %v9456 = vshrl.u32 %v9455, 7
        %v9457 = vsub.s32 0, %v9456
        %v9458 = vrot.slane %v8925, %v9457
        %v9459 = vlaneseq
        %v9460 = vshrl.u32 %v9459, 7
        %v9461 = vsub.s32 0, %v9460
        %v9462 = vrot.slane %v8933, %v9461
        %v9463 = vlaneseq
        %v9464 = vshrl.u32 %v9463, 7
        %v9465 = vsub.s32 0, %v9464
        %v9466 = vrot.slane %v8935, %v9465
        %v9467 = vlaneseq
        %v9468 = vshrl.u32 %v9467, 7
        %v9469 = vsub.s32 0, %v9468
        %v9470 = vrot.slane %v8918, %v9469
        %v9471 = vlaneseq
        %v9472 = vshrl.u32 %v9471, 7
        %v9473 = vsub.s32 0, %v9472
        %v9474 = vrot.slane %v8932, %v9473
        %v9475 = vlaneseq
        %v9476 = vshrl.u32 %v9475, 7
        %v9477 = vsub.s32 0, %v9476
        %v9478 = vrot.slane %v8934, %v9477
        %v9479 = vlaneseq
        %v9480 = vshrl.u32 %v9479, 7
        %v9481 = vsub.s32 0, %v9480
        %v9482 = vrot.slane %v8936, %v9481
        %v9483 = vlaneseq
        %v9484 = vshrl.u32 %v9483, 7
        %v9485 = vsub.s32 0, %v9484
        %v9486 = vrot.slane %v8960, %v9485
        %v9487 = vlaneseq
        %v9488 = vshrl.u32 %v9487, 7
        %v9489 = vsub.s32 0, %v9488
        %v9490 = vrot.slane %v8974, %v9489
        %v9491 = vlaneseq
        %v9492 = vshrl.u32 %v9491, 7
        %v9493 = vsub.s32 0, %v9492
        %v9494 = vrot.slane %v8982, %v9493
        %v9495 = vlaneseq
        %v9496 = vshrl.u32 %v9495, 7
        %v9497 = vsub.s32 0, %v9496
        %v9498 = vrot.slane %v8984, %v9497
        %v9499 = vlaneseq
        %v9500 = vshrl.u32 %v9499, 7
        %v9501 = vsub.s32 0, %v9500
        %v9502 = vrot.slane %v8967, %v9501
        %v9503 = vlaneseq
        %v9504 = vshrl.u32 %v9503, 7
        %v9505 = vsub.s32 0, %v9504
        %v9506 = vrot.slane %v8981, %v9505
        %v9507 = vlaneseq
        %v9508 = vshrl.u32 %v9507, 7
        %v9509 = vsub.s32 0, %v9508
        %v9510 = vrot.slane %v8983, %v9509
        %v9511 = vlaneseq
        %v9512 = vshrl.u32 %v9511, 7
        %v9513 = vsub.s32 0, %v9512
        %v9514 = vrot.slane %v8985, %v9513
        %v9515 = vlaneseq
        %v9516 = vshrl.u32 %v9515, 7
        %v9517 = vsub.s32 0, %v9516
        %v9518 = vrot.slane %v9009, %v9517
        %v9519 = vlaneseq
        %v9520 = vshrl.u32 %v9519, 7
        %v9521 = vsub.s32 0, %v9520
        %v9522 = vrot.slane %v9023, %v9521
        %v9523 = vlaneseq
        %v9524 = vshrl.u32 %v9523, 7
        %v9525 = vsub.s32 0, %v9524
        %v9526 = vrot.slane %v9031, %v9525
        %v9527 = vlaneseq
        %v9528 = vshrl.u32 %v9527, 7
        %v9529 = vsub.s32 0, %v9528
        %v9530 = vrot.slane %v9033, %v9529
        %v9531 = vlaneseq
        %v9532 = vshrl.u32 %v9531, 7
        %v9533 = vsub.s32 0, %v9532
        %v9534 = vrot.slane %v9016, %v9533
        %v9535 = vlaneseq
        %v9536 = vshrl.u32 %v9535, 7
        %v9537 = vsub.s32 0, %v9536
        %v9538 = vrot.slane %v9030, %v9537
        %v9539 = vlaneseq
        %v9540 = vshrl.u32 %v9539, 7
        %v9541 = vsub.s32 0, %v9540
        %v9542 = vrot.slane %v9032, %v9541
        %v9543 = vlaneseq
        %v9544 = vshrl.u32 %v9543, 7
        %v9545 = vsub.s32 0, %v9544
        %v9546 = vrot.slane %v9034, %v9545
        %v9675 = vmul.f32 %v1104, %v9038
        %v9676 = vmul.f32 %v1105, %v9042
        %v9677 = vmul.f32 %v1106, %v9046
        %v9678 = vmul.f32 %v1107, %v9050
        %v9679 = vmul.f32 %v1108, %v9054
        %v9680 = vmul.f32 %v1109, %v9058
        %v9681 = vmul.f32 %v1110, %v9062
        %v9682 = vmul.f32 %v1111, %v9066
        %v9683 = vmul.f32 %v1112, %v9070
        %v9684 = vmul.f32 %v1113, %v9074
        %v9685 = vmul.f32 %v1114, %v9078
        %v9686 = vmul.f32 %v1115, %v9082
        %v9687 = vmul.f32 %v1116, %v9086
        %v9688 = vmul.f32 %v1117, %v9090
        %v9689 = vmul.f32 %v1118, %v9094
        %v9690 = vmul.f32 %v1119, %v9098
        %v9691 = vmul.f32 %v1120, %v9102
        %v9692 = vmul.f32 %v1121, %v9106
        %v9693 = vmul.f32 %v1122, %v9110
        %v9694 = vmul.f32 %v1123, %v9114
        %v9695 = vmul.f32 %v1124, %v9118
        %v9696 = vmul.f32 %v1125, %v9122
        %v9697 = vmul.f32 %v1126, %v9126
        %v9698 = vmul.f32 %v1127, %v9130
        %v9699 = vmul.f32 %v1128, %v9134
        %v9700 = vmul.f32 %v1129, %v9138
        %v9701 = vmul.f32 %v1130, %v9142
        %v9702 = vmul.f32 %v1131, %v9146
        %v9703 = vmul.f32 %v1132, %v9150
        %v9704 = vmul.f32 %v1133, %v9154
        %v9705 = vmul.f32 %v1134, %v9158
        %v9706 = vmul.f32 %v1135, %v9162
        %v9707 = vmul.f32 %v1136, %v9166
        %v9708 = vmul.f32 %v1137, %v9170
        %v9709 = vmul.f32 %v1138, %v9174
        %v9710 = vmul.f32 %v1139, %v9178
        %v9711 = vmul.f32 %v1140, %v9182
        %v9712 = vmul.f32 %v1141, %v9186
        %v9713 = vmul.f32 %v1142, %v9190
        %v9714 = vmul.f32 %v1143, %v9194
        %v9715 = vmul.f32 %v1144, %v9198
        %v9716 = vmul.f32 %v1145, %v9202
        %v9717 = vmul.f32 %v1146, %v9206
        %v9718 = vmul.f32 %v1147, %v9210
        %v9719 = vmul.f32 %v1148, %v9214
        %v9720 = vmul.f32 %v1149, %v9218
        %v9721 = vmul.f32 %v1150, %v9222
        %v9722 = vmul.f32 %v1151, %v9226
        %v9723 = vmul.f32 %v1152, %v9230
        %v9724 = vmul.f32 %v1153, %v9234
        %v9725 = vmul.f32 %v1154, %v9238
        %v9726 = vmul.f32 %v1155, %v9242
        %v9727 = vmul.f32 %v1156, %v9246
        %v9728 = vmul.f32 %v1157, %v9250
        %v9729 = vmul.f32 %v1158, %v9254
        %v9730 = vmul.f32 %v1159, %v9258
        %v9731 = vmul.f32 %v1160, %v9262
        %v9732 = vmul.f32 %v1161, %v9266
        %v9733 = vmul.f32 %v1162, %v9270
        %v9734 = vmul.f32 %v1163, %v9274
        %v9735 = vmul.f32 %v1164, %v9278
        %v9736 = vmul.f32 %v1165, %v9282
        %v9737 = vmul.f32 %v1166, %v9286
        %v9738 = vmul.f32 %v1167, %v9290
        %v9739 = vmul.f32 %v1168, %v9294
        %v9740 = vmul.f32 %v1169, %v9298
        %v9741 = vmul.f32 %v1170, %v9302
        %v9742 = vmul.f32 %v1171, %v9306
        %v9743 = vmul.f32 %v1172, %v9310
        %v9744 = vmul.f32 %v1173, %v9314
        %v9745 = vmul.f32 %v1174, %v9318
        %v9746 = vmul.f32 %v1175, %v9322
        %v9747 = vmul.f32 %v1176, %v9326
        %v9748 = vmul.f32 %v1177, %v9330
        %v9749 = vmul.f32 %v1178, %v9334
        %v9750 = vmul.f32 %v1179, %v9338
        %v9751 = vmul.f32 %v1180, %v9342
        %v9752 = vmul.f32 %v1181, %v9346
        %v9753 = vmul.f32 %v1182, %v9350
        %v9754 = vmul.f32 %v1183, %v9354
        %v9755 = vmul.f32 %v1184, %v9358
        %v9756 = vmul.f32 %v1185, %v9362
        %v9757 = vmul.f32 %v1186, %v9366
        %v9758 = vmul.f32 %v1187, %v9370
        %v9759 = vmul.f32 %v1188, %v9374
        %v9760 = vmul.f32 %v1189, %v9378
        %v9761 = vmul.f32 %v1190, %v9382
        %v9762 = vmul.f32 %v1191, %v9386
        %v9763 = vmul.f32 %v1192, %v9390
        %v9764 = vmul.f32 %v1193, %v9394
        %v9765 = vmul.f32 %v1194, %v9398
        %v9766 = vmul.f32 %v1195, %v9402
        %v9767 = vmul.f32 %v1196, %v9406
        %v9768 = vmul.f32 %v1197, %v9410
        %v9769 = vmul.f32 %v1198, %v9414
        %v9770 = vmul.f32 %v1199, %v9418
        %v9771 = vmul.f32 %v1200, %v9422
        %v9772 = vmul.f32 %v1201, %v9426
        %v9773 = vmul.f32 %v1202, %v9430
        %v9774 = vmul.f32 %v1203, %v9434
        %v9775 = vmul.f32 %v1204, %v9438
        %v9776 = vmul.f32 %v1205, %v9442
        %v9777 = vmul.f32 %v1206, %v9446
        %v9778 = vmul.f32 %v1207, %v9450
        %v9779 = vmul.f32 %v1208, %v9454
        %v9780 = vmul.f32 %v1209, %v9458
        %v9781 = vmul.f32 %v1210, %v9462
        %v9782 = vmul.f32 %v1211, %v9466
        %v9783 = vmul.f32 %v1212, %v9470
        %v9784 = vmul.f32 %v1213, %v9474
        %v9785 = vmul.f32 %v1214, %v9478
        %v9786 = vmul.f32 %v1215, %v9482
        %v9787 = vmul.f32 %v1216, %v9486
        %v9788 = vmul.f32 %v1217, %v9490
        %v9789 = vmul.f32 %v1218, %v9494
        %v9790 = vmul.f32 %v1219, %v9498
        %v9791 = vmul.f32 %v1220, %v9502
        %v9792 = vmul.f32 %v1221, %v9506
        %v9793 = vmul.f32 %v1222, %v9510
        %v9794 = vmul.f32 %v1223, %v9514
        %v9795 = vmul.f32 %v1224, %v9518
        %v9796 = vmul.f32 %v1225, %v9522
        %v9797 = vmul.f32 %v1226, %v9526
        %v9798 = vmul.f32 %v1227, %v9530
        %v9799 = vmul.f32 %v1228, %v9534
        %v9800 = vmul.f32 %v1229, %v9538
        %v9801 = vmul.f32 %v1230, %v9542
        %v9802 = vmul.f32 %v1231, %v9546
        %v9811 = vunpack.c.l.b16 %v7570
        %v9812 = vunpack.c.l.b16 %v7571
        %v9813 = vunpack.c.l.b16 %v7572
        %v9814 = vunpack.c.l.b16 %v7573
        %v9815 = vunpack.c.l.b16 %v7574
        %v9816 = vunpack.c.l.b16 %v7575
        %v9817 = vunpack.c.l.b16 %v7576
        %v9818 = vunpack.c.l.b16 %v7577
        %v9819 = vpack.c.b16 %v9812, %v9811
        %v9820 = vpack.c.b16 %v9814, %v9813
        %v9821 = vpack.c.b16 %v9816, %v9815
        %v9822 = vpack.c.b16 %v9818, %v9817
        %v9828 = vsel %vm6609, %v7506, 0
        %v9831 = vsel %vm6609, %v7507, 0
        %v9834 = vsel %vm6609, %v7508, 0
        %v9837 = vsel %vm6609, %v7509, 0
        %v9840 = vsel %vm6609, %v7510, 0
        %v9843 = vsel %vm6609, %v7511, 0
        %v9846 = vsel %vm6609, %v7512, 0
        %v9849 = vsel %vm6609, %v7513, 0
        %v9852 = vsel %vm6609, %v7514, 0
        %v9855 = vsel %vm6609, %v7515, 0
        %v9858 = vsel %vm6609, %v7516, 0
        %v9861 = vsel %vm6609, %v7517, 0
        %v9864 = vsel %vm6609, %v7518, 0
        %v9867 = vsel %vm6609, %v7519, 0
        %v9870 = vsel %vm6609, %v7520, 0
        %v9873 = vsel %vm6609, %v7521, 0
        %v9876 = vsel %vm6609, %v7522, 0
        %v9879 = vsel %vm6609, %v7523, 0
        %v9882 = vsel %vm6609, %v7524, 0
        %v9885 = vsel %vm6609, %v7525, 0
        %v9888 = vsel %vm6609, %v7526, 0
        %v9891 = vsel %vm6609, %v7527, 0
        %v9894 = vsel %vm6609, %v7528, 0
        %v9897 = vsel %vm6609, %v7529, 0
        %v9900 = vsel %vm6609, %v7530, 0
        %v9903 = vsel %vm6609, %v7531, 0
        %v9906 = vsel %vm6609, %v7532, 0
        %v9909 = vsel %vm6609, %v7533, 0
        %v9912 = vsel %vm6609, %v7534, 0
        %v9915 = vsel %vm6609, %v7535, 0
        %v9918 = vsel %vm6609, %v7536, 0
        %v9921 = vsel %vm6609, %v7537, 0
        %v9924 = vsel %vm6609, %v7538, 0
        %v9927 = vsel %vm6609, %v7539, 0
        %v9930 = vsel %vm6609, %v7540, 0
        %v9933 = vsel %vm6609, %v7541, 0
        %v9936 = vsel %vm6609, %v7542, 0
        %v9939 = vsel %vm6609, %v7543, 0
        %v9942 = vsel %vm6609, %v7544, 0
        %v9945 = vsel %vm6609, %v7545, 0
        %v9948 = vsel %vm6609, %v7546, 0
        %v9951 = vsel %vm6609, %v7547, 0
        %v9954 = vsel %vm6609, %v7548, 0
        %v9957 = vsel %vm6609, %v7549, 0
        %v9960 = vsel %vm6609, %v7550, 0
        %v9963 = vsel %vm6609, %v7551, 0
        %v9966 = vsel %vm6609, %v7552, 0
        %v9969 = vsel %vm6609, %v7553, 0
        %v9972 = vsel %vm6609, %v7554, 0
        %v9975 = vsel %vm6609, %v7555, 0
        %v9978 = vsel %vm6609, %v7556, 0
        %v9981 = vsel %vm6609, %v7557, 0
        %v9984 = vsel %vm6609, %v7558, 0
        %v9987 = vsel %vm6609, %v7559, 0
        %v9990 = vsel %vm6609, %v7560, 0
        %v9993 = vsel %vm6609, %v7561, 0
        %v9996 = vsel %vm6609, %v7562, 0
        %v9999 = vsel %vm6609, %v7563, 0
        %v10002 = vsel %vm6609, %v7564, 0
        %v10005 = vsel %vm6609, %v7565, 0
        %v10008 = vsel %vm6609, %v7566, 0
        %v10011 = vsel %vm6609, %v7567, 0
        %v10014 = vsel %vm6609, %v7568, 0
        %v10017 = vsel %vm6609, %v7569, 0
        %10019 = vmatprep.subr.bf16.mxu0 0
        %10020 = vmatpush1.bf16.msra.mxu0 %v9819
        %10021 = vmatprep.subr.bf16.mxu0 0
        %10022 = vmatpush1.bf16.msra.mxu0 %v9820
        %10023 = vmatprep.subr.bf16.mxu0 0
        %10024 = vmatpush1.bf16.msra.mxu0 %v9821
        %10025 = vmatprep.subr.bf16.mxu0 0
        %10026 = vmatpush1.bf16.msra.mxu0 %v9822
        %10027 = vmatprep.subr.bf16.mxu0 0
        %10028 = vmatpush1.bf16.msra.mxu0 0
        %10029 = vmatprep.subr.bf16.mxu0 0
        %10030 = vmatpush1.bf16.msra.mxu0 0
        %10031 = vmatprep.subr.bf16.mxu0 0
        %10032 = vmatpush1.bf16.msra.mxu0 0
        %10033 = vmatprep.subr.bf16.mxu0 0
        %10034 = vmatpush1.bf16.msra.mxu0 0
        %10035 = vmatprep.subr.bf16.mxu0 0
        %10036 = vmatpush1.bf16.msra.mxu0 0
        %10037 = vmatprep.subr.bf16.mxu0 0
        %10038 = vmatpush1.bf16.msra.mxu0 0
        %10039 = vmatprep.subr.bf16.mxu0 0
        %10040 = vmatpush1.bf16.msra.mxu0 0
        %10041 = vmatprep.subr.bf16.mxu0 0
        %10042 = vmatpush1.bf16.msra.mxu0 0
        %10043 = vmatprep.subr.bf16.mxu0 0
        %10044 = vmatpush1.bf16.msra.mxu0 0
        %10045 = vmatprep.subr.bf16.mxu0 0
        %10046 = vmatpush1.bf16.msra.mxu0 0
        %10047 = vmatprep.subr.bf16.mxu0 0
        %10048 = vmatpush1.bf16.msra.mxu0 0
        %10049 = vmatprep.subr.bf16.mxu0 0
        %10050 = vmatpush1.bf16.msra.mxu0 0
        %10051 = vmatprep.mubr.bf16.mxu0 0
        %10052 = vmatmul.mubr.bf16.gmra.mrb[0].mxu0 %v9828
        %v10053 = vpop.f32.mrb[0].mxu0
        %v10054 = vadd.f32 %v9675, %v10053
        %v10055 = vpop.f32.mrb[0].mxu0
        %v10056 = vpop.f32.mrb[0].mxu0
        %v10057 = vadd.f32 %v9676, %v10056
        %v10058 = vpop.f32.mrb[0].mxu0
        %10059 = vmatprep.mubr.bf16.mxu0 0
        %10060 = vmatmul.mubr.bf16.gmra.mrb[0].mxu0 %v9831
        %v10061 = vpop.f32.mrb[0].mxu0
        %v10062 = vadd.f32 %v9677, %v10061
        %v10063 = vpop.f32.mrb[0].mxu0
        %v10064 = vpop.f32.mrb[0].mxu0
        %v10065 = vadd.f32 %v9678, %v10064
        %v10066 = vpop.f32.mrb[0].mxu0
        %10067 = vmatprep.mubr.bf16.mxu0 0
        %10068 = vmatmul.mubr.bf16.gmra.mrb[0].mxu0 %v9834
        %v10069 = vpop.f32.mrb[0].mxu0
        %v10070 = vadd.f32 %v9679, %v10069
        %v10071 = vpop.f32.mrb[0].mxu0
        %v10072 = vpop.f32.mrb[0].mxu0
        %v10073 = vadd.f32 %v9680, %v10072
        %v10074 = vpop.f32.mrb[0].mxu0
        %10075 = vmatprep.mubr.bf16.mxu0 0
        %10076 = vmatmul.mubr.bf16.gmra.mrb[0].mxu0 %v9837
        %v10077 = vpop.f32.mrb[0].mxu0
        %v10078 = vadd.f32 %v9681, %v10077
        %v10079 = vpop.f32.mrb[0].mxu0
        %v10080 = vpop.f32.mrb[0].mxu0
        %v10081 = vadd.f32 %v9682, %v10080
        %v10082 = vpop.f32.mrb[0].mxu0
        %10083 = vmatprep.mubr.bf16.mxu0 0
        %10084 = vmatmul.mubr.bf16.gmra.mrb[0].mxu0 %v9840
        %v10085 = vpop.f32.mrb[0].mxu0
        %v10086 = vadd.f32 %v9683, %v10085
        %v10087 = vpop.f32.mrb[0].mxu0
        %v10088 = vpop.f32.mrb[0].mxu0
        %v10089 = vadd.f32 %v9684, %v10088
        %v10090 = vpop.f32.mrb[0].mxu0
        %10091 = vmatprep.mubr.bf16.mxu0 0
        %10092 = vmatmul.mubr.bf16.gmra.mrb[0].mxu0 %v9843
        %v10093 = vpop.f32.mrb[0].mxu0
        %v10094 = vadd.f32 %v9685, %v10093
        %v10095 = vpop.f32.mrb[0].mxu0
        %v10096 = vpop.f32.mrb[0].mxu0
        %v10097 = vadd.f32 %v9686, %v10096
        %v10098 = vpop.f32.mrb[0].mxu0
        %10099 = vmatprep.mubr.bf16.mxu0 0
        %10100 = vmatmul.mubr.bf16.gmra.mrb[0].mxu0 %v9846
        %v10101 = vpop.f32.mrb[0].mxu0
        %v10102 = vadd.f32 %v9687, %v10101
        %v10103 = vpop.f32.mrb[0].mxu0
        %v10104 = vpop.f32.mrb[0].mxu0
        %v10105 = vadd.f32 %v9688, %v10104
        %v10106 = vpop.f32.mrb[0].mxu0
        %10107 = vmatprep.mubr.bf16.mxu0 0
        %10108 = vmatmul.mubr.bf16.gmra.mrb[0].mxu0 %v9849
        %v10109 = vpop.f32.mrb[0].mxu0
        %v10110 = vadd.f32 %v9689, %v10109
        %v10111 = vpop.f32.mrb[0].mxu0
        %v10112 = vpop.f32.mrb[0].mxu0
        %v10113 = vadd.f32 %v9690, %v10112
        %v10114 = vpop.f32.mrb[0].mxu0
        %10115 = vmatprep.mubr.bf16.mxu0 0
        %10116 = vmatmul.mubr.bf16.gmra.mrb[0].mxu0 %v9852
        %v10117 = vpop.f32.mrb[0].mxu0
        %v10118 = vadd.f32 %v9691, %v10117
        %v10119 = vpop.f32.mrb[0].mxu0
        %v10120 = vpop.f32.mrb[0].mxu0
        %v10121 = vadd.f32 %v9692, %v10120
        %v10122 = vpop.f32.mrb[0].mxu0
        %10123 = vmatprep.mubr.bf16.mxu0 0
        %10124 = vmatmul.mubr.bf16.gmra.mrb[0].mxu0 %v9855
        %v10125 = vpop.f32.mrb[0].mxu0
        %v10126 = vadd.f32 %v9693, %v10125
        %v10127 = vpop.f32.mrb[0].mxu0
        %v10128 = vpop.f32.mrb[0].mxu0
        %v10129 = vadd.f32 %v9694, %v10128
        %v10130 = vpop.f32.mrb[0].mxu0
        %10131 = vmatprep.mubr.bf16.mxu0 0
        %10132 = vmatmul.mubr.bf16.gmra.mrb[0].mxu0 %v9858
        %v10133 = vpop.f32.mrb[0].mxu0
        %v10134 = vadd.f32 %v9695, %v10133
        %v10135 = vpop.f32.mrb[0].mxu0
        %v10136 = vpop.f32.mrb[0].mxu0
        %v10137 = vadd.f32 %v9696, %v10136
        %v10138 = vpop.f32.mrb[0].mxu0
        %10139 = vmatprep.mubr.bf16.mxu0 0
        %10140 = vmatmul.mubr.bf16.gmra.mrb[0].mxu0 %v9861
        %v10141 = vpop.f32.mrb[0].mxu0
        %v10142 = vadd.f32 %v9697, %v10141
        %v10143 = vpop.f32.mrb[0].mxu0
        %v10144 = vpop.f32.mrb[0].mxu0
        %v10145 = vadd.f32 %v9698, %v10144
        %v10146 = vpop.f32.mrb[0].mxu0
        %10147 = vmatprep.mubr.bf16.mxu0 0
        %10148 = vmatmul.mubr.bf16.gmra.mrb[0].mxu0 %v9864
        %v10149 = vpop.f32.mrb[0].mxu0
        %v10150 = vadd.f32 %v9699, %v10149
        %v10151 = vpop.f32.mrb[0].mxu0
        %v10152 = vpop.f32.mrb[0].mxu0
        %v10153 = vadd.f32 %v9700, %v10152
        %v10154 = vpop.f32.mrb[0].mxu0
        %10155 = vmatprep.mubr.bf16.mxu0 0
        %10156 = vmatmul.mubr.bf16.gmra.mrb[0].mxu0 %v9867
        %v10157 = vpop.f32.mrb[0].mxu0
        %v10158 = vadd.f32 %v9701, %v10157
        %v10159 = vpop.f32.mrb[0].mxu0
        %v10160 = vpop.f32.mrb[0].mxu0
        %v10161 = vadd.f32 %v9702, %v10160
        %v10162 = vpop.f32.mrb[0].mxu0
        %10163 = vmatprep.mubr.bf16.mxu0 0
        %10164 = vmatmul.mubr.bf16.gmra.mrb[0].mxu0 %v9870
        %v10165 = vpop.f32.mrb[0].mxu0
        %v10166 = vadd.f32 %v9703, %v10165
        %v10167 = vpop.f32.mrb[0].mxu0
        %v10168 = vpop.f32.mrb[0].mxu0
        %v10169 = vadd.f32 %v9704, %v10168
        %v10170 = vpop.f32.mrb[0].mxu0
        %10171 = vmatprep.mubr.bf16.mxu0 0
        %10172 = vmatmul.mubr.bf16.gmra.mrb[0].mxu0 %v9873
        %v10173 = vpop.f32.mrb[0].mxu0
        %v10174 = vadd.f32 %v9705, %v10173
        %v10175 = vpop.f32.mrb[0].mxu0
        %v10176 = vpop.f32.mrb[0].mxu0
        %v10177 = vadd.f32 %v9706, %v10176
        %v10178 = vpop.f32.mrb[0].mxu0
        %10179 = vmatprep.mubr.bf16.mxu0 0
        %10180 = vmatmul.mubr.bf16.gmra.mrb[0].mxu0 %v9876
        %v10181 = vpop.f32.mrb[0].mxu0
        %v10182 = vadd.f32 %v9707, %v10181
        %v10183 = vpop.f32.mrb[0].mxu0
        %v10184 = vpop.f32.mrb[0].mxu0
        %v10185 = vadd.f32 %v9708, %v10184
        %v10186 = vpop.f32.mrb[0].mxu0
        %10187 = vmatprep.mubr.bf16.mxu0 0
        %10188 = vmatmul.mubr.bf16.gmra.mrb[0].mxu0 %v9879
        %v10189 = vpop.f32.mrb[0].mxu0
        %v10190 = vadd.f32 %v9709, %v10189
        %v10191 = vpop.f32.mrb[0].mxu0
        %v10192 = vpop.f32.mrb[0].mxu0
        %v10193 = vadd.f32 %v9710, %v10192
        %v10194 = vpop.f32.mrb[0].mxu0
        %10195 = vmatprep.mubr.bf16.mxu0 0
        %10196 = vmatmul.mubr.bf16.gmra.mrb[0].mxu0 %v9882
        %v10197 = vpop.f32.mrb[0].mxu0
        %v10198 = vadd.f32 %v9711, %v10197
        %v10199 = vpop.f32.mrb[0].mxu0
        %v10200 = vpop.f32.mrb[0].mxu0
        %v10201 = vadd.f32 %v9712, %v10200
        %v10202 = vpop.f32.mrb[0].mxu0
        %10203 = vmatprep.mubr.bf16.mxu0 0
        %10204 = vmatmul.mubr.bf16.gmra.mrb[0].mxu0 %v9885
        %v10205 = vpop.f32.mrb[0].mxu0
        %v10206 = vadd.f32 %v9713, %v10205
        %v10207 = vpop.f32.mrb[0].mxu0
        %v10208 = vpop.f32.mrb[0].mxu0
        %v10209 = vadd.f32 %v9714, %v10208
        %v10210 = vpop.f32.mrb[0].mxu0
        %10211 = vmatprep.mubr.bf16.mxu0 0
        %10212 = vmatmul.mubr.bf16.gmra.mrb[0].mxu0 %v9888
        %v10213 = vpop.f32.mrb[0].mxu0
        %v10214 = vadd.f32 %v9715, %v10213
        %v10215 = vpop.f32.mrb[0].mxu0
        %v10216 = vpop.f32.mrb[0].mxu0
        %v10217 = vadd.f32 %v9716, %v10216
        %v10218 = vpop.f32.mrb[0].mxu0
        %10219 = vmatprep.mubr.bf16.mxu0 0
        %10220 = vmatmul.mubr.bf16.gmra.mrb[0].mxu0 %v9891
        %v10221 = vpop.f32.mrb[0].mxu0
        %v10222 = vadd.f32 %v9717, %v10221
        %v10223 = vpop.f32.mrb[0].mxu0
        %v10224 = vpop.f32.mrb[0].mxu0
        %v10225 = vadd.f32 %v9718, %v10224
        %v10226 = vpop.f32.mrb[0].mxu0
        %10227 = vmatprep.mubr.bf16.mxu0 0
        %10228 = vmatmul.mubr.bf16.gmra.mrb[0].mxu0 %v9894
        %v10229 = vpop.f32.mrb[0].mxu0
        %v10230 = vadd.f32 %v9719, %v10229
        %v10231 = vpop.f32.mrb[0].mxu0
        %v10232 = vpop.f32.mrb[0].mxu0
        %v10233 = vadd.f32 %v9720, %v10232
        %v10234 = vpop.f32.mrb[0].mxu0
        %10235 = vmatprep.mubr.bf16.mxu0 0
        %10236 = vmatmul.mubr.bf16.gmra.mrb[0].mxu0 %v9897
        %v10237 = vpop.f32.mrb[0].mxu0
        %v10238 = vadd.f32 %v9721, %v10237
        %v10239 = vpop.f32.mrb[0].mxu0
        %v10240 = vpop.f32.mrb[0].mxu0
        %v10241 = vadd.f32 %v9722, %v10240
        %v10242 = vpop.f32.mrb[0].mxu0
        %10243 = vmatprep.mubr.bf16.mxu0 0
        %10244 = vmatmul.mubr.bf16.gmra.mrb[0].mxu0 %v9900
        %v10245 = vpop.f32.mrb[0].mxu0
        %v10246 = vadd.f32 %v9723, %v10245
        %v10247 = vpop.f32.mrb[0].mxu0
        %v10248 = vpop.f32.mrb[0].mxu0
        %v10249 = vadd.f32 %v9724, %v10248
        %v10250 = vpop.f32.mrb[0].mxu0
        %10251 = vmatprep.mubr.bf16.mxu0 0
        %10252 = vmatmul.mubr.bf16.gmra.mrb[0].mxu0 %v9903
        %v10253 = vpop.f32.mrb[0].mxu0
        %v10254 = vadd.f32 %v9725, %v10253
        %v10255 = vpop.f32.mrb[0].mxu0
        %v10256 = vpop.f32.mrb[0].mxu0
        %v10257 = vadd.f32 %v9726, %v10256
        %v10258 = vpop.f32.mrb[0].mxu0
        %10259 = vmatprep.mubr.bf16.mxu0 0
        %10260 = vmatmul.mubr.bf16.gmra.mrb[0].mxu0 %v9906
        %v10261 = vpop.f32.mrb[0].mxu0
        %v10262 = vadd.f32 %v9727, %v10261
        %v10263 = vpop.f32.mrb[0].mxu0
        %v10264 = vpop.f32.mrb[0].mxu0
        %v10265 = vadd.f32 %v9728, %v10264
        %v10266 = vpop.f32.mrb[0].mxu0
        %10267 = vmatprep.mubr.bf16.mxu0 0
        %10268 = vmatmul.mubr.bf16.gmra.mrb[0].mxu0 %v9909
        %v10269 = vpop.f32.mrb[0].mxu0
        %v10270 = vadd.f32 %v9729, %v10269
        %v10271 = vpop.f32.mrb[0].mxu0
        %v10272 = vpop.f32.mrb[0].mxu0
        %v10273 = vadd.f32 %v9730, %v10272
        %v10274 = vpop.f32.mrb[0].mxu0
        %10275 = vmatprep.mubr.bf16.mxu0 0
        %10276 = vmatmul.mubr.bf16.gmra.mrb[0].mxu0 %v9912
        %v10277 = vpop.f32.mrb[0].mxu0
        %v10278 = vadd.f32 %v9731, %v10277
        %v10279 = vpop.f32.mrb[0].mxu0
        %v10280 = vpop.f32.mrb[0].mxu0
        %v10281 = vadd.f32 %v9732, %v10280
        %v10282 = vpop.f32.mrb[0].mxu0
        %10283 = vmatprep.mubr.bf16.mxu0 0
        %10284 = vmatmul.mubr.bf16.gmra.mrb[0].mxu0 %v9915
        %v10285 = vpop.f32.mrb[0].mxu0
        %v10286 = vadd.f32 %v9733, %v10285
        %v10287 = vpop.f32.mrb[0].mxu0
        %v10288 = vpop.f32.mrb[0].mxu0
        %v10289 = vadd.f32 %v9734, %v10288
        %v10290 = vpop.f32.mrb[0].mxu0
        %10291 = vmatprep.mubr.bf16.mxu0 0
        %10292 = vmatmul.mubr.bf16.gmra.mrb[0].mxu0 %v9918
        %v10293 = vpop.f32.mrb[0].mxu0
        %v10294 = vadd.f32 %v9735, %v10293
        %v10295 = vpop.f32.mrb[0].mxu0
        %v10296 = vpop.f32.mrb[0].mxu0
        %v10297 = vadd.f32 %v9736, %v10296
        %v10298 = vpop.f32.mrb[0].mxu0
        %10299 = vmatprep.mubr.bf16.mxu0 0
        %10300 = vmatmul.mubr.bf16.gmra.mrb[0].mxu0 %v9921
        %v10301 = vpop.f32.mrb[0].mxu0
        %v10302 = vadd.f32 %v9737, %v10301
        %v10303 = vpop.f32.mrb[0].mxu0
        %v10304 = vpop.f32.mrb[0].mxu0
        %v10305 = vadd.f32 %v9738, %v10304
        %v10306 = vpop.f32.mrb[0].mxu0
        %10307 = vmatprep.mubr.bf16.mxu0 0
        %10308 = vmatmul.mubr.bf16.gmra.mrb[0].mxu0 %v9924
        %v10309 = vpop.f32.mrb[0].mxu0
        %v10310 = vadd.f32 %v9739, %v10309
        %v10311 = vpop.f32.mrb[0].mxu0
        %v10312 = vpop.f32.mrb[0].mxu0
        %v10313 = vadd.f32 %v9740, %v10312
        %v10314 = vpop.f32.mrb[0].mxu0
        %10315 = vmatprep.mubr.bf16.mxu0 0
        %10316 = vmatmul.mubr.bf16.gmra.mrb[0].mxu0 %v9927
        %v10317 = vpop.f32.mrb[0].mxu0
        %v10318 = vadd.f32 %v9741, %v10317
        %v10319 = vpop.f32.mrb[0].mxu0
        %v10320 = vpop.f32.mrb[0].mxu0
        %v10321 = vadd.f32 %v9742, %v10320
        %v10322 = vpop.f32.mrb[0].mxu0
        %10323 = vmatprep.mubr.bf16.mxu0 0
        %10324 = vmatmul.mubr.bf16.gmra.mrb[0].mxu0 %v9930
        %v10325 = vpop.f32.mrb[0].mxu0
        %v10326 = vadd.f32 %v9743, %v10325
        %v10327 = vpop.f32.mrb[0].mxu0
        %v10328 = vpop.f32.mrb[0].mxu0
        %v10329 = vadd.f32 %v9744, %v10328
        %v10330 = vpop.f32.mrb[0].mxu0
        %10331 = vmatprep.mubr.bf16.mxu0 0
        %10332 = vmatmul.mubr.bf16.gmra.mrb[0].mxu0 %v9933
        %v10333 = vpop.f32.mrb[0].mxu0
        %v10334 = vadd.f32 %v9745, %v10333
        %v10335 = vpop.f32.mrb[0].mxu0
        %v10336 = vpop.f32.mrb[0].mxu0
        %v10337 = vadd.f32 %v9746, %v10336
        %v10338 = vpop.f32.mrb[0].mxu0
        %10339 = vmatprep.mubr.bf16.mxu0 0
        %10340 = vmatmul.mubr.bf16.gmra.mrb[0].mxu0 %v9936
        %v10341 = vpop.f32.mrb[0].mxu0
        %v10342 = vadd.f32 %v9747, %v10341
        %v10343 = vpop.f32.mrb[0].mxu0
        %v10344 = vpop.f32.mrb[0].mxu0
        %v10345 = vadd.f32 %v9748, %v10344
        %v10346 = vpop.f32.mrb[0].mxu0
        %10347 = vmatprep.mubr.bf16.mxu0 0
        %10348 = vmatmul.mubr.bf16.gmra.mrb[0].mxu0 %v9939
        %v10349 = vpop.f32.mrb[0].mxu0
        %v10350 = vadd.f32 %v9749, %v10349
        %v10351 = vpop.f32.mrb[0].mxu0
        %v10352 = vpop.f32.mrb[0].mxu0
        %v10353 = vadd.f32 %v9750, %v10352
        %v10354 = vpop.f32.mrb[0].mxu0
        %10355 = vmatprep.mubr.bf16.mxu0 0
        %10356 = vmatmul.mubr.bf16.gmra.mrb[0].mxu0 %v9942
        %v10357 = vpop.f32.mrb[0].mxu0
        %v10358 = vadd.f32 %v9751, %v10357
        %v10359 = vpop.f32.mrb[0].mxu0
        %v10360 = vpop.f32.mrb[0].mxu0
        %v10361 = vadd.f32 %v9752, %v10360
        %v10362 = vpop.f32.mrb[0].mxu0
        %10363 = vmatprep.mubr.bf16.mxu0 0
        %10364 = vmatmul.mubr.bf16.gmra.mrb[0].mxu0 %v9945
        %v10365 = vpop.f32.mrb[0].mxu0
        %v10366 = vadd.f32 %v9753, %v10365
        %v10367 = vpop.f32.mrb[0].mxu0
        %v10368 = vpop.f32.mrb[0].mxu0
        %v10369 = vadd.f32 %v9754, %v10368
        %v10370 = vpop.f32.mrb[0].mxu0
        %10371 = vmatprep.mubr.bf16.mxu0 0
        %10372 = vmatmul.mubr.bf16.gmra.mrb[0].mxu0 %v9948
        %v10373 = vpop.f32.mrb[0].mxu0
        %v10374 = vadd.f32 %v9755, %v10373
        %v10375 = vpop.f32.mrb[0].mxu0
        %v10376 = vpop.f32.mrb[0].mxu0
        %v10377 = vadd.f32 %v9756, %v10376
        %v10378 = vpop.f32.mrb[0].mxu0
        %10379 = vmatprep.mubr.bf16.mxu0 0
        %10380 = vmatmul.mubr.bf16.gmra.mrb[0].mxu0 %v9951
        %v10381 = vpop.f32.mrb[0].mxu0
        %v10382 = vadd.f32 %v9757, %v10381
        %v10383 = vpop.f32.mrb[0].mxu0
        %v10384 = vpop.f32.mrb[0].mxu0
        %v10385 = vadd.f32 %v9758, %v10384
        %v10386 = vpop.f32.mrb[0].mxu0
        %10387 = vmatprep.mubr.bf16.mxu0 0
        %10388 = vmatmul.mubr.bf16.gmra.mrb[0].mxu0 %v9954
        %v10389 = vpop.f32.mrb[0].mxu0
        %v10390 = vadd.f32 %v9759, %v10389
        %v10391 = vpop.f32.mrb[0].mxu0
        %v10392 = vpop.f32.mrb[0].mxu0
        %v10393 = vadd.f32 %v9760, %v10392
        %v10394 = vpop.f32.mrb[0].mxu0
        %10395 = vmatprep.mubr.bf16.mxu0 0
        %10396 = vmatmul.mubr.bf16.gmra.mrb[0].mxu0 %v9957
        %v10397 = vpop.f32.mrb[0].mxu0
        %v10398 = vadd.f32 %v9761, %v10397
        %v10399 = vpop.f32.mrb[0].mxu0
        %v10400 = vpop.f32.mrb[0].mxu0
        %v10401 = vadd.f32 %v9762, %v10400
        %v10402 = vpop.f32.mrb[0].mxu0
        %10403 = vmatprep.mubr.bf16.mxu0 0
        %10404 = vmatmul.mubr.bf16.gmra.mrb[0].mxu0 %v9960
        %v10405 = vpop.f32.mrb[0].mxu0
        %v10406 = vadd.f32 %v9763, %v10405
        %v10407 = vpop.f32.mrb[0].mxu0
        %v10408 = vpop.f32.mrb[0].mxu0
        %v10409 = vadd.f32 %v9764, %v10408
        %v10410 = vpop.f32.mrb[0].mxu0
        %10411 = vmatprep.mubr.bf16.mxu0 0
        %10412 = vmatmul.mubr.bf16.gmra.mrb[0].mxu0 %v9963
        %v10413 = vpop.f32.mrb[0].mxu0
        %v10414 = vadd.f32 %v9765, %v10413
        %v10415 = vpop.f32.mrb[0].mxu0
        %v10416 = vpop.f32.mrb[0].mxu0
        %v10417 = vadd.f32 %v9766, %v10416
        %v10418 = vpop.f32.mrb[0].mxu0
        %10419 = vmatprep.mubr.bf16.mxu0 0
        %10420 = vmatmul.mubr.bf16.gmra.mrb[0].mxu0 %v9966
        %v10421 = vpop.f32.mrb[0].mxu0
        %v10422 = vadd.f32 %v9767, %v10421
        %v10423 = vpop.f32.mrb[0].mxu0
        %v10424 = vpop.f32.mrb[0].mxu0
        %v10425 = vadd.f32 %v9768, %v10424
        %v10426 = vpop.f32.mrb[0].mxu0
        %10427 = vmatprep.mubr.bf16.mxu0 0
        %10428 = vmatmul.mubr.bf16.gmra.mrb[0].mxu0 %v9969
        %v10429 = vpop.f32.mrb[0].mxu0
        %v10430 = vadd.f32 %v9769, %v10429
        %v10431 = vpop.f32.mrb[0].mxu0
        %v10432 = vpop.f32.mrb[0].mxu0
        %v10433 = vadd.f32 %v9770, %v10432
        %v10434 = vpop.f32.mrb[0].mxu0
        %10435 = vmatprep.mubr.bf16.mxu0 0
        %10436 = vmatmul.mubr.bf16.gmra.mrb[0].mxu0 %v9972
        %v10437 = vpop.f32.mrb[0].mxu0
        %v10438 = vadd.f32 %v9771, %v10437
        %v10439 = vpop.f32.mrb[0].mxu0
        %v10440 = vpop.f32.mrb[0].mxu0
        %v10441 = vadd.f32 %v9772, %v10440
        %v10442 = vpop.f32.mrb[0].mxu0
        %10443 = vmatprep.mubr.bf16.mxu0 0
        %10444 = vmatmul.mubr.bf16.gmra.mrb[0].mxu0 %v9975
        %v10445 = vpop.f32.mrb[0].mxu0
        %v10446 = vadd.f32 %v9773, %v10445
        %v10447 = vpop.f32.mrb[0].mxu0
        %v10448 = vpop.f32.mrb[0].mxu0
        %v10449 = vadd.f32 %v9774, %v10448
        %v10450 = vpop.f32.mrb[0].mxu0
        %10451 = vmatprep.mubr.bf16.mxu0 0
        %10452 = vmatmul.mubr.bf16.gmra.mrb[0].mxu0 %v9978
        %v10453 = vpop.f32.mrb[0].mxu0
        %v10454 = vadd.f32 %v9775, %v10453
        %v10455 = vpop.f32.mrb[0].mxu0
        %v10456 = vpop.f32.mrb[0].mxu0
        %v10457 = vadd.f32 %v9776, %v10456
        %v10458 = vpop.f32.mrb[0].mxu0
        %10459 = vmatprep.mubr.bf16.mxu0 0
        %10460 = vmatmul.mubr.bf16.gmra.mrb[0].mxu0 %v9981
        %v10461 = vpop.f32.mrb[0].mxu0
        %v10462 = vadd.f32 %v9777, %v10461
        %v10463 = vpop.f32.mrb[0].mxu0
        %v10464 = vpop.f32.mrb[0].mxu0
        %v10465 = vadd.f32 %v9778, %v10464
        %v10466 = vpop.f32.mrb[0].mxu0
        %10467 = vmatprep.mubr.bf16.mxu0 0
        %10468 = vmatmul.mubr.bf16.gmra.mrb[0].mxu0 %v9984
        %v10469 = vpop.f32.mrb[0].mxu0
        %v10470 = vadd.f32 %v9779, %v10469
        %v10471 = vpop.f32.mrb[0].mxu0
        %v10472 = vpop.f32.mrb[0].mxu0
        %v10473 = vadd.f32 %v9780, %v10472
        %v10474 = vpop.f32.mrb[0].mxu0
        %10475 = vmatprep.mubr.bf16.mxu0 0
        %10476 = vmatmul.mubr.bf16.gmra.mrb[0].mxu0 %v9987
        %v10477 = vpop.f32.mrb[0].mxu0
        %v10478 = vadd.f32 %v9781, %v10477
        %v10479 = vpop.f32.mrb[0].mxu0
        %v10480 = vpop.f32.mrb[0].mxu0
        %v10481 = vadd.f32 %v9782, %v10480
        %v10482 = vpop.f32.mrb[0].mxu0
        %10483 = vmatprep.mubr.bf16.mxu0 0
        %10484 = vmatmul.mubr.bf16.gmra.mrb[0].mxu0 %v9990
        %v10485 = vpop.f32.mrb[0].mxu0
        %v10486 = vadd.f32 %v9783, %v10485
        %v10487 = vpop.f32.mrb[0].mxu0
        %v10488 = vpop.f32.mrb[0].mxu0
        %v10489 = vadd.f32 %v9784, %v10488
        %v10490 = vpop.f32.mrb[0].mxu0
        %10491 = vmatprep.mubr.bf16.mxu0 0
        %10492 = vmatmul.mubr.bf16.gmra.mrb[0].mxu0 %v9993
        %v10493 = vpop.f32.mrb[0].mxu0
        %v10494 = vadd.f32 %v9785, %v10493
        %v10495 = vpop.f32.mrb[0].mxu0
        %v10496 = vpop.f32.mrb[0].mxu0
        %v10497 = vadd.f32 %v9786, %v10496
        %v10498 = vpop.f32.mrb[0].mxu0
        %10499 = vmatprep.mubr.bf16.mxu0 0
        %10500 = vmatmul.mubr.bf16.gmra.mrb[0].mxu0 %v9996
        %v10501 = vpop.f32.mrb[0].mxu0
        %v10502 = vadd.f32 %v9787, %v10501
        %v10503 = vpop.f32.mrb[0].mxu0
        %v10504 = vpop.f32.mrb[0].mxu0
        %v10505 = vadd.f32 %v9788, %v10504
        %v10506 = vpop.f32.mrb[0].mxu0
        %10507 = vmatprep.mubr.bf16.mxu0 0
        %10508 = vmatmul.mubr.bf16.gmra.mrb[0].mxu0 %v9999
        %v10509 = vpop.f32.mrb[0].mxu0
        %v10510 = vadd.f32 %v9789, %v10509
        %v10511 = vpop.f32.mrb[0].mxu0
        %v10512 = vpop.f32.mrb[0].mxu0
        %v10513 = vadd.f32 %v9790, %v10512
        %v10514 = vpop.f32.mrb[0].mxu0
        %10515 = vmatprep.mubr.bf16.mxu0 0
        %10516 = vmatmul.mubr.bf16.gmra.mrb[0].mxu0 %v10002
        %v10517 = vpop.f32.mrb[0].mxu0
        %v10518 = vadd.f32 %v9791, %v10517
        %v10519 = vpop.f32.mrb[0].mxu0
        %v10520 = vpop.f32.mrb[0].mxu0
        %v10521 = vadd.f32 %v9792, %v10520
        %v10522 = vpop.f32.mrb[0].mxu0
        %10523 = vmatprep.mubr.bf16.mxu0 0
        %10524 = vmatmul.mubr.bf16.gmra.mrb[0].mxu0 %v10005
        %v10525 = vpop.f32.mrb[0].mxu0
        %v10526 = vadd.f32 %v9793, %v10525
        %v10527 = vpop.f32.mrb[0].mxu0
        %v10528 = vpop.f32.mrb[0].mxu0
        %v10529 = vadd.f32 %v9794, %v10528
        %v10530 = vpop.f32.mrb[0].mxu0
        %10531 = vmatprep.mubr.bf16.mxu0 0
        %10532 = vmatmul.mubr.bf16.gmra.mrb[0].mxu0 %v10008
        %v10533 = vpop.f32.mrb[0].mxu0
        %v10534 = vadd.f32 %v9795, %v10533
        %v10535 = vpop.f32.mrb[0].mxu0
        %v10536 = vpop.f32.mrb[0].mxu0
        %v10537 = vadd.f32 %v9796, %v10536
        %v10538 = vpop.f32.mrb[0].mxu0
        %10539 = vmatprep.mubr.bf16.mxu0 0
        %10540 = vmatmul.mubr.bf16.gmra.mrb[0].mxu0 %v10011
        %v10541 = vpop.f32.mrb[0].mxu0
        %v10542 = vadd.f32 %v9797, %v10541
        %v10543 = vpop.f32.mrb[0].mxu0
        %v10544 = vpop.f32.mrb[0].mxu0
        %v10545 = vadd.f32 %v9798, %v10544
        %v10546 = vpop.f32.mrb[0].mxu0
        %10547 = vmatprep.mubr.bf16.mxu0 0
        %10548 = vmatmul.mubr.bf16.gmra.mrb[0].mxu0 %v10014
        %v10549 = vpop.f32.mrb[0].mxu0
        %v10550 = vadd.f32 %v9799, %v10549
        %v10551 = vpop.f32.mrb[0].mxu0
        %v10552 = vpop.f32.mrb[0].mxu0
        %v10553 = vadd.f32 %v9800, %v10552
        %v10554 = vpop.f32.mrb[0].mxu0
        %10555 = vmatprep.mubr.bf16.mxu0 0
        %10556 = vmatmul.mubr.bf16.gmra.mrb[0].mxu0 %v10017
        %v10557 = vpop.f32.mrb[0].mxu0
        %v10558 = vadd.f32 %v9801, %v10557
        %v10559 = vpop.f32.mrb[0].mxu0
        %v10560 = vpop.f32.mrb[0].mxu0
        %v10561 = vadd.f32 %v9802, %v10560
        %v10562 = vpop.f32.mrb[0].mxu0
        %10563 = vdwg.mxu0
        %v10564 = vld [vmem:[%s8] sm:$0x1]
        %v10566 = vlaneseq
        %v10567 = vshrl.u32 %v10566, 7
        %v10568 = vsub.s32 0, %v10567
        %v10569 = vrot.slane %v10564, %v10568
        %v10571 = vadd.f32 %v10054, %v10569
        %v10572 = vadd.f32 %v10057, %v10569
        %v10573 = vadd.f32 %v10062, %v10569
        %v10574 = vadd.f32 %v10065, %v10569
        %v10575 = vadd.f32 %v10070, %v10569
        %v10576 = vadd.f32 %v10073, %v10569
        %v10577 = vadd.f32 %v10078, %v10569
        %v10578 = vadd.f32 %v10081, %v10569
        %v10579 = vadd.f32 %v10086, %v10569
        %v10580 = vadd.f32 %v10089, %v10569
        %v10581 = vadd.f32 %v10094, %v10569
        %v10582 = vadd.f32 %v10097, %v10569
        %v10583 = vadd.f32 %v10102, %v10569
        %v10584 = vadd.f32 %v10105, %v10569
        %v10585 = vadd.f32 %v10110, %v10569
        %v10586 = vadd.f32 %v10113, %v10569
        %v10587 = vadd.f32 %v10118, %v10569
        %v10588 = vadd.f32 %v10121, %v10569
        %v10589 = vadd.f32 %v10126, %v10569
        %v10590 = vadd.f32 %v10129, %v10569
        %v10591 = vadd.f32 %v10134, %v10569
        %v10592 = vadd.f32 %v10137, %v10569
        %v10593 = vadd.f32 %v10142, %v10569
        %v10594 = vadd.f32 %v10145, %v10569
        %v10595 = vadd.f32 %v10150, %v10569
        %v10596 = vadd.f32 %v10153, %v10569
        %v10597 = vadd.f32 %v10158, %v10569
        %v10598 = vadd.f32 %v10161, %v10569
        %v10599 = vadd.f32 %v10166, %v10569
        %v10600 = vadd.f32 %v10169, %v10569
        %v10601 = vadd.f32 %v10174, %v10569
        %v10602 = vadd.f32 %v10177, %v10569
        %v10603 = vadd.f32 %v10182, %v10569
        %v10604 = vadd.f32 %v10185, %v10569
        %v10605 = vadd.f32 %v10190, %v10569
        %v10606 = vadd.f32 %v10193, %v10569
        %v10607 = vadd.f32 %v10198, %v10569
        %v10608 = vadd.f32 %v10201, %v10569
        %v10609 = vadd.f32 %v10206, %v10569
        %v10610 = vadd.f32 %v10209, %v10569
        %v10611 = vadd.f32 %v10214, %v10569
        %v10612 = vadd.f32 %v10217, %v10569
        %v10613 = vadd.f32 %v10222, %v10569
        %v10614 = vadd.f32 %v10225, %v10569
        %v10615 = vadd.f32 %v10230, %v10569
        %v10616 = vadd.f32 %v10233, %v10569
        %v10617 = vadd.f32 %v10238, %v10569
        %v10618 = vadd.f32 %v10241, %v10569
        %v10619 = vadd.f32 %v10246, %v10569
        %v10620 = vadd.f32 %v10249, %v10569
        %v10621 = vadd.f32 %v10254, %v10569
        %v10622 = vadd.f32 %v10257, %v10569
        %v10623 = vadd.f32 %v10262, %v10569
        %v10624 = vadd.f32 %v10265, %v10569
        %v10625 = vadd.f32 %v10270, %v10569
        %v10626 = vadd.f32 %v10273, %v10569
        %v10627 = vadd.f32 %v10278, %v10569
        %v10628 = vadd.f32 %v10281, %v10569
        %v10629 = vadd.f32 %v10286, %v10569
        %v10630 = vadd.f32 %v10289, %v10569
        %v10631 = vadd.f32 %v10294, %v10569
        %v10632 = vadd.f32 %v10297, %v10569
        %v10633 = vadd.f32 %v10302, %v10569
        %v10634 = vadd.f32 %v10305, %v10569
        %v10635 = vadd.f32 %v10310, %v10569
        %v10636 = vadd.f32 %v10313, %v10569
        %v10637 = vadd.f32 %v10318, %v10569
        %v10638 = vadd.f32 %v10321, %v10569
        %v10639 = vadd.f32 %v10326, %v10569
        %v10640 = vadd.f32 %v10329, %v10569
        %v10641 = vadd.f32 %v10334, %v10569
        %v10642 = vadd.f32 %v10337, %v10569
        %v10643 = vadd.f32 %v10342, %v10569
        %v10644 = vadd.f32 %v10345, %v10569
        %v10645 = vadd.f32 %v10350, %v10569
        %v10646 = vadd.f32 %v10353, %v10569
        %v10647 = vadd.f32 %v10358, %v10569
        %v10648 = vadd.f32 %v10361, %v10569
        %v10649 = vadd.f32 %v10366, %v10569
        %v10650 = vadd.f32 %v10369, %v10569
        %v10651 = vadd.f32 %v10374, %v10569
        %v10652 = vadd.f32 %v10377, %v10569
        %v10653 = vadd.f32 %v10382, %v10569
        %v10654 = vadd.f32 %v10385, %v10569
        %v10655 = vadd.f32 %v10390, %v10569
        %v10656 = vadd.f32 %v10393, %v10569
        %v10657 = vadd.f32 %v10398, %v10569
        %v10658 = vadd.f32 %v10401, %v10569
        %v10659 = vadd.f32 %v10406, %v10569
        %v10660 = vadd.f32 %v10409, %v10569
        %v10661 = vadd.f32 %v10414, %v10569
        %v10662 = vadd.f32 %v10417, %v10569
        %v10663 = vadd.f32 %v10422, %v10569
        %v10664 = vadd.f32 %v10425, %v10569
        %v10665 = vadd.f32 %v10430, %v10569
        %v10666 = vadd.f32 %v10433, %v10569
        %v10667 = vadd.f32 %v10438, %v10569
        %v10668 = vadd.f32 %v10441, %v10569
        %v10669 = vadd.f32 %v10446, %v10569
        %v10670 = vadd.f32 %v10449, %v10569
        %v10671 = vadd.f32 %v10454, %v10569
        %v10672 = vadd.f32 %v10457, %v10569
        %v10673 = vadd.f32 %v10462, %v10569
        %v10674 = vadd.f32 %v10465, %v10569
        %v10675 = vadd.f32 %v10470, %v10569
        %v10676 = vadd.f32 %v10473, %v10569
        %v10677 = vadd.f32 %v10478, %v10569
        %v10678 = vadd.f32 %v10481, %v10569
        %v10679 = vadd.f32 %v10486, %v10569
        %v10680 = vadd.f32 %v10489, %v10569
        %v10681 = vadd.f32 %v10494, %v10569
        %v10682 = vadd.f32 %v10497, %v10569
        %v10683 = vadd.f32 %v10502, %v10569
        %v10684 = vadd.f32 %v10505, %v10569
        %v10685 = vadd.f32 %v10510, %v10569
        %v10686 = vadd.f32 %v10513, %v10569
        %v10687 = vadd.f32 %v10518, %v10569
        %v10688 = vadd.f32 %v10521, %v10569
        %v10689 = vadd.f32 %v10526, %v10569
        %v10690 = vadd.f32 %v10529, %v10569
        %v10691 = vadd.f32 %v10534, %v10569
        %v10692 = vadd.f32 %v10537, %v10569
        %v10693 = vadd.f32 %v10542, %v10569
        %v10694 = vadd.f32 %v10545, %v10569
        %v10695 = vadd.f32 %v10550, %v10569
        %v10696 = vadd.f32 %v10553, %v10569
        %v10697 = vadd.f32 %v10558, %v10569
        %v10698 = vadd.f32 %v10561, %v10569
        %v10699 = vmax.f32 %v10571, 0.0
        %v10700 = vmax.f32 %v10572, 0.0
        %v10701 = vmax.f32 %v10573, 0.0
        %v10702 = vmax.f32 %v10574, 0.0
        %v10703 = vmax.f32 %v10575, 0.0
        %v10704 = vmax.f32 %v10576, 0.0
        %v10705 = vmax.f32 %v10577, 0.0
        %v10706 = vmax.f32 %v10578, 0.0
        %v10707 = vmax.f32 %v10579, 0.0
        %v10708 = vmax.f32 %v10580, 0.0
        %v10709 = vmax.f32 %v10581, 0.0
        %v10710 = vmax.f32 %v10582, 0.0
        %v10711 = vmax.f32 %v10583, 0.0
        %v10712 = vmax.f32 %v10584, 0.0
        %v10713 = vmax.f32 %v10585, 0.0
        %v10714 = vmax.f32 %v10586, 0.0
        %v10715 = vmax.f32 %v10587, 0.0
        %v10716 = vmax.f32 %v10588, 0.0
        %v10717 = vmax.f32 %v10589, 0.0
        %v10718 = vmax.f32 %v10590, 0.0
        %v10719 = vmax.f32 %v10591, 0.0
        %v10720 = vmax.f32 %v10592, 0.0
        %v10721 = vmax.f32 %v10593, 0.0
        %v10722 = vmax.f32 %v10594, 0.0
        %v10723 = vmax.f32 %v10595, 0.0
        %v10724 = vmax.f32 %v10596, 0.0
        %v10725 = vmax.f32 %v10597, 0.0
        %v10726 = vmax.f32 %v10598, 0.0
        %v10727 = vmax.f32 %v10599, 0.0
        %v10728 = vmax.f32 %v10600, 0.0
        %v10729 = vmax.f32 %v10601, 0.0
        %v10730 = vmax.f32 %v10602, 0.0
        %v10731 = vmax.f32 %v10603, 0.0
        %v10732 = vmax.f32 %v10604, 0.0
        %v10733 = vmax.f32 %v10605, 0.0
        %v10734 = vmax.f32 %v10606, 0.0
        %v10735 = vmax.f32 %v10607, 0.0
        %v10736 = vmax.f32 %v10608, 0.0
        %v10737 = vmax.f32 %v10609, 0.0
        %v10738 = vmax.f32 %v10610, 0.0
        %v10739 = vmax.f32 %v10611, 0.0
        %v10740 = vmax.f32 %v10612, 0.0
        %v10741 = vmax.f32 %v10613, 0.0
        %v10742 = vmax.f32 %v10614, 0.0
        %v10743 = vmax.f32 %v10615, 0.0
        %v10744 = vmax.f32 %v10616, 0.0
        %v10745 = vmax.f32 %v10617, 0.0
        %v10746 = vmax.f32 %v10618, 0.0
        %v10747 = vmax.f32 %v10619, 0.0
        %v10748 = vmax.f32 %v10620, 0.0
        %v10749 = vmax.f32 %v10621, 0.0
        %v10750 = vmax.f32 %v10622, 0.0
        %v10751 = vmax.f32 %v10623, 0.0
        %v10752 = vmax.f32 %v10624, 0.0
        %v10753 = vmax.f32 %v10625, 0.0
        %v10754 = vmax.f32 %v10626, 0.0
        %v10755 = vmax.f32 %v10627, 0.0
        %v10756 = vmax.f32 %v10628, 0.0
        %v10757 = vmax.f32 %v10629, 0.0
        %v10758 = vmax.f32 %v10630, 0.0
        %v10759 = vmax.f32 %v10631, 0.0
        %v10760 = vmax.f32 %v10632, 0.0
        %v10761 = vmax.f32 %v10633, 0.0
        %v10762 = vmax.f32 %v10634, 0.0
        %v10763 = vmax.f32 %v10635, 0.0
        %v10764 = vmax.f32 %v10636, 0.0
        %v10765 = vmax.f32 %v10637, 0.0
        %v10766 = vmax.f32 %v10638, 0.0
        %v10767 = vmax.f32 %v10639, 0.0
        %v10768 = vmax.f32 %v10640, 0.0
        %v10769 = vmax.f32 %v10641, 0.0
        %v10770 = vmax.f32 %v10642, 0.0
        %v10771 = vmax.f32 %v10643, 0.0
        %v10772 = vmax.f32 %v10644, 0.0
        %v10773 = vmax.f32 %v10645, 0.0
        %v10774 = vmax.f32 %v10646, 0.0
        %v10775 = vmax.f32 %v10647, 0.0
        %v10776 = vmax.f32 %v10648, 0.0
        %v10777 = vmax.f32 %v10649, 0.0
        %v10778 = vmax.f32 %v10650, 0.0
        %v10779 = vmax.f32 %v10651, 0.0
        %v10780 = vmax.f32 %v10652, 0.0
        %v10781 = vmax.f32 %v10653, 0.0
        %v10782 = vmax.f32 %v10654, 0.0
        %v10783 = vmax.f32 %v10655, 0.0
        %v10784 = vmax.f32 %v10656, 0.0
        %v10785 = vmax.f32 %v10657, 0.0
        %v10786 = vmax.f32 %v10658, 0.0
        %v10787 = vmax.f32 %v10659, 0.0
        %v10788 = vmax.f32 %v10660, 0.0
        %v10789 = vmax.f32 %v10661, 0.0
        %v10790 = vmax.f32 %v10662, 0.0
        %v10791 = vmax.f32 %v10663, 0.0
        %v10792 = vmax.f32 %v10664, 0.0
        %v10793 = vmax.f32 %v10665, 0.0
        %v10794 = vmax.f32 %v10666, 0.0
        %v10795 = vmax.f32 %v10667, 0.0
        %v10796 = vmax.f32 %v10668, 0.0
        %v10797 = vmax.f32 %v10669, 0.0
        %v10798 = vmax.f32 %v10670, 0.0
        %v10799 = vmax.f32 %v10671, 0.0
        %v10800 = vmax.f32 %v10672, 0.0
        %v10801 = vmax.f32 %v10673, 0.0
        %v10802 = vmax.f32 %v10674, 0.0
        %v10803 = vmax.f32 %v10675, 0.0
        %v10804 = vmax.f32 %v10676, 0.0
        %v10805 = vmax.f32 %v10677, 0.0
        %v10806 = vmax.f32 %v10678, 0.0
        %v10807 = vmax.f32 %v10679, 0.0
        %v10808 = vmax.f32 %v10680, 0.0
        %v10809 = vmax.f32 %v10681, 0.0
        %v10810 = vmax.f32 %v10682, 0.0
        %v10811 = vmax.f32 %v10683, 0.0
        %v10812 = vmax.f32 %v10684, 0.0
        %v10813 = vmax.f32 %v10685, 0.0
        %v10814 = vmax.f32 %v10686, 0.0
        %v10815 = vmax.f32 %v10687, 0.0
        %v10816 = vmax.f32 %v10688, 0.0
        %v10817 = vmax.f32 %v10689, 0.0
        %v10818 = vmax.f32 %v10690, 0.0
        %v10819 = vmax.f32 %v10691, 0.0
        %v10820 = vmax.f32 %v10692, 0.0
        %v10821 = vmax.f32 %v10693, 0.0
        %v10822 = vmax.f32 %v10694, 0.0
        %v10823 = vmax.f32 %v10695, 0.0
        %v10824 = vmax.f32 %v10696, 0.0
        %v10825 = vmax.f32 %v10697, 0.0
        %v10826 = vmax.f32 %v10698, 0.0
        %v10827 = vrot.slane %v10699, 4
        %v10828 = vmax.f32 %v10699, %v10827
        %v10829 = vrot.slane %v10828, 2
        %v10830 = vmax.f32 %v10828, %v10829
        %v10831 = vrot.slane %v10830, 1
        %v10832 = vmax.f32 %v10830, %v10831
        %v10833 = vrot.slane %v10700, 4
        %v10834 = vmax.f32 %v10700, %v10833
        %v10835 = vrot.slane %v10834, 2
        %v10836 = vmax.f32 %v10834, %v10835
        %v10837 = vrot.slane %v10836, 1
        %v10838 = vmax.f32 %v10836, %v10837
        %v10839 = vrot.slane %v10701, 4
        %v10840 = vmax.f32 %v10701, %v10839
        %v10841 = vrot.slane %v10840, 2
        %v10842 = vmax.f32 %v10840, %v10841
        %v10843 = vrot.slane %v10842, 1
        %v10844 = vmax.f32 %v10842, %v10843
        %v10845 = vrot.slane %v10702, 4
        %v10846 = vmax.f32 %v10702, %v10845
        %v10847 = vrot.slane %v10846, 2
        %v10848 = vmax.f32 %v10846, %v10847
        %v10849 = vrot.slane %v10848, 1
        %v10850 = vmax.f32 %v10848, %v10849
        %v10851 = vrot.slane %v10703, 4
        %v10852 = vmax.f32 %v10703, %v10851
        %v10853 = vrot.slane %v10852, 2
        %v10854 = vmax.f32 %v10852, %v10853
        %v10855 = vrot.slane %v10854, 1
        %v10856 = vmax.f32 %v10854, %v10855
        %v10857 = vrot.slane %v10704, 4
        %v10858 = vmax.f32 %v10704, %v10857
        %v10859 = vrot.slane %v10858, 2
        %v10860 = vmax.f32 %v10858, %v10859
        %v10861 = vrot.slane %v10860, 1
        %v10862 = vmax.f32 %v10860, %v10861
        %v10863 = vrot.slane %v10705, 4
        %v10864 = vmax.f32 %v10705, %v10863
        %v10865 = vrot.slane %v10864, 2
        %v10866 = vmax.f32 %v10864, %v10865
        %v10867 = vrot.slane %v10866, 1
        %v10868 = vmax.f32 %v10866, %v10867
        %v10869 = vrot.slane %v10706, 4
        %v10870 = vmax.f32 %v10706, %v10869
        %v10871 = vrot.slane %v10870, 2
        %v10872 = vmax.f32 %v10870, %v10871
        %v10873 = vrot.slane %v10872, 1
        %v10874 = vmax.f32 %v10872, %v10873
        %v10875 = vrot.slane %v10707, 4
        %v10876 = vmax.f32 %v10707, %v10875
        %v10877 = vrot.slane %v10876, 2
        %v10878 = vmax.f32 %v10876, %v10877
        %v10879 = vrot.slane %v10878, 1
        %v10880 = vmax.f32 %v10878, %v10879
        %v10881 = vrot.slane %v10708, 4
        %v10882 = vmax.f32 %v10708, %v10881
        %v10883 = vrot.slane %v10882, 2
        %v10884 = vmax.f32 %v10882, %v10883
        %v10885 = vrot.slane %v10884, 1
        %v10886 = vmax.f32 %v10884, %v10885
        %v10887 = vrot.slane %v10709, 4
        %v10888 = vmax.f32 %v10709, %v10887
        %v10889 = vrot.slane %v10888, 2
        %v10890 = vmax.f32 %v10888, %v10889
        %v10891 = vrot.slane %v10890, 1
        %v10892 = vmax.f32 %v10890, %v10891
        %v10893 = vrot.slane %v10710, 4
        %v10894 = vmax.f32 %v10710, %v10893
        %v10895 = vrot.slane %v10894, 2
        %v10896 = vmax.f32 %v10894, %v10895
        %v10897 = vrot.slane %v10896, 1
        %v10898 = vmax.f32 %v10896, %v10897
        %v10899 = vrot.slane %v10711, 4
        %v10900 = vmax.f32 %v10711, %v10899
        %v10901 = vrot.slane %v10900, 2
        %v10902 = vmax.f32 %v10900, %v10901
        %v10903 = vrot.slane %v10902, 1
        %v10904 = vmax.f32 %v10902, %v10903
        %v10905 = vrot.slane %v10712, 4
        %v10906 = vmax.f32 %v10712, %v10905
        %v10907 = vrot.slane %v10906, 2
        %v10908 = vmax.f32 %v10906, %v10907
        %v10909 = vrot.slane %v10908, 1
        %v10910 = vmax.f32 %v10908, %v10909
        %v10911 = vrot.slane %v10713, 4
        %v10912 = vmax.f32 %v10713, %v10911
        %v10913 = vrot.slane %v10912, 2
        %v10914 = vmax.f32 %v10912, %v10913
        %v10915 = vrot.slane %v10914, 1
        %v10916 = vmax.f32 %v10914, %v10915
        %v10917 = vrot.slane %v10714, 4
        %v10918 = vmax.f32 %v10714, %v10917
        %v10919 = vrot.slane %v10918, 2
        %v10920 = vmax.f32 %v10918, %v10919
        %v10921 = vrot.slane %v10920, 1
        %v10922 = vmax.f32 %v10920, %v10921
        %v10923 = vrot.slane %v10715, 4
        %v10924 = vmax.f32 %v10715, %v10923
        %v10925 = vrot.slane %v10924, 2
        %v10926 = vmax.f32 %v10924, %v10925
        %v10927 = vrot.slane %v10926, 1
        %v10928 = vmax.f32 %v10926, %v10927
        %v10929 = vrot.slane %v10716, 4
        %v10930 = vmax.f32 %v10716, %v10929
        %v10931 = vrot.slane %v10930, 2
        %v10932 = vmax.f32 %v10930, %v10931
        %v10933 = vrot.slane %v10932, 1
        %v10934 = vmax.f32 %v10932, %v10933
        %v10935 = vrot.slane %v10717, 4
        %v10936 = vmax.f32 %v10717, %v10935
        %v10937 = vrot.slane %v10936, 2
        %v10938 = vmax.f32 %v10936, %v10937
        %v10939 = vrot.slane %v10938, 1
        %v10940 = vmax.f32 %v10938, %v10939
        %v10941 = vrot.slane %v10718, 4
        %v10942 = vmax.f32 %v10718, %v10941
        %v10943 = vrot.slane %v10942, 2
        %v10944 = vmax.f32 %v10942, %v10943
        %v10945 = vrot.slane %v10944, 1
        %v10946 = vmax.f32 %v10944, %v10945
        %v10947 = vrot.slane %v10719, 4
        %v10948 = vmax.f32 %v10719, %v10947
        %v10949 = vrot.slane %v10948, 2
        %v10950 = vmax.f32 %v10948, %v10949
        %v10951 = vrot.slane %v10950, 1
        %v10952 = vmax.f32 %v10950, %v10951
        %v10953 = vrot.slane %v10720, 4
        %v10954 = vmax.f32 %v10720, %v10953
        %v10955 = vrot.slane %v10954, 2
        %v10956 = vmax.f32 %v10954, %v10955
        %v10957 = vrot.slane %v10956, 1
        %v10958 = vmax.f32 %v10956, %v10957
        %v10959 = vrot.slane %v10721, 4
        %v10960 = vmax.f32 %v10721, %v10959
        %v10961 = vrot.slane %v10960, 2
        %v10962 = vmax.f32 %v10960, %v10961
        %v10963 = vrot.slane %v10962, 1
        %v10964 = vmax.f32 %v10962, %v10963
        %v10965 = vrot.slane %v10722, 4
        %v10966 = vmax.f32 %v10722, %v10965
        %v10967 = vrot.slane %v10966, 2
        %v10968 = vmax.f32 %v10966, %v10967
        %v10969 = vrot.slane %v10968, 1
        %v10970 = vmax.f32 %v10968, %v10969
        %v10971 = vrot.slane %v10723, 4
        %v10972 = vmax.f32 %v10723, %v10971
        %v10973 = vrot.slane %v10972, 2
        %v10974 = vmax.f32 %v10972, %v10973
        %v10975 = vrot.slane %v10974, 1
        %v10976 = vmax.f32 %v10974, %v10975
        %v10977 = vrot.slane %v10724, 4
        %v10978 = vmax.f32 %v10724, %v10977
        %v10979 = vrot.slane %v10978, 2
        %v10980 = vmax.f32 %v10978, %v10979
        %v10981 = vrot.slane %v10980, 1
        %v10982 = vmax.f32 %v10980, %v10981
        %v10983 = vrot.slane %v10725, 4
        %v10984 = vmax.f32 %v10725, %v10983
        %v10985 = vrot.slane %v10984, 2
        %v10986 = vmax.f32 %v10984, %v10985
        %v10987 = vrot.slane %v10986, 1
        %v10988 = vmax.f32 %v10986, %v10987
        %v10989 = vrot.slane %v10726, 4
        %v10990 = vmax.f32 %v10726, %v10989
        %v10991 = vrot.slane %v10990, 2
        %v10992 = vmax.f32 %v10990, %v10991
        %v10993 = vrot.slane %v10992, 1
        %v10994 = vmax.f32 %v10992, %v10993
        %v10995 = vrot.slane %v10727, 4
        %v10996 = vmax.f32 %v10727, %v10995
        %v10997 = vrot.slane %v10996, 2
        %v10998 = vmax.f32 %v10996, %v10997
        %v10999 = vrot.slane %v10998, 1
        %v11000 = vmax.f32 %v10998, %v10999
        %v11001 = vrot.slane %v10728, 4
        %v11002 = vmax.f32 %v10728, %v11001
        %v11003 = vrot.slane %v11002, 2
        %v11004 = vmax.f32 %v11002, %v11003
        %v11005 = vrot.slane %v11004, 1
        %v11006 = vmax.f32 %v11004, %v11005
        %v11007 = vrot.slane %v10729, 4
        %v11008 = vmax.f32 %v10729, %v11007
        %v11009 = vrot.slane %v11008, 2
        %v11010 = vmax.f32 %v11008, %v11009
        %v11011 = vrot.slane %v11010, 1
        %v11012 = vmax.f32 %v11010, %v11011
        %v11013 = vrot.slane %v10730, 4
        %v11014 = vmax.f32 %v10730, %v11013
        %v11015 = vrot.slane %v11014, 2
        %v11016 = vmax.f32 %v11014, %v11015
        %v11017 = vrot.slane %v11016, 1
        %v11018 = vmax.f32 %v11016, %v11017
        %v11019 = vrot.slane %v10731, 4
        %v11020 = vmax.f32 %v10731, %v11019
        %v11021 = vrot.slane %v11020, 2
        %v11022 = vmax.f32 %v11020, %v11021
        %v11023 = vrot.slane %v11022, 1
        %v11024 = vmax.f32 %v11022, %v11023
        %v11025 = vrot.slane %v10732, 4
        %v11026 = vmax.f32 %v10732, %v11025
        %v11027 = vrot.slane %v11026, 2
        %v11028 = vmax.f32 %v11026, %v11027
        %v11029 = vrot.slane %v11028, 1
        %v11030 = vmax.f32 %v11028, %v11029
        %v11031 = vrot.slane %v10733, 4
        %v11032 = vmax.f32 %v10733, %v11031
        %v11033 = vrot.slane %v11032, 2
        %v11034 = vmax.f32 %v11032, %v11033
        %v11035 = vrot.slane %v11034, 1
        %v11036 = vmax.f32 %v11034, %v11035
        %v11037 = vrot.slane %v10734, 4
        %v11038 = vmax.f32 %v10734, %v11037
        %v11039 = vrot.slane %v11038, 2
        %v11040 = vmax.f32 %v11038, %v11039
        %v11041 = vrot.slane %v11040, 1
        %v11042 = vmax.f32 %v11040, %v11041
        %v11043 = vrot.slane %v10735, 4
        %v11044 = vmax.f32 %v10735, %v11043
        %v11045 = vrot.slane %v11044, 2
        %v11046 = vmax.f32 %v11044, %v11045
        %v11047 = vrot.slane %v11046, 1
        %v11048 = vmax.f32 %v11046, %v11047
        %v11049 = vrot.slane %v10736, 4
        %v11050 = vmax.f32 %v10736, %v11049
        %v11051 = vrot.slane %v11050, 2
        %v11052 = vmax.f32 %v11050, %v11051
        %v11053 = vrot.slane %v11052, 1
        %v11054 = vmax.f32 %v11052, %v11053
        %v11055 = vrot.slane %v10737, 4
        %v11056 = vmax.f32 %v10737, %v11055
        %v11057 = vrot.slane %v11056, 2
        %v11058 = vmax.f32 %v11056, %v11057
        %v11059 = vrot.slane %v11058, 1
        %v11060 = vmax.f32 %v11058, %v11059
        %v11061 = vrot.slane %v10738, 4
        %v11062 = vmax.f32 %v10738, %v11061
        %v11063 = vrot.slane %v11062, 2
        %v11064 = vmax.f32 %v11062, %v11063
        %v11065 = vrot.slane %v11064, 1
        %v11066 = vmax.f32 %v11064, %v11065
        %v11067 = vrot.slane %v10739, 4
        %v11068 = vmax.f32 %v10739, %v11067
        %v11069 = vrot.slane %v11068, 2
        %v11070 = vmax.f32 %v11068, %v11069
        %v11071 = vrot.slane %v11070, 1
        %v11072 = vmax.f32 %v11070, %v11071
        %v11073 = vrot.slane %v10740, 4
        %v11074 = vmax.f32 %v10740, %v11073
        %v11075 = vrot.slane %v11074, 2
        %v11076 = vmax.f32 %v11074, %v11075
        %v11077 = vrot.slane %v11076, 1
        %v11078 = vmax.f32 %v11076, %v11077
        %v11079 = vrot.slane %v10741, 4
        %v11080 = vmax.f32 %v10741, %v11079
        %v11081 = vrot.slane %v11080, 2
        %v11082 = vmax.f32 %v11080, %v11081
        %v11083 = vrot.slane %v11082, 1
        %v11084 = vmax.f32 %v11082, %v11083
        %v11085 = vrot.slane %v10742, 4
        %v11086 = vmax.f32 %v10742, %v11085
        %v11087 = vrot.slane %v11086, 2
        %v11088 = vmax.f32 %v11086, %v11087
        %v11089 = vrot.slane %v11088, 1
        %v11090 = vmax.f32 %v11088, %v11089
        %v11091 = vrot.slane %v10743, 4
        %v11092 = vmax.f32 %v10743, %v11091
        %v11093 = vrot.slane %v11092, 2
        %v11094 = vmax.f32 %v11092, %v11093
        %v11095 = vrot.slane %v11094, 1
        %v11096 = vmax.f32 %v11094, %v11095
        %v11097 = vrot.slane %v10744, 4
        %v11098 = vmax.f32 %v10744, %v11097
        %v11099 = vrot.slane %v11098, 2
        %v11100 = vmax.f32 %v11098, %v11099
        %v11101 = vrot.slane %v11100, 1
        %v11102 = vmax.f32 %v11100, %v11101
        %v11103 = vrot.slane %v10745, 4
        %v11104 = vmax.f32 %v10745, %v11103
        %v11105 = vrot.slane %v11104, 2
        %v11106 = vmax.f32 %v11104, %v11105
        %v11107 = vrot.slane %v11106, 1
        %v11108 = vmax.f32 %v11106, %v11107
        %v11109 = vrot.slane %v10746, 4
        %v11110 = vmax.f32 %v10746, %v11109
        %v11111 = vrot.slane %v11110, 2
        %v11112 = vmax.f32 %v11110, %v11111
        %v11113 = vrot.slane %v11112, 1
        %v11114 = vmax.f32 %v11112, %v11113
        %v11115 = vrot.slane %v10747, 4
        %v11116 = vmax.f32 %v10747, %v11115
        %v11117 = vrot.slane %v11116, 2
        %v11118 = vmax.f32 %v11116, %v11117
        %v11119 = vrot.slane %v11118, 1
        %v11120 = vmax.f32 %v11118, %v11119
        %v11121 = vrot.slane %v10748, 4
        %v11122 = vmax.f32 %v10748, %v11121
        %v11123 = vrot.slane %v11122, 2
        %v11124 = vmax.f32 %v11122, %v11123
        %v11125 = vrot.slane %v11124, 1
        %v11126 = vmax.f32 %v11124, %v11125
        %v11127 = vrot.slane %v10749, 4
        %v11128 = vmax.f32 %v10749, %v11127
        %v11129 = vrot.slane %v11128, 2
        %v11130 = vmax.f32 %v11128, %v11129
        %v11131 = vrot.slane %v11130, 1
        %v11132 = vmax.f32 %v11130, %v11131
        %v11133 = vrot.slane %v10750, 4
        %v11134 = vmax.f32 %v10750, %v11133
        %v11135 = vrot.slane %v11134, 2
        %v11136 = vmax.f32 %v11134, %v11135
        %v11137 = vrot.slane %v11136, 1
        %v11138 = vmax.f32 %v11136, %v11137
        %v11139 = vrot.slane %v10751, 4
        %v11140 = vmax.f32 %v10751, %v11139
        %v11141 = vrot.slane %v11140, 2
        %v11142 = vmax.f32 %v11140, %v11141
        %v11143 = vrot.slane %v11142, 1
        %v11144 = vmax.f32 %v11142, %v11143
        %v11145 = vrot.slane %v10752, 4
        %v11146 = vmax.f32 %v10752, %v11145
        %v11147 = vrot.slane %v11146, 2
        %v11148 = vmax.f32 %v11146, %v11147
        %v11149 = vrot.slane %v11148, 1
        %v11150 = vmax.f32 %v11148, %v11149
        %v11151 = vrot.slane %v10753, 4
        %v11152 = vmax.f32 %v10753, %v11151
        %v11153 = vrot.slane %v11152, 2
        %v11154 = vmax.f32 %v11152, %v11153
        %v11155 = vrot.slane %v11154, 1
        %v11156 = vmax.f32 %v11154, %v11155
        %v11157 = vrot.slane %v10754, 4
        %v11158 = vmax.f32 %v10754, %v11157
        %v11159 = vrot.slane %v11158, 2
        %v11160 = vmax.f32 %v11158, %v11159
        %v11161 = vrot.slane %v11160, 1
        %v11162 = vmax.f32 %v11160, %v11161
        %v11163 = vrot.slane %v10755, 4
        %v11164 = vmax.f32 %v10755, %v11163
        %v11165 = vrot.slane %v11164, 2
        %v11166 = vmax.f32 %v11164, %v11165
        %v11167 = vrot.slane %v11166, 1
        %v11168 = vmax.f32 %v11166, %v11167
        %v11169 = vrot.slane %v10756, 4
        %v11170 = vmax.f32 %v10756, %v11169
        %v11171 = vrot.slane %v11170, 2
        %v11172 = vmax.f32 %v11170, %v11171
        %v11173 = vrot.slane %v11172, 1
        %v11174 = vmax.f32 %v11172, %v11173
        %v11175 = vrot.slane %v10757, 4
        %v11176 = vmax.f32 %v10757, %v11175
        %v11177 = vrot.slane %v11176, 2
        %v11178 = vmax.f32 %v11176, %v11177
        %v11179 = vrot.slane %v11178, 1
        %v11180 = vmax.f32 %v11178, %v11179
        %v11181 = vrot.slane %v10758, 4
        %v11182 = vmax.f32 %v10758, %v11181
        %v11183 = vrot.slane %v11182, 2
        %v11184 = vmax.f32 %v11182, %v11183
        %v11185 = vrot.slane %v11184, 1
        %v11186 = vmax.f32 %v11184, %v11185
        %v11187 = vrot.slane %v10759, 4
        %v11188 = vmax.f32 %v10759, %v11187
        %v11189 = vrot.slane %v11188, 2
        %v11190 = vmax.f32 %v11188, %v11189
        %v11191 = vrot.slane %v11190, 1
        %v11192 = vmax.f32 %v11190, %v11191
        %v11193 = vrot.slane %v10760, 4
        %v11194 = vmax.f32 %v10760, %v11193
        %v11195 = vrot.slane %v11194, 2
        %v11196 = vmax.f32 %v11194, %v11195
        %v11197 = vrot.slane %v11196, 1
        %v11198 = vmax.f32 %v11196, %v11197
        %v11199 = vrot.slane %v10761, 4
        %v11200 = vmax.f32 %v10761, %v11199
        %v11201 = vrot.slane %v11200, 2
        %v11202 = vmax.f32 %v11200, %v11201
        %v11203 = vrot.slane %v11202, 1
        %v11204 = vmax.f32 %v11202, %v11203
        %v11205 = vrot.slane %v10762, 4
        %v11206 = vmax.f32 %v10762, %v11205
        %v11207 = vrot.slane %v11206, 2
        %v11208 = vmax.f32 %v11206, %v11207
        %v11209 = vrot.slane %v11208, 1
        %v11210 = vmax.f32 %v11208, %v11209
        %v11211 = vrot.slane %v10763, 4
        %v11212 = vmax.f32 %v10763, %v11211
        %v11213 = vrot.slane %v11212, 2
        %v11214 = vmax.f32 %v11212, %v11213
        %v11215 = vrot.slane %v11214, 1
        %v11216 = vmax.f32 %v11214, %v11215
        %v11217 = vrot.slane %v10764, 4
        %v11218 = vmax.f32 %v10764, %v11217
        %v11219 = vrot.slane %v11218, 2
        %v11220 = vmax.f32 %v11218, %v11219
        %v11221 = vrot.slane %v11220, 1
        %v11222 = vmax.f32 %v11220, %v11221
        %v11223 = vrot.slane %v10765, 4
        %v11224 = vmax.f32 %v10765, %v11223
        %v11225 = vrot.slane %v11224, 2
        %v11226 = vmax.f32 %v11224, %v11225
        %v11227 = vrot.slane %v11226, 1
        %v11228 = vmax.f32 %v11226, %v11227
        %v11229 = vrot.slane %v10766, 4
        %v11230 = vmax.f32 %v10766, %v11229
        %v11231 = vrot.slane %v11230, 2
        %v11232 = vmax.f32 %v11230, %v11231
        %v11233 = vrot.slane %v11232, 1
        %v11234 = vmax.f32 %v11232, %v11233
        %v11235 = vrot.slane %v10767, 4
        %v11236 = vmax.f32 %v10767, %v11235
        %v11237 = vrot.slane %v11236, 2
        %v11238 = vmax.f32 %v11236, %v11237
        %v11239 = vrot.slane %v11238, 1
        %v11240 = vmax.f32 %v11238, %v11239
        %v11241 = vrot.slane %v10768, 4
        %v11242 = vmax.f32 %v10768, %v11241
        %v11243 = vrot.slane %v11242, 2
        %v11244 = vmax.f32 %v11242, %v11243
        %v11245 = vrot.slane %v11244, 1
        %v11246 = vmax.f32 %v11244, %v11245
        %v11247 = vrot.slane %v10769, 4
        %v11248 = vmax.f32 %v10769, %v11247
        %v11249 = vrot.slane %v11248, 2
        %v11250 = vmax.f32 %v11248, %v11249
        %v11251 = vrot.slane %v11250, 1
        %v11252 = vmax.f32 %v11250, %v11251
        %v11253 = vrot.slane %v10770, 4
        %v11254 = vmax.f32 %v10770, %v11253
        %v11255 = vrot.slane %v11254, 2
        %v11256 = vmax.f32 %v11254, %v11255
        %v11257 = vrot.slane %v11256, 1
        %v11258 = vmax.f32 %v11256, %v11257
        %v11259 = vrot.slane %v10771, 4
        %v11260 = vmax.f32 %v10771, %v11259
        %v11261 = vrot.slane %v11260, 2
        %v11262 = vmax.f32 %v11260, %v11261
        %v11263 = vrot.slane %v11262, 1
        %v11264 = vmax.f32 %v11262, %v11263
        %v11265 = vrot.slane %v10772, 4
        %v11266 = vmax.f32 %v10772, %v11265
        %v11267 = vrot.slane %v11266, 2
        %v11268 = vmax.f32 %v11266, %v11267
        %v11269 = vrot.slane %v11268, 1
        %v11270 = vmax.f32 %v11268, %v11269
        %v11271 = vrot.slane %v10773, 4
        %v11272 = vmax.f32 %v10773, %v11271
        %v11273 = vrot.slane %v11272, 2
        %v11274 = vmax.f32 %v11272, %v11273
        %v11275 = vrot.slane %v11274, 1
        %v11276 = vmax.f32 %v11274, %v11275
        %v11277 = vrot.slane %v10774, 4
        %v11278 = vmax.f32 %v10774, %v11277
        %v11279 = vrot.slane %v11278, 2
        %v11280 = vmax.f32 %v11278, %v11279
        %v11281 = vrot.slane %v11280, 1
        %v11282 = vmax.f32 %v11280, %v11281
        %v11283 = vrot.slane %v10775, 4
        %v11284 = vmax.f32 %v10775, %v11283
        %v11285 = vrot.slane %v11284, 2
        %v11286 = vmax.f32 %v11284, %v11285
        %v11287 = vrot.slane %v11286, 1
        %v11288 = vmax.f32 %v11286, %v11287
        %v11289 = vrot.slane %v10776, 4
        %v11290 = vmax.f32 %v10776, %v11289
        %v11291 = vrot.slane %v11290, 2
        %v11292 = vmax.f32 %v11290, %v11291
        %v11293 = vrot.slane %v11292, 1
        %v11294 = vmax.f32 %v11292, %v11293
        %v11295 = vrot.slane %v10777, 4
        %v11296 = vmax.f32 %v10777, %v11295
        %v11297 = vrot.slane %v11296, 2
        %v11298 = vmax.f32 %v11296, %v11297
        %v11299 = vrot.slane %v11298, 1
        %v11300 = vmax.f32 %v11298, %v11299
        %v11301 = vrot.slane %v10778, 4
        %v11302 = vmax.f32 %v10778, %v11301
        %v11303 = vrot.slane %v11302, 2
        %v11304 = vmax.f32 %v11302, %v11303
        %v11305 = vrot.slane %v11304, 1
        %v11306 = vmax.f32 %v11304, %v11305
        %v11307 = vrot.slane %v10779, 4
        %v11308 = vmax.f32 %v10779, %v11307
        %v11309 = vrot.slane %v11308, 2
        %v11310 = vmax.f32 %v11308, %v11309
        %v11311 = vrot.slane %v11310, 1
        %v11312 = vmax.f32 %v11310, %v11311
        %v11313 = vrot.slane %v10780, 4
        %v11314 = vmax.f32 %v10780, %v11313
        %v11315 = vrot.slane %v11314, 2
        %v11316 = vmax.f32 %v11314, %v11315
        %v11317 = vrot.slane %v11316, 1
        %v11318 = vmax.f32 %v11316, %v11317
        %v11319 = vrot.slane %v10781, 4
        %v11320 = vmax.f32 %v10781, %v11319
        %v11321 = vrot.slane %v11320, 2
        %v11322 = vmax.f32 %v11320, %v11321
        %v11323 = vrot.slane %v11322, 1
        %v11324 = vmax.f32 %v11322, %v11323
        %v11325 = vrot.slane %v10782, 4
        %v11326 = vmax.f32 %v10782, %v11325
        %v11327 = vrot.slane %v11326, 2
        %v11328 = vmax.f32 %v11326, %v11327
        %v11329 = vrot.slane %v11328, 1
        %v11330 = vmax.f32 %v11328, %v11329
        %v11331 = vrot.slane %v10783, 4
        %v11332 = vmax.f32 %v10783, %v11331
        %v11333 = vrot.slane %v11332, 2
        %v11334 = vmax.f32 %v11332, %v11333
        %v11335 = vrot.slane %v11334, 1
        %v11336 = vmax.f32 %v11334, %v11335
        %v11337 = vrot.slane %v10784, 4
        %v11338 = vmax.f32 %v10784, %v11337
        %v11339 = vrot.slane %v11338, 2
        %v11340 = vmax.f32 %v11338, %v11339
        %v11341 = vrot.slane %v11340, 1
        %v11342 = vmax.f32 %v11340, %v11341
        %v11343 = vrot.slane %v10785, 4
        %v11344 = vmax.f32 %v10785, %v11343
        %v11345 = vrot.slane %v11344, 2
        %v11346 = vmax.f32 %v11344, %v11345
        %v11347 = vrot.slane %v11346, 1
        %v11348 = vmax.f32 %v11346, %v11347
        %v11349 = vrot.slane %v10786, 4
        %v11350 = vmax.f32 %v10786, %v11349
        %v11351 = vrot.slane %v11350, 2
        %v11352 = vmax.f32 %v11350, %v11351
        %v11353 = vrot.slane %v11352, 1
        %v11354 = vmax.f32 %v11352, %v11353
        %v11355 = vrot.slane %v10787, 4
        %v11356 = vmax.f32 %v10787, %v11355
        %v11357 = vrot.slane %v11356, 2
        %v11358 = vmax.f32 %v11356, %v11357
        %v11359 = vrot.slane %v11358, 1
        %v11360 = vmax.f32 %v11358, %v11359
        %v11361 = vrot.slane %v10788, 4
        %v11362 = vmax.f32 %v10788, %v11361
        %v11363 = vrot.slane %v11362, 2
        %v11364 = vmax.f32 %v11362, %v11363
        %v11365 = vrot.slane %v11364, 1
        %v11366 = vmax.f32 %v11364, %v11365
        %v11367 = vrot.slane %v10789, 4
        %v11368 = vmax.f32 %v10789, %v11367
        %v11369 = vrot.slane %v11368, 2
        %v11370 = vmax.f32 %v11368, %v11369
        %v11371 = vrot.slane %v11370, 1
        %v11372 = vmax.f32 %v11370, %v11371
        %v11373 = vrot.slane %v10790, 4
        %v11374 = vmax.f32 %v10790, %v11373
        %v11375 = vrot.slane %v11374, 2
        %v11376 = vmax.f32 %v11374, %v11375
        %v11377 = vrot.slane %v11376, 1
        %v11378 = vmax.f32 %v11376, %v11377
        %v11379 = vrot.slane %v10791, 4
        %v11380 = vmax.f32 %v10791, %v11379
        %v11381 = vrot.slane %v11380, 2
        %v11382 = vmax.f32 %v11380, %v11381
        %v11383 = vrot.slane %v11382, 1
        %v11384 = vmax.f32 %v11382, %v11383
        %v11385 = vrot.slane %v10792, 4
        %v11386 = vmax.f32 %v10792, %v11385
        %v11387 = vrot.slane %v11386, 2
        %v11388 = vmax.f32 %v11386, %v11387
        %v11389 = vrot.slane %v11388, 1
        %v11390 = vmax.f32 %v11388, %v11389
        %v11391 = vrot.slane %v10793, 4
        %v11392 = vmax.f32 %v10793, %v11391
        %v11393 = vrot.slane %v11392, 2
        %v11394 = vmax.f32 %v11392, %v11393
        %v11395 = vrot.slane %v11394, 1
        %v11396 = vmax.f32 %v11394, %v11395
        %v11397 = vrot.slane %v10794, 4
        %v11398 = vmax.f32 %v10794, %v11397
        %v11399 = vrot.slane %v11398, 2
        %v11400 = vmax.f32 %v11398, %v11399
        %v11401 = vrot.slane %v11400, 1
        %v11402 = vmax.f32 %v11400, %v11401
        %v11403 = vrot.slane %v10795, 4
        %v11404 = vmax.f32 %v10795, %v11403
        %v11405 = vrot.slane %v11404, 2
        %v11406 = vmax.f32 %v11404, %v11405
        %v11407 = vrot.slane %v11406, 1
        %v11408 = vmax.f32 %v11406, %v11407
        %v11409 = vrot.slane %v10796, 4
        %v11410 = vmax.f32 %v10796, %v11409
        %v11411 = vrot.slane %v11410, 2
        %v11412 = vmax.f32 %v11410, %v11411
        %v11413 = vrot.slane %v11412, 1
        %v11414 = vmax.f32 %v11412, %v11413
        %v11415 = vrot.slane %v10797, 4
        %v11416 = vmax.f32 %v10797, %v11415
        %v11417 = vrot.slane %v11416, 2
        %v11418 = vmax.f32 %v11416, %v11417
        %v11419 = vrot.slane %v11418, 1
        %v11420 = vmax.f32 %v11418, %v11419
        %v11421 = vrot.slane %v10798, 4
        %v11422 = vmax.f32 %v10798, %v11421
        %v11423 = vrot.slane %v11422, 2
        %v11424 = vmax.f32 %v11422, %v11423
        %v11425 = vrot.slane %v11424, 1
        %v11426 = vmax.f32 %v11424, %v11425
        %v11427 = vrot.slane %v10799, 4
        %v11428 = vmax.f32 %v10799, %v11427
        %v11429 = vrot.slane %v11428, 2
        %v11430 = vmax.f32 %v11428, %v11429
        %v11431 = vrot.slane %v11430, 1
        %v11432 = vmax.f32 %v11430, %v11431
        %v11433 = vrot.slane %v10800, 4
        %v11434 = vmax.f32 %v10800, %v11433
        %v11435 = vrot.slane %v11434, 2
        %v11436 = vmax.f32 %v11434, %v11435
        %v11437 = vrot.slane %v11436, 1
        %v11438 = vmax.f32 %v11436, %v11437
        %v11439 = vrot.slane %v10801, 4
        %v11440 = vmax.f32 %v10801, %v11439
        %v11441 = vrot.slane %v11440, 2
        %v11442 = vmax.f32 %v11440, %v11441
        %v11443 = vrot.slane %v11442, 1
        %v11444 = vmax.f32 %v11442, %v11443
        %v11445 = vrot.slane %v10802, 4
        %v11446 = vmax.f32 %v10802, %v11445
        %v11447 = vrot.slane %v11446, 2
        %v11448 = vmax.f32 %v11446, %v11447
        %v11449 = vrot.slane %v11448, 1
        %v11450 = vmax.f32 %v11448, %v11449
        %v11451 = vrot.slane %v10803, 4
        %v11452 = vmax.f32 %v10803, %v11451
        %v11453 = vrot.slane %v11452, 2
        %v11454 = vmax.f32 %v11452, %v11453
        %v11455 = vrot.slane %v11454, 1
        %v11456 = vmax.f32 %v11454, %v11455
        %v11457 = vrot.slane %v10804, 4
        %v11458 = vmax.f32 %v10804, %v11457
        %v11459 = vrot.slane %v11458, 2
        %v11460 = vmax.f32 %v11458, %v11459
        %v11461 = vrot.slane %v11460, 1
        %v11462 = vmax.f32 %v11460, %v11461
        %v11463 = vrot.slane %v10805, 4
        %v11464 = vmax.f32 %v10805, %v11463
        %v11465 = vrot.slane %v11464, 2
        %v11466 = vmax.f32 %v11464, %v11465
        %v11467 = vrot.slane %v11466, 1
        %v11468 = vmax.f32 %v11466, %v11467
        %v11469 = vrot.slane %v10806, 4
        %v11470 = vmax.f32 %v10806, %v11469
        %v11471 = vrot.slane %v11470, 2
        %v11472 = vmax.f32 %v11470, %v11471
        %v11473 = vrot.slane %v11472, 1
        %v11474 = vmax.f32 %v11472, %v11473
        %v11475 = vrot.slane %v10807, 4
        %v11476 = vmax.f32 %v10807, %v11475
        %v11477 = vrot.slane %v11476, 2
        %v11478 = vmax.f32 %v11476, %v11477
        %v11479 = vrot.slane %v11478, 1
        %v11480 = vmax.f32 %v11478, %v11479
        %v11481 = vrot.slane %v10808, 4
        %v11482 = vmax.f32 %v10808, %v11481
        %v11483 = vrot.slane %v11482, 2
        %v11484 = vmax.f32 %v11482, %v11483
        %v11485 = vrot.slane %v11484, 1
        %v11486 = vmax.f32 %v11484, %v11485
        %v11487 = vrot.slane %v10809, 4
        %v11488 = vmax.f32 %v10809, %v11487
        %v11489 = vrot.slane %v11488, 2
        %v11490 = vmax.f32 %v11488, %v11489
        %v11491 = vrot.slane %v11490, 1
        %v11492 = vmax.f32 %v11490, %v11491
        %v11493 = vrot.slane %v10810, 4
        %v11494 = vmax.f32 %v10810, %v11493
        %v11495 = vrot.slane %v11494, 2
        %v11496 = vmax.f32 %v11494, %v11495
        %v11497 = vrot.slane %v11496, 1
        %v11498 = vmax.f32 %v11496, %v11497
        %v11499 = vrot.slane %v10811, 4
        %v11500 = vmax.f32 %v10811, %v11499
        %v11501 = vrot.slane %v11500, 2
        %v11502 = vmax.f32 %v11500, %v11501
        %v11503 = vrot.slane %v11502, 1
        %v11504 = vmax.f32 %v11502, %v11503
        %v11505 = vrot.slane %v10812, 4
        %v11506 = vmax.f32 %v10812, %v11505
        %v11507 = vrot.slane %v11506, 2
        %v11508 = vmax.f32 %v11506, %v11507
        %v11509 = vrot.slane %v11508, 1
        %v11510 = vmax.f32 %v11508, %v11509
        %v11511 = vrot.slane %v10813, 4
        %v11512 = vmax.f32 %v10813, %v11511
        %v11513 = vrot.slane %v11512, 2
        %v11514 = vmax.f32 %v11512, %v11513
        %v11515 = vrot.slane %v11514, 1
        %v11516 = vmax.f32 %v11514, %v11515
        %v11517 = vrot.slane %v10814, 4
        %v11518 = vmax.f32 %v10814, %v11517
        %v11519 = vrot.slane %v11518, 2
        %v11520 = vmax.f32 %v11518, %v11519
        %v11521 = vrot.slane %v11520, 1
        %v11522 = vmax.f32 %v11520, %v11521
        %v11523 = vrot.slane %v10815, 4
        %v11524 = vmax.f32 %v10815, %v11523
        %v11525 = vrot.slane %v11524, 2
        %v11526 = vmax.f32 %v11524, %v11525
        %v11527 = vrot.slane %v11526, 1
        %v11528 = vmax.f32 %v11526, %v11527
        %v11529 = vrot.slane %v10816, 4
        %v11530 = vmax.f32 %v10816, %v11529
        %v11531 = vrot.slane %v11530, 2
        %v11532 = vmax.f32 %v11530, %v11531
        %v11533 = vrot.slane %v11532, 1
        %v11534 = vmax.f32 %v11532, %v11533
        %v11535 = vrot.slane %v10817, 4
        %v11536 = vmax.f32 %v10817, %v11535
        %v11537 = vrot.slane %v11536, 2
        %v11538 = vmax.f32 %v11536, %v11537
        %v11539 = vrot.slane %v11538, 1
        %v11540 = vmax.f32 %v11538, %v11539
        %v11541 = vrot.slane %v10818, 4
        %v11542 = vmax.f32 %v10818, %v11541
        %v11543 = vrot.slane %v11542, 2
        %v11544 = vmax.f32 %v11542, %v11543
        %v11545 = vrot.slane %v11544, 1
        %v11546 = vmax.f32 %v11544, %v11545
        %v11547 = vrot.slane %v10819, 4
        %v11548 = vmax.f32 %v10819, %v11547
        %v11549 = vrot.slane %v11548, 2
        %v11550 = vmax.f32 %v11548, %v11549
        %v11551 = vrot.slane %v11550, 1
        %v11552 = vmax.f32 %v11550, %v11551
        %v11553 = vrot.slane %v10820, 4
        %v11554 = vmax.f32 %v10820, %v11553
        %v11555 = vrot.slane %v11554, 2
        %v11556 = vmax.f32 %v11554, %v11555
        %v11557 = vrot.slane %v11556, 1
        %v11558 = vmax.f32 %v11556, %v11557
        %v11559 = vrot.slane %v10821, 4
        %v11560 = vmax.f32 %v10821, %v11559
        %v11561 = vrot.slane %v11560, 2
        %v11562 = vmax.f32 %v11560, %v11561
        %v11563 = vrot.slane %v11562, 1
        %v11564 = vmax.f32 %v11562, %v11563
        %v11565 = vrot.slane %v10822, 4
        %v11566 = vmax.f32 %v10822, %v11565
        %v11567 = vrot.slane %v11566, 2
        %v11568 = vmax.f32 %v11566, %v11567
        %v11569 = vrot.slane %v11568, 1
        %v11570 = vmax.f32 %v11568, %v11569
        %v11571 = vrot.slane %v10823, 4
        %v11572 = vmax.f32 %v10823, %v11571
        %v11573 = vrot.slane %v11572, 2
        %v11574 = vmax.f32 %v11572, %v11573
        %v11575 = vrot.slane %v11574, 1
        %v11576 = vmax.f32 %v11574, %v11575
        %v11577 = vrot.slane %v10824, 4
        %v11578 = vmax.f32 %v10824, %v11577
        %v11579 = vrot.slane %v11578, 2
        %v11580 = vmax.f32 %v11578, %v11579
        %v11581 = vrot.slane %v11580, 1
        %v11582 = vmax.f32 %v11580, %v11581
        %v11583 = vrot.slane %v10825, 4
        %v11584 = vmax.f32 %v10825, %v11583
        %v11585 = vrot.slane %v11584, 2
        %v11586 = vmax.f32 %v11584, %v11585
        %v11587 = vrot.slane %v11586, 1
        %v11588 = vmax.f32 %v11586, %v11587
        %v11589 = vrot.slane %v10826, 4
        %v11590 = vmax.f32 %v10826, %v11589
        %v11591 = vrot.slane %v11590, 2
        %v11592 = vmax.f32 %v11590, %v11591
        %v11593 = vrot.slane %v11592, 1
        %v11594 = vmax.f32 %v11592, %v11593
        %v11723 = vsel %vm3653, %v10838, %v10832
        %v11724 = vsel %vm3655, %v10844, %v11723
        %v11725 = vsel %vm3657, %v10850, %v11724
        %v11726 = vsel %vm3659, %v10856, %v11725
        %v11727 = vsel %vm3661, %v10862, %v11726
        %v11728 = vsel %vm3663, %v10868, %v11727
        %v11729 = vsel %vm3665, %v10874, %v11728
        %v11730 = vsel %vm3653, %v10886, %v10880
        %v11731 = vsel %vm3655, %v10892, %v11730
        %v11732 = vsel %vm3657, %v10898, %v11731
        %v11733 = vsel %vm3659, %v10904, %v11732
        %v11734 = vsel %vm3661, %v10910, %v11733
        %v11735 = vsel %vm3663, %v10916, %v11734
        %v11736 = vsel %vm3665, %v10922, %v11735
        %v11737 = vsel %vm3653, %v10934, %v10928
        %v11738 = vsel %vm3655, %v10940, %v11737
        %v11739 = vsel %vm3657, %v10946, %v11738
        %v11740 = vsel %vm3659, %v10952, %v11739
        %v11741 = vsel %vm3661, %v10958, %v11740
        %v11742 = vsel %vm3663, %v10964, %v11741
        %v11743 = vsel %vm3665, %v10970, %v11742
        %v11744 = vsel %vm3653, %v10982, %v10976
        %v11745 = vsel %vm3655, %v10988, %v11744
        %v11746 = vsel %vm3657, %v10994, %v11745
        %v11747 = vsel %vm3659, %v11000, %v11746
        %v11748 = vsel %vm3661, %v11006, %v11747
        %v11749 = vsel %vm3663, %v11012, %v11748
        %v11750 = vsel %vm3665, %v11018, %v11749
        %v11751 = vsel %vm3653, %v11030, %v11024
        %v11752 = vsel %vm3655, %v11036, %v11751
        %v11753 = vsel %vm3657, %v11042, %v11752
        %v11754 = vsel %vm3659, %v11048, %v11753
        %v11755 = vsel %vm3661, %v11054, %v11754
        %v11756 = vsel %vm3663, %v11060, %v11755
        %v11757 = vsel %vm3665, %v11066, %v11756
        %v11758 = vsel %vm3653, %v11078, %v11072
        %v11759 = vsel %vm3655, %v11084, %v11758
        %v11760 = vsel %vm3657, %v11090, %v11759
        %v11761 = vsel %vm3659, %v11096, %v11760
        %v11762 = vsel %vm3661, %v11102, %v11761
        %v11763 = vsel %vm3663, %v11108, %v11762
        %v11764 = vsel %vm3665, %v11114, %v11763
        %v11765 = vsel %vm3653, %v11126, %v11120
        %v11766 = vsel %vm3655, %v11132, %v11765
        %v11767 = vsel %vm3657, %v11138, %v11766
        %v11768 = vsel %vm3659, %v11144, %v11767
        %v11769 = vsel %vm3661, %v11150, %v11768
        %v11770 = vsel %vm3663, %v11156, %v11769
        %v11771 = vsel %vm3665, %v11162, %v11770
        %v11772 = vsel %vm3653, %v11174, %v11168
        %v11773 = vsel %vm3655, %v11180, %v11772
        %v11774 = vsel %vm3657, %v11186, %v11773
        %v11775 = vsel %vm3659, %v11192, %v11774
        %v11776 = vsel %vm3661, %v11198, %v11775
        %v11777 = vsel %vm3663, %v11204, %v11776
        %v11778 = vsel %vm3665, %v11210, %v11777
        %v11779 = vsel %vm3653, %v11222, %v11216
        %v11780 = vsel %vm3655, %v11228, %v11779
        %v11781 = vsel %vm3657, %v11234, %v11780
        %v11782 = vsel %vm3659, %v11240, %v11781
        %v11783 = vsel %vm3661, %v11246, %v11782
        %v11784 = vsel %vm3663, %v11252, %v11783
        %v11785 = vsel %vm3665, %v11258, %v11784
        %v11786 = vsel %vm3653, %v11270, %v11264
        %v11787 = vsel %vm3655, %v11276, %v11786
        %v11788 = vsel %vm3657, %v11282, %v11787
        %v11789 = vsel %vm3659, %v11288, %v11788
        %v11790 = vsel %vm3661, %v11294, %v11789
        %v11791 = vsel %vm3663, %v11300, %v11790
        %v11792 = vsel %vm3665, %v11306, %v11791
        %v11793 = vsel %vm3653, %v11318, %v11312
        %v11794 = vsel %vm3655, %v11324, %v11793
        %v11795 = vsel %vm3657, %v11330, %v11794
        %v11796 = vsel %vm3659, %v11336, %v11795
        %v11797 = vsel %vm3661, %v11342, %v11796
        %v11798 = vsel %vm3663, %v11348, %v11797
        %v11799 = vsel %vm3665, %v11354, %v11798
        %v11800 = vsel %vm3653, %v11366, %v11360
        %v11801 = vsel %vm3655, %v11372, %v11800
        %v11802 = vsel %vm3657, %v11378, %v11801
        %v11803 = vsel %vm3659, %v11384, %v11802
        %v11804 = vsel %vm3661, %v11390, %v11803
        %v11805 = vsel %vm3663, %v11396, %v11804
        %v11806 = vsel %vm3665, %v11402, %v11805
        %v11807 = vsel %vm3653, %v11414, %v11408
        %v11808 = vsel %vm3655, %v11420, %v11807
        %v11809 = vsel %vm3657, %v11426, %v11808
        %v11810 = vsel %vm3659, %v11432, %v11809
        %v11811 = vsel %vm3661, %v11438, %v11810
        %v11812 = vsel %vm3663, %v11444, %v11811
        %v11813 = vsel %vm3665, %v11450, %v11812
        %v11814 = vsel %vm3653, %v11462, %v11456
        %v11815 = vsel %vm3655, %v11468, %v11814
        %v11816 = vsel %vm3657, %v11474, %v11815
        %v11817 = vsel %vm3659, %v11480, %v11816
        %v11818 = vsel %vm3661, %v11486, %v11817
        %v11819 = vsel %vm3663, %v11492, %v11818
        %v11820 = vsel %vm3665, %v11498, %v11819
        %v11821 = vsel %vm3653, %v11510, %v11504
        %v11822 = vsel %vm3655, %v11516, %v11821
        %v11823 = vsel %vm3657, %v11522, %v11822
        %v11824 = vsel %vm3659, %v11528, %v11823
        %v11825 = vsel %vm3661, %v11534, %v11824
        %v11826 = vsel %vm3663, %v11540, %v11825
        %v11827 = vsel %vm3665, %v11546, %v11826
        %v11828 = vsel %vm3653, %v11558, %v11552
        %v11829 = vsel %vm3655, %v11564, %v11828
        %v11830 = vsel %vm3657, %v11570, %v11829
        %v11831 = vsel %vm3659, %v11576, %v11830
        %v11832 = vsel %vm3661, %v11582, %v11831
        %v11833 = vsel %vm3663, %v11588, %v11832
        %v11834 = vsel %vm3665, %v11594, %v11833
        %11851 = vst [vmem:[%s326] sm:$0xff] %v11729
        %11852 = vst [vmem:[%s326 + $0x8] sm:$0xff] %v11736
        %11853 = vst [vmem:[%s326 + $0x10] sm:$0xff] %v11743
        %11854 = vst [vmem:[%s326 + $0x18] sm:$0xff] %v11750
        %11855 = vst [vmem:[%s326 + $0x20] sm:$0xff] %v11757
        %11856 = vst [vmem:[%s326 + $0x28] sm:$0xff] %v11764
        %11857 = vst [vmem:[%s326 + $0x30] sm:$0xff] %v11771
        %11858 = vst [vmem:[%s326 + $0x38] sm:$0xff] %v11778
        %11859 = vst [vmem:[%s326 + $0x40] sm:$0xff] %v11785
        %11860 = vst [vmem:[%s326 + $0x48] sm:$0xff] %v11792
        %11861 = vst [vmem:[%s326 + $0x50] sm:$0xff] %v11799
        %11862 = vst [vmem:[%s326 + $0x58] sm:$0xff] %v11806
        %11863 = vst [vmem:[%s326 + $0x60] sm:$0xff] %v11813
        %11864 = vst [vmem:[%s326 + $0x68] sm:$0xff] %v11820
        %11865 = vst [vmem:[%s326 + $0x70] sm:$0xff] %v11827
        %11866 = vst [vmem:[%s326 + $0x78] sm:$0xff] %v11834
        %s11867 = sand.u32 %s225, 1
        %s11868 = scalar_lea.sflag [#allocation3], %s11867
        %s11869 = sand.u32 %s225, 1
        %s11870 = smul.addr %s11869, 128
        %s11871 = scalar_lea.vmem [#allocation2], %s11870
        // Predicated region
        $region57: #{tpu_custom_call.1} parent=55 // pred_check
          %p11872 = pneg %p235
        $region58: #{tpu_custom_call.1} parent=55 // pred_check_branch
          %11874 = sbr.rel (%p11872) target = $region60
        $region59: #{tpu_custom_call.1} parent=55 // pred_region
          %s11875 = smul.u32 16, %s23
          %s11877 = ssub.s32 2048, 2048
          %11878 = vsyncadd %s11868, %s11877
          %s11879 = smul.addr %s11875, 128
          %s11880 = scalar_lea.hbm %s9, %s11879
          %s11881 = sshll.u32 %s11871, 4
          %s11882 = int_to_ptr.vmem [resolvable:$true] %s11881
          %11887 = dma.vmem_to_hbm [thread:$0]  %s11882, 2048, %s11880, %s11868, 128, 128, 8
        $region60: #{tpu_custom_call.1} parent=55 // pred_fallthru
          _
      $region56: #{tpu_custom_call.1} parent=5 // pred_fallthru
        _
      %p11888 = scmp.le.s32.totalorder 2, %s18
      // Predicated region
      $region61: #{tpu_custom_call.1} parent=5 // pred_check
        %p11889 = pneg %p11888
      $region62: #{tpu_custom_call.1} parent=5 // pred_check_branch
        %11891 = sbr.rel (%p11889) target = $region64
      $region63: #{tpu_custom_call.1} parent=5 // pred_region
        %s11892 = ssub.s32 %s18, 2
        // Predicated region
        $region65: #{tpu_custom_call.1} parent=63 // pred_check
          %p11893 = pneg %p241
        $region66: #{tpu_custom_call.1} parent=63 // pred_check_branch
          %11895 = sbr.rel (%p11893) target = $region68
        $region67: #{tpu_custom_call.1} parent=63 // pred_region
          %s11896 = sand.u32 %s226, 1
          %s11897 = scalar_lea.sflag [#allocation3], %s11896
          %s11898 = sand.u32 %s226, 1
          %s11899 = smul.addr %s11898, 128
          %s11900 = scalar_lea.vmem [#allocation2], %s11899
          %11901 = dma.done %s11897, 2048
        $region68: #{tpu_custom_call.1} parent=63 // pred_fallthru
          _
      $region64: #{tpu_custom_call.1} parent=5 // pred_fallthru
        _
    $region6: #{tpu_custom_call.1} parent=1 // loop_footer
      %s22 = sadd.s32 1, %s18
    $region7: #{tpu_custom_call.1} parent=1 // loop_footer_branch
      %17 = sbr.rel target = $region3
    $region8: #{tpu_custom_call.1} parent=1 // loop_exit
      _
    %11902 = vsyncpa [#allocation3], 1
    %s11903 = scalar_lea.sflag [#allocation3], 1
    %11904 = vsyncpa %s11903, 1

</llo_original>
